<compile_context>
chip_gen: v7x
topology: tpu7x:2x2x1
jax: 0.10.0
libtpu: 0.0.40
codegen_flags: <defaults>
</compile_context>

<pallas_src>
import jax
import jax.numpy as jnp
import numpy as np
from jax.experimental import pallas as pl
from jax.experimental.pallas import tpu as pltpu

BN_EPS = 1e-5

# Geometry fixed by the module (fc expects 7*7*32 => 28x28, 1-channel inputs).
H1 = W1 = 28          # layer-1 spatial size
H2 = W2 = 14          # layer-2 spatial size (after first 2x2 pool)
H3 = W3 = 7           # final spatial size (after second 2x2 pool)
C1, C2 = 16, 32       # conv output channels
K = 5                 # conv kernel size
KK = K * K
PAD1 = 2 * W1 + 2     # max |flat shift| of a 5x5 tap in the 28-wide row layout
PAD2 = 2 * W2 + 2     # same for the 14-wide layout
NUM_CLASSES = 10
FCQ = NUM_CLASSES * C2   # 320 = FC columns packed as (class*32 + channel)


# ------------------------------ Pallas kernel ------------------------------ #

def _convnet_kernel(xp_ref, hw1_ref, w1_ref, g1_ref, bt1_ref, sel1_ref,
                    hw2_ref, w2_ref, g2_ref, bt2_ref,
                    wq_ref, emask_ref, fold_ref, fcb_ref,
                    o_ref,
                    sa_ref, sb_ref, im2_ref, sc_ref):
    """Fused conv1+BN+ReLU+pool1 -> conv2+BN+ReLU+pool2 -> FC, one invocation.

    Shapes (M1 = N*28*28, M2 = N*14*14, flat (n, h, w) column order):
      xp_ref   : (1, PAD1 + M1 + PAD1) f32   zero-padded flat input
      hw1_ref  : (2, M1) int32               rows = (h, w) per flat column (layer 1)
      w1_ref   : (25, C1, 1) f32             conv1 taps;   g1/bt1: (C1, 1) f32
      sel1_ref : (784, 196) bf16             one-hot 2x2-pool decimation (per image)
      hw2_ref  : (2, M2) int32               rows = (h, w) per flat column (layer 2)
      w2_ref   : (C2, 400) bf16              conv2 weight, col = tap*16 + cin
      g2/bt2   : (C2, 1) f32
      wq_ref   : (196, 320) f32              pool2-decimation + FC weight (class*32+chan)
      emask_ref: (C2, 320) f32               channel-diagonal extractor
      fold_ref : (320, 10) f32               class-group summation
      fcb_ref  : (1, 10) f32                 FC bias
      o_ref    : (1, N*10) f32               logits, lane order (n, class)
      sa_ref   : (C1, M1 + 32) f32           scratch: pool-1 window staging
      sb_ref   : (C1, PAD2 + M2 + PAD2) bf16 scratch: pooled layer-1 map, flat-padded
      im2_ref  : (400, M2) bf16              scratch: conv2 in-VMEM im2col
      sc_ref   : (C2, M2 + 16) f32           scratch: pool-2 window staging
    """
    f32, bf16 = jnp.float32, jnp.bfloat16
    M2 = im2_ref.shape[1]
    n_img = M2 // (H2 * W2)
    M1 = n_img * H1 * W1

    # ---------- layer 1: conv(1->16, 5x5, pad 2) as masked shifted-window FMAs (VPU) ----
    hh1, ww1 = hw1_ref[0:1, :], hw1_ref[1:2, :]
    mh1 = [((hh1 >= -d) & (hh1 < H1 - d)).astype(f32) for d in range(-2, 3)]
    mw1 = [((ww1 >= -d) & (ww1 < W1 - d)).astype(f32) for d in range(-2, 3)]
    acc1 = jnp.zeros((C1, M1), f32)
    for k in range(KK):
        dh, dw = k // K - 2, k % K - 2
        s = dh * W1 + dw
        src = xp_ref[:, PAD1 + s: PAD1 + s + M1]                      # (1, M1)
        acc1 = acc1 + w1_ref[k] * (src * (mh1[dh + 2] * mw1[dw + 2]))

    # BN1 (one-pass batch stats) + ReLU. Conv bias dropped: exact no-op before mean-sub.
    mu1 = jnp.mean(acc1, axis=1, keepdims=True)
    var1 = jnp.maximum(jnp.mean(acc1 * acc1, axis=1, keepdims=True) - mu1 * mu1, 0.0)
    a1 = jnp.maximum(
        (acc1 - mu1) * jax.lax.rsqrt(var1 + BN_EPS) * g1_ref[...] + bt1_ref[...], 0.0)

    # ---------- pool 1 (2x2/2 max): shifted-window max + per-image decimation -----------
    sa_ref[:, :M1] = a1
    sa_ref[:, M1:] = jnp.zeros((C1, sa_ref.shape[1] - M1), f32)
    pm1 = jnp.maximum(
        jnp.maximum(sa_ref[:, 0:M1], sa_ref[:, 1:1 + M1]),
        jnp.maximum(sa_ref[:, W1:W1 + M1], sa_ref[:, W1 + 1:W1 + 1 + M1]))

    sb_ref[:, :PAD2] = jnp.zeros((C1, PAD2), bf16)
    sb_ref[:, PAD2 + M2:] = jnp.zeros((C1, sb_ref.shape[1] - PAD2 - M2), bf16)
    sel1 = sel1_ref[...]
    for n in range(n_img):
        blk = pm1[:, n * H1 * W1:(n + 1) * H1 * W1].astype(bf16)      # (C1, 784)
        dec = jnp.dot(blk, sel1, preferred_element_type=f32)          # (C1, 196), exact
        sb_ref[:, PAD2 + n * H2 * W2: PAD2 + (n + 1) * H2 * W2] = dec.astype(bf16)

    # ---------- layer 2: conv(16->32) via in-VMEM im2col + ONE K=400 bf16 MXU matmul ----
    hh2, ww2 = hw2_ref[0:1, :], hw2_ref[1:2, :]
    mh2 = [((hh2 >= -d) & (hh2 < H2 - d)).astype(f32) for d in range(-2, 3)]
    mw2 = [((ww2 >= -d) & (ww2 < W2 - d)).astype(f32) for d in range(-2, 3)]
    for k in range(KK):
        dh, dw = k // K - 2, k % K - 2
        s = dh * W2 + dw
        src = sb_ref[:, PAD2 + s: PAD2 + s + M2]                      # (C1, M2) bf16
        m2k = (mh2[dh + 2] * mw2[dw + 2]).astype(bf16)                # (1, M2) 0/1
        im2_ref[k * C1:(k + 1) * C1, :] = src * m2k                   # tile-aligned store
    y2 = jnp.dot(w2_ref[...], im2_ref[...], preferred_element_type=f32)   # (C2, M2)

    mu2 = jnp.mean(y2, axis=1, keepdims=True)
    var2 = jnp.maximum(jnp.mean(y2 * y2, axis=1, keepdims=True) - mu2 * mu2, 0.0)
    a2 = jnp.maximum(
        (y2 - mu2) * jax.lax.rsqrt(var2 + BN_EPS) * g2_ref[...] + bt2_ref[...], 0.0)

    # ---------- pool 2 (2x2/2 max): shifted-window max (odd columns never consumed) -----
    sc_ref[:, :M2] = a2
    sc_ref[:, M2:] = jnp.zeros((C2, sc_ref.shape[1] - M2), f32)
    pm2 = jnp.maximum(
        jnp.maximum(sc_ref[:, 0:M2], sc_ref[:, 1:1 + M2]),
        jnp.maximum(sc_ref[:, W2:W2 + M2], sc_ref[:, W2 + 1:W2 + 1 + M2]))

    # ---------- fused pool-2 decimation + NCHW flatten + FC head -------------------------
    # wq zeroes odd pool positions and carries the fc weights in (class*32 + channel)
    # column order; emask keeps the channel-diagonal; fold sums each 32-wide class group.
    wq, emask, fold, fcb = wq_ref[...], emask_ref[...], fold_ref[...], fcb_ref[...]
    for n in range(n_img):
        p_n = pm2[:, n * H2 * W2:(n + 1) * H2 * W2]                   # (C2, 196)
        z_n = jnp.dot(p_n, wq, preferred_element_type=f32)            # (C2, 320)
        col = jnp.sum(z_n * emask, axis=0, keepdims=True)             # (1, 320)
        o_ref[:, n * NUM_CLASSES:(n + 1) * NUM_CLASSES] = (
            jnp.dot(col, fold, preferred_element_type=f32) + fcb)


# --------------------------------- wrappers --------------------------------- #

def _vmem_spec():
    return pl.BlockSpec(memory_space=pltpu.MemorySpace.VMEM)


def _hw_index_rows(n_img, h, w):
    """(2, n*h*w) int32: row 0 = in-image row index, row 1 = in-image column index."""
    idx = np.arange(n_img * h * w)
    return jnp.asarray(np.stack([(idx // w) % h, idx % w]).astype(np.int32))


def _pool1_decimation():
    """(784, 196) bf16 one-hot: column i*14+j selects flat row-major index (2i)*28 + 2j."""
    sel = np.zeros((H1 * W1, H2 * W2), np.float32)
    for i in range(H2):
        for j in range(W2):
            sel[(2 * i) * W1 + 2 * j, i * W2 + j] = 1.0
    return jnp.asarray(sel, dtype=jnp.bfloat16)


def _class_channel_mask():
    """(32, 320) f32: emask[c, o*32 + c] = 1 (channel-diagonal extractor)."""
    em = np.zeros((C2, FCQ), np.float32)
    for c in range(C2):
        em[c, np.arange(NUM_CLASSES) * C2 + c] = 1.0
    return jnp.asarray(em)


def _class_fold():
    """(320, 10) f32: fold[p, o] = 1 iff p // 32 == o (sums each 32-wide class group)."""
    fd = np.zeros((FCQ, NUM_CLASSES), np.float32)
    fd[np.arange(FCQ), np.arange(FCQ) // C2] = 1.0
    return jnp.asarray(fd)


def _pack_fc_weight(fc_w):
    """(196, 320) f32: wq[2*h3*14 + 2*w3, o*32 + c] = fc_w[o, c*49 + h3*7 + w3], else 0."""
    wq_small = jnp.transpose(fc_w.reshape(NUM_CLASSES, C2, H3, W3), (2, 3, 0, 1))
    wq_small = wq_small.reshape(H3, W3, FCQ).astype(jnp.float32)
    wq = jnp.zeros((H3, 2, W3, 2, FCQ), jnp.float32).at[:, 0, :, 0, :].set(wq_small)
    return wq.reshape(H2 * W2, FCQ)


def convnet_forward(x_nchw, p):
    """Forward pass matching the PyTorch ConvNet (training-mode BatchNorm)."""
    N = x_nchw.shape[0]
    M1 = N * H1 * W1
    M2 = N * H2 * W2

    # Flat (n, h, w) layout, zero padded in the flat dim so every 5x5 tap inside the
    # kernel is a static lane-window slice (no im2col patch tensor in HBM).
    xp = jnp.pad(x_nchw.reshape(1, M1).astype(jnp.float32), ((0, 0), (PAD1, PAD1)))

    # Parameter repacking (cheap one-time glue; fused/constant-folded under jit; would be
    # pre-packed in a real deployment). Conv biases b1/b2 are intentionally dropped:
    # training-mode BN subtracts the batch mean right after, so they are exact no-ops.
    w1 = p["conv1_w"].reshape(C1, KK).T.reshape(KK, C1, 1).astype(jnp.float32)
    w2 = jnp.transpose(p["conv2_w"], (0, 2, 3, 1)).reshape(C2, KK * C1).astype(jnp.bfloat16)
    g1, bt1 = p["bn1_gamma"].reshape(C1, 1), p["bn1_beta"].reshape(C1, 1)
    g2, bt2 = p["bn2_gamma"].reshape(C2, 1), p["bn2_beta"].reshape(C2, 1)
    hw1 = _hw_index_rows(N, H1, W1)
    hw2 = _hw_index_rows(N, H2, W2)
    sel1 = _pool1_decimation()
    wq = _pack_fc_weight(p["fc_w"])
    emask = _class_channel_mask()
    fold = _class_fold()
    fcb = p["fc_b"].reshape(1, NUM_CLASSES).astype(jnp.float32)

    # VMEM budget derived from the actual footprint (v7x has 64 MiB physical VMEM: keep
    # <= 48 MiB with headroom; 32 MiB floor covers SSA temporaries at small N).
    scratch_bytes = (C1 * (M1 + 32) * 4 + C1 * (2 * PAD2 + M2) * 2
                     + KK * C1 * M2 * 2 + C2 * (M2 + 16) * 4)
    operand_bytes = (xp.size * 4 + hw1.size * 4 + hw2.size * 4 + w1.size * 4
                     + w2.size * 2 + sel1.size * 2 + wq.size * 4 + emask.size * 4
                     + fold.size * 4 + (2 * C1 + 2 * C2 + NUM_CLASSES) * 4)
    vmem_limit = int(min(48 * 2 ** 20,
                         max(32 * 2 ** 20, 4 * (operand_bytes + scratch_bytes))))

    out = pl.pallas_call(
        _convnet_kernel,
        out_shape=jax.ShapeDtypeStruct((1, N * NUM_CLASSES), jnp.float32),
        in_specs=[_vmem_spec()] * 14,
        out_specs=_vmem_spec(),
        scratch_shapes=[
            pltpu.VMEM((C1, M1 + 32), jnp.float32),             # pool-1 window staging
            pltpu.VMEM((C1, PAD2 + M2 + PAD2), jnp.bfloat16),   # pooled/padded layer-1 map
            pltpu.VMEM((KK * C1, M2), jnp.bfloat16),            # conv2 in-VMEM im2col (K=400)
            pltpu.VMEM((C2, M2 + 16), jnp.float32),             # pool-2 window staging
        ],
        compiler_params=pltpu.CompilerParams(vmem_limit_bytes=vmem_limit),
    )(xp, hw1, w1, g1, bt1, sel1, hw2, w2, g2, bt2, wq, emask, fold, fcb)
    return out.reshape(N, NUM_CLASSES)


# ----------------------------- pure-JAX reference ---------------------------- #

def reference_forward(x_nchw, p):
    def block(x, w, b, g, beta):
        y = jax.lax.conv_general_dilated(
            x, w, window_strides=(1, 1), padding=((2, 2), (2, 2)),
            dimension_numbers=("NCHW", "OIHW", "NCHW"))
        y = y + b[None, :, None, None]
        mean = jnp.mean(y, axis=(0, 2, 3), keepdims=True)
        var = jnp.var(y, axis=(0, 2, 3), keepdims=True)
        y = (y - mean) / jnp.sqrt(var + BN_EPS)
        y = y * g[None, :, None, None] + beta[None, :, None, None]
        y = jnp.maximum(y, 0.0)
        return jax.lax.reduce_window(y, -jnp.inf, jax.lax.max,
                                     (1, 1, 2, 2), (1, 1, 2, 2), "VALID")

    y = block(x_nchw, p["conv1_w"], p["conv1_b"], p["bn1_gamma"], p["bn1_beta"])
    y = block(y, p["conv2_w"], p["conv2_b"], p["bn2_gamma"], p["bn2_beta"])
    y = y.reshape(y.shape[0], -1)
    return y @ p["fc_w"].T + p["fc_b"]


# ------------------------------------ main ------------------------------------ #

if __name__ == "__main__":
    key = jax.random.PRNGKey(0)
    ks = jax.random.split(key, 11)
    num_classes = 10

    params = {
        "conv1_w": 0.1 * jax.random.normal(ks[0], (16, 1, 5, 5), jnp.float32),
        "conv1_b": 0.1 * jax.random.normal(ks[1], (16,), jnp.float32),
        "bn1_gamma": 1.0 + 0.1 * jax.random.normal(ks[2], (16,), jnp.float32),
        "bn1_beta": 0.1 * jax.random.normal(ks[3], (16,), jnp.float32),
        "conv2_w": 0.05 * jax.random.normal(ks[4], (32, 16, 5, 5), jnp.float32),
        "conv2_b": 0.1 * jax.random.normal(ks[5], (32,), jnp.float32),
        "bn2_gamma": 1.0 + 0.1 * jax.random.normal(ks[6], (32,), jnp.float32),
        "bn2_beta": 0.1 * jax.random.normal(ks[7], (32,), jnp.float32),
        "fc_w": 0.02 * jax.random.normal(ks[8], (num_classes, 7 * 7 * 32), jnp.float32),
        "fc_b": 0.1 * jax.random.normal(ks[9], (num_classes,), jnp.float32),
    }

    # fc(7*7*32) implies 28x28 single-channel inputs (MNIST-like).
    x = jax.random.normal(ks[10], (2, 1, 28, 28), jnp.float32)

    forward = jax.jit(convnet_forward)
    out = jax.block_until_ready(forward(x, params))
    assert out.shape == (2, num_classes)

    ref = jax.block_until_ready(jax.jit(reference_forward)(x, params))
    # conv2 / pool-1 decimation use bf16 operands with f32 accumulation; everything else
    # (conv1, BN, pools, FC) is f32, so 2e-2 vs the pure-f32 reference holds comfortably.
    np.testing.assert_allclose(np.asarray(out), np.asarray(ref), rtol=2e-2, atol=2e-2)

    print("KERNEL_OK")
</pallas_src>

<mosaic_0001>
module attributes {stable_mosaic.version = 11 : i64} {
  func.func @_convnet_kernel(%arg0: memref<1x1684xf32, #tpu.memory_space<vmem>>, %arg1: memref<2x1568xi32, #tpu.memory_space<vmem>>, %arg2: memref<25x16x1xf32, #tpu.memory_space<vmem>>, %arg3: memref<16x1xf32, #tpu.memory_space<vmem>>, %arg4: memref<16x1xf32, #tpu.memory_space<vmem>>, %arg5: memref<784x196xbf16, #tpu.memory_space<vmem>>, %arg6: memref<2x392xi32, #tpu.memory_space<vmem>>, %arg7: memref<32x400xbf16, #tpu.memory_space<vmem>>, %arg8: memref<32x1xf32, #tpu.memory_space<vmem>>, %arg9: memref<32x1xf32, #tpu.memory_space<vmem>>, %arg10: memref<196x320xf32, #tpu.memory_space<vmem>>, %arg11: memref<32x320xf32, #tpu.memory_space<vmem>>, %arg12: memref<320x10xf32, #tpu.memory_space<vmem>>, %arg13: memref<1x10xf32, #tpu.memory_space<vmem>>, %arg14: memref<1x20xf32, #tpu.memory_space<vmem>>, %arg15: memref<16x1600xf32, #tpu.memory_space<vmem>>, %arg16: memref<16x452xbf16, #tpu.memory_space<vmem>>, %arg17: memref<400x392xbf16, #tpu.memory_space<vmem>>, %arg18: memref<32x408xf32, #tpu.memory_space<vmem>>) attributes {dimension_semantics = [], scalar_prefetch = 0 : i64, scratch_operands = 4 : i64, tpu.core_type = #tpu.core_type<tc>} {
    %c0 = arith.constant 0 : index
    %c0_0 = arith.constant 0 : index
    %0 = vector.load %arg1[%c0, %c0_0] : memref<2x1568xi32, #tpu.memory_space<vmem>>, vector<1x1568xi32>
    %c1 = arith.constant 1 : index
    %c0_1 = arith.constant 0 : index
    %1 = vector.load %arg1[%c1, %c0_1] : memref<2x1568xi32, #tpu.memory_space<vmem>>, vector<1x1568xi32>
    %c2_i32 = arith.constant 2 : i32
    %2 = vector.broadcast %c2_i32 : i32 to vector<1x1568xi32>
    %3 = arith.cmpi sge, %0, %2 : vector<1x1568xi32>
    %c30_i32 = arith.constant 30 : i32
    %4 = vector.broadcast %c30_i32 : i32 to vector<1x1568xi32>
    %5 = arith.cmpi slt, %0, %4 : vector<1x1568xi32>
    %6 = arith.andi %3, %5 : vector<1x1568xi1>
    %7 = arith.extui %6 : vector<1x1568xi1> to vector<1x1568xi32>
    %8 = arith.sitofp %7 : vector<1x1568xi32> to vector<1x1568xf32>
    %c1_i32 = arith.constant 1 : i32
    %9 = vector.broadcast %c1_i32 : i32 to vector<1x1568xi32>
    %10 = arith.cmpi sge, %0, %9 : vector<1x1568xi32>
    %c29_i32 = arith.constant 29 : i32
    %11 = vector.broadcast %c29_i32 : i32 to vector<1x1568xi32>
    %12 = arith.cmpi slt, %0, %11 : vector<1x1568xi32>
    %13 = arith.andi %10, %12 : vector<1x1568xi1>
    %14 = arith.extui %13 : vector<1x1568xi1> to vector<1x1568xi32>
    %15 = arith.sitofp %14 : vector<1x1568xi32> to vector<1x1568xf32>
    %c0_i32 = arith.constant 0 : i32
    %16 = vector.broadcast %c0_i32 : i32 to vector<1x1568xi32>
    %17 = arith.cmpi sge, %0, %16 : vector<1x1568xi32>
    %c28_i32 = arith.constant 28 : i32
    %18 = vector.broadcast %c28_i32 : i32 to vector<1x1568xi32>
    %19 = arith.cmpi slt, %0, %18 : vector<1x1568xi32>
    %20 = arith.andi %17, %19 : vector<1x1568xi1>
    %21 = arith.extui %20 : vector<1x1568xi1> to vector<1x1568xi32>
    %22 = arith.sitofp %21 : vector<1x1568xi32> to vector<1x1568xf32>
    %c-1_i32 = arith.constant -1 : i32
    %23 = vector.broadcast %c-1_i32 : i32 to vector<1x1568xi32>
    %24 = arith.cmpi sge, %0, %23 : vector<1x1568xi32>
    %c27_i32 = arith.constant 27 : i32
    %25 = vector.broadcast %c27_i32 : i32 to vector<1x1568xi32>
    %26 = arith.cmpi slt, %0, %25 : vector<1x1568xi32>
    %27 = arith.andi %24, %26 : vector<1x1568xi1>
    %28 = arith.extui %27 : vector<1x1568xi1> to vector<1x1568xi32>
    %29 = arith.sitofp %28 : vector<1x1568xi32> to vector<1x1568xf32>
    %c-2_i32 = arith.constant -2 : i32
    %30 = vector.broadcast %c-2_i32 : i32 to vector<1x1568xi32>
    %31 = arith.cmpi sge, %0, %30 : vector<1x1568xi32>
    %c26_i32 = arith.constant 26 : i32
    %32 = vector.broadcast %c26_i32 : i32 to vector<1x1568xi32>
    %33 = arith.cmpi slt, %0, %32 : vector<1x1568xi32>
    %34 = arith.andi %31, %33 : vector<1x1568xi1>
    %35 = arith.extui %34 : vector<1x1568xi1> to vector<1x1568xi32>
    %36 = arith.sitofp %35 : vector<1x1568xi32> to vector<1x1568xf32>
    %c2_i32_2 = arith.constant 2 : i32
    %37 = vector.broadcast %c2_i32_2 : i32 to vector<1x1568xi32>
    %38 = arith.cmpi sge, %1, %37 : vector<1x1568xi32>
    %c30_i32_3 = arith.constant 30 : i32
    %39 = vector.broadcast %c30_i32_3 : i32 to vector<1x1568xi32>
    %40 = arith.cmpi slt, %1, %39 : vector<1x1568xi32>
    %41 = arith.andi %38, %40 : vector<1x1568xi1>
    %42 = arith.extui %41 : vector<1x1568xi1> to vector<1x1568xi32>
    %43 = arith.sitofp %42 : vector<1x1568xi32> to vector<1x1568xf32>
    %c1_i32_4 = arith.constant 1 : i32
    %44 = vector.broadcast %c1_i32_4 : i32 to vector<1x1568xi32>
    %45 = arith.cmpi sge, %1, %44 : vector<1x1568xi32>
    %c29_i32_5 = arith.constant 29 : i32
    %46 = vector.broadcast %c29_i32_5 : i32 to vector<1x1568xi32>
    %47 = arith.cmpi slt, %1, %46 : vector<1x1568xi32>
    %48 = arith.andi %45, %47 : vector<1x1568xi1>
    %49 = arith.extui %48 : vector<1x1568xi1> to vector<1x1568xi32>
    %50 = arith.sitofp %49 : vector<1x1568xi32> to vector<1x1568xf32>
    %c0_i32_6 = arith.constant 0 : i32
    %51 = vector.broadcast %c0_i32_6 : i32 to vector<1x1568xi32>
    %52 = arith.cmpi sge, %1, %51 : vector<1x1568xi32>
    %c28_i32_7 = arith.constant 28 : i32
    %53 = vector.broadcast %c28_i32_7 : i32 to vector<1x1568xi32>
    %54 = arith.cmpi slt, %1, %53 : vector<1x1568xi32>
    %55 = arith.andi %52, %54 : vector<1x1568xi1>
    %56 = arith.extui %55 : vector<1x1568xi1> to vector<1x1568xi32>
    %57 = arith.sitofp %56 : vector<1x1568xi32> to vector<1x1568xf32>
    %c-1_i32_8 = arith.constant -1 : i32
    %58 = vector.broadcast %c-1_i32_8 : i32 to vector<1x1568xi32>
    %59 = arith.cmpi sge, %1, %58 : vector<1x1568xi32>
    %c27_i32_9 = arith.constant 27 : i32
    %60 = vector.broadcast %c27_i32_9 : i32 to vector<1x1568xi32>
    %61 = arith.cmpi slt, %1, %60 : vector<1x1568xi32>
    %62 = arith.andi %59, %61 : vector<1x1568xi1>
    %63 = arith.extui %62 : vector<1x1568xi1> to vector<1x1568xi32>
    %64 = arith.sitofp %63 : vector<1x1568xi32> to vector<1x1568xf32>
    %c-2_i32_10 = arith.constant -2 : i32
    %65 = vector.broadcast %c-2_i32_10 : i32 to vector<1x1568xi32>
    %66 = arith.cmpi sge, %1, %65 : vector<1x1568xi32>
    %c26_i32_11 = arith.constant 26 : i32
    %67 = vector.broadcast %c26_i32_11 : i32 to vector<1x1568xi32>
    %68 = arith.cmpi slt, %1, %67 : vector<1x1568xi32>
    %69 = arith.andi %66, %68 : vector<1x1568xi1>
    %70 = arith.extui %69 : vector<1x1568xi1> to vector<1x1568xi32>
    %71 = arith.sitofp %70 : vector<1x1568xi32> to vector<1x1568xf32>
    %cst = arith.constant 0.000000e+00 : f32
    %72 = vector.broadcast %cst : f32 to vector<16x1568xf32>
    %c0_12 = arith.constant 0 : index
    %c0_13 = arith.constant 0 : index
    %73 = vector.load %arg0[%c0_12, %c0_13] : memref<1x1684xf32, #tpu.memory_space<vmem>>, vector<1x1568xf32>
    %c0_14 = arith.constant 0 : index
    %c0_15 = arith.constant 0 : index
    %c0_16 = arith.constant 0 : index
    %74 = vector.load %arg2[%c0_14, %c0_15, %c0_16] : memref<25x16x1xf32, #tpu.memory_space<vmem>>, vector<1x16x1xf32>
    %75 = vector.shape_cast %74 : vector<1x16x1xf32> to vector<16x1xf32>
    %76 = arith.mulf %8, %43 : vector<1x1568xf32>
    %77 = arith.mulf %73, %76 : vector<1x1568xf32>
    %78 = vector.broadcast %75 : vector<16x1xf32> to vector<16x1568xf32>
    %79 = vector.broadcast %77 : vector<1x1568xf32> to vector<16x1568xf32>
    %80 = arith.mulf %78, %79 : vector<16x1568xf32>
    %81 = arith.addf %72, %80 : vector<16x1568xf32>
    %c0_17 = arith.constant 0 : index
    %c1_18 = arith.constant 1 : index
    %82 = vector.load %arg0[%c0_17, %c1_18] : memref<1x1684xf32, #tpu.memory_space<vmem>>, vector<1x1568xf32>
    %c1_19 = arith.constant 1 : index
    %c0_20 = arith.constant 0 : index
    %c0_21 = arith.constant 0 : index
    %83 = vector.load %arg2[%c1_19, %c0_20, %c0_21] : memref<25x16x1xf32, #tpu.memory_space<vmem>>, vector<1x16x1xf32>
    %84 = vector.shape_cast %83 : vector<1x16x1xf32> to vector<16x1xf32>
    %85 = arith.mulf %8, %50 : vector<1x1568xf32>
    %86 = arith.mulf %82, %85 : vector<1x1568xf32>
    %87 = vector.broadcast %84 : vector<16x1xf32> to vector<16x1568xf32>
    %88 = vector.broadcast %86 : vector<1x1568xf32> to vector<16x1568xf32>
    %89 = arith.mulf %87, %88 : vector<16x1568xf32>
    %90 = arith.addf %81, %89 : vector<16x1568xf32>
    %c0_22 = arith.constant 0 : index
    %c2 = arith.constant 2 : index
    %91 = vector.load %arg0[%c0_22, %c2] : memref<1x1684xf32, #tpu.memory_space<vmem>>, vector<1x1568xf32>
    %c2_23 = arith.constant 2 : index
    %c0_24 = arith.constant 0 : index
    %c0_25 = arith.constant 0 : index
    %92 = vector.load %arg2[%c2_23, %c0_24, %c0_25] : memref<25x16x1xf32, #tpu.memory_space<vmem>>, vector<1x16x1xf32>
    %93 = vector.shape_cast %92 : vector<1x16x1xf32> to vector<16x1xf32>
    %94 = arith.mulf %8, %57 : vector<1x1568xf32>
    %95 = arith.mulf %91, %94 : vector<1x1568xf32>
    %96 = vector.broadcast %93 : vector<16x1xf32> to vector<16x1568xf32>
    %97 = vector.broadcast %95 : vector<1x1568xf32> to vector<16x1568xf32>
    %98 = arith.mulf %96, %97 : vector<16x1568xf32>
    %99 = arith.addf %90, %98 : vector<16x1568xf32>
    %c0_26 = arith.constant 0 : index
    %c3 = arith.constant 3 : index
    %100 = vector.load %arg0[%c0_26, %c3] : memref<1x1684xf32, #tpu.memory_space<vmem>>, vector<1x1568xf32>
    %c3_27 = arith.constant 3 : index
    %c0_28 = arith.constant 0 : index
    %c0_29 = arith.constant 0 : index
    %101 = vector.load %arg2[%c3_27, %c0_28, %c0_29] : memref<25x16x1xf32, #tpu.memory_space<vmem>>, vector<1x16x1xf32>
    %102 = vector.shape_cast %101 : vector<1x16x1xf32> to vector<16x1xf32>
    %103 = arith.mulf %8, %64 : vector<1x1568xf32>
    %104 = arith.mulf %100, %103 : vector<1x1568xf32>
    %105 = vector.broadcast %102 : vector<16x1xf32> to vector<16x1568xf32>
    %106 = vector.broadcast %104 : vector<1x1568xf32> to vector<16x1568xf32>
    %107 = arith.mulf %105, %106 : vector<16x1568xf32>
    %108 = arith.addf %99, %107 : vector<16x1568xf32>
    %c0_30 = arith.constant 0 : index
    %c4 = arith.constant 4 : index
    %109 = vector.load %arg0[%c0_30, %c4] : memref<1x1684xf32, #tpu.memory_space<vmem>>, vector<1x1568xf32>
    %c4_31 = arith.constant 4 : index
    %c0_32 = arith.constant 0 : index
    %c0_33 = arith.constant 0 : index
    %110 = vector.load %arg2[%c4_31, %c0_32, %c0_33] : memref<25x16x1xf32, #tpu.memory_space<vmem>>, vector<1x16x1xf32>
    %111 = vector.shape_cast %110 : vector<1x16x1xf32> to vector<16x1xf32>
    %112 = arith.mulf %8, %71 : vector<1x1568xf32>
    %113 = arith.mulf %109, %112 : vector<1x1568xf32>
    %114 = vector.broadcast %111 : vector<16x1xf32> to vector<16x1568xf32>
    %115 = vector.broadcast %113 : vector<1x1568xf32> to vector<16x1568xf32>
    %116 = arith.mulf %114, %115 : vector<16x1568xf32>
    %117 = arith.addf %108, %116 : vector<16x1568xf32>
    %c0_34 = arith.constant 0 : index
    %c28 = arith.constant 28 : index
    %118 = vector.load %arg0[%c0_34, %c28] : memref<1x1684xf32, #tpu.memory_space<vmem>>, vector<1x1568xf32>
    %c5 = arith.constant 5 : index
    %c0_35 = arith.constant 0 : index
    %c0_36 = arith.constant 0 : index
    %119 = vector.load %arg2[%c5, %c0_35, %c0_36] : memref<25x16x1xf32, #tpu.memory_space<vmem>>, vector<1x16x1xf32>
    %120 = vector.shape_cast %119 : vector<1x16x1xf32> to vector<16x1xf32>
    %121 = arith.mulf %15, %43 : vector<1x1568xf32>
    %122 = arith.mulf %118, %121 : vector<1x1568xf32>
    %123 = vector.broadcast %120 : vector<16x1xf32> to vector<16x1568xf32>
    %124 = vector.broadcast %122 : vector<1x1568xf32> to vector<16x1568xf32>
    %125 = arith.mulf %123, %124 : vector<16x1568xf32>
    %126 = arith.addf %117, %125 : vector<16x1568xf32>
    %c0_37 = arith.constant 0 : index
    %c29 = arith.constant 29 : index
    %127 = vector.load %arg0[%c0_37, %c29] : memref<1x1684xf32, #tpu.memory_space<vmem>>, vector<1x1568xf32>
    %c6 = arith.constant 6 : index
    %c0_38 = arith.constant 0 : index
    %c0_39 = arith.constant 0 : index
    %128 = vector.load %arg2[%c6, %c0_38, %c0_39] : memref<25x16x1xf32, #tpu.memory_space<vmem>>, vector<1x16x1xf32>
    %129 = vector.shape_cast %128 : vector<1x16x1xf32> to vector<16x1xf32>
    %130 = arith.mulf %15, %50 : vector<1x1568xf32>
    %131 = arith.mulf %127, %130 : vector<1x1568xf32>
    %132 = vector.broadcast %129 : vector<16x1xf32> to vector<16x1568xf32>
    %133 = vector.broadcast %131 : vector<1x1568xf32> to vector<16x1568xf32>
    %134 = arith.mulf %132, %133 : vector<16x1568xf32>
    %135 = arith.addf %126, %134 : vector<16x1568xf32>
    %c0_40 = arith.constant 0 : index
    %c30 = arith.constant 30 : index
    %136 = vector.load %arg0[%c0_40, %c30] : memref<1x1684xf32, #tpu.memory_space<vmem>>, vector<1x1568xf32>
    %c7 = arith.constant 7 : index
    %c0_41 = arith.constant 0 : index
    %c0_42 = arith.constant 0 : index
    %137 = vector.load %arg2[%c7, %c0_41, %c0_42] : memref<25x16x1xf32, #tpu.memory_space<vmem>>, vector<1x16x1xf32>
    %138 = vector.shape_cast %137 : vector<1x16x1xf32> to vector<16x1xf32>
    %139 = arith.mulf %15, %57 : vector<1x1568xf32>
    %140 = arith.mulf %136, %139 : vector<1x1568xf32>
    %141 = vector.broadcast %138 : vector<16x1xf32> to vector<16x1568xf32>
    %142 = vector.broadcast %140 : vector<1x1568xf32> to vector<16x1568xf32>
    %143 = arith.mulf %141, %142 : vector<16x1568xf32>
    %144 = arith.addf %135, %143 : vector<16x1568xf32>
    %c0_43 = arith.constant 0 : index
    %c31 = arith.constant 31 : index
    %145 = vector.load %arg0[%c0_43, %c31] : memref<1x1684xf32, #tpu.memory_space<vmem>>, vector<1x1568xf32>
    %c8 = arith.constant 8 : index
    %c0_44 = arith.constant 0 : index
    %c0_45 = arith.constant 0 : index
    %146 = vector.load %arg2[%c8, %c0_44, %c0_45] : memref<25x16x1xf32, #tpu.memory_space<vmem>>, vector<1x16x1xf32>
    %147 = vector.shape_cast %146 : vector<1x16x1xf32> to vector<16x1xf32>
    %148 = arith.mulf %15, %64 : vector<1x1568xf32>
    %149 = arith.mulf %145, %148 : vector<1x1568xf32>
    %150 = vector.broadcast %147 : vector<16x1xf32> to vector<16x1568xf32>
    %151 = vector.broadcast %149 : vector<1x1568xf32> to vector<16x1568xf32>
    %152 = arith.mulf %150, %151 : vector<16x1568xf32>
    %153 = arith.addf %144, %152 : vector<16x1568xf32>
    %c0_46 = arith.constant 0 : index
    %c32 = arith.constant 32 : index
    %154 = vector.load %arg0[%c0_46, %c32] : memref<1x1684xf32, #tpu.memory_space<vmem>>, vector<1x1568xf32>
    %c9 = arith.constant 9 : index
    %c0_47 = arith.constant 0 : index
    %c0_48 = arith.constant 0 : index
    %155 = vector.load %arg2[%c9, %c0_47, %c0_48] : memref<25x16x1xf32, #tpu.memory_space<vmem>>, vector<1x16x1xf32>
    %156 = vector.shape_cast %155 : vector<1x16x1xf32> to vector<16x1xf32>
    %157 = arith.mulf %15, %71 : vector<1x1568xf32>
    %158 = arith.mulf %154, %157 : vector<1x1568xf32>
    %159 = vector.broadcast %156 : vector<16x1xf32> to vector<16x1568xf32>
    %160 = vector.broadcast %158 : vector<1x1568xf32> to vector<16x1568xf32>
    %161 = arith.mulf %159, %160 : vector<16x1568xf32>
    %162 = arith.addf %153, %161 : vector<16x1568xf32>
    %c0_49 = arith.constant 0 : index
    %c56 = arith.constant 56 : index
    %163 = vector.load %arg0[%c0_49, %c56] : memref<1x1684xf32, #tpu.memory_space<vmem>>, vector<1x1568xf32>
    %c10 = arith.constant 10 : index
    %c0_50 = arith.constant 0 : index
    %c0_51 = arith.constant 0 : index
    %164 = vector.load %arg2[%c10, %c0_50, %c0_51] : memref<25x16x1xf32, #tpu.memory_space<vmem>>, vector<1x16x1xf32>
    %165 = vector.shape_cast %164 : vector<1x16x1xf32> to vector<16x1xf32>
    %166 = arith.mulf %22, %43 : vector<1x1568xf32>
    %167 = arith.mulf %163, %166 : vector<1x1568xf32>
    %168 = vector.broadcast %165 : vector<16x1xf32> to vector<16x1568xf32>
    %169 = vector.broadcast %167 : vector<1x1568xf32> to vector<16x1568xf32>
    %170 = arith.mulf %168, %169 : vector<16x1568xf32>
    %171 = arith.addf %162, %170 : vector<16x1568xf32>
    %c0_52 = arith.constant 0 : index
    %c57 = arith.constant 57 : index
    %172 = vector.load %arg0[%c0_52, %c57] : memref<1x1684xf32, #tpu.memory_space<vmem>>, vector<1x1568xf32>
    %c11 = arith.constant 11 : index
    %c0_53 = arith.constant 0 : index
    %c0_54 = arith.constant 0 : index
    %173 = vector.load %arg2[%c11, %c0_53, %c0_54] : memref<25x16x1xf32, #tpu.memory_space<vmem>>, vector<1x16x1xf32>
    %174 = vector.shape_cast %173 : vector<1x16x1xf32> to vector<16x1xf32>
    %175 = arith.mulf %22, %50 : vector<1x1568xf32>
    %176 = arith.mulf %172, %175 : vector<1x1568xf32>
    %177 = vector.broadcast %174 : vector<16x1xf32> to vector<16x1568xf32>
    %178 = vector.broadcast %176 : vector<1x1568xf32> to vector<16x1568xf32>
    %179 = arith.mulf %177, %178 : vector<16x1568xf32>
    %180 = arith.addf %171, %179 : vector<16x1568xf32>
    %c0_55 = arith.constant 0 : index
    %c58 = arith.constant 58 : index
    %181 = vector.load %arg0[%c0_55, %c58] : memref<1x1684xf32, #tpu.memory_space<vmem>>, vector<1x1568xf32>
    %c12 = arith.constant 12 : index
    %c0_56 = arith.constant 0 : index
    %c0_57 = arith.constant 0 : index
    %182 = vector.load %arg2[%c12, %c0_56, %c0_57] : memref<25x16x1xf32, #tpu.memory_space<vmem>>, vector<1x16x1xf32>
    %183 = vector.shape_cast %182 : vector<1x16x1xf32> to vector<16x1xf32>
    %184 = arith.mulf %22, %57 : vector<1x1568xf32>
    %185 = arith.mulf %181, %184 : vector<1x1568xf32>
    %186 = vector.broadcast %183 : vector<16x1xf32> to vector<16x1568xf32>
    %187 = vector.broadcast %185 : vector<1x1568xf32> to vector<16x1568xf32>
    %188 = arith.mulf %186, %187 : vector<16x1568xf32>
    %189 = arith.addf %180, %188 : vector<16x1568xf32>
    %c0_58 = arith.constant 0 : index
    %c59 = arith.constant 59 : index
    %190 = vector.load %arg0[%c0_58, %c59] : memref<1x1684xf32, #tpu.memory_space<vmem>>, vector<1x1568xf32>
    %c13 = arith.constant 13 : index
    %c0_59 = arith.constant 0 : index
    %c0_60 = arith.constant 0 : index
    %191 = vector.load %arg2[%c13, %c0_59, %c0_60] : memref<25x16x1xf32, #tpu.memory_space<vmem>>, vector<1x16x1xf32>
    %192 = vector.shape_cast %191 : vector<1x16x1xf32> to vector<16x1xf32>
    %193 = arith.mulf %22, %64 : vector<1x1568xf32>
    %194 = arith.mulf %190, %193 : vector<1x1568xf32>
    %195 = vector.broadcast %192 : vector<16x1xf32> to vector<16x1568xf32>
    %196 = vector.broadcast %194 : vector<1x1568xf32> to vector<16x1568xf32>
    %197 = arith.mulf %195, %196 : vector<16x1568xf32>
    %198 = arith.addf %189, %197 : vector<16x1568xf32>
    %c0_61 = arith.constant 0 : index
    %c60 = arith.constant 60 : index
    %199 = vector.load %arg0[%c0_61, %c60] : memref<1x1684xf32, #tpu.memory_space<vmem>>, vector<1x1568xf32>
    %c14 = arith.constant 14 : index
    %c0_62 = arith.constant 0 : index
    %c0_63 = arith.constant 0 : index
    %200 = vector.load %arg2[%c14, %c0_62, %c0_63] : memref<25x16x1xf32, #tpu.memory_space<vmem>>, vector<1x16x1xf32>
    %201 = vector.shape_cast %200 : vector<1x16x1xf32> to vector<16x1xf32>
    %202 = arith.mulf %22, %71 : vector<1x1568xf32>
    %203 = arith.mulf %199, %202 : vector<1x1568xf32>
    %204 = vector.broadcast %201 : vector<16x1xf32> to vector<16x1568xf32>
    %205 = vector.broadcast %203 : vector<1x1568xf32> to vector<16x1568xf32>
    %206 = arith.mulf %204, %205 : vector<16x1568xf32>
    %207 = arith.addf %198, %206 : vector<16x1568xf32>
    %c0_64 = arith.constant 0 : index
    %c84 = arith.constant 84 : index
    %208 = vector.load %arg0[%c0_64, %c84] : memref<1x1684xf32, #tpu.memory_space<vmem>>, vector<1x1568xf32>
    %c15 = arith.constant 15 : index
    %c0_65 = arith.constant 0 : index
    %c0_66 = arith.constant 0 : index
    %209 = vector.load %arg2[%c15, %c0_65, %c0_66] : memref<25x16x1xf32, #tpu.memory_space<vmem>>, vector<1x16x1xf32>
    %210 = vector.shape_cast %209 : vector<1x16x1xf32> to vector<16x1xf32>
    %211 = arith.mulf %29, %43 : vector<1x1568xf32>
    %212 = arith.mulf %208, %211 : vector<1x1568xf32>
    %213 = vector.broadcast %210 : vector<16x1xf32> to vector<16x1568xf32>
    %214 = vector.broadcast %212 : vector<1x1568xf32> to vector<16x1568xf32>
    %215 = arith.mulf %213, %214 : vector<16x1568xf32>
    %216 = arith.addf %207, %215 : vector<16x1568xf32>
    %c0_67 = arith.constant 0 : index
    %c85 = arith.constant 85 : index
    %217 = vector.load %arg0[%c0_67, %c85] : memref<1x1684xf32, #tpu.memory_space<vmem>>, vector<1x1568xf32>
    %c16 = arith.constant 16 : index
    %c0_68 = arith.constant 0 : index
    %c0_69 = arith.constant 0 : index
    %218 = vector.load %arg2[%c16, %c0_68, %c0_69] : memref<25x16x1xf32, #tpu.memory_space<vmem>>, vector<1x16x1xf32>
    %219 = vector.shape_cast %218 : vector<1x16x1xf32> to vector<16x1xf32>
    %220 = arith.mulf %29, %50 : vector<1x1568xf32>
    %221 = arith.mulf %217, %220 : vector<1x1568xf32>
    %222 = vector.broadcast %219 : vector<16x1xf32> to vector<16x1568xf32>
    %223 = vector.broadcast %221 : vector<1x1568xf32> to vector<16x1568xf32>
    %224 = arith.mulf %222, %223 : vector<16x1568xf32>
    %225 = arith.addf %216, %224 : vector<16x1568xf32>
    %c0_70 = arith.constant 0 : index
    %c86 = arith.constant 86 : index
    %226 = vector.load %arg0[%c0_70, %c86] : memref<1x1684xf32, #tpu.memory_space<vmem>>, vector<1x1568xf32>
    %c17 = arith.constant 17 : index
    %c0_71 = arith.constant 0 : index
    %c0_72 = arith.constant 0 : index
    %227 = vector.load %arg2[%c17, %c0_71, %c0_72] : memref<25x16x1xf32, #tpu.memory_space<vmem>>, vector<1x16x1xf32>
    %228 = vector.shape_cast %227 : vector<1x16x1xf32> to vector<16x1xf32>
    %229 = arith.mulf %29, %57 : vector<1x1568xf32>
    %230 = arith.mulf %226, %229 : vector<1x1568xf32>
    %231 = vector.broadcast %228 : vector<16x1xf32> to vector<16x1568xf32>
    %232 = vector.broadcast %230 : vector<1x1568xf32> to vector<16x1568xf32>
    %233 = arith.mulf %231, %232 : vector<16x1568xf32>
    %234 = arith.addf %225, %233 : vector<16x1568xf32>
    %c0_73 = arith.constant 0 : index
    %c87 = arith.constant 87 : index
    %235 = vector.load %arg0[%c0_73, %c87] : memref<1x1684xf32, #tpu.memory_space<vmem>>, vector<1x1568xf32>
    %c18 = arith.constant 18 : index
    %c0_74 = arith.constant 0 : index
    %c0_75 = arith.constant 0 : index
    %236 = vector.load %arg2[%c18, %c0_74, %c0_75] : memref<25x16x1xf32, #tpu.memory_space<vmem>>, vector<1x16x1xf32>
    %237 = vector.shape_cast %236 : vector<1x16x1xf32> to vector<16x1xf32>
    %238 = arith.mulf %29, %64 : vector<1x1568xf32>
    %239 = arith.mulf %235, %238 : vector<1x1568xf32>
    %240 = vector.broadcast %237 : vector<16x1xf32> to vector<16x1568xf32>
    %241 = vector.broadcast %239 : vector<1x1568xf32> to vector<16x1568xf32>
    %242 = arith.mulf %240, %241 : vector<16x1568xf32>
    %243 = arith.addf %234, %242 : vector<16x1568xf32>
    %c0_76 = arith.constant 0 : index
    %c88 = arith.constant 88 : index
    %244 = vector.load %arg0[%c0_76, %c88] : memref<1x1684xf32, #tpu.memory_space<vmem>>, vector<1x1568xf32>
    %c19 = arith.constant 19 : index
    %c0_77 = arith.constant 0 : index
    %c0_78 = arith.constant 0 : index
    %245 = vector.load %arg2[%c19, %c0_77, %c0_78] : memref<25x16x1xf32, #tpu.memory_space<vmem>>, vector<1x16x1xf32>
    %246 = vector.shape_cast %245 : vector<1x16x1xf32> to vector<16x1xf32>
    %247 = arith.mulf %29, %71 : vector<1x1568xf32>
    %248 = arith.mulf %244, %247 : vector<1x1568xf32>
    %249 = vector.broadcast %246 : vector<16x1xf32> to vector<16x1568xf32>
    %250 = vector.broadcast %248 : vector<1x1568xf32> to vector<16x1568xf32>
    %251 = arith.mulf %249, %250 : vector<16x1568xf32>
    %252 = arith.addf %243, %251 : vector<16x1568xf32>
    %c0_79 = arith.constant 0 : index
    %c112 = arith.constant 112 : index
    %253 = vector.load %arg0[%c0_79, %c112] : memref<1x1684xf32, #tpu.memory_space<vmem>>, vector<1x1568xf32>
    %c20 = arith.constant 20 : index
    %c0_80 = arith.constant 0 : index
    %c0_81 = arith.constant 0 : index
    %254 = vector.load %arg2[%c20, %c0_80, %c0_81] : memref<25x16x1xf32, #tpu.memory_space<vmem>>, vector<1x16x1xf32>
    %255 = vector.shape_cast %254 : vector<1x16x1xf32> to vector<16x1xf32>
    %256 = arith.mulf %36, %43 : vector<1x1568xf32>
    %257 = arith.mulf %253, %256 : vector<1x1568xf32>
    %258 = vector.broadcast %255 : vector<16x1xf32> to vector<16x1568xf32>
    %259 = vector.broadcast %257 : vector<1x1568xf32> to vector<16x1568xf32>
    %260 = arith.mulf %258, %259 : vector<16x1568xf32>
    %261 = arith.addf %252, %260 : vector<16x1568xf32>
    %c0_82 = arith.constant 0 : index
    %c113 = arith.constant 113 : index
    %262 = vector.load %arg0[%c0_82, %c113] : memref<1x1684xf32, #tpu.memory_space<vmem>>, vector<1x1568xf32>
    %c21 = arith.constant 21 : index
    %c0_83 = arith.constant 0 : index
    %c0_84 = arith.constant 0 : index
    %263 = vector.load %arg2[%c21, %c0_83, %c0_84] : memref<25x16x1xf32, #tpu.memory_space<vmem>>, vector<1x16x1xf32>
    %264 = vector.shape_cast %263 : vector<1x16x1xf32> to vector<16x1xf32>
    %265 = arith.mulf %36, %50 : vector<1x1568xf32>
    %266 = arith.mulf %262, %265 : vector<1x1568xf32>
    %267 = vector.broadcast %264 : vector<16x1xf32> to vector<16x1568xf32>
    %268 = vector.broadcast %266 : vector<1x1568xf32> to vector<16x1568xf32>
    %269 = arith.mulf %267, %268 : vector<16x1568xf32>
    %270 = arith.addf %261, %269 : vector<16x1568xf32>
    %c0_85 = arith.constant 0 : index
    %c114 = arith.constant 114 : index
    %271 = vector.load %arg0[%c0_85, %c114] : memref<1x1684xf32, #tpu.memory_space<vmem>>, vector<1x1568xf32>
    %c22 = arith.constant 22 : index
    %c0_86 = arith.constant 0 : index
    %c0_87 = arith.constant 0 : index
    %272 = vector.load %arg2[%c22, %c0_86, %c0_87] : memref<25x16x1xf32, #tpu.memory_space<vmem>>, vector<1x16x1xf32>
    %273 = vector.shape_cast %272 : vector<1x16x1xf32> to vector<16x1xf32>
    %274 = arith.mulf %36, %57 : vector<1x1568xf32>
    %275 = arith.mulf %271, %274 : vector<1x1568xf32>
    %276 = vector.broadcast %273 : vector<16x1xf32> to vector<16x1568xf32>
    %277 = vector.broadcast %275 : vector<1x1568xf32> to vector<16x1568xf32>
    %278 = arith.mulf %276, %277 : vector<16x1568xf32>
    %279 = arith.addf %270, %278 : vector<16x1568xf32>
    %c0_88 = arith.constant 0 : index
    %c115 = arith.constant 115 : index
    %280 = vector.load %arg0[%c0_88, %c115] : memref<1x1684xf32, #tpu.memory_space<vmem>>, vector<1x1568xf32>
    %c23 = arith.constant 23 : index
    %c0_89 = arith.constant 0 : index
    %c0_90 = arith.constant 0 : index
    %281 = vector.load %arg2[%c23, %c0_89, %c0_90] : memref<25x16x1xf32, #tpu.memory_space<vmem>>, vector<1x16x1xf32>
    %282 = vector.shape_cast %281 : vector<1x16x1xf32> to vector<16x1xf32>
    %283 = arith.mulf %36, %64 : vector<1x1568xf32>
    %284 = arith.mulf %280, %283 : vector<1x1568xf32>
    %285 = vector.broadcast %282 : vector<16x1xf32> to vector<16x1568xf32>
    %286 = vector.broadcast %284 : vector<1x1568xf32> to vector<16x1568xf32>
    %287 = arith.mulf %285, %286 : vector<16x1568xf32>
    %288 = arith.addf %279, %287 : vector<16x1568xf32>
    %c0_91 = arith.constant 0 : index
    %c116 = arith.constant 116 : index
    %289 = vector.load %arg0[%c0_91, %c116] : memref<1x1684xf32, #tpu.memory_space<vmem>>, vector<1x1568xf32>
    %c24 = arith.constant 24 : index
    %c0_92 = arith.constant 0 : index
    %c0_93 = arith.constant 0 : index
    %290 = vector.load %arg2[%c24, %c0_92, %c0_93] : memref<25x16x1xf32, #tpu.memory_space<vmem>>, vector<1x16x1xf32>
    %291 = vector.shape_cast %290 : vector<1x16x1xf32> to vector<16x1xf32>
    %292 = arith.mulf %36, %71 : vector<1x1568xf32>
    %293 = arith.mulf %289, %292 : vector<1x1568xf32>
    %294 = vector.broadcast %291 : vector<16x1xf32> to vector<16x1568xf32>
    %295 = vector.broadcast %293 : vector<1x1568xf32> to vector<16x1568xf32>
    %296 = arith.mulf %294, %295 : vector<16x1568xf32>
    %297 = arith.addf %288, %296 : vector<16x1568xf32>
    %cst_94 = arith.constant dense<0.000000e+00> : vector<16xf32>
    %298 = vector.multi_reduction <add>, %297, %cst_94 [1] : vector<16x1568xf32> to vector<16xf32>
    %299 = vector.shape_cast %298 : vector<16xf32> to vector<16x1xf32>
    %cst_95 = arith.constant 1.568000e+03 : f32
    %300 = vector.broadcast %cst_95 : f32 to vector<16x1xf32>
    %301 = arith.divf %299, %300 : vector<16x1xf32>
    %302 = arith.mulf %297, %297 : vector<16x1568xf32>
    %cst_96 = arith.constant dense<0.000000e+00> : vector<16xf32>
    %303 = vector.multi_reduction <add>, %302, %cst_96 [1] : vector<16x1568xf32> to vector<16xf32>
    %304 = vector.shape_cast %303 : vector<16xf32> to vector<16x1xf32>
    %cst_97 = arith.constant 1.568000e+03 : f32
    %305 = vector.broadcast %cst_97 : f32 to vector<16x1xf32>
    %306 = arith.divf %304, %305 : vector<16x1xf32>
    %307 = arith.mulf %301, %301 : vector<16x1xf32>
    %308 = arith.subf %306, %307 : vector<16x1xf32>
    %cst_98 = arith.constant 0.000000e+00 : f32
    %309 = vector.broadcast %cst_98 : f32 to vector<16x1xf32>
    %310 = arith.maximumf %308, %309 : vector<16x1xf32>
    %311 = vector.broadcast %301 : vector<16x1xf32> to vector<16x1568xf32>
    %312 = arith.subf %297, %311 : vector<16x1568xf32>
    %cst_99 = arith.constant 9.99999974E-6 : f32
    %313 = vector.broadcast %cst_99 : f32 to vector<16x1xf32>
    %314 = arith.addf %310, %313 : vector<16x1xf32>
    %315 = math.rsqrt %314 : vector<16x1xf32>
    %316 = vector.broadcast %315 : vector<16x1xf32> to vector<16x1568xf32>
    %317 = arith.mulf %312, %316 : vector<16x1568xf32>
    %c0_100 = arith.constant 0 : index
    %c0_101 = arith.constant 0 : index
    %318 = vector.load %arg3[%c0_100, %c0_101] : memref<16x1xf32, #tpu.memory_space<vmem>>, vector<16x1xf32>
    %319 = vector.broadcast %318 : vector<16x1xf32> to vector<16x1568xf32>
    %320 = arith.mulf %317, %319 : vector<16x1568xf32>
    %c0_102 = arith.constant 0 : index
    %c0_103 = arith.constant 0 : index
    %321 = vector.load %arg4[%c0_102, %c0_103] : memref<16x1xf32, #tpu.memory_space<vmem>>, vector<16x1xf32>
    %322 = vector.broadcast %321 : vector<16x1xf32> to vector<16x1568xf32>
    %323 = arith.addf %320, %322 : vector<16x1568xf32>
    %cst_104 = arith.constant 0.000000e+00 : f32
    %324 = vector.broadcast %cst_104 : f32 to vector<16x1568xf32>
    %325 = arith.maximumf %323, %324 : vector<16x1568xf32>
    %c0_105 = arith.constant 0 : index
    %c0_106 = arith.constant 0 : index
    %326 = vector.load %arg15[%c0_105, %c0_106] : memref<16x1600xf32, #tpu.memory_space<vmem>>, vector<16x1568xf32>
    tpu.vector_store %arg15[%c0_105, %c0_106], %325 {strides = array<i32>} : memref<16x1600xf32, #tpu.memory_space<vmem>>, vector<16x1568xf32>,
    %cst_107 = arith.constant 0.000000e+00 : f32
    %327 = vector.broadcast %cst_107 : f32 to vector<16x32xf32>
    %c0_108 = arith.constant 0 : index
    %c1568 = arith.constant 1568 : index
    %328 = vector.load %arg15[%c0_108, %c1568] : memref<16x1600xf32, #tpu.memory_space<vmem>>, vector<16x32xf32>
    tpu.vector_store %arg15[%c0_108, %c1568], %327 {strides = array<i32>} : memref<16x1600xf32, #tpu.memory_space<vmem>>, vector<16x32xf32>,
    %c0_109 = arith.constant 0 : index
    %c0_110 = arith.constant 0 : index
    %329 = vector.load %arg15[%c0_109, %c0_110] : memref<16x1600xf32, #tpu.memory_space<vmem>>, vector<16x1568xf32>
    %c0_111 = arith.constant 0 : index
    %c1_112 = arith.constant 1 : index
    %330 = vector.load %arg15[%c0_111, %c1_112] : memref<16x1600xf32, #tpu.memory_space<vmem>>, vector<16x1568xf32>
    %331 = arith.maximumf %329, %330 : vector<16x1568xf32>
    %c0_113 = arith.constant 0 : index
    %c28_114 = arith.constant 28 : index
    %332 = vector.load %arg15[%c0_113, %c28_114] : memref<16x1600xf32, #tpu.memory_space<vmem>>, vector<16x1568xf32>
    %c0_115 = arith.constant 0 : index
    %c29_116 = arith.constant 29 : index
    %333 = vector.load %arg15[%c0_115, %c29_116] : memref<16x1600xf32, #tpu.memory_space<vmem>>, vector<16x1568xf32>
    %334 = arith.maximumf %332, %333 : vector<16x1568xf32>
    %335 = arith.maximumf %331, %334 : vector<16x1568xf32>
    %cst_117 = arith.constant 0.000000e+00 : bf16
    %336 = vector.broadcast %cst_117 : bf16 to vector<16x30xbf16>
    %c0_118 = arith.constant 0 : index
    %c0_119 = arith.constant 0 : index
    %337 = vector.load %arg16[%c0_118, %c0_119] : memref<16x452xbf16, #tpu.memory_space<vmem>>, vector<16x30xbf16>
    tpu.vector_store %arg16[%c0_118, %c0_119], %336 {strides = array<i32>} : memref<16x452xbf16, #tpu.memory_space<vmem>>, vector<16x30xbf16>,
    %cst_120 = arith.constant 0.000000e+00 : bf16
    %338 = vector.broadcast %cst_120 : bf16 to vector<16x30xbf16>
    %c0_121 = arith.constant 0 : index
    %c422 = arith.constant 422 : index
    %339 = vector.load %arg16[%c0_121, %c422] : memref<16x452xbf16, #tpu.memory_space<vmem>>, vector<16x30xbf16>
    tpu.vector_store %arg16[%c0_121, %c422], %338 {strides = array<i32>} : memref<16x452xbf16, #tpu.memory_space<vmem>>, vector<16x30xbf16>,
    %c0_122 = arith.constant 0 : index
    %c0_123 = arith.constant 0 : index
    %340 = vector.load %arg5[%c0_122, %c0_123] : memref<784x196xbf16, #tpu.memory_space<vmem>>, vector<784x196xbf16>
    %341 = vector.extract_strided_slice %335 {offsets = [0, 0], sizes = [16, 784], strides = [1, 1]} : vector<16x1568xf32> to vector<16x784xf32>
    %342 = arith.truncf %341 : vector<16x784xf32> to vector<16x784xbf16>
    %cst_124 = arith.constant dense<0.000000e+00> : vector<16x196xf32>
    %343 = tpu.matmul %342, %340, %cst_124 {dimension_numbers = #tpu.dot_dimension_numbers<[1], [0], [0], [1], [0, 0, 1, 1], [], []>} : vector<16x784xbf16>, vector<784x196xbf16>, vector<16x196xf32> -> vector<16x196xf32>
    %344 = arith.truncf %343 : vector<16x196xf32> to vector<16x196xbf16>
    %c0_125 = arith.constant 0 : index
    %c30_126 = arith.constant 30 : index
    %345 = vector.load %arg16[%c0_125, %c30_126] : memref<16x452xbf16, #tpu.memory_space<vmem>>, vector<16x196xbf16>
    tpu.vector_store %arg16[%c0_125, %c30_126], %344 {strides = array<i32>} : memref<16x452xbf16, #tpu.memory_space<vmem>>, vector<16x196xbf16>,
    %346 = vector.extract_strided_slice %335 {offsets = [0, 784], sizes = [16, 784], strides = [1, 1]} : vector<16x1568xf32> to vector<16x784xf32>
    %347 = arith.truncf %346 : vector<16x784xf32> to vector<16x784xbf16>
    %cst_127 = arith.constant dense<0.000000e+00> : vector<16x196xf32>
    %348 = tpu.matmul %347, %340, %cst_127 {dimension_numbers = #tpu.dot_dimension_numbers<[1], [0], [0], [1], [0, 0, 1, 1], [], []>} : vector<16x784xbf16>, vector<784x196xbf16>, vector<16x196xf32> -> vector<16x196xf32>
    %349 = arith.truncf %348 : vector<16x196xf32> to vector<16x196xbf16>
    %c0_128 = arith.constant 0 : index
    %c226 = arith.constant 226 : index
    %350 = vector.load %arg16[%c0_128, %c226] : memref<16x452xbf16, #tpu.memory_space<vmem>>, vector<16x196xbf16>
    tpu.vector_store %arg16[%c0_128, %c226], %349 {strides = array<i32>} : memref<16x452xbf16, #tpu.memory_space<vmem>>, vector<16x196xbf16>,
    %c0_129 = arith.constant 0 : index
    %c0_130 = arith.constant 0 : index
    %351 = vector.load %arg6[%c0_129, %c0_130] : memref<2x392xi32, #tpu.memory_space<vmem>>, vector<1x392xi32>
    %c1_131 = arith.constant 1 : index
    %c0_132 = arith.constant 0 : index
    %352 = vector.load %arg6[%c1_131, %c0_132] : memref<2x392xi32, #tpu.memory_space<vmem>>, vector<1x392xi32>
    %c2_i32_133 = arith.constant 2 : i32
    %353 = vector.broadcast %c2_i32_133 : i32 to vector<1x392xi32>
    %354 = arith.cmpi sge, %351, %353 : vector<1x392xi32>
    %c16_i32 = arith.constant 16 : i32
    %355 = vector.broadcast %c16_i32 : i32 to vector<1x392xi32>
    %356 = arith.cmpi slt, %351, %355 : vector<1x392xi32>
    %357 = arith.andi %354, %356 : vector<1x392xi1>
    %358 = arith.extui %357 : vector<1x392xi1> to vector<1x392xi32>
    %359 = arith.sitofp %358 : vector<1x392xi32> to vector<1x392xf32>
    %c1_i32_134 = arith.constant 1 : i32
    %360 = vector.broadcast %c1_i32_134 : i32 to vector<1x392xi32>
    %361 = arith.cmpi sge, %351, %360 : vector<1x392xi32>
    %c15_i32 = arith.constant 15 : i32
    %362 = vector.broadcast %c15_i32 : i32 to vector<1x392xi32>
    %363 = arith.cmpi slt, %351, %362 : vector<1x392xi32>
    %364 = arith.andi %361, %363 : vector<1x392xi1>
    %365 = arith.extui %364 : vector<1x392xi1> to vector<1x392xi32>
    %366 = arith.sitofp %365 : vector<1x392xi32> to vector<1x392xf32>
    %c0_i32_135 = arith.constant 0 : i32
    %367 = vector.broadcast %c0_i32_135 : i32 to vector<1x392xi32>
    %368 = arith.cmpi sge, %351, %367 : vector<1x392xi32>
    %c14_i32 = arith.constant 14 : i32
    %369 = vector.broadcast %c14_i32 : i32 to vector<1x392xi32>
    %370 = arith.cmpi slt, %351, %369 : vector<1x392xi32>
    %371 = arith.andi %368, %370 : vector<1x392xi1>
    %372 = arith.extui %371 : vector<1x392xi1> to vector<1x392xi32>
    %373 = arith.sitofp %372 : vector<1x392xi32> to vector<1x392xf32>
    %c-1_i32_136 = arith.constant -1 : i32
    %374 = vector.broadcast %c-1_i32_136 : i32 to vector<1x392xi32>
    %375 = arith.cmpi sge, %351, %374 : vector<1x392xi32>
    %c13_i32 = arith.constant 13 : i32
    %376 = vector.broadcast %c13_i32 : i32 to vector<1x392xi32>
    %377 = arith.cmpi slt, %351, %376 : vector<1x392xi32>
    %378 = arith.andi %375, %377 : vector<1x392xi1>
    %379 = arith.extui %378 : vector<1x392xi1> to vector<1x392xi32>
    %380 = arith.sitofp %379 : vector<1x392xi32> to vector<1x392xf32>
    %c-2_i32_137 = arith.constant -2 : i32
    %381 = vector.broadcast %c-2_i32_137 : i32 to vector<1x392xi32>
    %382 = arith.cmpi sge, %351, %381 : vector<1x392xi32>
    %c12_i32 = arith.constant 12 : i32
    %383 = vector.broadcast %c12_i32 : i32 to vector<1x392xi32>
    %384 = arith.cmpi slt, %351, %383 : vector<1x392xi32>
    %385 = arith.andi %382, %384 : vector<1x392xi1>
    %386 = arith.extui %385 : vector<1x392xi1> to vector<1x392xi32>
    %387 = arith.sitofp %386 : vector<1x392xi32> to vector<1x392xf32>
    %c2_i32_138 = arith.constant 2 : i32
    %388 = vector.broadcast %c2_i32_138 : i32 to vector<1x392xi32>
    %389 = arith.cmpi sge, %352, %388 : vector<1x392xi32>
    %c16_i32_139 = arith.constant 16 : i32
    %390 = vector.broadcast %c16_i32_139 : i32 to vector<1x392xi32>
    %391 = arith.cmpi slt, %352, %390 : vector<1x392xi32>
    %392 = arith.andi %389, %391 : vector<1x392xi1>
    %393 = arith.extui %392 : vector<1x392xi1> to vector<1x392xi32>
    %394 = arith.sitofp %393 : vector<1x392xi32> to vector<1x392xf32>
    %c1_i32_140 = arith.constant 1 : i32
    %395 = vector.broadcast %c1_i32_140 : i32 to vector<1x392xi32>
    %396 = arith.cmpi sge, %352, %395 : vector<1x392xi32>
    %c15_i32_141 = arith.constant 15 : i32
    %397 = vector.broadcast %c15_i32_141 : i32 to vector<1x392xi32>
    %398 = arith.cmpi slt, %352, %397 : vector<1x392xi32>
    %399 = arith.andi %396, %398 : vector<1x392xi1>
    %400 = arith.extui %399 : vector<1x392xi1> to vector<1x392xi32>
    %401 = arith.sitofp %400 : vector<1x392xi32> to vector<1x392xf32>
    %c0_i32_142 = arith.constant 0 : i32
    %402 = vector.broadcast %c0_i32_142 : i32 to vector<1x392xi32>
    %403 = arith.cmpi sge, %352, %402 : vector<1x392xi32>
    %c14_i32_143 = arith.constant 14 : i32
    %404 = vector.broadcast %c14_i32_143 : i32 to vector<1x392xi32>
    %405 = arith.cmpi slt, %352, %404 : vector<1x392xi32>
    %406 = arith.andi %403, %405 : vector<1x392xi1>
    %407 = arith.extui %406 : vector<1x392xi1> to vector<1x392xi32>
    %408 = arith.sitofp %407 : vector<1x392xi32> to vector<1x392xf32>
    %c-1_i32_144 = arith.constant -1 : i32
    %409 = vector.broadcast %c-1_i32_144 : i32 to vector<1x392xi32>
    %410 = arith.cmpi sge, %352, %409 : vector<1x392xi32>
    %c13_i32_145 = arith.constant 13 : i32
    %411 = vector.broadcast %c13_i32_145 : i32 to vector<1x392xi32>
    %412 = arith.cmpi slt, %352, %411 : vector<1x392xi32>
    %413 = arith.andi %410, %412 : vector<1x392xi1>
    %414 = arith.extui %413 : vector<1x392xi1> to vector<1x392xi32>
    %415 = arith.sitofp %414 : vector<1x392xi32> to vector<1x392xf32>
    %c-2_i32_146 = arith.constant -2 : i32
    %416 = vector.broadcast %c-2_i32_146 : i32 to vector<1x392xi32>
    %417 = arith.cmpi sge, %352, %416 : vector<1x392xi32>
    %c12_i32_147 = arith.constant 12 : i32
    %418 = vector.broadcast %c12_i32_147 : i32 to vector<1x392xi32>
    %419 = arith.cmpi slt, %352, %418 : vector<1x392xi32>
    %420 = arith.andi %417, %419 : vector<1x392xi1>
    %421 = arith.extui %420 : vector<1x392xi1> to vector<1x392xi32>
    %422 = arith.sitofp %421 : vector<1x392xi32> to vector<1x392xf32>
    %c0_148 = arith.constant 0 : index
    %c0_149 = arith.constant 0 : index
    %423 = vector.load %arg16[%c0_148, %c0_149] : memref<16x452xbf16, #tpu.memory_space<vmem>>, vector<16x392xbf16>
    %424 = arith.mulf %359, %394 : vector<1x392xf32>
    %425 = arith.truncf %424 : vector<1x392xf32> to vector<1x392xbf16>
    %426 = vector.broadcast %425 : vector<1x392xbf16> to vector<16x392xbf16>
    %427 = arith.mulf %423, %426 : vector<16x392xbf16>
    %c0_150 = arith.constant 0 : index
    %c0_151 = arith.constant 0 : index
    %428 = vector.load %arg17[%c0_150, %c0_151] : memref<400x392xbf16, #tpu.memory_space<vmem>>, vector<16x392xbf16>
    tpu.vector_store %arg17[%c0_150, %c0_151], %427 {strides = array<i32>} : memref<400x392xbf16, #tpu.memory_space<vmem>>, vector<16x392xbf16>,
    %c0_152 = arith.constant 0 : index
    %c1_153 = arith.constant 1 : index
    %429 = vector.load %arg16[%c0_152, %c1_153] : memref<16x452xbf16, #tpu.memory_space<vmem>>, vector<16x392xbf16>
    %430 = arith.mulf %359, %401 : vector<1x392xf32>
    %431 = arith.truncf %430 : vector<1x392xf32> to vector<1x392xbf16>
    %432 = vector.broadcast %431 : vector<1x392xbf16> to vector<16x392xbf16>
    %433 = arith.mulf %429, %432 : vector<16x392xbf16>
    %c16_154 = arith.constant 16 : index
    %c0_155 = arith.constant 0 : index
    %434 = vector.load %arg17[%c16_154, %c0_155] : memref<400x392xbf16, #tpu.memory_space<vmem>>, vector<16x392xbf16>
    tpu.vector_store %arg17[%c16_154, %c0_155], %433 {strides = array<i32>} : memref<400x392xbf16, #tpu.memory_space<vmem>>, vector<16x392xbf16>,
    %c0_156 = arith.constant 0 : index
    %c2_157 = arith.constant 2 : index
    %435 = vector.load %arg16[%c0_156, %c2_157] : memref<16x452xbf16, #tpu.memory_space<vmem>>, vector<16x392xbf16>
    %436 = arith.mulf %359, %408 : vector<1x392xf32>
    %437 = arith.truncf %436 : vector<1x392xf32> to vector<1x392xbf16>
    %438 = vector.broadcast %437 : vector<1x392xbf16> to vector<16x392xbf16>
    %439 = arith.mulf %435, %438 : vector<16x392xbf16>
    %c32_158 = arith.constant 32 : index
    %c0_159 = arith.constant 0 : index
    %440 = vector.load %arg17[%c32_158, %c0_159] : memref<400x392xbf16, #tpu.memory_space<vmem>>, vector<16x392xbf16>
    tpu.vector_store %arg17[%c32_158, %c0_159], %439 {strides = array<i32>} : memref<400x392xbf16, #tpu.memory_space<vmem>>, vector<16x392xbf16>,
    %c0_160 = arith.constant 0 : index
    %c3_161 = arith.constant 3 : index
    %441 = vector.load %arg16[%c0_160, %c3_161] : memref<16x452xbf16, #tpu.memory_space<vmem>>, vector<16x392xbf16>
    %442 = arith.mulf %359, %415 : vector<1x392xf32>
    %443 = arith.truncf %442 : vector<1x392xf32> to vector<1x392xbf16>
    %444 = vector.broadcast %443 : vector<1x392xbf16> to vector<16x392xbf16>
    %445 = arith.mulf %441, %444 : vector<16x392xbf16>
    %c48 = arith.constant 48 : index
    %c0_162 = arith.constant 0 : index
    %446 = vector.load %arg17[%c48, %c0_162] : memref<400x392xbf16, #tpu.memory_space<vmem>>, vector<16x392xbf16>
    tpu.vector_store %arg17[%c48, %c0_162], %445 {strides = array<i32>} : memref<400x392xbf16, #tpu.memory_space<vmem>>, vector<16x392xbf16>,
    %c0_163 = arith.constant 0 : index
    %c4_164 = arith.constant 4 : index
    %447 = vector.load %arg16[%c0_163, %c4_164] : memref<16x452xbf16, #tpu.memory_space<vmem>>, vector<16x392xbf16>
    %448 = arith.mulf %359, %422 : vector<1x392xf32>
    %449 = arith.truncf %448 : vector<1x392xf32> to vector<1x392xbf16>
    %450 = vector.broadcast %449 : vector<1x392xbf16> to vector<16x392xbf16>
    %451 = arith.mulf %447, %450 : vector<16x392xbf16>
    %c64 = arith.constant 64 : index
    %c0_165 = arith.constant 0 : index
    %452 = vector.load %arg17[%c64, %c0_165] : memref<400x392xbf16, #tpu.memory_space<vmem>>, vector<16x392xbf16>
    tpu.vector_store %arg17[%c64, %c0_165], %451 {strides = array<i32>} : memref<400x392xbf16, #tpu.memory_space<vmem>>, vector<16x392xbf16>,
    %c0_166 = arith.constant 0 : index
    %c14_167 = arith.constant 14 : index
    %453 = vector.load %arg16[%c0_166, %c14_167] : memref<16x452xbf16, #tpu.memory_space<vmem>>, vector<16x392xbf16>
    %454 = arith.mulf %366, %394 : vector<1x392xf32>
    %455 = arith.truncf %454 : vector<1x392xf32> to vector<1x392xbf16>
    %456 = vector.broadcast %455 : vector<1x392xbf16> to vector<16x392xbf16>
    %457 = arith.mulf %453, %456 : vector<16x392xbf16>
    %c80 = arith.constant 80 : index
    %c0_168 = arith.constant 0 : index
    %458 = vector.load %arg17[%c80, %c0_168] : memref<400x392xbf16, #tpu.memory_space<vmem>>, vector<16x392xbf16>
    tpu.vector_store %arg17[%c80, %c0_168], %457 {strides = array<i32>} : memref<400x392xbf16, #tpu.memory_space<vmem>>, vector<16x392xbf16>,
    %c0_169 = arith.constant 0 : index
    %c15_170 = arith.constant 15 : index
    %459 = vector.load %arg16[%c0_169, %c15_170] : memref<16x452xbf16, #tpu.memory_space<vmem>>, vector<16x392xbf16>
    %460 = arith.mulf %366, %401 : vector<1x392xf32>
    %461 = arith.truncf %460 : vector<1x392xf32> to vector<1x392xbf16>
    %462 = vector.broadcast %461 : vector<1x392xbf16> to vector<16x392xbf16>
    %463 = arith.mulf %459, %462 : vector<16x392xbf16>
    %c96 = arith.constant 96 : index
    %c0_171 = arith.constant 0 : index
    %464 = vector.load %arg17[%c96, %c0_171] : memref<400x392xbf16, #tpu.memory_space<vmem>>, vector<16x392xbf16>
    tpu.vector_store %arg17[%c96, %c0_171], %463 {strides = array<i32>} : memref<400x392xbf16, #tpu.memory_space<vmem>>, vector<16x392xbf16>,
    %c0_172 = arith.constant 0 : index
    %c16_173 = arith.constant 16 : index
    %465 = vector.load %arg16[%c0_172, %c16_173] : memref<16x452xbf16, #tpu.memory_space<vmem>>, vector<16x392xbf16>
    %466 = arith.mulf %366, %408 : vector<1x392xf32>
    %467 = arith.truncf %466 : vector<1x392xf32> to vector<1x392xbf16>
    %468 = vector.broadcast %467 : vector<1x392xbf16> to vector<16x392xbf16>
    %469 = arith.mulf %465, %468 : vector<16x392xbf16>
    %c112_174 = arith.constant 112 : index
    %c0_175 = arith.constant 0 : index
    %470 = vector.load %arg17[%c112_174, %c0_175] : memref<400x392xbf16, #tpu.memory_space<vmem>>, vector<16x392xbf16>
    tpu.vector_store %arg17[%c112_174, %c0_175], %469 {strides = array<i32>} : memref<400x392xbf16, #tpu.memory_space<vmem>>, vector<16x392xbf16>,
    %c0_176 = arith.constant 0 : index
    %c17_177 = arith.constant 17 : index
    %471 = vector.load %arg16[%c0_176, %c17_177] : memref<16x452xbf16, #tpu.memory_space<vmem>>, vector<16x392xbf16>
    %472 = arith.mulf %366, %415 : vector<1x392xf32>
    %473 = arith.truncf %472 : vector<1x392xf32> to vector<1x392xbf16>
    %474 = vector.broadcast %473 : vector<1x392xbf16> to vector<16x392xbf16>
    %475 = arith.mulf %471, %474 : vector<16x392xbf16>
    %c128 = arith.constant 128 : index
    %c0_178 = arith.constant 0 : index
    %476 = vector.load %arg17[%c128, %c0_178] : memref<400x392xbf16, #tpu.memory_space<vmem>>, vector<16x392xbf16>
    tpu.vector_store %arg17[%c128, %c0_178], %475 {strides = array<i32>} : memref<400x392xbf16, #tpu.memory_space<vmem>>, vector<16x392xbf16>,
    %c0_179 = arith.constant 0 : index
    %c18_180 = arith.constant 18 : index
    %477 = vector.load %arg16[%c0_179, %c18_180] : memref<16x452xbf16, #tpu.memory_space<vmem>>, vector<16x392xbf16>
    %478 = arith.mulf %366, %422 : vector<1x392xf32>
    %479 = arith.truncf %478 : vector<1x392xf32> to vector<1x392xbf16>
    %480 = vector.broadcast %479 : vector<1x392xbf16> to vector<16x392xbf16>
    %481 = arith.mulf %477, %480 : vector<16x392xbf16>
    %c144 = arith.constant 144 : index
    %c0_181 = arith.constant 0 : index
    %482 = vector.load %arg17[%c144, %c0_181] : memref<400x392xbf16, #tpu.memory_space<vmem>>, vector<16x392xbf16>
    tpu.vector_store %arg17[%c144, %c0_181], %481 {strides = array<i32>} : memref<400x392xbf16, #tpu.memory_space<vmem>>, vector<16x392xbf16>,
    %c0_182 = arith.constant 0 : index
    %c28_183 = arith.constant 28 : index
    %483 = vector.load %arg16[%c0_182, %c28_183] : memref<16x452xbf16, #tpu.memory_space<vmem>>, vector<16x392xbf16>
    %484 = arith.mulf %373, %394 : vector<1x392xf32>
    %485 = arith.truncf %484 : vector<1x392xf32> to vector<1x392xbf16>
    %486 = vector.broadcast %485 : vector<1x392xbf16> to vector<16x392xbf16>
    %487 = arith.mulf %483, %486 : vector<16x392xbf16>
    %c160 = arith.constant 160 : index
    %c0_184 = arith.constant 0 : index
    %488 = vector.load %arg17[%c160, %c0_184] : memref<400x392xbf16, #tpu.memory_space<vmem>>, vector<16x392xbf16>
    tpu.vector_store %arg17[%c160, %c0_184], %487 {strides = array<i32>} : memref<400x392xbf16, #tpu.memory_space<vmem>>, vector<16x392xbf16>,
    %c0_185 = arith.constant 0 : index
    %c29_186 = arith.constant 29 : index
    %489 = vector.load %arg16[%c0_185, %c29_186] : memref<16x452xbf16, #tpu.memory_space<vmem>>, vector<16x392xbf16>
    %490 = arith.mulf %373, %401 : vector<1x392xf32>
    %491 = arith.truncf %490 : vector<1x392xf32> to vector<1x392xbf16>
    %492 = vector.broadcast %491 : vector<1x392xbf16> to vector<16x392xbf16>
    %493 = arith.mulf %489, %492 : vector<16x392xbf16>
    %c176 = arith.constant 176 : index
    %c0_187 = arith.constant 0 : index
    %494 = vector.load %arg17[%c176, %c0_187] : memref<400x392xbf16, #tpu.memory_space<vmem>>, vector<16x392xbf16>
    tpu.vector_store %arg17[%c176, %c0_187], %493 {strides = array<i32>} : memref<400x392xbf16, #tpu.memory_space<vmem>>, vector<16x392xbf16>,
    %c0_188 = arith.constant 0 : index
    %c30_189 = arith.constant 30 : index
    %495 = vector.load %arg16[%c0_188, %c30_189] : memref<16x452xbf16, #tpu.memory_space<vmem>>, vector<16x392xbf16>
    %496 = arith.mulf %373, %408 : vector<1x392xf32>
    %497 = arith.truncf %496 : vector<1x392xf32> to vector<1x392xbf16>
    %498 = vector.broadcast %497 : vector<1x392xbf16> to vector<16x392xbf16>
    %499 = arith.mulf %495, %498 : vector<16x392xbf16>
    %c192 = arith.constant 192 : index
    %c0_190 = arith.constant 0 : index
    %500 = vector.load %arg17[%c192, %c0_190] : memref<400x392xbf16, #tpu.memory_space<vmem>>, vector<16x392xbf16>
    tpu.vector_store %arg17[%c192, %c0_190], %499 {strides = array<i32>} : memref<400x392xbf16, #tpu.memory_space<vmem>>, vector<16x392xbf16>,
    %c0_191 = arith.constant 0 : index
    %c31_192 = arith.constant 31 : index
    %501 = vector.load %arg16[%c0_191, %c31_192] : memref<16x452xbf16, #tpu.memory_space<vmem>>, vector<16x392xbf16>
    %502 = arith.mulf %373, %415 : vector<1x392xf32>
    %503 = arith.truncf %502 : vector<1x392xf32> to vector<1x392xbf16>
    %504 = vector.broadcast %503 : vector<1x392xbf16> to vector<16x392xbf16>
    %505 = arith.mulf %501, %504 : vector<16x392xbf16>
    %c208 = arith.constant 208 : index
    %c0_193 = arith.constant 0 : index
    %506 = vector.load %arg17[%c208, %c0_193] : memref<400x392xbf16, #tpu.memory_space<vmem>>, vector<16x392xbf16>
    tpu.vector_store %arg17[%c208, %c0_193], %505 {strides = array<i32>} : memref<400x392xbf16, #tpu.memory_space<vmem>>, vector<16x392xbf16>,
    %c0_194 = arith.constant 0 : index
    %c32_195 = arith.constant 32 : index
    %507 = vector.load %arg16[%c0_194, %c32_195] : memref<16x452xbf16, #tpu.memory_space<vmem>>, vector<16x392xbf16>
    %508 = arith.mulf %373, %422 : vector<1x392xf32>
    %509 = arith.truncf %508 : vector<1x392xf32> to vector<1x392xbf16>
    %510 = vector.broadcast %509 : vector<1x392xbf16> to vector<16x392xbf16>
    %511 = arith.mulf %507, %510 : vector<16x392xbf16>
    %c224 = arith.constant 224 : index
    %c0_196 = arith.constant 0 : index
    %512 = vector.load %arg17[%c224, %c0_196] : memref<400x392xbf16, #tpu.memory_space<vmem>>, vector<16x392xbf16>
    tpu.vector_store %arg17[%c224, %c0_196], %511 {strides = array<i32>} : memref<400x392xbf16, #tpu.memory_space<vmem>>, vector<16x392xbf16>,
    %c0_197 = arith.constant 0 : index
    %c42 = arith.constant 42 : index
    %513 = vector.load %arg16[%c0_197, %c42] : memref<16x452xbf16, #tpu.memory_space<vmem>>, vector<16x392xbf16>
    %514 = arith.mulf %380, %394 : vector<1x392xf32>
    %515 = arith.truncf %514 : vector<1x392xf32> to vector<1x392xbf16>
    %516 = vector.broadcast %515 : vector<1x392xbf16> to vector<16x392xbf16>
    %517 = arith.mulf %513, %516 : vector<16x392xbf16>
    %c240 = arith.constant 240 : index
    %c0_198 = arith.constant 0 : index
    %518 = vector.load %arg17[%c240, %c0_198] : memref<400x392xbf16, #tpu.memory_space<vmem>>, vector<16x392xbf16>
    tpu.vector_store %arg17[%c240, %c0_198], %517 {strides = array<i32>} : memref<400x392xbf16, #tpu.memory_space<vmem>>, vector<16x392xbf16>,
    %c0_199 = arith.constant 0 : index
    %c43 = arith.constant 43 : index
    %519 = vector.load %arg16[%c0_199, %c43] : memref<16x452xbf16, #tpu.memory_space<vmem>>, vector<16x392xbf16>
    %520 = arith.mulf %380, %401 : vector<1x392xf32>
    %521 = arith.truncf %520 : vector<1x392xf32> to vector<1x392xbf16>
    %522 = vector.broadcast %521 : vector<1x392xbf16> to vector<16x392xbf16>
    %523 = arith.mulf %519, %522 : vector<16x392xbf16>
    %c256 = arith.constant 256 : index
    %c0_200 = arith.constant 0 : index
    %524 = vector.load %arg17[%c256, %c0_200] : memref<400x392xbf16, #tpu.memory_space<vmem>>, vector<16x392xbf16>
    tpu.vector_store %arg17[%c256, %c0_200], %523 {strides = array<i32>} : memref<400x392xbf16, #tpu.memory_space<vmem>>, vector<16x392xbf16>,
    %c0_201 = arith.constant 0 : index
    %c44 = arith.constant 44 : index
    %525 = vector.load %arg16[%c0_201, %c44] : memref<16x452xbf16, #tpu.memory_space<vmem>>, vector<16x392xbf16>
    %526 = arith.mulf %380, %408 : vector<1x392xf32>
    %527 = arith.truncf %526 : vector<1x392xf32> to vector<1x392xbf16>
    %528 = vector.broadcast %527 : vector<1x392xbf16> to vector<16x392xbf16>
    %529 = arith.mulf %525, %528 : vector<16x392xbf16>
    %c272 = arith.constant 272 : index
    %c0_202 = arith.constant 0 : index
    %530 = vector.load %arg17[%c272, %c0_202] : memref<400x392xbf16, #tpu.memory_space<vmem>>, vector<16x392xbf16>
    tpu.vector_store %arg17[%c272, %c0_202], %529 {strides = array<i32>} : memref<400x392xbf16, #tpu.memory_space<vmem>>, vector<16x392xbf16>,
    %c0_203 = arith.constant 0 : index
    %c45 = arith.constant 45 : index
    %531 = vector.load %arg16[%c0_203, %c45] : memref<16x452xbf16, #tpu.memory_space<vmem>>, vector<16x392xbf16>
    %532 = arith.mulf %380, %415 : vector<1x392xf32>
    %533 = arith.truncf %532 : vector<1x392xf32> to vector<1x392xbf16>
    %534 = vector.broadcast %533 : vector<1x392xbf16> to vector<16x392xbf16>
    %535 = arith.mulf %531, %534 : vector<16x392xbf16>
    %c288 = arith.constant 288 : index
    %c0_204 = arith.constant 0 : index
    %536 = vector.load %arg17[%c288, %c0_204] : memref<400x392xbf16, #tpu.memory_space<vmem>>, vector<16x392xbf16>
    tpu.vector_store %arg17[%c288, %c0_204], %535 {strides = array<i32>} : memref<400x392xbf16, #tpu.memory_space<vmem>>, vector<16x392xbf16>,
    %c0_205 = arith.constant 0 : index
    %c46 = arith.constant 46 : index
    %537 = vector.load %arg16[%c0_205, %c46] : memref<16x452xbf16, #tpu.memory_space<vmem>>, vector<16x392xbf16>
    %538 = arith.mulf %380, %422 : vector<1x392xf32>
    %539 = arith.truncf %538 : vector<1x392xf32> to vector<1x392xbf16>
    %540 = vector.broadcast %539 : vector<1x392xbf16> to vector<16x392xbf16>
    %541 = arith.mulf %537, %540 : vector<16x392xbf16>
    %c304 = arith.constant 304 : index
    %c0_206 = arith.constant 0 : index
    %542 = vector.load %arg17[%c304, %c0_206] : memref<400x392xbf16, #tpu.memory_space<vmem>>, vector<16x392xbf16>
    tpu.vector_store %arg17[%c304, %c0_206], %541 {strides = array<i32>} : memref<400x392xbf16, #tpu.memory_space<vmem>>, vector<16x392xbf16>,
    %c0_207 = arith.constant 0 : index
    %c56_208 = arith.constant 56 : index
    %543 = vector.load %arg16[%c0_207, %c56_208] : memref<16x452xbf16, #tpu.memory_space<vmem>>, vector<16x392xbf16>
    %544 = arith.mulf %387, %394 : vector<1x392xf32>
    %545 = arith.truncf %544 : vector<1x392xf32> to vector<1x392xbf16>
    %546 = vector.broadcast %545 : vector<1x392xbf16> to vector<16x392xbf16>
    %547 = arith.mulf %543, %546 : vector<16x392xbf16>
    %c320 = arith.constant 320 : index
    %c0_209 = arith.constant 0 : index
    %548 = vector.load %arg17[%c320, %c0_209] : memref<400x392xbf16, #tpu.memory_space<vmem>>, vector<16x392xbf16>
    tpu.vector_store %arg17[%c320, %c0_209], %547 {strides = array<i32>} : memref<400x392xbf16, #tpu.memory_space<vmem>>, vector<16x392xbf16>,
    %c0_210 = arith.constant 0 : index
    %c57_211 = arith.constant 57 : index
    %549 = vector.load %arg16[%c0_210, %c57_211] : memref<16x452xbf16, #tpu.memory_space<vmem>>, vector<16x392xbf16>
    %550 = arith.mulf %387, %401 : vector<1x392xf32>
    %551 = arith.truncf %550 : vector<1x392xf32> to vector<1x392xbf16>
    %552 = vector.broadcast %551 : vector<1x392xbf16> to vector<16x392xbf16>
    %553 = arith.mulf %549, %552 : vector<16x392xbf16>
    %c336 = arith.constant 336 : index
    %c0_212 = arith.constant 0 : index
    %554 = vector.load %arg17[%c336, %c0_212] : memref<400x392xbf16, #tpu.memory_space<vmem>>, vector<16x392xbf16>
    tpu.vector_store %arg17[%c336, %c0_212], %553 {strides = array<i32>} : memref<400x392xbf16, #tpu.memory_space<vmem>>, vector<16x392xbf16>,
    %c0_213 = arith.constant 0 : index
    %c58_214 = arith.constant 58 : index
    %555 = vector.load %arg16[%c0_213, %c58_214] : memref<16x452xbf16, #tpu.memory_space<vmem>>, vector<16x392xbf16>
    %556 = arith.mulf %387, %408 : vector<1x392xf32>
    %557 = arith.truncf %556 : vector<1x392xf32> to vector<1x392xbf16>
    %558 = vector.broadcast %557 : vector<1x392xbf16> to vector<16x392xbf16>
    %559 = arith.mulf %555, %558 : vector<16x392xbf16>
    %c352 = arith.constant 352 : index
    %c0_215 = arith.constant 0 : index
    %560 = vector.load %arg17[%c352, %c0_215] : memref<400x392xbf16, #tpu.memory_space<vmem>>, vector<16x392xbf16>
    tpu.vector_store %arg17[%c352, %c0_215], %559 {strides = array<i32>} : memref<400x392xbf16, #tpu.memory_space<vmem>>, vector<16x392xbf16>,
    %c0_216 = arith.constant 0 : index
    %c59_217 = arith.constant 59 : index
    %561 = vector.load %arg16[%c0_216, %c59_217] : memref<16x452xbf16, #tpu.memory_space<vmem>>, vector<16x392xbf16>
    %562 = arith.mulf %387, %415 : vector<1x392xf32>
    %563 = arith.truncf %562 : vector<1x392xf32> to vector<1x392xbf16>
    %564 = vector.broadcast %563 : vector<1x392xbf16> to vector<16x392xbf16>
    %565 = arith.mulf %561, %564 : vector<16x392xbf16>
    %c368 = arith.constant 368 : index
    %c0_218 = arith.constant 0 : index
    %566 = vector.load %arg17[%c368, %c0_218] : memref<400x392xbf16, #tpu.memory_space<vmem>>, vector<16x392xbf16>
    tpu.vector_store %arg17[%c368, %c0_218], %565 {strides = array<i32>} : memref<400x392xbf16, #tpu.memory_space<vmem>>, vector<16x392xbf16>,
    %c0_219 = arith.constant 0 : index
    %c60_220 = arith.constant 60 : index
    %567 = vector.load %arg16[%c0_219, %c60_220] : memref<16x452xbf16, #tpu.memory_space<vmem>>, vector<16x392xbf16>
    %568 = arith.mulf %387, %422 : vector<1x392xf32>
    %569 = arith.truncf %568 : vector<1x392xf32> to vector<1x392xbf16>
    %570 = vector.broadcast %569 : vector<1x392xbf16> to vector<16x392xbf16>
    %571 = arith.mulf %567, %570 : vector<16x392xbf16>
    %c384 = arith.constant 384 : index
    %c0_221 = arith.constant 0 : index
    %572 = vector.load %arg17[%c384, %c0_221] : memref<400x392xbf16, #tpu.memory_space<vmem>>, vector<16x392xbf16>
    tpu.vector_store %arg17[%c384, %c0_221], %571 {strides = array<i32>} : memref<400x392xbf16, #tpu.memory_space<vmem>>, vector<16x392xbf16>,
    %c0_222 = arith.constant 0 : index
    %c0_223 = arith.constant 0 : index
    %573 = vector.load %arg7[%c0_222, %c0_223] : memref<32x400xbf16, #tpu.memory_space<vmem>>, vector<32x400xbf16>
    %c0_224 = arith.constant 0 : index
    %c0_225 = arith.constant 0 : index
    %574 = vector.load %arg17[%c0_224, %c0_225] : memref<400x392xbf16, #tpu.memory_space<vmem>>, vector<400x392xbf16>
    %cst_226 = arith.constant dense<0.000000e+00> : vector<32x392xf32>
    %575 = tpu.matmul %573, %574, %cst_226 {dimension_numbers = #tpu.dot_dimension_numbers<[1], [0], [0], [1], [0, 0, 1, 1], [], []>} : vector<32x400xbf16>, vector<400x392xbf16>, vector<32x392xf32> -> vector<32x392xf32>
    %cst_227 = arith.constant dense<0.000000e+00> : vector<32xf32>
    %576 = vector.multi_reduction <add>, %575, %cst_227 [1] : vector<32x392xf32> to vector<32xf32>
    %577 = vector.shape_cast %576 : vector<32xf32> to vector<32x1xf32>
    %cst_228 = arith.constant 3.920000e+02 : f32
    %578 = vector.broadcast %cst_228 : f32 to vector<32x1xf32>
    %579 = arith.divf %577, %578 : vector<32x1xf32>
    %580 = arith.mulf %575, %575 : vector<32x392xf32>
    %cst_229 = arith.constant dense<0.000000e+00> : vector<32xf32>
    %581 = vector.multi_reduction <add>, %580, %cst_229 [1] : vector<32x392xf32> to vector<32xf32>
    %582 = vector.shape_cast %581 : vector<32xf32> to vector<32x1xf32>
    %cst_230 = arith.constant 3.920000e+02 : f32
    %583 = vector.broadcast %cst_230 : f32 to vector<32x1xf32>
    %584 = arith.divf %582, %583 : vector<32x1xf32>
    %585 = arith.mulf %579, %579 : vector<32x1xf32>
    %586 = arith.subf %584, %585 : vector<32x1xf32>
    %cst_231 = arith.constant 0.000000e+00 : f32
    %587 = vector.broadcast %cst_231 : f32 to vector<32x1xf32>
    %588 = arith.maximumf %586, %587 : vector<32x1xf32>
    %589 = vector.broadcast %579 : vector<32x1xf32> to vector<32x392xf32>
    %590 = arith.subf %575, %589 : vector<32x392xf32>
    %cst_232 = arith.constant 9.99999974E-6 : f32
    %591 = vector.broadcast %cst_232 : f32 to vector<32x1xf32>
    %592 = arith.addf %588, %591 : vector<32x1xf32>
    %593 = math.rsqrt %592 : vector<32x1xf32>
    %594 = vector.broadcast %593 : vector<32x1xf32> to vector<32x392xf32>
    %595 = arith.mulf %590, %594 : vector<32x392xf32>
    %c0_233 = arith.constant 0 : index
    %c0_234 = arith.constant 0 : index
    %596 = vector.load %arg8[%c0_233, %c0_234] : memref<32x1xf32, #tpu.memory_space<vmem>>, vector<32x1xf32>
    %597 = vector.broadcast %596 : vector<32x1xf32> to vector<32x392xf32>
    %598 = arith.mulf %595, %597 : vector<32x392xf32>
    %c0_235 = arith.constant 0 : index
    %c0_236 = arith.constant 0 : index
    %599 = vector.load %arg9[%c0_235, %c0_236] : memref<32x1xf32, #tpu.memory_space<vmem>>, vector<32x1xf32>
    %600 = vector.broadcast %599 : vector<32x1xf32> to vector<32x392xf32>
    %601 = arith.addf %598, %600 : vector<32x392xf32>
    %cst_237 = arith.constant 0.000000e+00 : f32
    %602 = vector.broadcast %cst_237 : f32 to vector<32x392xf32>
    %603 = arith.maximumf %601, %602 : vector<32x392xf32>
    %c0_238 = arith.constant 0 : index
    %c0_239 = arith.constant 0 : index
    %604 = vector.load %arg18[%c0_238, %c0_239] : memref<32x408xf32, #tpu.memory_space<vmem>>, vector<32x392xf32>
    tpu.vector_store %arg18[%c0_238, %c0_239], %603 {strides = array<i32>} : memref<32x408xf32, #tpu.memory_space<vmem>>, vector<32x392xf32>,
    %cst_240 = arith.constant 0.000000e+00 : f32
    %605 = vector.broadcast %cst_240 : f32 to vector<32x16xf32>
    %c0_241 = arith.constant 0 : index
    %c392 = arith.constant 392 : index
    %606 = vector.load %arg18[%c0_241, %c392] : memref<32x408xf32, #tpu.memory_space<vmem>>, vector<32x16xf32>
    tpu.vector_store %arg18[%c0_241, %c392], %605 {strides = array<i32>} : memref<32x408xf32, #tpu.memory_space<vmem>>, vector<32x16xf32>,
    %c0_242 = arith.constant 0 : index
    %c0_243 = arith.constant 0 : index
    %607 = vector.load %arg18[%c0_242, %c0_243] : memref<32x408xf32, #tpu.memory_space<vmem>>, vector<32x392xf32>
    %c0_244 = arith.constant 0 : index
    %c1_245 = arith.constant 1 : index
    %608 = vector.load %arg18[%c0_244, %c1_245] : memref<32x408xf32, #tpu.memory_space<vmem>>, vector<32x392xf32>
    %609 = arith.maximumf %607, %608 : vector<32x392xf32>
    %c0_246 = arith.constant 0 : index
    %c14_247 = arith.constant 14 : index
    %610 = vector.load %arg18[%c0_246, %c14_247] : memref<32x408xf32, #tpu.memory_space<vmem>>, vector<32x392xf32>
    %c0_248 = arith.constant 0 : index
    %c15_249 = arith.constant 15 : index
    %611 = vector.load %arg18[%c0_248, %c15_249] : memref<32x408xf32, #tpu.memory_space<vmem>>, vector<32x392xf32>
    %612 = arith.maximumf %610, %611 : vector<32x392xf32>
    %613 = arith.maximumf %609, %612 : vector<32x392xf32>
    %c0_250 = arith.constant 0 : index
    %c0_251 = arith.constant 0 : index
    %614 = vector.load %arg10[%c0_250, %c0_251] : memref<196x320xf32, #tpu.memory_space<vmem>>, vector<196x320xf32>
    %c0_252 = arith.constant 0 : index
    %c0_253 = arith.constant 0 : index
    %615 = vector.load %arg11[%c0_252, %c0_253] : memref<32x320xf32, #tpu.memory_space<vmem>>, vector<32x320xf32>
    %c0_254 = arith.constant 0 : index
    %c0_255 = arith.constant 0 : index
    %616 = vector.load %arg12[%c0_254, %c0_255] : memref<320x10xf32, #tpu.memory_space<vmem>>, vector<320x10xf32>
    %c0_256 = arith.constant 0 : index
    %c0_257 = arith.constant 0 : index
    %617 = vector.load %arg13[%c0_256, %c0_257] : memref<1x10xf32, #tpu.memory_space<vmem>>, vector<1x10xf32>
    %618 = vector.extract_strided_slice %613 {offsets = [0, 0], sizes = [32, 196], strides = [1, 1]} : vector<32x392xf32> to vector<32x196xf32>
    %cst_258 = arith.constant dense<0.000000e+00> : vector<32x320xf32>
    %619 = tpu.matmul %618, %614, %cst_258 {dimension_numbers = #tpu.dot_dimension_numbers<[1], [0], [0], [1], [0, 0, 1, 1], [], []>} : vector<32x196xf32>, vector<196x320xf32>, vector<32x320xf32> -> vector<32x320xf32>
    %620 = arith.mulf %619, %615 : vector<32x320xf32>
    %cst_259 = arith.constant dense<0.000000e+00> : vector<320xf32>
    %621 = vector.multi_reduction <add>, %620, %cst_259 [0] : vector<32x320xf32> to vector<320xf32>
    %622 = vector.shape_cast %621 : vector<320xf32> to vector<1x320xf32>
    %cst_260 = arith.constant dense<0.000000e+00> : vector<1x10xf32>
    %623 = tpu.matmul %622, %616, %cst_260 {dimension_numbers = #tpu.dot_dimension_numbers<[1], [0], [0], [1], [0, 0, 1, 1], [], []>} : vector<1x320xf32>, vector<320x10xf32>, vector<1x10xf32> -> vector<1x10xf32>
    %624 = arith.addf %623, %617 : vector<1x10xf32>
    %c0_261 = arith.constant 0 : index
    %c0_262 = arith.constant 0 : index
    %625 = vector.load %arg14[%c0_261, %c0_262] : memref<1x20xf32, #tpu.memory_space<vmem>>, vector<1x10xf32>
    tpu.vector_store %arg14[%c0_261, %c0_262], %624 {strides = array<i32>} : memref<1x20xf32, #tpu.memory_space<vmem>>, vector<1x10xf32>,
    %626 = vector.extract_strided_slice %613 {offsets = [0, 196], sizes = [32, 196], strides = [1, 1]} : vector<32x392xf32> to vector<32x196xf32>
    %cst_263 = arith.constant dense<0.000000e+00> : vector<32x320xf32>
    %627 = tpu.matmul %626, %614, %cst_263 {dimension_numbers = #tpu.dot_dimension_numbers<[1], [0], [0], [1], [0, 0, 1, 1], [], []>} : vector<32x196xf32>, vector<196x320xf32>, vector<32x320xf32> -> vector<32x320xf32>
    %628 = arith.mulf %627, %615 : vector<32x320xf32>
    %cst_264 = arith.constant dense<0.000000e+00> : vector<320xf32>
    %629 = vector.multi_reduction <add>, %628, %cst_264 [0] : vector<32x320xf32> to vector<320xf32>
    %630 = vector.shape_cast %629 : vector<320xf32> to vector<1x320xf32>
    %cst_265 = arith.constant dense<0.000000e+00> : vector<1x10xf32>
    %631 = tpu.matmul %630, %616, %cst_265 {dimension_numbers = #tpu.dot_dimension_numbers<[1], [0], [0], [1], [0, 0, 1, 1], [], []>} : vector<1x320xf32>, vector<320x10xf32>, vector<1x10xf32> -> vector<1x10xf32>
    %632 = arith.addf %631, %617 : vector<1x10xf32>
    %c0_266 = arith.constant 0 : index
    %c10_267 = arith.constant 10 : index
    %633 = vector.load %arg14[%c0_266, %c10_267] : memref<1x20xf32, #tpu.memory_space<vmem>>, vector<1x10xf32>
    tpu.vector_store %arg14[%c0_266, %c10_267], %632 {strides = array<i32>} : memref<1x20xf32, #tpu.memory_space<vmem>>, vector<1x10xf32>,
    return
  }
}

</mosaic_0001>

<llo_original>
// kernel: convnet_forward.1
$region0: #{convnet_forward.1}
  #allocation0 [shape = 'u32[]', space=smem, size = 0x4, offset = 0x4, fixed_abs, tag = 'smem constant byte address 0x4 - core index']
  #allocation1 [shape = 'u32[144,128]{1,0:T(1,128)}', space=vmem, size = 0x12000, scoped, tag = 'internal scratch']
  #allocation2 [shape = 'f32[16,1600]{1,0:T(8,128)}', space=vmem, size = 0x1a000, scoped, tag = 'scratch operand']
  #allocation3 [shape = 'bf16[16,452]{1,0:T(16,128)(2,1)}', space=vmem, size = 0x4000, scoped, tag = 'scratch operand']
  #allocation4 [shape = 'bf16[400,392]{1,0:T(16,128)(2,1)}', space=vmem, size = 0x64000, scoped, tag = 'scratch operand']
  #allocation5 [shape = 'f32[32,408]{1,0:T(8,128)}', space=vmem, size = 0x10000, scoped, tag = 'scratch operand']
  %s0 = inlined_call_operand.vmem [shape: f32[1,1684], index: 0, kind: input, shape index: {}]
  %s1 = inlined_call_operand.vmem [shape: s32[2,1568], index: 1, kind: input, shape index: {}]
  %s2 = inlined_call_operand.vmem [shape: f32[25,16,1], index: 2, kind: input, shape index: {}]
  %s3 = inlined_call_operand.vmem [shape: f32[16,1], index: 3, kind: input, shape index: {}]
  %s4 = inlined_call_operand.vmem [shape: f32[16,1], index: 4, kind: input, shape index: {}]
  %s5 = inlined_call_operand.vmem [shape: bf16[784,196], index: 5, kind: input, shape index: {}]
  %s6 = inlined_call_operand.vmem [shape: s32[2,392], index: 6, kind: input, shape index: {}]
  %s7 = inlined_call_operand.vmem [shape: bf16[32,400], index: 7, kind: input, shape index: {}]
  %s8 = inlined_call_operand.vmem [shape: f32[32,1], index: 8, kind: input, shape index: {}]
  %s9 = inlined_call_operand.vmem [shape: f32[32,1], index: 9, kind: input, shape index: {}]
  %s10 = inlined_call_operand.vmem [shape: f32[196,320], index: 10, kind: input, shape index: {}]
  %s11 = inlined_call_operand.vmem [shape: f32[32,320], index: 11, kind: input, shape index: {}]
  %s12 = inlined_call_operand.vmem [shape: f32[320,10], index: 12, kind: input, shape index: {}]
  %s13 = inlined_call_operand.vmem [shape: f32[1,10], index: 13, kind: input, shape index: {}]
  %s14 = inlined_call_operand.vmem [shape: f32[1,20], index: 14, kind: output, shape index: {}]
  %s15 = sld [smem:[#allocation0]]
  $region66: #{convnet_forward.1} parent=0
    _
  %s17 = ssub.s32 1, %s15
  %s18 = scalar_select 0, %s17, %s15
  // Predicated region
  $region2: #{convnet_forward.1} parent=0 // pred_check
    _
  $region3: #{convnet_forward.1} parent=0 // pred_check_branch
    %20 = sbr.rel (0) target = $region5
  $region4: #{convnet_forward.1} parent=0 // pred_region
    _
  $region5: #{convnet_forward.1} parent=0 // pred_fallthru
    _
  // Predicated region
  $region6: #{convnet_forward.1} parent=0 // pred_check
    _
  $region7: #{convnet_forward.1} parent=0 // pred_check_branch
    %22 = sbr.rel (0) target = $region9
  $region8: #{convnet_forward.1} parent=0 // pred_region
    _
  $region9: #{convnet_forward.1} parent=0 // pred_fallthru
    _
  // Predicated region
  $region10: #{convnet_forward.1} parent=0 // pred_check
    _
  $region11: #{convnet_forward.1} parent=0 // pred_check_branch
    %24 = sbr.rel (0) target = $region13
  $region12: #{convnet_forward.1} parent=0 // pred_region
    _
  $region13: #{convnet_forward.1} parent=0 // pred_fallthru
    _
  // Predicated region
  $region14: #{convnet_forward.1} parent=0 // pred_check
    _
  $region15: #{convnet_forward.1} parent=0 // pred_check_branch
    %26 = sbr.rel (0) target = $region17
  $region16: #{convnet_forward.1} parent=0 // pred_region
    _
  $region17: #{convnet_forward.1} parent=0 // pred_fallthru
    _
  // Predicated region
  $region18: #{convnet_forward.1} parent=0 // pred_check
    _
  $region19: #{convnet_forward.1} parent=0 // pred_check_branch
    %28 = sbr.rel (0) target = $region21
  $region20: #{convnet_forward.1} parent=0 // pred_region
    _
  $region21: #{convnet_forward.1} parent=0 // pred_fallthru
    _
  // Predicated region
  $region22: #{convnet_forward.1} parent=0 // pred_check
    _
  $region23: #{convnet_forward.1} parent=0 // pred_check_branch
    %30 = sbr.rel (0) target = $region25
  $region24: #{convnet_forward.1} parent=0 // pred_region
    _
  $region25: #{convnet_forward.1} parent=0 // pred_fallthru
    _
  // Predicated region
  $region26: #{convnet_forward.1} parent=0 // pred_check
    _
  $region27: #{convnet_forward.1} parent=0 // pred_check_branch
    %32 = sbr.rel (0) target = $region29
  $region28: #{convnet_forward.1} parent=0 // pred_region
    _
  $region29: #{convnet_forward.1} parent=0 // pred_fallthru
    _
  // Predicated region
  $region30: #{convnet_forward.1} parent=0 // pred_check
    _
  $region31: #{convnet_forward.1} parent=0 // pred_check_branch
    %34 = sbr.rel (0) target = $region33
  $region32: #{convnet_forward.1} parent=0 // pred_region
    _
  $region33: #{convnet_forward.1} parent=0 // pred_fallthru
    _
  // Predicated region
  $region34: #{convnet_forward.1} parent=0 // pred_check
    _
  $region35: #{convnet_forward.1} parent=0 // pred_check_branch
    %36 = sbr.rel (0) target = $region37
  $region36: #{convnet_forward.1} parent=0 // pred_region
    _
  $region37: #{convnet_forward.1} parent=0 // pred_fallthru
    _
  // Predicated region
  $region38: #{convnet_forward.1} parent=0 // pred_check
    _
  $region39: #{convnet_forward.1} parent=0 // pred_check_branch
    %38 = sbr.rel (0) target = $region41
  $region40: #{convnet_forward.1} parent=0 // pred_region
    _
  $region41: #{convnet_forward.1} parent=0 // pred_fallthru
    _
  // Predicated region
  $region42: #{convnet_forward.1} parent=0 // pred_check
    _
  $region43: #{convnet_forward.1} parent=0 // pred_check_branch
    %40 = sbr.rel (0) target = $region45
  $region44: #{convnet_forward.1} parent=0 // pred_region
    _
  $region45: #{convnet_forward.1} parent=0 // pred_fallthru
    _
  // Predicated region
  $region46: #{convnet_forward.1} parent=0 // pred_check
    _
  $region47: #{convnet_forward.1} parent=0 // pred_check_branch
    %42 = sbr.rel (0) target = $region49
  $region48: #{convnet_forward.1} parent=0 // pred_region
    _
  $region49: #{convnet_forward.1} parent=0 // pred_fallthru
    _
  // Predicated region
  $region50: #{convnet_forward.1} parent=0 // pred_check
    _
  $region51: #{convnet_forward.1} parent=0 // pred_check_branch
    %44 = sbr.rel (0) target = $region53
  $region52: #{convnet_forward.1} parent=0 // pred_region
    _
  $region53: #{convnet_forward.1} parent=0 // pred_fallthru
    _
  // Predicated region
  $region54: #{convnet_forward.1} parent=0 // pred_check
    _
  $region55: #{convnet_forward.1} parent=0 // pred_check_branch
    %46 = sbr.rel (0) target = $region57
  $region56: #{convnet_forward.1} parent=0 // pred_region
    _
  $region57: #{convnet_forward.1} parent=0 // pred_fallthru
    _
  %v48 = vld [vmem:[%s1] ss:$2 sm:$0xff]
  %s49 = scalar_lea.vmem %s1, 16
  %v50 = vld [vmem:[%s49] ss:$2 sm:$0x1f]
  %s51 = scalar_lea.vmem %s1, 1
  %v52 = vld [vmem:[%s51] ss:$2 sm:$0xff]
  %s53 = scalar_lea.vmem %s1, 17
  %v54 = vld [vmem:[%s53] ss:$2 sm:$0x1f]
  %vm55 = vcmp.ge.s32.totalorder %v48, 2
  %vm56 = vcmp.ge.s32.totalorder %v50, 2
  %vm57 = vcmp.lt.s32.totalorder %v48, 30
  %vm58 = vcmp.lt.s32.totalorder %v50, 30
  %vm59 = vmand %vm55, %vm57
  %vm60 = vmand %vm56, %vm58
  %v61 = vsel %vm59, 1, 0
  %v62 = vsel %vm60, 1, 0
  %v63 = vcvt.s32.f32 %v61
  %v64 = vcvt.s32.f32 %v62
  %vm65 = vcmp.ge.s32.totalorder %v48, 1
  %vm66 = vcmp.ge.s32.totalorder %v50, 1
  %vm67 = vcmp.lt.s32.totalorder %v48, 29
  %vm68 = vcmp.lt.s32.totalorder %v50, 29
  %vm69 = vmand %vm65, %vm67
  %vm70 = vmand %vm66, %vm68
  %v71 = vsel %vm69, 1, 0
  %v72 = vsel %vm70, 1, 0
  %v73 = vcvt.s32.f32 %v71
  %v74 = vcvt.s32.f32 %v72
  %vm75 = vcmp.ge.s32.totalorder %v48, 0
  %vm76 = vcmp.ge.s32.totalorder %v50, 0
  %vm77 = vcmp.lt.s32.totalorder %v48, 28
  %vm78 = vcmp.lt.s32.totalorder %v50, 28
  %vm79 = vmand %vm75, %vm77
  %vm80 = vmand %vm76, %vm78
  %v81 = vsel %vm79, 1, 0
  %v82 = vsel %vm80, 1, 0
  %v83 = vcvt.s32.f32 %v81
  %v84 = vcvt.s32.f32 %v82
  %vm85 = vcmp.ge.s32.totalorder %v48, 4294967295
  %vm86 = vcmp.ge.s32.totalorder %v50, 4294967295
  %vm87 = vcmp.lt.s32.totalorder %v48, 27
  %vm88 = vcmp.lt.s32.totalorder %v50, 27
  %vm89 = vmand %vm85, %vm87
  %vm90 = vmand %vm86, %vm88
  %v91 = vsel %vm89, 1, 0
  %v92 = vsel %vm90, 1, 0
  %v93 = vcvt.s32.f32 %v91
  %v94 = vcvt.s32.f32 %v92
  %vm95 = vcmp.ge.s32.totalorder %v48, 4294967294
  %vm96 = vcmp.ge.s32.totalorder %v50, 4294967294
  %vm97 = vcmp.lt.s32.totalorder %v48, 26
  %vm98 = vcmp.lt.s32.totalorder %v50, 26
  %vm99 = vmand %vm95, %vm97
  %vm100 = vmand %vm96, %vm98
  %v101 = vsel %vm99, 1, 0
  %v102 = vsel %vm100, 1, 0
  %v103 = vcvt.s32.f32 %v101
  %v104 = vcvt.s32.f32 %v102
  %vm105 = vcmp.ge.s32.totalorder %v52, 2
  %vm106 = vcmp.ge.s32.totalorder %v54, 2
  %vm107 = vcmp.lt.s32.totalorder %v52, 30
  %vm108 = vcmp.lt.s32.totalorder %v54, 30
  %vm109 = vmand %vm105, %vm107
  %vm110 = vmand %vm106, %vm108
  %v111 = vsel %vm109, 1, 0
  %v112 = vsel %vm110, 1, 0
  %v113 = vcvt.s32.f32 %v111
  %v114 = vcvt.s32.f32 %v112
  %vm115 = vcmp.ge.s32.totalorder %v52, 1
  %vm116 = vcmp.ge.s32.totalorder %v54, 1
  %vm117 = vcmp.lt.s32.totalorder %v52, 29
  %vm118 = vcmp.lt.s32.totalorder %v54, 29
  %vm119 = vmand %vm115, %vm117
  %vm120 = vmand %vm116, %vm118
  %v121 = vsel %vm119, 1, 0
  %v122 = vsel %vm120, 1, 0
  %v123 = vcvt.s32.f32 %v121
  %v124 = vcvt.s32.f32 %v122
  %vm125 = vcmp.ge.s32.totalorder %v52, 0
  %vm126 = vcmp.ge.s32.totalorder %v54, 0
  %vm127 = vcmp.lt.s32.totalorder %v52, 28
  %vm128 = vcmp.lt.s32.totalorder %v54, 28
  %vm129 = vmand %vm125, %vm127
  %vm130 = vmand %vm126, %vm128
  %v131 = vsel %vm129, 1, 0
  %v132 = vsel %vm130, 1, 0
  %v133 = vcvt.s32.f32 %v131
  %v134 = vcvt.s32.f32 %v132
  %vm135 = vcmp.ge.s32.totalorder %v52, 4294967295
  %vm136 = vcmp.ge.s32.totalorder %v54, 4294967295
  %vm137 = vcmp.lt.s32.totalorder %v52, 27
  %vm138 = vcmp.lt.s32.totalorder %v54, 27
  %vm139 = vmand %vm135, %vm137
  %vm140 = vmand %vm136, %vm138
  %v141 = vsel %vm139, 1, 0
  %v142 = vsel %vm140, 1, 0
  %v143 = vcvt.s32.f32 %v141
  %v144 = vcvt.s32.f32 %v142
  %vm145 = vcmp.ge.s32.totalorder %v52, 4294967294
  %vm146 = vcmp.ge.s32.totalorder %v54, 4294967294
  %vm147 = vcmp.lt.s32.totalorder %v52, 26
  %vm148 = vcmp.lt.s32.totalorder %v54, 26
  %vm149 = vmand %vm145, %vm147
  %vm150 = vmand %vm146, %vm148
  %v151 = vsel %vm149, 1, 0
  %v152 = vsel %vm150, 1, 0
  %v153 = vcvt.s32.f32 %v151
  %v154 = vcvt.s32.f32 %v152
  %v155 = vld [vmem:[%s0] sm:$0xff]
  %v156 = vld [vmem:[%s0 + $0x8] sm:$0x1f]
  %v157 = vld [vmem:[%s2] sm:$0xff]
  %v158 = vld [vmem:[%s2 + $0x8] sm:$0xff]
  %v159 = vmul.f32 %v63, %v113
  %v160 = vmul.f32 %v64, %v114
  %v161 = vmul.f32 %v155, %v159
  %v162 = vmul.f32 %v156, %v160
  %164 = vset.pattern.permute.xlu0 0
  %165 = vperm.xlu0 %164, %v157
  %v166 = vpop.permute.xlu0 %165
  %169 = vset.pattern.permute.xlu0 0
  %170 = vperm.xlu0 %169, %v158
  %v171 = vpop.permute.xlu0 %170
  %v175 = vlaneseq
  %v176 = vshrl.u32 %v175, 7
  %v177 = vsub.s32 0, %v176
  %v178 = vrot.slane %v161, %v177
  %v179 = vlaneseq
  %v180 = vshrl.u32 %v179, 7
  %v181 = vsub.s32 1, %v180
  %v182 = vrot.slane %v161, %v181
  %v183 = vlaneseq
  %v184 = vshrl.u32 %v183, 7
  %v185 = vsub.s32 2, %v184
  %v186 = vrot.slane %v161, %v185
  %v187 = vlaneseq
  %v188 = vshrl.u32 %v187, 7
  %v189 = vsub.s32 3, %v188
  %v190 = vrot.slane %v161, %v189
  %v191 = vlaneseq
  %v192 = vshrl.u32 %v191, 7
  %v193 = vsub.s32 4, %v192
  %v194 = vrot.slane %v161, %v193
  %v195 = vlaneseq
  %v196 = vshrl.u32 %v195, 7
  %v197 = vsub.s32 5, %v196
  %v198 = vrot.slane %v161, %v197
  %v199 = vlaneseq
  %v200 = vshrl.u32 %v199, 7
  %v201 = vsub.s32 6, %v200
  %v202 = vrot.slane %v161, %v201
  %v203 = vlaneseq
  %v204 = vshrl.u32 %v203, 7
  %v205 = vsub.s32 7, %v204
  %v206 = vrot.slane %v161, %v205
  %v207 = vlaneseq
  %v208 = vshrl.u32 %v207, 7
  %v209 = vsub.s32 0, %v208
  %v210 = vrot.slane %v162, %v209
  %v211 = vlaneseq
  %v212 = vshrl.u32 %v211, 7
  %v213 = vsub.s32 1, %v212
  %v214 = vrot.slane %v162, %v213
  %v215 = vlaneseq
  %v216 = vshrl.u32 %v215, 7
  %v217 = vsub.s32 2, %v216
  %v218 = vrot.slane %v162, %v217
  %v219 = vlaneseq
  %v220 = vshrl.u32 %v219, 7
  %v221 = vsub.s32 3, %v220
  %v222 = vrot.slane %v162, %v221
  %v223 = vlaneseq
  %v224 = vshrl.u32 %v223, 7
  %v225 = vsub.s32 4, %v224
  %v226 = vrot.slane %v162, %v225
  %v240 = vmul.f32 %v166, %v178
  %v241 = vmul.f32 %v166, %v182
  %v242 = vmul.f32 %v166, %v186
  %v243 = vmul.f32 %v166, %v190
  %v244 = vmul.f32 %v166, %v194
  %v245 = vmul.f32 %v166, %v198
  %v246 = vmul.f32 %v166, %v202
  %v247 = vmul.f32 %v166, %v206
  %v248 = vmul.f32 %v166, %v210
  %v249 = vmul.f32 %v166, %v214
  %v250 = vmul.f32 %v166, %v218
  %v251 = vmul.f32 %v166, %v222
  %v252 = vmul.f32 %v166, %v226
  %v253 = vmul.f32 %v171, %v178
  %v254 = vmul.f32 %v171, %v182
  %v255 = vmul.f32 %v171, %v186
  %v256 = vmul.f32 %v171, %v190
  %v257 = vmul.f32 %v171, %v194
  %v258 = vmul.f32 %v171, %v198
  %v259 = vmul.f32 %v171, %v202
  %v260 = vmul.f32 %v171, %v206
  %v261 = vmul.f32 %v171, %v210
  %v262 = vmul.f32 %v171, %v214
  %v263 = vmul.f32 %v171, %v218
  %v264 = vmul.f32 %v171, %v222
  %v265 = vmul.f32 %v171, %v226
  %v266 = vadd.f32 %v240, 0.0
  %v267 = vadd.f32 %v241, 0.0
  %v268 = vadd.f32 %v242, 0.0
  %v269 = vadd.f32 %v243, 0.0
  %v270 = vadd.f32 %v244, 0.0
  %v271 = vadd.f32 %v245, 0.0
  %v272 = vadd.f32 %v246, 0.0
  %v273 = vadd.f32 %v247, 0.0
  %v274 = vadd.f32 %v248, 0.0
  %v275 = vadd.f32 %v249, 0.0
  %v276 = vadd.f32 %v250, 0.0
  %v277 = vadd.f32 %v251, 0.0
  %v278 = vadd.f32 %v252, 0.0
  %v279 = vadd.f32 %v253, 0.0
  %v280 = vadd.f32 %v254, 0.0
  %v281 = vadd.f32 %v255, 0.0
  %v282 = vadd.f32 %v256, 0.0
  %v283 = vadd.f32 %v257, 0.0
  %v284 = vadd.f32 %v258, 0.0
  %v285 = vadd.f32 %v259, 0.0
  %v286 = vadd.f32 %v260, 0.0
  %v287 = vadd.f32 %v261, 0.0
  %v288 = vadd.f32 %v262, 0.0
  %v289 = vadd.f32 %v263, 0.0
  %v290 = vadd.f32 %v264, 0.0
  %v291 = vadd.f32 %v265, 0.0
  %s292 = scalar_lea.vmem %s2, 16
  %v293 = vld [vmem:[%s292] sm:$0xff]
  %v294 = vld [vmem:[%s292 + $0x8] sm:$0xff]
  %v295 = vmul.f32 %v63, %v123
  %v296 = vmul.f32 %v64, %v124
  %299 = vrot.lane.b32.xlu0 %v295, 1
  %v300 = vpop.permute.xlu0 %299
  %301 = vrot.lane.b32.xlu0 %v296, 1
  %v302 = vpop.permute.xlu0 %301
  %v303 = vrot.slane %v300, 7
  %v304 = vrot.slane %v302, 7
  %vm305 = vcmask 7168
  %v306 = vsel %vm305, %v303, %v300
  %vm307 = vcmask 1040384
  %v308 = vsel %vm307, %v303, %v304
  %v309 = vsel %vm305, %v308, %v302
  %v312 = vmul.f32 %v155, %v306
  %v313 = vmul.f32 %v156, %v309
  %315 = vset.pattern.permute.xlu0 0
  %316 = vperm.xlu0 %315, %v293
  %v317 = vpop.permute.xlu0 %316
  %320 = vset.pattern.permute.xlu0 0
  %321 = vperm.xlu0 %320, %v294
  %v322 = vpop.permute.xlu0 %321
  %v326 = vlaneseq
  %v327 = vshrl.u32 %v326, 7
  %v328 = vsub.s32 0, %v327
  %v329 = vrot.slane %v312, %v328
  %v330 = vlaneseq
  %v331 = vshrl.u32 %v330, 7
  %v332 = vsub.s32 1, %v331
  %v333 = vrot.slane %v312, %v332
  %v334 = vlaneseq
  %v335 = vshrl.u32 %v334, 7
  %v336 = vsub.s32 2, %v335
  %v337 = vrot.slane %v312, %v336
  %v338 = vlaneseq
  %v339 = vshrl.u32 %v338, 7
  %v340 = vsub.s32 3, %v339
  %v341 = vrot.slane %v312, %v340
  %v342 = vlaneseq
  %v343 = vshrl.u32 %v342, 7
  %v344 = vsub.s32 4, %v343
  %v345 = vrot.slane %v312, %v344
  %v346 = vlaneseq
  %v347 = vshrl.u32 %v346, 7
  %v348 = vsub.s32 5, %v347
  %v349 = vrot.slane %v312, %v348
  %v350 = vlaneseq
  %v351 = vshrl.u32 %v350, 7
  %v352 = vsub.s32 6, %v351
  %v353 = vrot.slane %v312, %v352
  %v354 = vlaneseq
  %v355 = vshrl.u32 %v354, 7
  %v356 = vsub.s32 7, %v355
  %v357 = vrot.slane %v312, %v356
  %v358 = vlaneseq
  %v359 = vshrl.u32 %v358, 7
  %v360 = vsub.s32 0, %v359
  %v361 = vrot.slane %v313, %v360
  %v362 = vlaneseq
  %v363 = vshrl.u32 %v362, 7
  %v364 = vsub.s32 1, %v363
  %v365 = vrot.slane %v313, %v364
  %v366 = vlaneseq
  %v367 = vshrl.u32 %v366, 7
  %v368 = vsub.s32 2, %v367
  %v369 = vrot.slane %v313, %v368
  %v370 = vlaneseq
  %v371 = vshrl.u32 %v370, 7
  %v372 = vsub.s32 3, %v371
  %v373 = vrot.slane %v313, %v372
  %v374 = vlaneseq
  %v375 = vshrl.u32 %v374, 7
  %v376 = vsub.s32 4, %v375
  %v377 = vrot.slane %v313, %v376
  %v391 = vmul.f32 %v317, %v329
  %v392 = vmul.f32 %v317, %v333
  %v393 = vmul.f32 %v317, %v337
  %v394 = vmul.f32 %v317, %v341
  %v395 = vmul.f32 %v317, %v345
  %v396 = vmul.f32 %v317, %v349
  %v397 = vmul.f32 %v317, %v353
  %v398 = vmul.f32 %v317, %v357
  %v399 = vmul.f32 %v317, %v361
  %v400 = vmul.f32 %v317, %v365
  %v401 = vmul.f32 %v317, %v369
  %v402 = vmul.f32 %v317, %v373
  %v403 = vmul.f32 %v317, %v377
  %v404 = vmul.f32 %v322, %v329
  %v405 = vmul.f32 %v322, %v333
  %v406 = vmul.f32 %v322, %v337
  %v407 = vmul.f32 %v322, %v341
  %v408 = vmul.f32 %v322, %v345
  %v409 = vmul.f32 %v322, %v349
  %v410 = vmul.f32 %v322, %v353
  %v411 = vmul.f32 %v322, %v357
  %v412 = vmul.f32 %v322, %v361
  %v413 = vmul.f32 %v322, %v365
  %v414 = vmul.f32 %v322, %v369
  %v415 = vmul.f32 %v322, %v373
  %v416 = vmul.f32 %v322, %v377
  %443 = vrot.lane.b32.xlu0 %v391, 127
  %v444 = vpop.permute.xlu0 %443
  %445 = vrot.lane.b32.xlu0 %v392, 127
  %v446 = vpop.permute.xlu0 %445
  %447 = vrot.lane.b32.xlu0 %v393, 127
  %v448 = vpop.permute.xlu0 %447
  %449 = vrot.lane.b32.xlu0 %v394, 127
  %v450 = vpop.permute.xlu0 %449
  %451 = vrot.lane.b32.xlu0 %v395, 127
  %v452 = vpop.permute.xlu0 %451
  %453 = vrot.lane.b32.xlu0 %v396, 127
  %v454 = vpop.permute.xlu0 %453
  %455 = vrot.lane.b32.xlu0 %v397, 127
  %v456 = vpop.permute.xlu0 %455
  %457 = vrot.lane.b32.xlu0 %v398, 127
  %v458 = vpop.permute.xlu0 %457
  %459 = vrot.lane.b32.xlu0 %v399, 127
  %v460 = vpop.permute.xlu0 %459
  %461 = vrot.lane.b32.xlu0 %v400, 127
  %v462 = vpop.permute.xlu0 %461
  %463 = vrot.lane.b32.xlu0 %v401, 127
  %v464 = vpop.permute.xlu0 %463
  %465 = vrot.lane.b32.xlu0 %v402, 127
  %v466 = vpop.permute.xlu0 %465
  %467 = vrot.lane.b32.xlu0 %v403, 127
  %v468 = vpop.permute.xlu0 %467
  %469 = vrot.lane.b32.xlu0 %v404, 127
  %v470 = vpop.permute.xlu0 %469
  %471 = vrot.lane.b32.xlu0 %v405, 127
  %v472 = vpop.permute.xlu0 %471
  %473 = vrot.lane.b32.xlu0 %v406, 127
  %v474 = vpop.permute.xlu0 %473
  %475 = vrot.lane.b32.xlu0 %v407, 127
  %v476 = vpop.permute.xlu0 %475
  %477 = vrot.lane.b32.xlu0 %v408, 127
  %v478 = vpop.permute.xlu0 %477
  %479 = vrot.lane.b32.xlu0 %v409, 127
  %v480 = vpop.permute.xlu0 %479
  %481 = vrot.lane.b32.xlu0 %v410, 127
  %v482 = vpop.permute.xlu0 %481
  %483 = vrot.lane.b32.xlu0 %v411, 127
  %v484 = vpop.permute.xlu0 %483
  %485 = vrot.lane.b32.xlu0 %v412, 127
  %v486 = vpop.permute.xlu0 %485
  %487 = vrot.lane.b32.xlu0 %v413, 127
  %v488 = vpop.permute.xlu0 %487
  %489 = vrot.lane.b32.xlu0 %v414, 127
  %v490 = vpop.permute.xlu0 %489
  %491 = vrot.lane.b32.xlu0 %v415, 127
  %v492 = vpop.permute.xlu0 %491
  %493 = vrot.lane.b32.xlu0 %v416, 127
  %v494 = vpop.permute.xlu0 %493
  %vm495 = vcmask 1039360
  %v496 = vsel %vm495, %v444, %v446
  %v497 = vsel %vm495, %v446, %v448
  %v498 = vsel %vm495, %v448, %v450
  %v499 = vsel %vm495, %v450, %v452
  %v500 = vsel %vm495, %v452, %v454
  %v501 = vsel %vm495, %v454, %v456
  %v502 = vsel %vm495, %v456, %v458
  %v503 = vsel %vm495, %v458, %v460
  %v504 = vsel %vm495, %v460, %v462
  %v505 = vsel %vm495, %v462, %v464
  %v506 = vsel %vm495, %v464, %v466
  %v507 = vsel %vm495, %v466, %v468
  %v508 = vsel %vm495, %v470, %v472
  %v509 = vsel %vm495, %v472, %v474
  %v510 = vsel %vm495, %v474, %v476
  %v511 = vsel %vm495, %v476, %v478
  %v512 = vsel %vm495, %v478, %v480
  %v513 = vsel %vm495, %v480, %v482
  %v514 = vsel %vm495, %v482, %v484
  %v515 = vsel %vm495, %v484, %v486
  %v516 = vsel %vm495, %v486, %v488
  %v517 = vsel %vm495, %v488, %v490
  %v518 = vsel %vm495, %v490, %v492
  %v519 = vsel %vm495, %v492, %v494
  %v546 = vadd.f32 %v266, %v496
  %v547 = vadd.f32 %v267, %v497
  %v548 = vadd.f32 %v268, %v498
  %v549 = vadd.f32 %v269, %v499
  %v550 = vadd.f32 %v270, %v500
  %v551 = vadd.f32 %v271, %v501
  %v552 = vadd.f32 %v272, %v502
  %v553 = vadd.f32 %v273, %v503
  %v554 = vadd.f32 %v274, %v504
  %v555 = vadd.f32 %v275, %v505
  %v556 = vadd.f32 %v276, %v506
  %v557 = vadd.f32 %v277, %v507
  %v558 = vadd.f32 %v278, %v468
  %v559 = vadd.f32 %v279, %v508
  %v560 = vadd.f32 %v280, %v509
  %v561 = vadd.f32 %v281, %v510
  %v562 = vadd.f32 %v282, %v511
  %v563 = vadd.f32 %v283, %v512
  %v564 = vadd.f32 %v284, %v513
  %v565 = vadd.f32 %v285, %v514
  %v566 = vadd.f32 %v286, %v515
  %v567 = vadd.f32 %v287, %v516
  %v568 = vadd.f32 %v288, %v517
  %v569 = vadd.f32 %v289, %v518
  %v570 = vadd.f32 %v290, %v519
  %v571 = vadd.f32 %v291, %v494
  %s572 = scalar_lea.vmem %s2, 32
  %v573 = vld [vmem:[%s572] sm:$0xff]
  %v574 = vld [vmem:[%s572 + $0x8] sm:$0xff]
  %v575 = vmul.f32 %v63, %v133
  %v576 = vmul.f32 %v64, %v134
  %579 = vrot.lane.b32.xlu0 %v575, 2
  %v580 = vpop.permute.xlu0 %579
  %581 = vrot.lane.b32.xlu0 %v576, 2
  %v582 = vpop.permute.xlu0 %581
  %v583 = vrot.slane %v580, 7
  %v584 = vrot.slane %v582, 7
  %vm585 = vcmask 15360
  %v586 = vsel %vm585, %v583, %v580
  %v587 = vsel %vm307, %v583, %v584
  %v588 = vsel %vm585, %v587, %v582
  %v591 = vmul.f32 %v155, %v586
  %v592 = vmul.f32 %v156, %v588
  %594 = vset.pattern.permute.xlu0 0
  %595 = vperm.xlu0 %594, %v573
  %v596 = vpop.permute.xlu0 %595
  %599 = vset.pattern.permute.xlu0 0
  %600 = vperm.xlu0 %599, %v574
  %v601 = vpop.permute.xlu0 %600
  %v605 = vlaneseq
  %v606 = vshrl.u32 %v605, 7
  %v607 = vsub.s32 0, %v606
  %v608 = vrot.slane %v591, %v607
  %v609 = vlaneseq
  %v610 = vshrl.u32 %v609, 7
  %v611 = vsub.s32 1, %v610
  %v612 = vrot.slane %v591, %v611
  %v613 = vlaneseq
  %v614 = vshrl.u32 %v613, 7
  %v615 = vsub.s32 2, %v614
  %v616 = vrot.slane %v591, %v615
  %v617 = vlaneseq
  %v618 = vshrl.u32 %v617, 7
  %v619 = vsub.s32 3, %v618
  %v620 = vrot.slane %v591, %v619
  %v621 = vlaneseq
  %v622 = vshrl.u32 %v621, 7
  %v623 = vsub.s32 4, %v622
  %v624 = vrot.slane %v591, %v623
  %v625 = vlaneseq
  %v626 = vshrl.u32 %v625, 7
  %v627 = vsub.s32 5, %v626
  %v628 = vrot.slane %v591, %v627
  %v629 = vlaneseq
  %v630 = vshrl.u32 %v629, 7
  %v631 = vsub.s32 6, %v630
  %v632 = vrot.slane %v591, %v631
  %v633 = vlaneseq
  %v634 = vshrl.u32 %v633, 7
  %v635 = vsub.s32 7, %v634
  %v636 = vrot.slane %v591, %v635
  %v637 = vlaneseq
  %v638 = vshrl.u32 %v637, 7
  %v639 = vsub.s32 0, %v638
  %v640 = vrot.slane %v592, %v639
  %v641 = vlaneseq
  %v642 = vshrl.u32 %v641, 7
  %v643 = vsub.s32 1, %v642
  %v644 = vrot.slane %v592, %v643
  %v645 = vlaneseq
  %v646 = vshrl.u32 %v645, 7
  %v647 = vsub.s32 2, %v646
  %v648 = vrot.slane %v592, %v647
  %v649 = vlaneseq
  %v650 = vshrl.u32 %v649, 7
  %v651 = vsub.s32 3, %v650
  %v652 = vrot.slane %v592, %v651
  %v653 = vlaneseq
  %v654 = vshrl.u32 %v653, 7
  %v655 = vsub.s32 4, %v654
  %v656 = vrot.slane %v592, %v655
  %v670 = vmul.f32 %v596, %v608
  %v671 = vmul.f32 %v596, %v612
  %v672 = vmul.f32 %v596, %v616
  %v673 = vmul.f32 %v596, %v620
  %v674 = vmul.f32 %v596, %v624
  %v675 = vmul.f32 %v596, %v628
  %v676 = vmul.f32 %v596, %v632
  %v677 = vmul.f32 %v596, %v636
  %v678 = vmul.f32 %v596, %v640
  %v679 = vmul.f32 %v596, %v644
  %v680 = vmul.f32 %v596, %v648
  %v681 = vmul.f32 %v596, %v652
  %v682 = vmul.f32 %v596, %v656
  %v683 = vmul.f32 %v601, %v608
  %v684 = vmul.f32 %v601, %v612
  %v685 = vmul.f32 %v601, %v616
  %v686 = vmul.f32 %v601, %v620
  %v687 = vmul.f32 %v601, %v624
  %v688 = vmul.f32 %v601, %v628
  %v689 = vmul.f32 %v601, %v632
  %v690 = vmul.f32 %v601, %v636
  %v691 = vmul.f32 %v601, %v640
  %v692 = vmul.f32 %v601, %v644
  %v693 = vmul.f32 %v601, %v648
  %v694 = vmul.f32 %v601, %v652
  %v695 = vmul.f32 %v601, %v656
  %722 = vrot.lane.b32.xlu0 %v670, 126
  %v723 = vpop.permute.xlu0 %722
  %724 = vrot.lane.b32.xlu0 %v671, 126
  %v725 = vpop.permute.xlu0 %724
  %726 = vrot.lane.b32.xlu0 %v672, 126
  %v727 = vpop.permute.xlu0 %726
  %728 = vrot.lane.b32.xlu0 %v673, 126
  %v729 = vpop.permute.xlu0 %728
  %730 = vrot.lane.b32.xlu0 %v674, 126
  %v731 = vpop.permute.xlu0 %730
  %732 = vrot.lane.b32.xlu0 %v675, 126
  %v733 = vpop.permute.xlu0 %732
  %734 = vrot.lane.b32.xlu0 %v676, 126
  %v735 = vpop.permute.xlu0 %734
  %736 = vrot.lane.b32.xlu0 %v677, 126
  %v737 = vpop.permute.xlu0 %736
  %738 = vrot.lane.b32.xlu0 %v678, 126
  %v739 = vpop.permute.xlu0 %738
  %740 = vrot.lane.b32.xlu0 %v679, 126
  %v741 = vpop.permute.xlu0 %740
  %742 = vrot.lane.b32.xlu0 %v680, 126
  %v743 = vpop.permute.xlu0 %742
  %744 = vrot.lane.b32.xlu0 %v681, 126
  %v745 = vpop.permute.xlu0 %744
  %746 = vrot.lane.b32.xlu0 %v682, 126
  %v747 = vpop.permute.xlu0 %746
  %748 = vrot.lane.b32.xlu0 %v683, 126
  %v749 = vpop.permute.xlu0 %748
  %750 = vrot.lane.b32.xlu0 %v684, 126
  %v751 = vpop.permute.xlu0 %750
  %752 = vrot.lane.b32.xlu0 %v685, 126
  %v753 = vpop.permute.xlu0 %752
  %754 = vrot.lane.b32.xlu0 %v686, 126
  %v755 = vpop.permute.xlu0 %754
  %756 = vrot.lane.b32.xlu0 %v687, 126
  %v757 = vpop.permute.xlu0 %756
  %758 = vrot.lane.b32.xlu0 %v688, 126
  %v759 = vpop.permute.xlu0 %758
  %760 = vrot.lane.b32.xlu0 %v689, 126
  %v761 = vpop.permute.xlu0 %760
  %762 = vrot.lane.b32.xlu0 %v690, 126
  %v763 = vpop.permute.xlu0 %762
  %764 = vrot.lane.b32.xlu0 %v691, 126
  %v765 = vpop.permute.xlu0 %764
  %766 = vrot.lane.b32.xlu0 %v692, 126
  %v767 = vpop.permute.xlu0 %766
  %768 = vrot.lane.b32.xlu0 %v693, 126
  %v769 = vpop.permute.xlu0 %768
  %770 = vrot.lane.b32.xlu0 %v694, 126
  %v771 = vpop.permute.xlu0 %770
  %772 = vrot.lane.b32.xlu0 %v695, 126
  %v773 = vpop.permute.xlu0 %772
  %vm774 = vcmask 1031168
  %v775 = vsel %vm774, %v723, %v725
  %v776 = vsel %vm774, %v725, %v727
  %v777 = vsel %vm774, %v727, %v729
  %v778 = vsel %vm774, %v729, %v731
  %v779 = vsel %vm774, %v731, %v733
  %v780 = vsel %vm774, %v733, %v735
  %v781 = vsel %vm774, %v735, %v737
  %v782 = vsel %vm774, %v737, %v739
  %v783 = vsel %vm774, %v739, %v741
  %v784 = vsel %vm774, %v741, %v743
  %v785 = vsel %vm774, %v743, %v745
  %v786 = vsel %vm774, %v745, %v747
  %v787 = vsel %vm774, %v749, %v751
  %v788 = vsel %vm774, %v751, %v753
  %v789 = vsel %vm774, %v753, %v755
  %v790 = vsel %vm774, %v755, %v757
  %v791 = vsel %vm774, %v757, %v759
  %v792 = vsel %vm774, %v759, %v761
  %v793 = vsel %vm774, %v761, %v763
  %v794 = vsel %vm774, %v763, %v765
  %v795 = vsel %vm774, %v765, %v767
  %v796 = vsel %vm774, %v767, %v769
  %v797 = vsel %vm774, %v769, %v771
  %v798 = vsel %vm774, %v771, %v773
  %v825 = vadd.f32 %v546, %v775
  %v826 = vadd.f32 %v547, %v776
  %v827 = vadd.f32 %v548, %v777
  %v828 = vadd.f32 %v549, %v778
  %v829 = vadd.f32 %v550, %v779
  %v830 = vadd.f32 %v551, %v780
  %v831 = vadd.f32 %v552, %v781
  %v832 = vadd.f32 %v553, %v782
  %v833 = vadd.f32 %v554, %v783
  %v834 = vadd.f32 %v555, %v784
  %v835 = vadd.f32 %v556, %v785
  %v836 = vadd.f32 %v557, %v786
  %v837 = vadd.f32 %v558, %v747
  %v838 = vadd.f32 %v559, %v787
  %v839 = vadd.f32 %v560, %v788
  %v840 = vadd.f32 %v561, %v789
  %v841 = vadd.f32 %v562, %v790
  %v842 = vadd.f32 %v563, %v791
  %v843 = vadd.f32 %v564, %v792
  %v844 = vadd.f32 %v565, %v793
  %v845 = vadd.f32 %v566, %v794
  %v846 = vadd.f32 %v567, %v795
  %v847 = vadd.f32 %v568, %v796
  %v848 = vadd.f32 %v569, %v797
  %v849 = vadd.f32 %v570, %v798
  %v850 = vadd.f32 %v571, %v773
  %s851 = scalar_lea.vmem %s2, 48
  %v852 = vld [vmem:[%s851] sm:$0xff]
  %v853 = vld [vmem:[%s851 + $0x8] sm:$0xff]
  %v854 = vmul.f32 %v63, %v143
  %v855 = vmul.f32 %v64, %v144
  %858 = vrot.lane.b32.xlu0 %v854, 3
  %v859 = vpop.permute.xlu0 %858
  %860 = vrot.lane.b32.xlu0 %v855, 3
  %v861 = vpop.permute.xlu0 %860
  %v862 = vrot.slane %v859, 7
  %v863 = vrot.slane %v861, 7
  %vm864 = vcmask 23552
  %v865 = vsel %vm864, %v862, %v859
  %v866 = vsel %vm307, %v862, %v863
  %v867 = vsel %vm864, %v866, %v861
  %v870 = vmul.f32 %v155, %v865
  %v871 = vmul.f32 %v156, %v867
  %873 = vset.pattern.permute.xlu0 0
  %874 = vperm.xlu0 %873, %v852
  %v875 = vpop.permute.xlu0 %874
  %878 = vset.pattern.permute.xlu0 0
  %879 = vperm.xlu0 %878, %v853
  %v880 = vpop.permute.xlu0 %879
  %v884 = vlaneseq
  %v885 = vshrl.u32 %v884, 7
  %v886 = vsub.s32 0, %v885
  %v887 = vrot.slane %v870, %v886
  %v888 = vlaneseq
  %v889 = vshrl.u32 %v888, 7
  %v890 = vsub.s32 1, %v889
  %v891 = vrot.slane %v870, %v890
  %v892 = vlaneseq
  %v893 = vshrl.u32 %v892, 7
  %v894 = vsub.s32 2, %v893
  %v895 = vrot.slane %v870, %v894
  %v896 = vlaneseq
  %v897 = vshrl.u32 %v896, 7
  %v898 = vsub.s32 3, %v897
  %v899 = vrot.slane %v870, %v898
  %v900 = vlaneseq
  %v901 = vshrl.u32 %v900, 7
  %v902 = vsub.s32 4, %v901
  %v903 = vrot.slane %v870, %v902
  %v904 = vlaneseq
  %v905 = vshrl.u32 %v904, 7
  %v906 = vsub.s32 5, %v905
  %v907 = vrot.slane %v870, %v906
  %v908 = vlaneseq
  %v909 = vshrl.u32 %v908, 7
  %v910 = vsub.s32 6, %v909
  %v911 = vrot.slane %v870, %v910
  %v912 = vlaneseq
  %v913 = vshrl.u32 %v912, 7
  %v914 = vsub.s32 7, %v913
  %v915 = vrot.slane %v870, %v914
  %v916 = vlaneseq
  %v917 = vshrl.u32 %v916, 7
  %v918 = vsub.s32 0, %v917
  %v919 = vrot.slane %v871, %v918
  %v920 = vlaneseq
  %v921 = vshrl.u32 %v920, 7
  %v922 = vsub.s32 1, %v921
  %v923 = vrot.slane %v871, %v922
  %v924 = vlaneseq
  %v925 = vshrl.u32 %v924, 7
  %v926 = vsub.s32 2, %v925
  %v927 = vrot.slane %v871, %v926
  %v928 = vlaneseq
  %v929 = vshrl.u32 %v928, 7
  %v930 = vsub.s32 3, %v929
  %v931 = vrot.slane %v871, %v930
  %v932 = vlaneseq
  %v933 = vshrl.u32 %v932, 7
  %v934 = vsub.s32 4, %v933
  %v935 = vrot.slane %v871, %v934
  %v949 = vmul.f32 %v875, %v887
  %v950 = vmul.f32 %v875, %v891
  %v951 = vmul.f32 %v875, %v895
  %v952 = vmul.f32 %v875, %v899
  %v953 = vmul.f32 %v875, %v903
  %v954 = vmul.f32 %v875, %v907
  %v955 = vmul.f32 %v875, %v911
  %v956 = vmul.f32 %v875, %v915
  %v957 = vmul.f32 %v875, %v919
  %v958 = vmul.f32 %v875, %v923
  %v959 = vmul.f32 %v875, %v927
  %v960 = vmul.f32 %v875, %v931
  %v961 = vmul.f32 %v875, %v935
  %v962 = vmul.f32 %v880, %v887
  %v963 = vmul.f32 %v880, %v891
  %v964 = vmul.f32 %v880, %v895
  %v965 = vmul.f32 %v880, %v899
  %v966 = vmul.f32 %v880, %v903
  %v967 = vmul.f32 %v880, %v907
  %v968 = vmul.f32 %v880, %v911
  %v969 = vmul.f32 %v880, %v915
  %v970 = vmul.f32 %v880, %v919
  %v971 = vmul.f32 %v880, %v923
  %v972 = vmul.f32 %v880, %v927
  %v973 = vmul.f32 %v880, %v931
  %v974 = vmul.f32 %v880, %v935
  %1001 = vrot.lane.b32.xlu0 %v949, 125
  %v1002 = vpop.permute.xlu0 %1001
  %1003 = vrot.lane.b32.xlu0 %v950, 125
  %v1004 = vpop.permute.xlu0 %1003
  %1005 = vrot.lane.b32.xlu0 %v951, 125
  %v1006 = vpop.permute.xlu0 %1005
  %1007 = vrot.lane.b32.xlu0 %v952, 125
  %v1008 = vpop.permute.xlu0 %1007
  %1009 = vrot.lane.b32.xlu0 %v953, 125
  %v1010 = vpop.permute.xlu0 %1009
  %1011 = vrot.lane.b32.xlu0 %v954, 125
  %v1012 = vpop.permute.xlu0 %1011
  %1013 = vrot.lane.b32.xlu0 %v955, 125
  %v1014 = vpop.permute.xlu0 %1013
  %1015 = vrot.lane.b32.xlu0 %v956, 125
  %v1016 = vpop.permute.xlu0 %1015
  %1017 = vrot.lane.b32.xlu0 %v957, 125
  %v1018 = vpop.permute.xlu0 %1017
  %1019 = vrot.lane.b32.xlu0 %v958, 125
  %v1020 = vpop.permute.xlu0 %1019
  %1021 = vrot.lane.b32.xlu0 %v959, 125
  %v1022 = vpop.permute.xlu0 %1021
  %1023 = vrot.lane.b32.xlu0 %v960, 125
  %v1024 = vpop.permute.xlu0 %1023
  %1025 = vrot.lane.b32.xlu0 %v961, 125
  %v1026 = vpop.permute.xlu0 %1025
  %1027 = vrot.lane.b32.xlu0 %v962, 125
  %v1028 = vpop.permute.xlu0 %1027
  %1029 = vrot.lane.b32.xlu0 %v963, 125
  %v1030 = vpop.permute.xlu0 %1029
  %1031 = vrot.lane.b32.xlu0 %v964, 125
  %v1032 = vpop.permute.xlu0 %1031
  %1033 = vrot.lane.b32.xlu0 %v965, 125
  %v1034 = vpop.permute.xlu0 %1033
  %1035 = vrot.lane.b32.xlu0 %v966, 125
  %v1036 = vpop.permute.xlu0 %1035
  %1037 = vrot.lane.b32.xlu0 %v967, 125
  %v1038 = vpop.permute.xlu0 %1037
  %1039 = vrot.lane.b32.xlu0 %v968, 125
  %v1040 = vpop.permute.xlu0 %1039
  %1041 = vrot.lane.b32.xlu0 %v969, 125
  %v1042 = vpop.permute.xlu0 %1041
  %1043 = vrot.lane.b32.xlu0 %v970, 125
  %v1044 = vpop.permute.xlu0 %1043
  %1045 = vrot.lane.b32.xlu0 %v971, 125
  %v1046 = vpop.permute.xlu0 %1045
  %1047 = vrot.lane.b32.xlu0 %v972, 125
  %v1048 = vpop.permute.xlu0 %1047
  %1049 = vrot.lane.b32.xlu0 %v973, 125
  %v1050 = vpop.permute.xlu0 %1049
  %1051 = vrot.lane.b32.xlu0 %v974, 125
  %v1052 = vpop.permute.xlu0 %1051
  %vm1053 = vcmask 1022976
  %v1054 = vsel %vm1053, %v1002, %v1004
  %v1055 = vsel %vm1053, %v1004, %v1006
  %v1056 = vsel %vm1053, %v1006, %v1008
  %v1057 = vsel %vm1053, %v1008, %v1010
  %v1058 = vsel %vm1053, %v1010, %v1012
  %v1059 = vsel %vm1053, %v1012, %v1014
  %v1060 = vsel %vm1053, %v1014, %v1016
  %v1061 = vsel %vm1053, %v1016, %v1018
  %v1062 = vsel %vm1053, %v1018, %v1020
  %v1063 = vsel %vm1053, %v1020, %v1022
  %v1064 = vsel %vm1053, %v1022, %v1024
  %v1065 = vsel %vm1053, %v1024, %v1026
  %v1066 = vsel %vm1053, %v1028, %v1030
  %v1067 = vsel %vm1053, %v1030, %v1032
  %v1068 = vsel %vm1053, %v1032, %v1034
  %v1069 = vsel %vm1053, %v1034, %v1036
  %v1070 = vsel %vm1053, %v1036, %v1038
  %v1071 = vsel %vm1053, %v1038, %v1040
  %v1072 = vsel %vm1053, %v1040, %v1042
  %v1073 = vsel %vm1053, %v1042, %v1044
  %v1074 = vsel %vm1053, %v1044, %v1046
  %v1075 = vsel %vm1053, %v1046, %v1048
  %v1076 = vsel %vm1053, %v1048, %v1050
  %v1077 = vsel %vm1053, %v1050, %v1052
  %v1104 = vadd.f32 %v825, %v1054
  %v1105 = vadd.f32 %v826, %v1055
  %v1106 = vadd.f32 %v827, %v1056
  %v1107 = vadd.f32 %v828, %v1057
  %v1108 = vadd.f32 %v829, %v1058
  %v1109 = vadd.f32 %v830, %v1059
  %v1110 = vadd.f32 %v831, %v1060
  %v1111 = vadd.f32 %v832, %v1061
  %v1112 = vadd.f32 %v833, %v1062
  %v1113 = vadd.f32 %v834, %v1063
  %v1114 = vadd.f32 %v835, %v1064
  %v1115 = vadd.f32 %v836, %v1065
  %v1116 = vadd.f32 %v837, %v1026
  %v1117 = vadd.f32 %v838, %v1066
  %v1118 = vadd.f32 %v839, %v1067
  %v1119 = vadd.f32 %v840, %v1068
  %v1120 = vadd.f32 %v841, %v1069
  %v1121 = vadd.f32 %v842, %v1070
  %v1122 = vadd.f32 %v843, %v1071
  %v1123 = vadd.f32 %v844, %v1072
  %v1124 = vadd.f32 %v845, %v1073
  %v1125 = vadd.f32 %v846, %v1074
  %v1126 = vadd.f32 %v847, %v1075
  %v1127 = vadd.f32 %v848, %v1076
  %v1128 = vadd.f32 %v849, %v1077
  %v1129 = vadd.f32 %v850, %v1052
  %s1130 = scalar_lea.vmem %s2, 64
  %v1131 = vld [vmem:[%s1130] sm:$0xff]
  %v1132 = vld [vmem:[%s1130 + $0x8] sm:$0xff]
  %v1133 = vmul.f32 %v63, %v153
  %v1134 = vmul.f32 %v64, %v154
  %1137 = vrot.lane.b32.xlu0 %v1133, 4
  %v1138 = vpop.permute.xlu0 %1137
  %1139 = vrot.lane.b32.xlu0 %v1134, 4
  %v1140 = vpop.permute.xlu0 %1139
  %v1141 = vrot.slane %v1138, 7
  %v1142 = vrot.slane %v1140, 7
  %vm1143 = vcmask 31744
  %v1144 = vsel %vm1143, %v1141, %v1138
  %v1145 = vsel %vm307, %v1141, %v1142
  %v1146 = vsel %vm1143, %v1145, %v1140
  %v1149 = vmul.f32 %v155, %v1144
  %v1150 = vmul.f32 %v156, %v1146
  %1152 = vset.pattern.permute.xlu0 0
  %1153 = vperm.xlu0 %1152, %v1131
  %v1154 = vpop.permute.xlu0 %1153
  %1157 = vset.pattern.permute.xlu0 0
  %1158 = vperm.xlu0 %1157, %v1132
  %v1159 = vpop.permute.xlu0 %1158
  %v1163 = vlaneseq
  %v1164 = vshrl.u32 %v1163, 7
  %v1165 = vsub.s32 0, %v1164
  %v1166 = vrot.slane %v1149, %v1165
  %v1167 = vlaneseq
  %v1168 = vshrl.u32 %v1167, 7
  %v1169 = vsub.s32 1, %v1168
  %v1170 = vrot.slane %v1149, %v1169
  %v1171 = vlaneseq
  %v1172 = vshrl.u32 %v1171, 7
  %v1173 = vsub.s32 2, %v1172
  %v1174 = vrot.slane %v1149, %v1173
  %v1175 = vlaneseq
  %v1176 = vshrl.u32 %v1175, 7
  %v1177 = vsub.s32 3, %v1176
  %v1178 = vrot.slane %v1149, %v1177
  %v1179 = vlaneseq
  %v1180 = vshrl.u32 %v1179, 7
  %v1181 = vsub.s32 4, %v1180
  %v1182 = vrot.slane %v1149, %v1181
  %v1183 = vlaneseq
  %v1184 = vshrl.u32 %v1183, 7
  %v1185 = vsub.s32 5, %v1184
  %v1186 = vrot.slane %v1149, %v1185
  %v1187 = vlaneseq
  %v1188 = vshrl.u32 %v1187, 7
  %v1189 = vsub.s32 6, %v1188
  %v1190 = vrot.slane %v1149, %v1189
  %v1191 = vlaneseq
  %v1192 = vshrl.u32 %v1191, 7
  %v1193 = vsub.s32 7, %v1192
  %v1194 = vrot.slane %v1149, %v1193
  %v1195 = vlaneseq
  %v1196 = vshrl.u32 %v1195, 7
  %v1197 = vsub.s32 0, %v1196
  %v1198 = vrot.slane %v1150, %v1197
  %v1199 = vlaneseq
  %v1200 = vshrl.u32 %v1199, 7
  %v1201 = vsub.s32 1, %v1200
  %v1202 = vrot.slane %v1150, %v1201
  %v1203 = vlaneseq
  %v1204 = vshrl.u32 %v1203, 7
  %v1205 = vsub.s32 2, %v1204
  %v1206 = vrot.slane %v1150, %v1205
  %v1207 = vlaneseq
  %v1208 = vshrl.u32 %v1207, 7
  %v1209 = vsub.s32 3, %v1208
  %v1210 = vrot.slane %v1150, %v1209
  %v1211 = vlaneseq
  %v1212 = vshrl.u32 %v1211, 7
  %v1213 = vsub.s32 4, %v1212
  %v1214 = vrot.slane %v1150, %v1213
  %v1228 = vmul.f32 %v1154, %v1166
  %v1229 = vmul.f32 %v1154, %v1170
  %v1230 = vmul.f32 %v1154, %v1174
  %v1231 = vmul.f32 %v1154, %v1178
  %v1232 = vmul.f32 %v1154, %v1182
  %v1233 = vmul.f32 %v1154, %v1186
  %v1234 = vmul.f32 %v1154, %v1190
  %v1235 = vmul.f32 %v1154, %v1194
  %v1236 = vmul.f32 %v1154, %v1198
  %v1237 = vmul.f32 %v1154, %v1202
  %v1238 = vmul.f32 %v1154, %v1206
  %v1239 = vmul.f32 %v1154, %v1210
  %v1240 = vmul.f32 %v1154, %v1214
  %v1241 = vmul.f32 %v1159, %v1166
  %v1242 = vmul.f32 %v1159, %v1170
  %v1243 = vmul.f32 %v1159, %v1174
  %v1244 = vmul.f32 %v1159, %v1178
  %v1245 = vmul.f32 %v1159, %v1182
  %v1246 = vmul.f32 %v1159, %v1186
  %v1247 = vmul.f32 %v1159, %v1190
  %v1248 = vmul.f32 %v1159, %v1194
  %v1249 = vmul.f32 %v1159, %v1198
  %v1250 = vmul.f32 %v1159, %v1202
  %v1251 = vmul.f32 %v1159, %v1206
  %v1252 = vmul.f32 %v1159, %v1210
  %v1253 = vmul.f32 %v1159, %v1214
  %1280 = vrot.lane.b32.xlu0 %v1228, 124
  %v1281 = vpop.permute.xlu0 %1280
  %1282 = vrot.lane.b32.xlu0 %v1229, 124
  %v1283 = vpop.permute.xlu0 %1282
  %1284 = vrot.lane.b32.xlu0 %v1230, 124
  %v1285 = vpop.permute.xlu0 %1284
  %1286 = vrot.lane.b32.xlu0 %v1231, 124
  %v1287 = vpop.permute.xlu0 %1286
  %1288 = vrot.lane.b32.xlu0 %v1232, 124
  %v1289 = vpop.permute.xlu0 %1288
  %1290 = vrot.lane.b32.xlu0 %v1233, 124
  %v1291 = vpop.permute.xlu0 %1290
  %1292 = vrot.lane.b32.xlu0 %v1234, 124
  %v1293 = vpop.permute.xlu0 %1292
  %1294 = vrot.lane.b32.xlu0 %v1235, 124
  %v1295 = vpop.permute.xlu0 %1294
  %1296 = vrot.lane.b32.xlu0 %v1236, 124
  %v1297 = vpop.permute.xlu0 %1296
  %1298 = vrot.lane.b32.xlu0 %v1237, 124
  %v1299 = vpop.permute.xlu0 %1298
  %1300 = vrot.lane.b32.xlu0 %v1238, 124
  %v1301 = vpop.permute.xlu0 %1300
  %1302 = vrot.lane.b32.xlu0 %v1239, 124
  %v1303 = vpop.permute.xlu0 %1302
  %1304 = vrot.lane.b32.xlu0 %v1240, 124
  %v1305 = vpop.permute.xlu0 %1304
  %1306 = vrot.lane.b32.xlu0 %v1241, 124
  %v1307 = vpop.permute.xlu0 %1306
  %1308 = vrot.lane.b32.xlu0 %v1242, 124
  %v1309 = vpop.permute.xlu0 %1308
  %1310 = vrot.lane.b32.xlu0 %v1243, 124
  %v1311 = vpop.permute.xlu0 %1310
  %1312 = vrot.lane.b32.xlu0 %v1244, 124
  %v1313 = vpop.permute.xlu0 %1312
  %1314 = vrot.lane.b32.xlu0 %v1245, 124
  %v1315 = vpop.permute.xlu0 %1314
  %1316 = vrot.lane.b32.xlu0 %v1246, 124
  %v1317 = vpop.permute.xlu0 %1316
  %1318 = vrot.lane.b32.xlu0 %v1247, 124
  %v1319 = vpop.permute.xlu0 %1318
  %1320 = vrot.lane.b32.xlu0 %v1248, 124
  %v1321 = vpop.permute.xlu0 %1320
  %1322 = vrot.lane.b32.xlu0 %v1249, 124
  %v1323 = vpop.permute.xlu0 %1322
  %1324 = vrot.lane.b32.xlu0 %v1250, 124
  %v1325 = vpop.permute.xlu0 %1324
  %1326 = vrot.lane.b32.xlu0 %v1251, 124
  %v1327 = vpop.permute.xlu0 %1326
  %1328 = vrot.lane.b32.xlu0 %v1252, 124
  %v1329 = vpop.permute.xlu0 %1328
  %1330 = vrot.lane.b32.xlu0 %v1253, 124
  %v1331 = vpop.permute.xlu0 %1330
  %vm1332 = vcmask 1014784
  %v1333 = vsel %vm1332, %v1281, %v1283
  %v1334 = vsel %vm1332, %v1283, %v1285
  %v1335 = vsel %vm1332, %v1285, %v1287
  %v1336 = vsel %vm1332, %v1287, %v1289
  %v1337 = vsel %vm1332, %v1289, %v1291
  %v1338 = vsel %vm1332, %v1291, %v1293
  %v1339 = vsel %vm1332, %v1293, %v1295
  %v1340 = vsel %vm1332, %v1295, %v1297
  %v1341 = vsel %vm1332, %v1297, %v1299
  %v1342 = vsel %vm1332, %v1299, %v1301
  %v1343 = vsel %vm1332, %v1301, %v1303
  %v1344 = vsel %vm1332, %v1303, %v1305
  %v1345 = vsel %vm1332, %v1307, %v1309
  %v1346 = vsel %vm1332, %v1309, %v1311
  %v1347 = vsel %vm1332, %v1311, %v1313
  %v1348 = vsel %vm1332, %v1313, %v1315
  %v1349 = vsel %vm1332, %v1315, %v1317
  %v1350 = vsel %vm1332, %v1317, %v1319
  %v1351 = vsel %vm1332, %v1319, %v1321
  %v1352 = vsel %vm1332, %v1321, %v1323
  %v1353 = vsel %vm1332, %v1323, %v1325
  %v1354 = vsel %vm1332, %v1325, %v1327
  %v1355 = vsel %vm1332, %v1327, %v1329
  %v1356 = vsel %vm1332, %v1329, %v1331
  %v1383 = vadd.f32 %v1104, %v1333
  %v1384 = vadd.f32 %v1105, %v1334
  %v1385 = vadd.f32 %v1106, %v1335
  %v1386 = vadd.f32 %v1107, %v1336
  %v1387 = vadd.f32 %v1108, %v1337
  %v1388 = vadd.f32 %v1109, %v1338
  %v1389 = vadd.f32 %v1110, %v1339
  %v1390 = vadd.f32 %v1111, %v1340
  %v1391 = vadd.f32 %v1112, %v1341
  %v1392 = vadd.f32 %v1113, %v1342
  %v1393 = vadd.f32 %v1114, %v1343
  %v1394 = vadd.f32 %v1115, %v1344
  %v1395 = vadd.f32 %v1116, %v1305
  %v1396 = vadd.f32 %v1117, %v1345
  %v1397 = vadd.f32 %v1118, %v1346
  %v1398 = vadd.f32 %v1119, %v1347
  %v1399 = vadd.f32 %v1120, %v1348
  %v1400 = vadd.f32 %v1121, %v1349
  %v1401 = vadd.f32 %v1122, %v1350
  %v1402 = vadd.f32 %v1123, %v1351
  %v1403 = vadd.f32 %v1124, %v1352
  %v1404 = vadd.f32 %v1125, %v1353
  %v1405 = vadd.f32 %v1126, %v1354
  %v1406 = vadd.f32 %v1127, %v1355
  %v1407 = vadd.f32 %v1128, %v1356
  %v1408 = vadd.f32 %v1129, %v1331
  %s1409 = scalar_lea.vmem %s2, 80
  %v1410 = vld [vmem:[%s1409] sm:$0xff]
  %v1411 = vld [vmem:[%s1409 + $0x8] sm:$0xff]
  %v1412 = vmul.f32 %v73, %v113
  %v1413 = vmul.f32 %v74, %v114
  %1416 = vrot.lane.b32.xlu0 %v1412, 28
  %v1417 = vpop.permute.xlu0 %1416
  %1418 = vrot.lane.b32.xlu0 %v1413, 28
  %v1419 = vpop.permute.xlu0 %1418
  %v1420 = vrot.slane %v1417, 7
  %v1421 = vrot.slane %v1419, 7
  %vm1422 = vcmask 228352
  %v1423 = vsel %vm1422, %v1420, %v1417
  %v1424 = vsel %vm307, %v1420, %v1421
  %v1425 = vsel %vm1422, %v1424, %v1419
  %v1428 = vmul.f32 %v155, %v1423
  %v1429 = vmul.f32 %v156, %v1425
  %1431 = vset.pattern.permute.xlu0 0
  %1432 = vperm.xlu0 %1431, %v1410
  %v1433 = vpop.permute.xlu0 %1432
  %1436 = vset.pattern.permute.xlu0 0
  %1437 = vperm.xlu0 %1436, %v1411
  %v1438 = vpop.permute.xlu0 %1437
  %v1442 = vlaneseq
  %v1443 = vshrl.u32 %v1442, 7
  %v1444 = vsub.s32 0, %v1443
  %v1445 = vrot.slane %v1428, %v1444
  %v1446 = vlaneseq
  %v1447 = vshrl.u32 %v1446, 7
  %v1448 = vsub.s32 1, %v1447
  %v1449 = vrot.slane %v1428, %v1448
  %v1450 = vlaneseq
  %v1451 = vshrl.u32 %v1450, 7
  %v1452 = vsub.s32 2, %v1451
  %v1453 = vrot.slane %v1428, %v1452
  %v1454 = vlaneseq
  %v1455 = vshrl.u32 %v1454, 7
  %v1456 = vsub.s32 3, %v1455
  %v1457 = vrot.slane %v1428, %v1456
  %v1458 = vlaneseq
  %v1459 = vshrl.u32 %v1458, 7
  %v1460 = vsub.s32 4, %v1459
  %v1461 = vrot.slane %v1428, %v1460
  %v1462 = vlaneseq
  %v1463 = vshrl.u32 %v1462, 7
  %v1464 = vsub.s32 5, %v1463
  %v1465 = vrot.slane %v1428, %v1464
  %v1466 = vlaneseq
  %v1467 = vshrl.u32 %v1466, 7
  %v1468 = vsub.s32 6, %v1467
  %v1469 = vrot.slane %v1428, %v1468
  %v1470 = vlaneseq
  %v1471 = vshrl.u32 %v1470, 7
  %v1472 = vsub.s32 7, %v1471
  %v1473 = vrot.slane %v1428, %v1472
  %v1474 = vlaneseq
  %v1475 = vshrl.u32 %v1474, 7
  %v1476 = vsub.s32 0, %v1475
  %v1477 = vrot.slane %v1429, %v1476
  %v1478 = vlaneseq
  %v1479 = vshrl.u32 %v1478, 7
  %v1480 = vsub.s32 1, %v1479
  %v1481 = vrot.slane %v1429, %v1480
  %v1482 = vlaneseq
  %v1483 = vshrl.u32 %v1482, 7
  %v1484 = vsub.s32 2, %v1483
  %v1485 = vrot.slane %v1429, %v1484
  %v1486 = vlaneseq
  %v1487 = vshrl.u32 %v1486, 7
  %v1488 = vsub.s32 3, %v1487
  %v1489 = vrot.slane %v1429, %v1488
  %v1490 = vlaneseq
  %v1491 = vshrl.u32 %v1490, 7
  %v1492 = vsub.s32 4, %v1491
  %v1493 = vrot.slane %v1429, %v1492
  %v1507 = vmul.f32 %v1433, %v1445
  %v1508 = vmul.f32 %v1433, %v1449
  %v1509 = vmul.f32 %v1433, %v1453
  %v1510 = vmul.f32 %v1433, %v1457
  %v1511 = vmul.f32 %v1433, %v1461
  %v1512 = vmul.f32 %v1433, %v1465
  %v1513 = vmul.f32 %v1433, %v1469
  %v1514 = vmul.f32 %v1433, %v1473
  %v1515 = vmul.f32 %v1433, %v1477
  %v1516 = vmul.f32 %v1433, %v1481
  %v1517 = vmul.f32 %v1433, %v1485
  %v1518 = vmul.f32 %v1433, %v1489
  %v1519 = vmul.f32 %v1433, %v1493
  %v1520 = vmul.f32 %v1438, %v1445
  %v1521 = vmul.f32 %v1438, %v1449
  %v1522 = vmul.f32 %v1438, %v1453
  %v1523 = vmul.f32 %v1438, %v1457
  %v1524 = vmul.f32 %v1438, %v1461
  %v1525 = vmul.f32 %v1438, %v1465
  %v1526 = vmul.f32 %v1438, %v1469
  %v1527 = vmul.f32 %v1438, %v1473
  %v1528 = vmul.f32 %v1438, %v1477
  %v1529 = vmul.f32 %v1438, %v1481
  %v1530 = vmul.f32 %v1438, %v1485
  %v1531 = vmul.f32 %v1438, %v1489
  %v1532 = vmul.f32 %v1438, %v1493
  %1559 = vrot.lane.b32.xlu0 %v1507, 100
  %v1560 = vpop.permute.xlu0 %1559
  %1561 = vrot.lane.b32.xlu0 %v1508, 100
  %v1562 = vpop.permute.xlu0 %1561
  %1563 = vrot.lane.b32.xlu0 %v1509, 100
  %v1564 = vpop.permute.xlu0 %1563
  %1565 = vrot.lane.b32.xlu0 %v1510, 100
  %v1566 = vpop.permute.xlu0 %1565
  %1567 = vrot.lane.b32.xlu0 %v1511, 100
  %v1568 = vpop.permute.xlu0 %1567
  %1569 = vrot.lane.b32.xlu0 %v1512, 100
  %v1570 = vpop.permute.xlu0 %1569
  %1571 = vrot.lane.b32.xlu0 %v1513, 100
  %v1572 = vpop.permute.xlu0 %1571
  %1573 = vrot.lane.b32.xlu0 %v1514, 100
  %v1574 = vpop.permute.xlu0 %1573
  %1575 = vrot.lane.b32.xlu0 %v1515, 100
  %v1576 = vpop.permute.xlu0 %1575
  %1577 = vrot.lane.b32.xlu0 %v1516, 100
  %v1578 = vpop.permute.xlu0 %1577
  %1579 = vrot.lane.b32.xlu0 %v1517, 100
  %v1580 = vpop.permute.xlu0 %1579
  %1581 = vrot.lane.b32.xlu0 %v1518, 100
  %v1582 = vpop.permute.xlu0 %1581
  %1583 = vrot.lane.b32.xlu0 %v1519, 100
  %v1584 = vpop.permute.xlu0 %1583
  %1585 = vrot.lane.b32.xlu0 %v1520, 100
  %v1586 = vpop.permute.xlu0 %1585
  %1587 = vrot.lane.b32.xlu0 %v1521, 100
  %v1588 = vpop.permute.xlu0 %1587
  %1589 = vrot.lane.b32.xlu0 %v1522, 100
  %v1590 = vpop.permute.xlu0 %1589
  %1591 = vrot.lane.b32.xlu0 %v1523, 100
  %v1592 = vpop.permute.xlu0 %1591
  %1593 = vrot.lane.b32.xlu0 %v1524, 100
  %v1594 = vpop.permute.xlu0 %1593
  %1595 = vrot.lane.b32.xlu0 %v1525, 100
  %v1596 = vpop.permute.xlu0 %1595
  %1597 = vrot.lane.b32.xlu0 %v1526, 100
  %v1598 = vpop.permute.xlu0 %1597
  %1599 = vrot.lane.b32.xlu0 %v1527, 100
  %v1600 = vpop.permute.xlu0 %1599
  %1601 = vrot.lane.b32.xlu0 %v1528, 100
  %v1602 = vpop.permute.xlu0 %1601
  %1603 = vrot.lane.b32.xlu0 %v1529, 100
  %v1604 = vpop.permute.xlu0 %1603
  %1605 = vrot.lane.b32.xlu0 %v1530, 100
  %v1606 = vpop.permute.xlu0 %1605
  %1607 = vrot.lane.b32.xlu0 %v1531, 100
  %v1608 = vpop.permute.xlu0 %1607
  %1609 = vrot.lane.b32.xlu0 %v1532, 100
  %v1610 = vpop.permute.xlu0 %1609
  %vm1611 = vcmask 818176
  %v1612 = vsel %vm1611, %v1560, %v1562
  %v1613 = vsel %vm1611, %v1562, %v1564
  %v1614 = vsel %vm1611, %v1564, %v1566
  %v1615 = vsel %vm1611, %v1566, %v1568
  %v1616 = vsel %vm1611, %v1568, %v1570
  %v1617 = vsel %vm1611, %v1570, %v1572
  %v1618 = vsel %vm1611, %v1572, %v1574
  %v1619 = vsel %vm1611, %v1574, %v1576
  %v1620 = vsel %vm1611, %v1576, %v1578
  %v1621 = vsel %vm1611, %v1578, %v1580
  %v1622 = vsel %vm1611, %v1580, %v1582
  %v1623 = vsel %vm1611, %v1582, %v1584
  %v1624 = vsel %vm1611, %v1586, %v1588
  %v1625 = vsel %vm1611, %v1588, %v1590
  %v1626 = vsel %vm1611, %v1590, %v1592
  %v1627 = vsel %vm1611, %v1592, %v1594
  %v1628 = vsel %vm1611, %v1594, %v1596
  %v1629 = vsel %vm1611, %v1596, %v1598
  %v1630 = vsel %vm1611, %v1598, %v1600
  %v1631 = vsel %vm1611, %v1600, %v1602
  %v1632 = vsel %vm1611, %v1602, %v1604
  %v1633 = vsel %vm1611, %v1604, %v1606
  %v1634 = vsel %vm1611, %v1606, %v1608
  %v1635 = vsel %vm1611, %v1608, %v1610
  %v1662 = vadd.f32 %v1383, %v1612
  %v1663 = vadd.f32 %v1384, %v1613
  %v1664 = vadd.f32 %v1385, %v1614
  %v1665 = vadd.f32 %v1386, %v1615
  %v1666 = vadd.f32 %v1387, %v1616
  %v1667 = vadd.f32 %v1388, %v1617
  %v1668 = vadd.f32 %v1389, %v1618
  %v1669 = vadd.f32 %v1390, %v1619
  %v1670 = vadd.f32 %v1391, %v1620
  %v1671 = vadd.f32 %v1392, %v1621
  %v1672 = vadd.f32 %v1393, %v1622
  %v1673 = vadd.f32 %v1394, %v1623
  %v1674 = vadd.f32 %v1395, %v1584
  %v1675 = vadd.f32 %v1396, %v1624
  %v1676 = vadd.f32 %v1397, %v1625
  %v1677 = vadd.f32 %v1398, %v1626
  %v1678 = vadd.f32 %v1399, %v1627
  %v1679 = vadd.f32 %v1400, %v1628
  %v1680 = vadd.f32 %v1401, %v1629
  %v1681 = vadd.f32 %v1402, %v1630
  %v1682 = vadd.f32 %v1403, %v1631
  %v1683 = vadd.f32 %v1404, %v1632
  %v1684 = vadd.f32 %v1405, %v1633
  %v1685 = vadd.f32 %v1406, %v1634
  %v1686 = vadd.f32 %v1407, %v1635
  %v1687 = vadd.f32 %v1408, %v1610
  %s1688 = scalar_lea.vmem %s2, 96
  %v1689 = vld [vmem:[%s1688] sm:$0xff]
  %v1690 = vld [vmem:[%s1688 + $0x8] sm:$0xff]
  %v1691 = vmul.f32 %v73, %v123
  %v1692 = vmul.f32 %v74, %v124
  %1695 = vrot.lane.b32.xlu0 %v1691, 29
  %v1696 = vpop.permute.xlu0 %1695
  %1697 = vrot.lane.b32.xlu0 %v1692, 29
  %v1698 = vpop.permute.xlu0 %1697
  %v1699 = vrot.slane %v1696, 7
  %v1700 = vrot.slane %v1698, 7
  %vm1701 = vcmask 236544
  %v1702 = vsel %vm1701, %v1699, %v1696
  %v1703 = vsel %vm307, %v1699, %v1700
  %v1704 = vsel %vm1701, %v1703, %v1698
  %v1707 = vmul.f32 %v155, %v1702
  %v1708 = vmul.f32 %v156, %v1704
  %1710 = vset.pattern.permute.xlu0 0
  %1711 = vperm.xlu0 %1710, %v1689
  %v1712 = vpop.permute.xlu0 %1711
  %1715 = vset.pattern.permute.xlu0 0
  %1716 = vperm.xlu0 %1715, %v1690
  %v1717 = vpop.permute.xlu0 %1716
  %v1721 = vlaneseq
  %v1722 = vshrl.u32 %v1721, 7
  %v1723 = vsub.s32 0, %v1722
  %v1724 = vrot.slane %v1707, %v1723
  %v1725 = vlaneseq
  %v1726 = vshrl.u32 %v1725, 7
  %v1727 = vsub.s32 1, %v1726
  %v1728 = vrot.slane %v1707, %v1727
  %v1729 = vlaneseq
  %v1730 = vshrl.u32 %v1729, 7
  %v1731 = vsub.s32 2, %v1730
  %v1732 = vrot.slane %v1707, %v1731
  %v1733 = vlaneseq
  %v1734 = vshrl.u32 %v1733, 7
  %v1735 = vsub.s32 3, %v1734
  %v1736 = vrot.slane %v1707, %v1735
  %v1737 = vlaneseq
  %v1738 = vshrl.u32 %v1737, 7
  %v1739 = vsub.s32 4, %v1738
  %v1740 = vrot.slane %v1707, %v1739
  %v1741 = vlaneseq
  %v1742 = vshrl.u32 %v1741, 7
  %v1743 = vsub.s32 5, %v1742
  %v1744 = vrot.slane %v1707, %v1743
  %v1745 = vlaneseq
  %v1746 = vshrl.u32 %v1745, 7
  %v1747 = vsub.s32 6, %v1746
  %v1748 = vrot.slane %v1707, %v1747
  %v1749 = vlaneseq
  %v1750 = vshrl.u32 %v1749, 7
  %v1751 = vsub.s32 7, %v1750
  %v1752 = vrot.slane %v1707, %v1751
  %v1753 = vlaneseq
  %v1754 = vshrl.u32 %v1753, 7
  %v1755 = vsub.s32 0, %v1754
  %v1756 = vrot.slane %v1708, %v1755
  %v1757 = vlaneseq
  %v1758 = vshrl.u32 %v1757, 7
  %v1759 = vsub.s32 1, %v1758
  %v1760 = vrot.slane %v1708, %v1759
  %v1761 = vlaneseq
  %v1762 = vshrl.u32 %v1761, 7
  %v1763 = vsub.s32 2, %v1762
  %v1764 = vrot.slane %v1708, %v1763
  %v1765 = vlaneseq
  %v1766 = vshrl.u32 %v1765, 7
  %v1767 = vsub.s32 3, %v1766
  %v1768 = vrot.slane %v1708, %v1767
  %v1769 = vlaneseq
  %v1770 = vshrl.u32 %v1769, 7
  %v1771 = vsub.s32 4, %v1770
  %v1772 = vrot.slane %v1708, %v1771
  %v1786 = vmul.f32 %v1712, %v1724
  %v1787 = vmul.f32 %v1712, %v1728
  %v1788 = vmul.f32 %v1712, %v1732
  %v1789 = vmul.f32 %v1712, %v1736
  %v1790 = vmul.f32 %v1712, %v1740
  %v1791 = vmul.f32 %v1712, %v1744
  %v1792 = vmul.f32 %v1712, %v1748
  %v1793 = vmul.f32 %v1712, %v1752
  %v1794 = vmul.f32 %v1712, %v1756
  %v1795 = vmul.f32 %v1712, %v1760
  %v1796 = vmul.f32 %v1712, %v1764
  %v1797 = vmul.f32 %v1712, %v1768
  %v1798 = vmul.f32 %v1712, %v1772
  %v1799 = vmul.f32 %v1717, %v1724
  %v1800 = vmul.f32 %v1717, %v1728
  %v1801 = vmul.f32 %v1717, %v1732
  %v1802 = vmul.f32 %v1717, %v1736
  %v1803 = vmul.f32 %v1717, %v1740
  %v1804 = vmul.f32 %v1717, %v1744
  %v1805 = vmul.f32 %v1717, %v1748
  %v1806 = vmul.f32 %v1717, %v1752
  %v1807 = vmul.f32 %v1717, %v1756
  %v1808 = vmul.f32 %v1717, %v1760
  %v1809 = vmul.f32 %v1717, %v1764
  %v1810 = vmul.f32 %v1717, %v1768
  %v1811 = vmul.f32 %v1717, %v1772
  %1838 = vrot.lane.b32.xlu0 %v1786, 99
  %v1839 = vpop.permute.xlu0 %1838
  %1840 = vrot.lane.b32.xlu0 %v1787, 99
  %v1841 = vpop.permute.xlu0 %1840
  %1842 = vrot.lane.b32.xlu0 %v1788, 99
  %v1843 = vpop.permute.xlu0 %1842
  %1844 = vrot.lane.b32.xlu0 %v1789, 99
  %v1845 = vpop.permute.xlu0 %1844
  %1846 = vrot.lane.b32.xlu0 %v1790, 99
  %v1847 = vpop.permute.xlu0 %1846
  %1848 = vrot.lane.b32.xlu0 %v1791, 99
  %v1849 = vpop.permute.xlu0 %1848
  %1850 = vrot.lane.b32.xlu0 %v1792, 99
  %v1851 = vpop.permute.xlu0 %1850
  %1852 = vrot.lane.b32.xlu0 %v1793, 99
  %v1853 = vpop.permute.xlu0 %1852
  %1854 = vrot.lane.b32.xlu0 %v1794, 99
  %v1855 = vpop.permute.xlu0 %1854
  %1856 = vrot.lane.b32.xlu0 %v1795, 99
  %v1857 = vpop.permute.xlu0 %1856
  %1858 = vrot.lane.b32.xlu0 %v1796, 99
  %v1859 = vpop.permute.xlu0 %1858
  %1860 = vrot.lane.b32.xlu0 %v1797, 99
  %v1861 = vpop.permute.xlu0 %1860
  %1862 = vrot.lane.b32.xlu0 %v1798, 99
  %v1863 = vpop.permute.xlu0 %1862
  %1864 = vrot.lane.b32.xlu0 %v1799, 99
  %v1865 = vpop.permute.xlu0 %1864
  %1866 = vrot.lane.b32.xlu0 %v1800, 99
  %v1867 = vpop.permute.xlu0 %1866
  %1868 = vrot.lane.b32.xlu0 %v1801, 99
  %v1869 = vpop.permute.xlu0 %1868
  %1870 = vrot.lane.b32.xlu0 %v1802, 99
  %v1871 = vpop.permute.xlu0 %1870
  %1872 = vrot.lane.b32.xlu0 %v1803, 99
  %v1873 = vpop.permute.xlu0 %1872
  %1874 = vrot.lane.b32.xlu0 %v1804, 99
  %v1875 = vpop.permute.xlu0 %1874
  %1876 = vrot.lane.b32.xlu0 %v1805, 99
  %v1877 = vpop.permute.xlu0 %1876
  %1878 = vrot.lane.b32.xlu0 %v1806, 99
  %v1879 = vpop.permute.xlu0 %1878
  %1880 = vrot.lane.b32.xlu0 %v1807, 99
  %v1881 = vpop.permute.xlu0 %1880
  %1882 = vrot.lane.b32.xlu0 %v1808, 99
  %v1883 = vpop.permute.xlu0 %1882
  %1884 = vrot.lane.b32.xlu0 %v1809, 99
  %v1885 = vpop.permute.xlu0 %1884
  %1886 = vrot.lane.b32.xlu0 %v1810, 99
  %v1887 = vpop.permute.xlu0 %1886
  %1888 = vrot.lane.b32.xlu0 %v1811, 99
  %v1889 = vpop.permute.xlu0 %1888
  %vm1890 = vcmask 809984
  %v1891 = vsel %vm1890, %v1839, %v1841
  %v1892 = vsel %vm1890, %v1841, %v1843
  %v1893 = vsel %vm1890, %v1843, %v1845
  %v1894 = vsel %vm1890, %v1845, %v1847
  %v1895 = vsel %vm1890, %v1847, %v1849
  %v1896 = vsel %vm1890, %v1849, %v1851
  %v1897 = vsel %vm1890, %v1851, %v1853
  %v1898 = vsel %vm1890, %v1853, %v1855
  %v1899 = vsel %vm1890, %v1855, %v1857
  %v1900 = vsel %vm1890, %v1857, %v1859
  %v1901 = vsel %vm1890, %v1859, %v1861
  %v1902 = vsel %vm1890, %v1861, %v1863
  %v1903 = vsel %vm1890, %v1865, %v1867
  %v1904 = vsel %vm1890, %v1867, %v1869
  %v1905 = vsel %vm1890, %v1869, %v1871
  %v1906 = vsel %vm1890, %v1871, %v1873
  %v1907 = vsel %vm1890, %v1873, %v1875
  %v1908 = vsel %vm1890, %v1875, %v1877
  %v1909 = vsel %vm1890, %v1877, %v1879
  %v1910 = vsel %vm1890, %v1879, %v1881
  %v1911 = vsel %vm1890, %v1881, %v1883
  %v1912 = vsel %vm1890, %v1883, %v1885
  %v1913 = vsel %vm1890, %v1885, %v1887
  %v1914 = vsel %vm1890, %v1887, %v1889
  %v1941 = vadd.f32 %v1662, %v1891
  %v1942 = vadd.f32 %v1663, %v1892
  %v1943 = vadd.f32 %v1664, %v1893
  %v1944 = vadd.f32 %v1665, %v1894
  %v1945 = vadd.f32 %v1666, %v1895
  %v1946 = vadd.f32 %v1667, %v1896
  %v1947 = vadd.f32 %v1668, %v1897
  %v1948 = vadd.f32 %v1669, %v1898
  %v1949 = vadd.f32 %v1670, %v1899
  %v1950 = vadd.f32 %v1671, %v1900
  %v1951 = vadd.f32 %v1672, %v1901
  %v1952 = vadd.f32 %v1673, %v1902
  %v1953 = vadd.f32 %v1674, %v1863
  %v1954 = vadd.f32 %v1675, %v1903
  %v1955 = vadd.f32 %v1676, %v1904
  %v1956 = vadd.f32 %v1677, %v1905
  %v1957 = vadd.f32 %v1678, %v1906
  %v1958 = vadd.f32 %v1679, %v1907
  %v1959 = vadd.f32 %v1680, %v1908
  %v1960 = vadd.f32 %v1681, %v1909
  %v1961 = vadd.f32 %v1682, %v1910
  %v1962 = vadd.f32 %v1683, %v1911
  %v1963 = vadd.f32 %v1684, %v1912
  %v1964 = vadd.f32 %v1685, %v1913
  %v1965 = vadd.f32 %v1686, %v1914
  %v1966 = vadd.f32 %v1687, %v1889
  %s1967 = scalar_lea.vmem %s2, 112
  %v1968 = vld [vmem:[%s1967] sm:$0xff]
  %v1969 = vld [vmem:[%s1967 + $0x8] sm:$0xff]
  %v1970 = vmul.f32 %v73, %v133
  %v1971 = vmul.f32 %v74, %v134
  %1974 = vrot.lane.b32.xlu0 %v1970, 30
  %v1975 = vpop.permute.xlu0 %1974
  %1976 = vrot.lane.b32.xlu0 %v1971, 30
  %v1977 = vpop.permute.xlu0 %1976
  %v1978 = vrot.slane %v1975, 7
  %v1979 = vrot.slane %v1977, 7
  %vm1980 = vcmask 244736
  %v1981 = vsel %vm1980, %v1978, %v1975
  %v1982 = vsel %vm307, %v1978, %v1979
  %v1983 = vsel %vm1980, %v1982, %v1977
  %v1986 = vmul.f32 %v155, %v1981
  %v1987 = vmul.f32 %v156, %v1983
  %1989 = vset.pattern.permute.xlu0 0
  %1990 = vperm.xlu0 %1989, %v1968
  %v1991 = vpop.permute.xlu0 %1990
  %1994 = vset.pattern.permute.xlu0 0
  %1995 = vperm.xlu0 %1994, %v1969
  %v1996 = vpop.permute.xlu0 %1995
  %v2000 = vlaneseq
  %v2001 = vshrl.u32 %v2000, 7
  %v2002 = vsub.s32 0, %v2001
  %v2003 = vrot.slane %v1986, %v2002
  %v2004 = vlaneseq
  %v2005 = vshrl.u32 %v2004, 7
  %v2006 = vsub.s32 1, %v2005
  %v2007 = vrot.slane %v1986, %v2006
  %v2008 = vlaneseq
  %v2009 = vshrl.u32 %v2008, 7
  %v2010 = vsub.s32 2, %v2009
  %v2011 = vrot.slane %v1986, %v2010
  %v2012 = vlaneseq
  %v2013 = vshrl.u32 %v2012, 7
  %v2014 = vsub.s32 3, %v2013
  %v2015 = vrot.slane %v1986, %v2014
  %v2016 = vlaneseq
  %v2017 = vshrl.u32 %v2016, 7
  %v2018 = vsub.s32 4, %v2017
  %v2019 = vrot.slane %v1986, %v2018
  %v2020 = vlaneseq
  %v2021 = vshrl.u32 %v2020, 7
  %v2022 = vsub.s32 5, %v2021
  %v2023 = vrot.slane %v1986, %v2022
  %v2024 = vlaneseq
  %v2025 = vshrl.u32 %v2024, 7
  %v2026 = vsub.s32 6, %v2025
  %v2027 = vrot.slane %v1986, %v2026
  %v2028 = vlaneseq
  %v2029 = vshrl.u32 %v2028, 7
  %v2030 = vsub.s32 7, %v2029
  %v2031 = vrot.slane %v1986, %v2030
  %v2032 = vlaneseq
  %v2033 = vshrl.u32 %v2032, 7
  %v2034 = vsub.s32 0, %v2033
  %v2035 = vrot.slane %v1987, %v2034
  %v2036 = vlaneseq
  %v2037 = vshrl.u32 %v2036, 7
  %v2038 = vsub.s32 1, %v2037
  %v2039 = vrot.slane %v1987, %v2038
  %v2040 = vlaneseq
  %v2041 = vshrl.u32 %v2040, 7
  %v2042 = vsub.s32 2, %v2041
  %v2043 = vrot.slane %v1987, %v2042
  %v2044 = vlaneseq
  %v2045 = vshrl.u32 %v2044, 7
  %v2046 = vsub.s32 3, %v2045
  %v2047 = vrot.slane %v1987, %v2046
  %v2048 = vlaneseq
  %v2049 = vshrl.u32 %v2048, 7
  %v2050 = vsub.s32 4, %v2049
  %v2051 = vrot.slane %v1987, %v2050
  %v2065 = vmul.f32 %v1991, %v2003
  %v2066 = vmul.f32 %v1991, %v2007
  %v2067 = vmul.f32 %v1991, %v2011
  %v2068 = vmul.f32 %v1991, %v2015
  %v2069 = vmul.f32 %v1991, %v2019
  %v2070 = vmul.f32 %v1991, %v2023
  %v2071 = vmul.f32 %v1991, %v2027
  %v2072 = vmul.f32 %v1991, %v2031
  %v2073 = vmul.f32 %v1991, %v2035
  %v2074 = vmul.f32 %v1991, %v2039
  %v2075 = vmul.f32 %v1991, %v2043
  %v2076 = vmul.f32 %v1991, %v2047
  %v2077 = vmul.f32 %v1991, %v2051
  %v2078 = vmul.f32 %v1996, %v2003
  %v2079 = vmul.f32 %v1996, %v2007
  %v2080 = vmul.f32 %v1996, %v2011
  %v2081 = vmul.f32 %v1996, %v2015
  %v2082 = vmul.f32 %v1996, %v2019
  %v2083 = vmul.f32 %v1996, %v2023
  %v2084 = vmul.f32 %v1996, %v2027
  %v2085 = vmul.f32 %v1996, %v2031
  %v2086 = vmul.f32 %v1996, %v2035
  %v2087 = vmul.f32 %v1996, %v2039
  %v2088 = vmul.f32 %v1996, %v2043
  %v2089 = vmul.f32 %v1996, %v2047
  %v2090 = vmul.f32 %v1996, %v2051
  %2117 = vrot.lane.b32.xlu0 %v2065, 98
  %v2118 = vpop.permute.xlu0 %2117
  %2119 = vrot.lane.b32.xlu0 %v2066, 98
  %v2120 = vpop.permute.xlu0 %2119
  %2121 = vrot.lane.b32.xlu0 %v2067, 98
  %v2122 = vpop.permute.xlu0 %2121
  %2123 = vrot.lane.b32.xlu0 %v2068, 98
  %v2124 = vpop.permute.xlu0 %2123
  %2125 = vrot.lane.b32.xlu0 %v2069, 98
  %v2126 = vpop.permute.xlu0 %2125
  %2127 = vrot.lane.b32.xlu0 %v2070, 98
  %v2128 = vpop.permute.xlu0 %2127
  %2129 = vrot.lane.b32.xlu0 %v2071, 98
  %v2130 = vpop.permute.xlu0 %2129
  %2131 = vrot.lane.b32.xlu0 %v2072, 98
  %v2132 = vpop.permute.xlu0 %2131
  %2133 = vrot.lane.b32.xlu0 %v2073, 98
  %v2134 = vpop.permute.xlu0 %2133
  %2135 = vrot.lane.b32.xlu0 %v2074, 98
  %v2136 = vpop.permute.xlu0 %2135
  %2137 = vrot.lane.b32.xlu0 %v2075, 98
  %v2138 = vpop.permute.xlu0 %2137
  %2139 = vrot.lane.b32.xlu0 %v2076, 98
  %v2140 = vpop.permute.xlu0 %2139
  %2141 = vrot.lane.b32.xlu0 %v2077, 98
  %v2142 = vpop.permute.xlu0 %2141
  %2143 = vrot.lane.b32.xlu0 %v2078, 98
  %v2144 = vpop.permute.xlu0 %2143
  %2145 = vrot.lane.b32.xlu0 %v2079, 98
  %v2146 = vpop.permute.xlu0 %2145
  %2147 = vrot.lane.b32.xlu0 %v2080, 98
  %v2148 = vpop.permute.xlu0 %2147
  %2149 = vrot.lane.b32.xlu0 %v2081, 98
  %v2150 = vpop.permute.xlu0 %2149
  %2151 = vrot.lane.b32.xlu0 %v2082, 98
  %v2152 = vpop.permute.xlu0 %2151
  %2153 = vrot.lane.b32.xlu0 %v2083, 98
  %v2154 = vpop.permute.xlu0 %2153
  %2155 = vrot.lane.b32.xlu0 %v2084, 98
  %v2156 = vpop.permute.xlu0 %2155
  %2157 = vrot.lane.b32.xlu0 %v2085, 98
  %v2158 = vpop.permute.xlu0 %2157
  %2159 = vrot.lane.b32.xlu0 %v2086, 98
  %v2160 = vpop.permute.xlu0 %2159
  %2161 = vrot.lane.b32.xlu0 %v2087, 98
  %v2162 = vpop.permute.xlu0 %2161
  %2163 = vrot.lane.b32.xlu0 %v2088, 98
  %v2164 = vpop.permute.xlu0 %2163
  %2165 = vrot.lane.b32.xlu0 %v2089, 98
  %v2166 = vpop.permute.xlu0 %2165
  %2167 = vrot.lane.b32.xlu0 %v2090, 98
  %v2168 = vpop.permute.xlu0 %2167
  %vm2169 = vcmask 801792
  %v2170 = vsel %vm2169, %v2118, %v2120
  %v2171 = vsel %vm2169, %v2120, %v2122
  %v2172 = vsel %vm2169, %v2122, %v2124
  %v2173 = vsel %vm2169, %v2124, %v2126
  %v2174 = vsel %vm2169, %v2126, %v2128
  %v2175 = vsel %vm2169, %v2128, %v2130
  %v2176 = vsel %vm2169, %v2130, %v2132
  %v2177 = vsel %vm2169, %v2132, %v2134
  %v2178 = vsel %vm2169, %v2134, %v2136
  %v2179 = vsel %vm2169, %v2136, %v2138
  %v2180 = vsel %vm2169, %v2138, %v2140
  %v2181 = vsel %vm2169, %v2140, %v2142
  %v2182 = vsel %vm2169, %v2144, %v2146
  %v2183 = vsel %vm2169, %v2146, %v2148
  %v2184 = vsel %vm2169, %v2148, %v2150
  %v2185 = vsel %vm2169, %v2150, %v2152
  %v2186 = vsel %vm2169, %v2152, %v2154
  %v2187 = vsel %vm2169, %v2154, %v2156
  %v2188 = vsel %vm2169, %v2156, %v2158
  %v2189 = vsel %vm2169, %v2158, %v2160
  %v2190 = vsel %vm2169, %v2160, %v2162
  %v2191 = vsel %vm2169, %v2162, %v2164
  %v2192 = vsel %vm2169, %v2164, %v2166
  %v2193 = vsel %vm2169, %v2166, %v2168
  %v2220 = vadd.f32 %v1941, %v2170
  %v2221 = vadd.f32 %v1942, %v2171
  %v2222 = vadd.f32 %v1943, %v2172
  %v2223 = vadd.f32 %v1944, %v2173
  %v2224 = vadd.f32 %v1945, %v2174
  %v2225 = vadd.f32 %v1946, %v2175
  %v2226 = vadd.f32 %v1947, %v2176
  %v2227 = vadd.f32 %v1948, %v2177
  %v2228 = vadd.f32 %v1949, %v2178
  %v2229 = vadd.f32 %v1950, %v2179
  %v2230 = vadd.f32 %v1951, %v2180
  %v2231 = vadd.f32 %v1952, %v2181
  %v2232 = vadd.f32 %v1953, %v2142
  %v2233 = vadd.f32 %v1954, %v2182
  %v2234 = vadd.f32 %v1955, %v2183
  %v2235 = vadd.f32 %v1956, %v2184
  %v2236 = vadd.f32 %v1957, %v2185
  %v2237 = vadd.f32 %v1958, %v2186
  %v2238 = vadd.f32 %v1959, %v2187
  %v2239 = vadd.f32 %v1960, %v2188
  %v2240 = vadd.f32 %v1961, %v2189
  %v2241 = vadd.f32 %v1962, %v2190
  %v2242 = vadd.f32 %v1963, %v2191
  %v2243 = vadd.f32 %v1964, %v2192
  %v2244 = vadd.f32 %v1965, %v2193
  %v2245 = vadd.f32 %v1966, %v2168
  %s2246 = scalar_lea.vmem %s2, 128
  %v2247 = vld [vmem:[%s2246] sm:$0xff]
  %v2248 = vld [vmem:[%s2246 + $0x8] sm:$0xff]
  %v2249 = vmul.f32 %v73, %v143
  %v2250 = vmul.f32 %v74, %v144
  %2253 = vrot.lane.b32.xlu0 %v2249, 31
  %v2254 = vpop.permute.xlu0 %2253
  %2255 = vrot.lane.b32.xlu0 %v2250, 31
  %v2256 = vpop.permute.xlu0 %2255
  %v2257 = vrot.slane %v2254, 7
  %v2258 = vrot.slane %v2256, 7
  %vm2259 = vcmask 252928
  %v2260 = vsel %vm2259, %v2257, %v2254
  %v2261 = vsel %vm307, %v2257, %v2258
  %v2262 = vsel %vm2259, %v2261, %v2256
  %v2265 = vmul.f32 %v155, %v2260
  %v2266 = vmul.f32 %v156, %v2262
  %2268 = vset.pattern.permute.xlu0 0
  %2269 = vperm.xlu0 %2268, %v2247
  %v2270 = vpop.permute.xlu0 %2269
  %2273 = vset.pattern.permute.xlu0 0
  %2274 = vperm.xlu0 %2273, %v2248
  %v2275 = vpop.permute.xlu0 %2274
  %v2279 = vlaneseq
  %v2280 = vshrl.u32 %v2279, 7
  %v2281 = vsub.s32 0, %v2280
  %v2282 = vrot.slane %v2265, %v2281
  %v2283 = vlaneseq
  %v2284 = vshrl.u32 %v2283, 7
  %v2285 = vsub.s32 1, %v2284
  %v2286 = vrot.slane %v2265, %v2285
  %v2287 = vlaneseq
  %v2288 = vshrl.u32 %v2287, 7
  %v2289 = vsub.s32 2, %v2288
  %v2290 = vrot.slane %v2265, %v2289
  %v2291 = vlaneseq
  %v2292 = vshrl.u32 %v2291, 7
  %v2293 = vsub.s32 3, %v2292
  %v2294 = vrot.slane %v2265, %v2293
  %v2295 = vlaneseq
  %v2296 = vshrl.u32 %v2295, 7
  %v2297 = vsub.s32 4, %v2296
  %v2298 = vrot.slane %v2265, %v2297
  %v2299 = vlaneseq
  %v2300 = vshrl.u32 %v2299, 7
  %v2301 = vsub.s32 5, %v2300
  %v2302 = vrot.slane %v2265, %v2301
  %v2303 = vlaneseq
  %v2304 = vshrl.u32 %v2303, 7
  %v2305 = vsub.s32 6, %v2304
  %v2306 = vrot.slane %v2265, %v2305
  %v2307 = vlaneseq
  %v2308 = vshrl.u32 %v2307, 7
  %v2309 = vsub.s32 7, %v2308
  %v2310 = vrot.slane %v2265, %v2309
  %v2311 = vlaneseq
  %v2312 = vshrl.u32 %v2311, 7
  %v2313 = vsub.s32 0, %v2312
  %v2314 = vrot.slane %v2266, %v2313
  %v2315 = vlaneseq
  %v2316 = vshrl.u32 %v2315, 7
  %v2317 = vsub.s32 1, %v2316
  %v2318 = vrot.slane %v2266, %v2317
  %v2319 = vlaneseq
  %v2320 = vshrl.u32 %v2319, 7
  %v2321 = vsub.s32 2, %v2320
  %v2322 = vrot.slane %v2266, %v2321
  %v2323 = vlaneseq
  %v2324 = vshrl.u32 %v2323, 7
  %v2325 = vsub.s32 3, %v2324
  %v2326 = vrot.slane %v2266, %v2325
  %v2327 = vlaneseq
  %v2328 = vshrl.u32 %v2327, 7
  %v2329 = vsub.s32 4, %v2328
  %v2330 = vrot.slane %v2266, %v2329
  %v2344 = vmul.f32 %v2270, %v2282
  %v2345 = vmul.f32 %v2270, %v2286
  %v2346 = vmul.f32 %v2270, %v2290
  %v2347 = vmul.f32 %v2270, %v2294
  %v2348 = vmul.f32 %v2270, %v2298
  %v2349 = vmul.f32 %v2270, %v2302
  %v2350 = vmul.f32 %v2270, %v2306
  %v2351 = vmul.f32 %v2270, %v2310
  %v2352 = vmul.f32 %v2270, %v2314
  %v2353 = vmul.f32 %v2270, %v2318
  %v2354 = vmul.f32 %v2270, %v2322
  %v2355 = vmul.f32 %v2270, %v2326
  %v2356 = vmul.f32 %v2270, %v2330
  %v2357 = vmul.f32 %v2275, %v2282
  %v2358 = vmul.f32 %v2275, %v2286
  %v2359 = vmul.f32 %v2275, %v2290
  %v2360 = vmul.f32 %v2275, %v2294
  %v2361 = vmul.f32 %v2275, %v2298
  %v2362 = vmul.f32 %v2275, %v2302
  %v2363 = vmul.f32 %v2275, %v2306
  %v2364 = vmul.f32 %v2275, %v2310
  %v2365 = vmul.f32 %v2275, %v2314
  %v2366 = vmul.f32 %v2275, %v2318
  %v2367 = vmul.f32 %v2275, %v2322
  %v2368 = vmul.f32 %v2275, %v2326
  %v2369 = vmul.f32 %v2275, %v2330
  %2396 = vrot.lane.b32.xlu0 %v2344, 97
  %v2397 = vpop.permute.xlu0 %2396
  %2398 = vrot.lane.b32.xlu0 %v2345, 97
  %v2399 = vpop.permute.xlu0 %2398
  %2400 = vrot.lane.b32.xlu0 %v2346, 97
  %v2401 = vpop.permute.xlu0 %2400
  %2402 = vrot.lane.b32.xlu0 %v2347, 97
  %v2403 = vpop.permute.xlu0 %2402
  %2404 = vrot.lane.b32.xlu0 %v2348, 97
  %v2405 = vpop.permute.xlu0 %2404
  %2406 = vrot.lane.b32.xlu0 %v2349, 97
  %v2407 = vpop.permute.xlu0 %2406
  %2408 = vrot.lane.b32.xlu0 %v2350, 97
  %v2409 = vpop.permute.xlu0 %2408
  %2410 = vrot.lane.b32.xlu0 %v2351, 97
  %v2411 = vpop.permute.xlu0 %2410
  %2412 = vrot.lane.b32.xlu0 %v2352, 97
  %v2413 = vpop.permute.xlu0 %2412
  %2414 = vrot.lane.b32.xlu0 %v2353, 97
  %v2415 = vpop.permute.xlu0 %2414
  %2416 = vrot.lane.b32.xlu0 %v2354, 97
  %v2417 = vpop.permute.xlu0 %2416
  %2418 = vrot.lane.b32.xlu0 %v2355, 97
  %v2419 = vpop.permute.xlu0 %2418
  %2420 = vrot.lane.b32.xlu0 %v2356, 97
  %v2421 = vpop.permute.xlu0 %2420
  %2422 = vrot.lane.b32.xlu0 %v2357, 97
  %v2423 = vpop.permute.xlu0 %2422
  %2424 = vrot.lane.b32.xlu0 %v2358, 97
  %v2425 = vpop.permute.xlu0 %2424
  %2426 = vrot.lane.b32.xlu0 %v2359, 97
  %v2427 = vpop.permute.xlu0 %2426
  %2428 = vrot.lane.b32.xlu0 %v2360, 97
  %v2429 = vpop.permute.xlu0 %2428
  %2430 = vrot.lane.b32.xlu0 %v2361, 97
  %v2431 = vpop.permute.xlu0 %2430
  %2432 = vrot.lane.b32.xlu0 %v2362, 97
  %v2433 = vpop.permute.xlu0 %2432
  %2434 = vrot.lane.b32.xlu0 %v2363, 97
  %v2435 = vpop.permute.xlu0 %2434
  %2436 = vrot.lane.b32.xlu0 %v2364, 97
  %v2437 = vpop.permute.xlu0 %2436
  %2438 = vrot.lane.b32.xlu0 %v2365, 97
  %v2439 = vpop.permute.xlu0 %2438
  %2440 = vrot.lane.b32.xlu0 %v2366, 97
  %v2441 = vpop.permute.xlu0 %2440
  %2442 = vrot.lane.b32.xlu0 %v2367, 97
  %v2443 = vpop.permute.xlu0 %2442
  %2444 = vrot.lane.b32.xlu0 %v2368, 97
  %v2445 = vpop.permute.xlu0 %2444
  %2446 = vrot.lane.b32.xlu0 %v2369, 97
  %v2447 = vpop.permute.xlu0 %2446
  %vm2448 = vcmask 793600
  %v2449 = vsel %vm2448, %v2397, %v2399
  %v2450 = vsel %vm2448, %v2399, %v2401
  %v2451 = vsel %vm2448, %v2401, %v2403
  %v2452 = vsel %vm2448, %v2403, %v2405
  %v2453 = vsel %vm2448, %v2405, %v2407
  %v2454 = vsel %vm2448, %v2407, %v2409
  %v2455 = vsel %vm2448, %v2409, %v2411
  %v2456 = vsel %vm2448, %v2411, %v2413
  %v2457 = vsel %vm2448, %v2413, %v2415
  %v2458 = vsel %vm2448, %v2415, %v2417
  %v2459 = vsel %vm2448, %v2417, %v2419
  %v2460 = vsel %vm2448, %v2419, %v2421
  %v2461 = vsel %vm2448, %v2423, %v2425
  %v2462 = vsel %vm2448, %v2425, %v2427
  %v2463 = vsel %vm2448, %v2427, %v2429
  %v2464 = vsel %vm2448, %v2429, %v2431
  %v2465 = vsel %vm2448, %v2431, %v2433
  %v2466 = vsel %vm2448, %v2433, %v2435
  %v2467 = vsel %vm2448, %v2435, %v2437
  %v2468 = vsel %vm2448, %v2437, %v2439
  %v2469 = vsel %vm2448, %v2439, %v2441
  %v2470 = vsel %vm2448, %v2441, %v2443
  %v2471 = vsel %vm2448, %v2443, %v2445
  %v2472 = vsel %vm2448, %v2445, %v2447
  %v2499 = vadd.f32 %v2220, %v2449
  %v2500 = vadd.f32 %v2221, %v2450
  %v2501 = vadd.f32 %v2222, %v2451
  %v2502 = vadd.f32 %v2223, %v2452
  %v2503 = vadd.f32 %v2224, %v2453
  %v2504 = vadd.f32 %v2225, %v2454
  %v2505 = vadd.f32 %v2226, %v2455
  %v2506 = vadd.f32 %v2227, %v2456
  %v2507 = vadd.f32 %v2228, %v2457
  %v2508 = vadd.f32 %v2229, %v2458
  %v2509 = vadd.f32 %v2230, %v2459
  %v2510 = vadd.f32 %v2231, %v2460
  %v2511 = vadd.f32 %v2232, %v2421
  %v2512 = vadd.f32 %v2233, %v2461
  %v2513 = vadd.f32 %v2234, %v2462
  %v2514 = vadd.f32 %v2235, %v2463
  %v2515 = vadd.f32 %v2236, %v2464
  %v2516 = vadd.f32 %v2237, %v2465
  %v2517 = vadd.f32 %v2238, %v2466
  %v2518 = vadd.f32 %v2239, %v2467
  %v2519 = vadd.f32 %v2240, %v2468
  %v2520 = vadd.f32 %v2241, %v2469
  %v2521 = vadd.f32 %v2242, %v2470
  %v2522 = vadd.f32 %v2243, %v2471
  %v2523 = vadd.f32 %v2244, %v2472
  %v2524 = vadd.f32 %v2245, %v2447
  %s2525 = scalar_lea.vmem %s2, 144
  %v2526 = vld [vmem:[%s2525] sm:$0xff]
  %v2527 = vld [vmem:[%s2525 + $0x8] sm:$0xff]
  %v2528 = vmul.f32 %v73, %v153
  %v2529 = vmul.f32 %v74, %v154
  %2532 = vrot.lane.b32.xlu0 %v2528, 32
  %v2533 = vpop.permute.xlu0 %2532
  %2534 = vrot.lane.b32.xlu0 %v2529, 32
  %v2535 = vpop.permute.xlu0 %2534
  %v2536 = vrot.slane %v2533, 7
  %v2537 = vrot.slane %v2535, 7
  %vm2538 = vcmask 261120
  %v2539 = vsel %vm2538, %v2536, %v2533
  %v2540 = vsel %vm307, %v2536, %v2537
  %v2541 = vsel %vm2538, %v2540, %v2535
  %v2544 = vmul.f32 %v155, %v2539
  %v2545 = vmul.f32 %v156, %v2541
  %2547 = vset.pattern.permute.xlu0 0
  %2548 = vperm.xlu0 %2547, %v2526
  %v2549 = vpop.permute.xlu0 %2548
  %2552 = vset.pattern.permute.xlu0 0
  %2553 = vperm.xlu0 %2552, %v2527
  %v2554 = vpop.permute.xlu0 %2553
  %v2558 = vlaneseq
  %v2559 = vshrl.u32 %v2558, 7
  %v2560 = vsub.s32 0, %v2559
  %v2561 = vrot.slane %v2544, %v2560
  %v2562 = vlaneseq
  %v2563 = vshrl.u32 %v2562, 7
  %v2564 = vsub.s32 1, %v2563
  %v2565 = vrot.slane %v2544, %v2564
  %v2566 = vlaneseq
  %v2567 = vshrl.u32 %v2566, 7
  %v2568 = vsub.s32 2, %v2567
  %v2569 = vrot.slane %v2544, %v2568
  %v2570 = vlaneseq
  %v2571 = vshrl.u32 %v2570, 7
  %v2572 = vsub.s32 3, %v2571
  %v2573 = vrot.slane %v2544, %v2572
  %v2574 = vlaneseq
  %v2575 = vshrl.u32 %v2574, 7
  %v2576 = vsub.s32 4, %v2575
  %v2577 = vrot.slane %v2544, %v2576
  %v2578 = vlaneseq
  %v2579 = vshrl.u32 %v2578, 7
  %v2580 = vsub.s32 5, %v2579
  %v2581 = vrot.slane %v2544, %v2580
  %v2582 = vlaneseq
  %v2583 = vshrl.u32 %v2582, 7
  %v2584 = vsub.s32 6, %v2583
  %v2585 = vrot.slane %v2544, %v2584
  %v2586 = vlaneseq
  %v2587 = vshrl.u32 %v2586, 7
  %v2588 = vsub.s32 7, %v2587
  %v2589 = vrot.slane %v2544, %v2588
  %v2590 = vlaneseq
  %v2591 = vshrl.u32 %v2590, 7
  %v2592 = vsub.s32 0, %v2591
  %v2593 = vrot.slane %v2545, %v2592
  %v2594 = vlaneseq
  %v2595 = vshrl.u32 %v2594, 7
  %v2596 = vsub.s32 1, %v2595
  %v2597 = vrot.slane %v2545, %v2596
  %v2598 = vlaneseq
  %v2599 = vshrl.u32 %v2598, 7
  %v2600 = vsub.s32 2, %v2599
  %v2601 = vrot.slane %v2545, %v2600
  %v2602 = vlaneseq
  %v2603 = vshrl.u32 %v2602, 7
  %v2604 = vsub.s32 3, %v2603
  %v2605 = vrot.slane %v2545, %v2604
  %v2606 = vlaneseq
  %v2607 = vshrl.u32 %v2606, 7
  %v2608 = vsub.s32 4, %v2607
  %v2609 = vrot.slane %v2545, %v2608
  %v2623 = vmul.f32 %v2549, %v2561
  %v2624 = vmul.f32 %v2549, %v2565
  %v2625 = vmul.f32 %v2549, %v2569
  %v2626 = vmul.f32 %v2549, %v2573
  %v2627 = vmul.f32 %v2549, %v2577
  %v2628 = vmul.f32 %v2549, %v2581
  %v2629 = vmul.f32 %v2549, %v2585
  %v2630 = vmul.f32 %v2549, %v2589
  %v2631 = vmul.f32 %v2549, %v2593
  %v2632 = vmul.f32 %v2549, %v2597
  %v2633 = vmul.f32 %v2549, %v2601
  %v2634 = vmul.f32 %v2549, %v2605
  %v2635 = vmul.f32 %v2549, %v2609
  %v2636 = vmul.f32 %v2554, %v2561
  %v2637 = vmul.f32 %v2554, %v2565
  %v2638 = vmul.f32 %v2554, %v2569
  %v2639 = vmul.f32 %v2554, %v2573
  %v2640 = vmul.f32 %v2554, %v2577
  %v2641 = vmul.f32 %v2554, %v2581
  %v2642 = vmul.f32 %v2554, %v2585
  %v2643 = vmul.f32 %v2554, %v2589
  %v2644 = vmul.f32 %v2554, %v2593
  %v2645 = vmul.f32 %v2554, %v2597
  %v2646 = vmul.f32 %v2554, %v2601
  %v2647 = vmul.f32 %v2554, %v2605
  %v2648 = vmul.f32 %v2554, %v2609
  %2675 = vrot.lane.b32.xlu0 %v2623, 96
  %v2676 = vpop.permute.xlu0 %2675
  %2677 = vrot.lane.b32.xlu0 %v2624, 96
  %v2678 = vpop.permute.xlu0 %2677
  %2679 = vrot.lane.b32.xlu0 %v2625, 96
  %v2680 = vpop.permute.xlu0 %2679
  %2681 = vrot.lane.b32.xlu0 %v2626, 96
  %v2682 = vpop.permute.xlu0 %2681
  %2683 = vrot.lane.b32.xlu0 %v2627, 96
  %v2684 = vpop.permute.xlu0 %2683
  %2685 = vrot.lane.b32.xlu0 %v2628, 96
  %v2686 = vpop.permute.xlu0 %2685
  %2687 = vrot.lane.b32.xlu0 %v2629, 96
  %v2688 = vpop.permute.xlu0 %2687
  %2689 = vrot.lane.b32.xlu0 %v2630, 96
  %v2690 = vpop.permute.xlu0 %2689
  %2691 = vrot.lane.b32.xlu0 %v2631, 96
  %v2692 = vpop.permute.xlu0 %2691
  %2693 = vrot.lane.b32.xlu0 %v2632, 96
  %v2694 = vpop.permute.xlu0 %2693
  %2695 = vrot.lane.b32.xlu0 %v2633, 96
  %v2696 = vpop.permute.xlu0 %2695
  %2697 = vrot.lane.b32.xlu0 %v2634, 96
  %v2698 = vpop.permute.xlu0 %2697
  %2699 = vrot.lane.b32.xlu0 %v2635, 96
  %v2700 = vpop.permute.xlu0 %2699
  %2701 = vrot.lane.b32.xlu0 %v2636, 96
  %v2702 = vpop.permute.xlu0 %2701
  %2703 = vrot.lane.b32.xlu0 %v2637, 96
  %v2704 = vpop.permute.xlu0 %2703
  %2705 = vrot.lane.b32.xlu0 %v2638, 96
  %v2706 = vpop.permute.xlu0 %2705
  %2707 = vrot.lane.b32.xlu0 %v2639, 96
  %v2708 = vpop.permute.xlu0 %2707
  %2709 = vrot.lane.b32.xlu0 %v2640, 96
  %v2710 = vpop.permute.xlu0 %2709
  %2711 = vrot.lane.b32.xlu0 %v2641, 96
  %v2712 = vpop.permute.xlu0 %2711
  %2713 = vrot.lane.b32.xlu0 %v2642, 96
  %v2714 = vpop.permute.xlu0 %2713
  %2715 = vrot.lane.b32.xlu0 %v2643, 96
  %v2716 = vpop.permute.xlu0 %2715
  %2717 = vrot.lane.b32.xlu0 %v2644, 96
  %v2718 = vpop.permute.xlu0 %2717
  %2719 = vrot.lane.b32.xlu0 %v2645, 96
  %v2720 = vpop.permute.xlu0 %2719
  %2721 = vrot.lane.b32.xlu0 %v2646, 96
  %v2722 = vpop.permute.xlu0 %2721
  %2723 = vrot.lane.b32.xlu0 %v2647, 96
  %v2724 = vpop.permute.xlu0 %2723
  %2725 = vrot.lane.b32.xlu0 %v2648, 96
  %v2726 = vpop.permute.xlu0 %2725
  %vm2727 = vcmask 785408
  %v2728 = vsel %vm2727, %v2676, %v2678
  %v2729 = vsel %vm2727, %v2678, %v2680
  %v2730 = vsel %vm2727, %v2680, %v2682
  %v2731 = vsel %vm2727, %v2682, %v2684
  %v2732 = vsel %vm2727, %v2684, %v2686
  %v2733 = vsel %vm2727, %v2686, %v2688
  %v2734 = vsel %vm2727, %v2688, %v2690
  %v2735 = vsel %vm2727, %v2690, %v2692
  %v2736 = vsel %vm2727, %v2692, %v2694
  %v2737 = vsel %vm2727, %v2694, %v2696
  %v2738 = vsel %vm2727, %v2696, %v2698
  %v2739 = vsel %vm2727, %v2698, %v2700
  %v2740 = vsel %vm2727, %v2702, %v2704
  %v2741 = vsel %vm2727, %v2704, %v2706
  %v2742 = vsel %vm2727, %v2706, %v2708
  %v2743 = vsel %vm2727, %v2708, %v2710
  %v2744 = vsel %vm2727, %v2710, %v2712
  %v2745 = vsel %vm2727, %v2712, %v2714
  %v2746 = vsel %vm2727, %v2714, %v2716
  %v2747 = vsel %vm2727, %v2716, %v2718
  %v2748 = vsel %vm2727, %v2718, %v2720
  %v2749 = vsel %vm2727, %v2720, %v2722
  %v2750 = vsel %vm2727, %v2722, %v2724
  %v2751 = vsel %vm2727, %v2724, %v2726
  %v2778 = vadd.f32 %v2499, %v2728
  %v2779 = vadd.f32 %v2500, %v2729
  %v2780 = vadd.f32 %v2501, %v2730
  %v2781 = vadd.f32 %v2502, %v2731
  %v2782 = vadd.f32 %v2503, %v2732
  %v2783 = vadd.f32 %v2504, %v2733
  %v2784 = vadd.f32 %v2505, %v2734
  %v2785 = vadd.f32 %v2506, %v2735
  %v2786 = vadd.f32 %v2507, %v2736
  %v2787 = vadd.f32 %v2508, %v2737
  %v2788 = vadd.f32 %v2509, %v2738
  %v2789 = vadd.f32 %v2510, %v2739
  %v2790 = vadd.f32 %v2511, %v2700
  %v2791 = vadd.f32 %v2512, %v2740
  %v2792 = vadd.f32 %v2513, %v2741
  %v2793 = vadd.f32 %v2514, %v2742
  %v2794 = vadd.f32 %v2515, %v2743
  %v2795 = vadd.f32 %v2516, %v2744
  %v2796 = vadd.f32 %v2517, %v2745
  %v2797 = vadd.f32 %v2518, %v2746
  %v2798 = vadd.f32 %v2519, %v2747
  %v2799 = vadd.f32 %v2520, %v2748
  %v2800 = vadd.f32 %v2521, %v2749
  %v2801 = vadd.f32 %v2522, %v2750
  %v2802 = vadd.f32 %v2523, %v2751
  %v2803 = vadd.f32 %v2524, %v2726
  %s2804 = scalar_lea.vmem %s2, 160
  %v2805 = vld [vmem:[%s2804] sm:$0xff]
  %v2806 = vld [vmem:[%s2804 + $0x8] sm:$0xff]
  %v2807 = vmul.f32 %v83, %v113
  %v2808 = vmul.f32 %v84, %v114
  %2811 = vrot.lane.b32.xlu0 %v2807, 56
  %v2812 = vpop.permute.xlu0 %2811
  %2813 = vrot.lane.b32.xlu0 %v2808, 56
  %v2814 = vpop.permute.xlu0 %2813
  %v2815 = vrot.slane %v2812, 7
  %v2816 = vrot.slane %v2814, 7
  %vm2817 = vcmask 457728
  %v2818 = vsel %vm2817, %v2815, %v2812
  %v2819 = vsel %vm307, %v2815, %v2816
  %v2820 = vsel %vm2817, %v2819, %v2814
  %v2823 = vmul.f32 %v155, %v2818
  %v2824 = vmul.f32 %v156, %v2820
  %2826 = vset.pattern.permute.xlu0 0
  %2827 = vperm.xlu0 %2826, %v2805
  %v2828 = vpop.permute.xlu0 %2827
  %2831 = vset.pattern.permute.xlu0 0
  %2832 = vperm.xlu0 %2831, %v2806
  %v2833 = vpop.permute.xlu0 %2832
  %v2837 = vlaneseq
  %v2838 = vshrl.u32 %v2837, 7
  %v2839 = vsub.s32 0, %v2838
  %v2840 = vrot.slane %v2823, %v2839
  %v2841 = vlaneseq
  %v2842 = vshrl.u32 %v2841, 7
  %v2843 = vsub.s32 1, %v2842
  %v2844 = vrot.slane %v2823, %v2843
  %v2845 = vlaneseq
  %v2846 = vshrl.u32 %v2845, 7
  %v2847 = vsub.s32 2, %v2846
  %v2848 = vrot.slane %v2823, %v2847
  %v2849 = vlaneseq
  %v2850 = vshrl.u32 %v2849, 7
  %v2851 = vsub.s32 3, %v2850
  %v2852 = vrot.slane %v2823, %v2851
  %v2853 = vlaneseq
  %v2854 = vshrl.u32 %v2853, 7
  %v2855 = vsub.s32 4, %v2854
  %v2856 = vrot.slane %v2823, %v2855
  %v2857 = vlaneseq
  %v2858 = vshrl.u32 %v2857, 7
  %v2859 = vsub.s32 5, %v2858
  %v2860 = vrot.slane %v2823, %v2859
  %v2861 = vlaneseq
  %v2862 = vshrl.u32 %v2861, 7
  %v2863 = vsub.s32 6, %v2862
  %v2864 = vrot.slane %v2823, %v2863
  %v2865 = vlaneseq
  %v2866 = vshrl.u32 %v2865, 7
  %v2867 = vsub.s32 7, %v2866
  %v2868 = vrot.slane %v2823, %v2867
  %v2869 = vlaneseq
  %v2870 = vshrl.u32 %v2869, 7
  %v2871 = vsub.s32 0, %v2870
  %v2872 = vrot.slane %v2824, %v2871
  %v2873 = vlaneseq
  %v2874 = vshrl.u32 %v2873, 7
  %v2875 = vsub.s32 1, %v2874
  %v2876 = vrot.slane %v2824, %v2875
  %v2877 = vlaneseq
  %v2878 = vshrl.u32 %v2877, 7
  %v2879 = vsub.s32 2, %v2878
  %v2880 = vrot.slane %v2824, %v2879
  %v2881 = vlaneseq
  %v2882 = vshrl.u32 %v2881, 7
  %v2883 = vsub.s32 3, %v2882
  %v2884 = vrot.slane %v2824, %v2883
  %v2885 = vlaneseq
  %v2886 = vshrl.u32 %v2885, 7
  %v2887 = vsub.s32 4, %v2886
  %v2888 = vrot.slane %v2824, %v2887
  %v2902 = vmul.f32 %v2828, %v2840
  %v2903 = vmul.f32 %v2828, %v2844
  %v2904 = vmul.f32 %v2828, %v2848
  %v2905 = vmul.f32 %v2828, %v2852
  %v2906 = vmul.f32 %v2828, %v2856
  %v2907 = vmul.f32 %v2828, %v2860
  %v2908 = vmul.f32 %v2828, %v2864
  %v2909 = vmul.f32 %v2828, %v2868
  %v2910 = vmul.f32 %v2828, %v2872
  %v2911 = vmul.f32 %v2828, %v2876
  %v2912 = vmul.f32 %v2828, %v2880
  %v2913 = vmul.f32 %v2828, %v2884
  %v2914 = vmul.f32 %v2828, %v2888
  %v2915 = vmul.f32 %v2833, %v2840
  %v2916 = vmul.f32 %v2833, %v2844
  %v2917 = vmul.f32 %v2833, %v2848
  %v2918 = vmul.f32 %v2833, %v2852
  %v2919 = vmul.f32 %v2833, %v2856
  %v2920 = vmul.f32 %v2833, %v2860
  %v2921 = vmul.f32 %v2833, %v2864
  %v2922 = vmul.f32 %v2833, %v2868
  %v2923 = vmul.f32 %v2833, %v2872
  %v2924 = vmul.f32 %v2833, %v2876
  %v2925 = vmul.f32 %v2833, %v2880
  %v2926 = vmul.f32 %v2833, %v2884
  %v2927 = vmul.f32 %v2833, %v2888
  %2954 = vrot.lane.b32.xlu0 %v2902, 72
  %v2955 = vpop.permute.xlu0 %2954
  %2956 = vrot.lane.b32.xlu0 %v2903, 72
  %v2957 = vpop.permute.xlu0 %2956
  %2958 = vrot.lane.b32.xlu0 %v2904, 72
  %v2959 = vpop.permute.xlu0 %2958
  %2960 = vrot.lane.b32.xlu0 %v2905, 72
  %v2961 = vpop.permute.xlu0 %2960
  %2962 = vrot.lane.b32.xlu0 %v2906, 72
  %v2963 = vpop.permute.xlu0 %2962
  %2964 = vrot.lane.b32.xlu0 %v2907, 72
  %v2965 = vpop.permute.xlu0 %2964
  %2966 = vrot.lane.b32.xlu0 %v2908, 72
  %v2967 = vpop.permute.xlu0 %2966
  %2968 = vrot.lane.b32.xlu0 %v2909, 72
  %v2969 = vpop.permute.xlu0 %2968
  %2970 = vrot.lane.b32.xlu0 %v2910, 72
  %v2971 = vpop.permute.xlu0 %2970
  %2972 = vrot.lane.b32.xlu0 %v2911, 72
  %v2973 = vpop.permute.xlu0 %2972
  %2974 = vrot.lane.b32.xlu0 %v2912, 72
  %v2975 = vpop.permute.xlu0 %2974
  %2976 = vrot.lane.b32.xlu0 %v2913, 72
  %v2977 = vpop.permute.xlu0 %2976
  %2978 = vrot.lane.b32.xlu0 %v2914, 72
  %v2979 = vpop.permute.xlu0 %2978
  %2980 = vrot.lane.b32.xlu0 %v2915, 72
  %v2981 = vpop.permute.xlu0 %2980
  %2982 = vrot.lane.b32.xlu0 %v2916, 72
  %v2983 = vpop.permute.xlu0 %2982
  %2984 = vrot.lane.b32.xlu0 %v2917, 72
  %v2985 = vpop.permute.xlu0 %2984
  %2986 = vrot.lane.b32.xlu0 %v2918, 72
  %v2987 = vpop.permute.xlu0 %2986
  %2988 = vrot.lane.b32.xlu0 %v2919, 72
  %v2989 = vpop.permute.xlu0 %2988
  %2990 = vrot.lane.b32.xlu0 %v2920, 72
  %v2991 = vpop.permute.xlu0 %2990
  %2992 = vrot.lane.b32.xlu0 %v2921, 72
  %v2993 = vpop.permute.xlu0 %2992
  %2994 = vrot.lane.b32.xlu0 %v2922, 72
  %v2995 = vpop.permute.xlu0 %2994
  %2996 = vrot.lane.b32.xlu0 %v2923, 72
  %v2997 = vpop.permute.xlu0 %2996
  %2998 = vrot.lane.b32.xlu0 %v2924, 72
  %v2999 = vpop.permute.xlu0 %2998
  %3000 = vrot.lane.b32.xlu0 %v2925, 72
  %v3001 = vpop.permute.xlu0 %3000
  %3002 = vrot.lane.b32.xlu0 %v2926, 72
  %v3003 = vpop.permute.xlu0 %3002
  %3004 = vrot.lane.b32.xlu0 %v2927, 72
  %v3005 = vpop.permute.xlu0 %3004
  %vm3006 = vcmask 588800
  %v3007 = vsel %vm3006, %v2955, %v2957
  %v3008 = vsel %vm3006, %v2957, %v2959
  %v3009 = vsel %vm3006, %v2959, %v2961
  %v3010 = vsel %vm3006, %v2961, %v2963
  %v3011 = vsel %vm3006, %v2963, %v2965
  %v3012 = vsel %vm3006, %v2965, %v2967
  %v3013 = vsel %vm3006, %v2967, %v2969
  %v3014 = vsel %vm3006, %v2969, %v2971
  %v3015 = vsel %vm3006, %v2971, %v2973
  %v3016 = vsel %vm3006, %v2973, %v2975
  %v3017 = vsel %vm3006, %v2975, %v2977
  %v3018 = vsel %vm3006, %v2977, %v2979
  %v3019 = vsel %vm3006, %v2981, %v2983
  %v3020 = vsel %vm3006, %v2983, %v2985
  %v3021 = vsel %vm3006, %v2985, %v2987
  %v3022 = vsel %vm3006, %v2987, %v2989
  %v3023 = vsel %vm3006, %v2989, %v2991
  %v3024 = vsel %vm3006, %v2991, %v2993
  %v3025 = vsel %vm3006, %v2993, %v2995
  %v3026 = vsel %vm3006, %v2995, %v2997
  %v3027 = vsel %vm3006, %v2997, %v2999
  %v3028 = vsel %vm3006, %v2999, %v3001
  %v3029 = vsel %vm3006, %v3001, %v3003
  %v3030 = vsel %vm3006, %v3003, %v3005
  %v3057 = vadd.f32 %v2778, %v3007
  %v3058 = vadd.f32 %v2779, %v3008
  %v3059 = vadd.f32 %v2780, %v3009
  %v3060 = vadd.f32 %v2781, %v3010
  %v3061 = vadd.f32 %v2782, %v3011
  %v3062 = vadd.f32 %v2783, %v3012
  %v3063 = vadd.f32 %v2784, %v3013
  %v3064 = vadd.f32 %v2785, %v3014
  %v3065 = vadd.f32 %v2786, %v3015
  %v3066 = vadd.f32 %v2787, %v3016
  %v3067 = vadd.f32 %v2788, %v3017
  %v3068 = vadd.f32 %v2789, %v3018
  %v3069 = vadd.f32 %v2790, %v2979
  %v3070 = vadd.f32 %v2791, %v3019
  %v3071 = vadd.f32 %v2792, %v3020
  %v3072 = vadd.f32 %v2793, %v3021
  %v3073 = vadd.f32 %v2794, %v3022
  %v3074 = vadd.f32 %v2795, %v3023
  %v3075 = vadd.f32 %v2796, %v3024
  %v3076 = vadd.f32 %v2797, %v3025
  %v3077 = vadd.f32 %v2798, %v3026
  %v3078 = vadd.f32 %v2799, %v3027
  %v3079 = vadd.f32 %v2800, %v3028
  %v3080 = vadd.f32 %v2801, %v3029
  %v3081 = vadd.f32 %v2802, %v3030
  %v3082 = vadd.f32 %v2803, %v3005
  %s3083 = scalar_lea.vmem %s2, 176
  %v3084 = vld [vmem:[%s3083] sm:$0xff]
  %v3085 = vld [vmem:[%s3083 + $0x8] sm:$0xff]
  %v3086 = vmul.f32 %v83, %v123
  %v3087 = vmul.f32 %v84, %v124
  %3090 = vrot.lane.b32.xlu0 %v3086, 57
  %v3091 = vpop.permute.xlu0 %3090
  %3092 = vrot.lane.b32.xlu0 %v3087, 57
  %v3093 = vpop.permute.xlu0 %3092
  %v3094 = vrot.slane %v3091, 7
  %v3095 = vrot.slane %v3093, 7
  %vm3096 = vcmask 465920
  %v3097 = vsel %vm3096, %v3094, %v3091
  %v3098 = vsel %vm307, %v3094, %v3095
  %v3099 = vsel %vm3096, %v3098, %v3093
  %v3102 = vmul.f32 %v155, %v3097
  %v3103 = vmul.f32 %v156, %v3099
  %3105 = vset.pattern.permute.xlu0 0
  %3106 = vperm.xlu0 %3105, %v3084
  %v3107 = vpop.permute.xlu0 %3106
  %3110 = vset.pattern.permute.xlu0 0
  %3111 = vperm.xlu0 %3110, %v3085
  %v3112 = vpop.permute.xlu0 %3111
  %v3116 = vlaneseq
  %v3117 = vshrl.u32 %v3116, 7
  %v3118 = vsub.s32 0, %v3117
  %v3119 = vrot.slane %v3102, %v3118
  %v3120 = vlaneseq
  %v3121 = vshrl.u32 %v3120, 7
  %v3122 = vsub.s32 1, %v3121
  %v3123 = vrot.slane %v3102, %v3122
  %v3124 = vlaneseq
  %v3125 = vshrl.u32 %v3124, 7
  %v3126 = vsub.s32 2, %v3125
  %v3127 = vrot.slane %v3102, %v3126
  %v3128 = vlaneseq
  %v3129 = vshrl.u32 %v3128, 7
  %v3130 = vsub.s32 3, %v3129
  %v3131 = vrot.slane %v3102, %v3130
  %v3132 = vlaneseq
  %v3133 = vshrl.u32 %v3132, 7
  %v3134 = vsub.s32 4, %v3133
  %v3135 = vrot.slane %v3102, %v3134
  %v3136 = vlaneseq
  %v3137 = vshrl.u32 %v3136, 7
  %v3138 = vsub.s32 5, %v3137
  %v3139 = vrot.slane %v3102, %v3138
  %v3140 = vlaneseq
  %v3141 = vshrl.u32 %v3140, 7
  %v3142 = vsub.s32 6, %v3141
  %v3143 = vrot.slane %v3102, %v3142
  %v3144 = vlaneseq
  %v3145 = vshrl.u32 %v3144, 7
  %v3146 = vsub.s32 7, %v3145
  %v3147 = vrot.slane %v3102, %v3146
  %v3148 = vlaneseq
  %v3149 = vshrl.u32 %v3148, 7
  %v3150 = vsub.s32 0, %v3149
  %v3151 = vrot.slane %v3103, %v3150
  %v3152 = vlaneseq
  %v3153 = vshrl.u32 %v3152, 7
  %v3154 = vsub.s32 1, %v3153
  %v3155 = vrot.slane %v3103, %v3154
  %v3156 = vlaneseq
  %v3157 = vshrl.u32 %v3156, 7
  %v3158 = vsub.s32 2, %v3157
  %v3159 = vrot.slane %v3103, %v3158
  %v3160 = vlaneseq
  %v3161 = vshrl.u32 %v3160, 7
  %v3162 = vsub.s32 3, %v3161
  %v3163 = vrot.slane %v3103, %v3162
  %v3164 = vlaneseq
  %v3165 = vshrl.u32 %v3164, 7
  %v3166 = vsub.s32 4, %v3165
  %v3167 = vrot.slane %v3103, %v3166
  %v3181 = vmul.f32 %v3107, %v3119
  %v3182 = vmul.f32 %v3107, %v3123
  %v3183 = vmul.f32 %v3107, %v3127
  %v3184 = vmul.f32 %v3107, %v3131
  %v3185 = vmul.f32 %v3107, %v3135
  %v3186 = vmul.f32 %v3107, %v3139
  %v3187 = vmul.f32 %v3107, %v3143
  %v3188 = vmul.f32 %v3107, %v3147
  %v3189 = vmul.f32 %v3107, %v3151
  %v3190 = vmul.f32 %v3107, %v3155
  %v3191 = vmul.f32 %v3107, %v3159
  %v3192 = vmul.f32 %v3107, %v3163
  %v3193 = vmul.f32 %v3107, %v3167
  %v3194 = vmul.f32 %v3112, %v3119
  %v3195 = vmul.f32 %v3112, %v3123
  %v3196 = vmul.f32 %v3112, %v3127
  %v3197 = vmul.f32 %v3112, %v3131
  %v3198 = vmul.f32 %v3112, %v3135
  %v3199 = vmul.f32 %v3112, %v3139
  %v3200 = vmul.f32 %v3112, %v3143
  %v3201 = vmul.f32 %v3112, %v3147
  %v3202 = vmul.f32 %v3112, %v3151
  %v3203 = vmul.f32 %v3112, %v3155
  %v3204 = vmul.f32 %v3112, %v3159
  %v3205 = vmul.f32 %v3112, %v3163
  %v3206 = vmul.f32 %v3112, %v3167
  %3233 = vrot.lane.b32.xlu0 %v3181, 71
  %v3234 = vpop.permute.xlu0 %3233
  %3235 = vrot.lane.b32.xlu0 %v3182, 71
  %v3236 = vpop.permute.xlu0 %3235
  %3237 = vrot.lane.b32.xlu0 %v3183, 71
  %v3238 = vpop.permute.xlu0 %3237
  %3239 = vrot.lane.b32.xlu0 %v3184, 71
  %v3240 = vpop.permute.xlu0 %3239
  %3241 = vrot.lane.b32.xlu0 %v3185, 71
  %v3242 = vpop.permute.xlu0 %3241
  %3243 = vrot.lane.b32.xlu0 %v3186, 71
  %v3244 = vpop.permute.xlu0 %3243
  %3245 = vrot.lane.b32.xlu0 %v3187, 71
  %v3246 = vpop.permute.xlu0 %3245
  %3247 = vrot.lane.b32.xlu0 %v3188, 71
  %v3248 = vpop.permute.xlu0 %3247
  %3249 = vrot.lane.b32.xlu0 %v3189, 71
  %v3250 = vpop.permute.xlu0 %3249
  %3251 = vrot.lane.b32.xlu0 %v3190, 71
  %v3252 = vpop.permute.xlu0 %3251
  %3253 = vrot.lane.b32.xlu0 %v3191, 71
  %v3254 = vpop.permute.xlu0 %3253
  %3255 = vrot.lane.b32.xlu0 %v3192, 71
  %v3256 = vpop.permute.xlu0 %3255
  %3257 = vrot.lane.b32.xlu0 %v3193, 71
  %v3258 = vpop.permute.xlu0 %3257
  %3259 = vrot.lane.b32.xlu0 %v3194, 71
  %v3260 = vpop.permute.xlu0 %3259
  %3261 = vrot.lane.b32.xlu0 %v3195, 71
  %v3262 = vpop.permute.xlu0 %3261
  %3263 = vrot.lane.b32.xlu0 %v3196, 71
  %v3264 = vpop.permute.xlu0 %3263
  %3265 = vrot.lane.b32.xlu0 %v3197, 71
  %v3266 = vpop.permute.xlu0 %3265
  %3267 = vrot.lane.b32.xlu0 %v3198, 71
  %v3268 = vpop.permute.xlu0 %3267
  %3269 = vrot.lane.b32.xlu0 %v3199, 71
  %v3270 = vpop.permute.xlu0 %3269
  %3271 = vrot.lane.b32.xlu0 %v3200, 71
  %v3272 = vpop.permute.xlu0 %3271
  %3273 = vrot.lane.b32.xlu0 %v3201, 71
  %v3274 = vpop.permute.xlu0 %3273
  %3275 = vrot.lane.b32.xlu0 %v3202, 71
  %v3276 = vpop.permute.xlu0 %3275
  %3277 = vrot.lane.b32.xlu0 %v3203, 71
  %v3278 = vpop.permute.xlu0 %3277
  %3279 = vrot.lane.b32.xlu0 %v3204, 71
  %v3280 = vpop.permute.xlu0 %3279
  %3281 = vrot.lane.b32.xlu0 %v3205, 71
  %v3282 = vpop.permute.xlu0 %3281
  %3283 = vrot.lane.b32.xlu0 %v3206, 71
  %v3284 = vpop.permute.xlu0 %3283
  %vm3285 = vcmask 580608
  %v3286 = vsel %vm3285, %v3234, %v3236
  %v3287 = vsel %vm3285, %v3236, %v3238
  %v3288 = vsel %vm3285, %v3238, %v3240
  %v3289 = vsel %vm3285, %v3240, %v3242
  %v3290 = vsel %vm3285, %v3242, %v3244
  %v3291 = vsel %vm3285, %v3244, %v3246
  %v3292 = vsel %vm3285, %v3246, %v3248
  %v3293 = vsel %vm3285, %v3248, %v3250
  %v3294 = vsel %vm3285, %v3250, %v3252
  %v3295 = vsel %vm3285, %v3252, %v3254
  %v3296 = vsel %vm3285, %v3254, %v3256
  %v3297 = vsel %vm3285, %v3256, %v3258
  %v3298 = vsel %vm3285, %v3260, %v3262
  %v3299 = vsel %vm3285, %v3262, %v3264
  %v3300 = vsel %vm3285, %v3264, %v3266
  %v3301 = vsel %vm3285, %v3266, %v3268
  %v3302 = vsel %vm3285, %v3268, %v3270
  %v3303 = vsel %vm3285, %v3270, %v3272
  %v3304 = vsel %vm3285, %v3272, %v3274
  %v3305 = vsel %vm3285, %v3274, %v3276
  %v3306 = vsel %vm3285, %v3276, %v3278
  %v3307 = vsel %vm3285, %v3278, %v3280
  %v3308 = vsel %vm3285, %v3280, %v3282
  %v3309 = vsel %vm3285, %v3282, %v3284
  %v3336 = vadd.f32 %v3057, %v3286
  %v3337 = vadd.f32 %v3058, %v3287
  %v3338 = vadd.f32 %v3059, %v3288
  %v3339 = vadd.f32 %v3060, %v3289
  %v3340 = vadd.f32 %v3061, %v3290
  %v3341 = vadd.f32 %v3062, %v3291
  %v3342 = vadd.f32 %v3063, %v3292
  %v3343 = vadd.f32 %v3064, %v3293
  %v3344 = vadd.f32 %v3065, %v3294
  %v3345 = vadd.f32 %v3066, %v3295
  %v3346 = vadd.f32 %v3067, %v3296
  %v3347 = vadd.f32 %v3068, %v3297
  %v3348 = vadd.f32 %v3069, %v3258
  %v3349 = vadd.f32 %v3070, %v3298
  %v3350 = vadd.f32 %v3071, %v3299
  %v3351 = vadd.f32 %v3072, %v3300
  %v3352 = vadd.f32 %v3073, %v3301
  %v3353 = vadd.f32 %v3074, %v3302
  %v3354 = vadd.f32 %v3075, %v3303
  %v3355 = vadd.f32 %v3076, %v3304
  %v3356 = vadd.f32 %v3077, %v3305
  %v3357 = vadd.f32 %v3078, %v3306
  %v3358 = vadd.f32 %v3079, %v3307
  %v3359 = vadd.f32 %v3080, %v3308
  %v3360 = vadd.f32 %v3081, %v3309
  %v3361 = vadd.f32 %v3082, %v3284
  %s3362 = scalar_lea.vmem %s2, 192
  %v3363 = vld [vmem:[%s3362] sm:$0xff]
  %v3364 = vld [vmem:[%s3362 + $0x8] sm:$0xff]
  %v3365 = vmul.f32 %v83, %v133
  %v3366 = vmul.f32 %v84, %v134
  %3369 = vrot.lane.b32.xlu0 %v3365, 58
  %v3370 = vpop.permute.xlu0 %3369
  %3371 = vrot.lane.b32.xlu0 %v3366, 58
  %v3372 = vpop.permute.xlu0 %3371
  %v3373 = vrot.slane %v3370, 7
  %v3374 = vrot.slane %v3372, 7
  %vm3375 = vcmask 474112
  %v3376 = vsel %vm3375, %v3373, %v3370
  %v3377 = vsel %vm307, %v3373, %v3374
  %v3378 = vsel %vm3375, %v3377, %v3372
  %v3381 = vmul.f32 %v155, %v3376
  %v3382 = vmul.f32 %v156, %v3378
  %3384 = vset.pattern.permute.xlu0 0
  %3385 = vperm.xlu0 %3384, %v3363
  %v3386 = vpop.permute.xlu0 %3385
  %3389 = vset.pattern.permute.xlu0 0
  %3390 = vperm.xlu0 %3389, %v3364
  %v3391 = vpop.permute.xlu0 %3390
  %v3395 = vlaneseq
  %v3396 = vshrl.u32 %v3395, 7
  %v3397 = vsub.s32 0, %v3396
  %v3398 = vrot.slane %v3381, %v3397
  %v3399 = vlaneseq
  %v3400 = vshrl.u32 %v3399, 7
  %v3401 = vsub.s32 1, %v3400
  %v3402 = vrot.slane %v3381, %v3401
  %v3403 = vlaneseq
  %v3404 = vshrl.u32 %v3403, 7
  %v3405 = vsub.s32 2, %v3404
  %v3406 = vrot.slane %v3381, %v3405
  %v3407 = vlaneseq
  %v3408 = vshrl.u32 %v3407, 7
  %v3409 = vsub.s32 3, %v3408
  %v3410 = vrot.slane %v3381, %v3409
  %v3411 = vlaneseq
  %v3412 = vshrl.u32 %v3411, 7
  %v3413 = vsub.s32 4, %v3412
  %v3414 = vrot.slane %v3381, %v3413
  %v3415 = vlaneseq
  %v3416 = vshrl.u32 %v3415, 7
  %v3417 = vsub.s32 5, %v3416
  %v3418 = vrot.slane %v3381, %v3417
  %v3419 = vlaneseq
  %v3420 = vshrl.u32 %v3419, 7
  %v3421 = vsub.s32 6, %v3420
  %v3422 = vrot.slane %v3381, %v3421
  %v3423 = vlaneseq
  %v3424 = vshrl.u32 %v3423, 7
  %v3425 = vsub.s32 7, %v3424
  %v3426 = vrot.slane %v3381, %v3425
  %v3427 = vlaneseq
  %v3428 = vshrl.u32 %v3427, 7
  %v3429 = vsub.s32 0, %v3428
  %v3430 = vrot.slane %v3382, %v3429
  %v3431 = vlaneseq
  %v3432 = vshrl.u32 %v3431, 7
  %v3433 = vsub.s32 1, %v3432
  %v3434 = vrot.slane %v3382, %v3433
  %v3435 = vlaneseq
  %v3436 = vshrl.u32 %v3435, 7
  %v3437 = vsub.s32 2, %v3436
  %v3438 = vrot.slane %v3382, %v3437
  %v3439 = vlaneseq
  %v3440 = vshrl.u32 %v3439, 7
  %v3441 = vsub.s32 3, %v3440
  %v3442 = vrot.slane %v3382, %v3441
  %v3443 = vlaneseq
  %v3444 = vshrl.u32 %v3443, 7
  %v3445 = vsub.s32 4, %v3444
  %v3446 = vrot.slane %v3382, %v3445
  %v3460 = vmul.f32 %v3386, %v3398
  %v3461 = vmul.f32 %v3386, %v3402
  %v3462 = vmul.f32 %v3386, %v3406
  %v3463 = vmul.f32 %v3386, %v3410
  %v3464 = vmul.f32 %v3386, %v3414
  %v3465 = vmul.f32 %v3386, %v3418
  %v3466 = vmul.f32 %v3386, %v3422
  %v3467 = vmul.f32 %v3386, %v3426
  %v3468 = vmul.f32 %v3386, %v3430
  %v3469 = vmul.f32 %v3386, %v3434
  %v3470 = vmul.f32 %v3386, %v3438
  %v3471 = vmul.f32 %v3386, %v3442
  %v3472 = vmul.f32 %v3386, %v3446
  %v3473 = vmul.f32 %v3391, %v3398
  %v3474 = vmul.f32 %v3391, %v3402
  %v3475 = vmul.f32 %v3391, %v3406
  %v3476 = vmul.f32 %v3391, %v3410
  %v3477 = vmul.f32 %v3391, %v3414
  %v3478 = vmul.f32 %v3391, %v3418
  %v3479 = vmul.f32 %v3391, %v3422
  %v3480 = vmul.f32 %v3391, %v3426
  %v3481 = vmul.f32 %v3391, %v3430
  %v3482 = vmul.f32 %v3391, %v3434
  %v3483 = vmul.f32 %v3391, %v3438
  %v3484 = vmul.f32 %v3391, %v3442
  %v3485 = vmul.f32 %v3391, %v3446
  %3512 = vrot.lane.b32.xlu0 %v3460, 70
  %v3513 = vpop.permute.xlu0 %3512
  %3514 = vrot.lane.b32.xlu0 %v3461, 70
  %v3515 = vpop.permute.xlu0 %3514
  %3516 = vrot.lane.b32.xlu0 %v3462, 70
  %v3517 = vpop.permute.xlu0 %3516
  %3518 = vrot.lane.b32.xlu0 %v3463, 70
  %v3519 = vpop.permute.xlu0 %3518
  %3520 = vrot.lane.b32.xlu0 %v3464, 70
  %v3521 = vpop.permute.xlu0 %3520
  %3522 = vrot.lane.b32.xlu0 %v3465, 70
  %v3523 = vpop.permute.xlu0 %3522
  %3524 = vrot.lane.b32.xlu0 %v3466, 70
  %v3525 = vpop.permute.xlu0 %3524
  %3526 = vrot.lane.b32.xlu0 %v3467, 70
  %v3527 = vpop.permute.xlu0 %3526
  %3528 = vrot.lane.b32.xlu0 %v3468, 70
  %v3529 = vpop.permute.xlu0 %3528
  %3530 = vrot.lane.b32.xlu0 %v3469, 70
  %v3531 = vpop.permute.xlu0 %3530
  %3532 = vrot.lane.b32.xlu0 %v3470, 70
  %v3533 = vpop.permute.xlu0 %3532
  %3534 = vrot.lane.b32.xlu0 %v3471, 70
  %v3535 = vpop.permute.xlu0 %3534
  %3536 = vrot.lane.b32.xlu0 %v3472, 70
  %v3537 = vpop.permute.xlu0 %3536
  %3538 = vrot.lane.b32.xlu0 %v3473, 70
  %v3539 = vpop.permute.xlu0 %3538
  %3540 = vrot.lane.b32.xlu0 %v3474, 70
  %v3541 = vpop.permute.xlu0 %3540
  %3542 = vrot.lane.b32.xlu0 %v3475, 70
  %v3543 = vpop.permute.xlu0 %3542
  %3544 = vrot.lane.b32.xlu0 %v3476, 70
  %v3545 = vpop.permute.xlu0 %3544
  %3546 = vrot.lane.b32.xlu0 %v3477, 70
  %v3547 = vpop.permute.xlu0 %3546
  %3548 = vrot.lane.b32.xlu0 %v3478, 70
  %v3549 = vpop.permute.xlu0 %3548
  %3550 = vrot.lane.b32.xlu0 %v3479, 70
  %v3551 = vpop.permute.xlu0 %3550
  %3552 = vrot.lane.b32.xlu0 %v3480, 70
  %v3553 = vpop.permute.xlu0 %3552
  %3554 = vrot.lane.b32.xlu0 %v3481, 70
  %v3555 = vpop.permute.xlu0 %3554
  %3556 = vrot.lane.b32.xlu0 %v3482, 70
  %v3557 = vpop.permute.xlu0 %3556
  %3558 = vrot.lane.b32.xlu0 %v3483, 70
  %v3559 = vpop.permute.xlu0 %3558
  %3560 = vrot.lane.b32.xlu0 %v3484, 70
  %v3561 = vpop.permute.xlu0 %3560
  %3562 = vrot.lane.b32.xlu0 %v3485, 70
  %v3563 = vpop.permute.xlu0 %3562
  %vm3564 = vcmask 572416
  %v3565 = vsel %vm3564, %v3513, %v3515
  %v3566 = vsel %vm3564, %v3515, %v3517
  %v3567 = vsel %vm3564, %v3517, %v3519
  %v3568 = vsel %vm3564, %v3519, %v3521
  %v3569 = vsel %vm3564, %v3521, %v3523
  %v3570 = vsel %vm3564, %v3523, %v3525
  %v3571 = vsel %vm3564, %v3525, %v3527
  %v3572 = vsel %vm3564, %v3527, %v3529
  %v3573 = vsel %vm3564, %v3529, %v3531
  %v3574 = vsel %vm3564, %v3531, %v3533
  %v3575 = vsel %vm3564, %v3533, %v3535
  %v3576 = vsel %vm3564, %v3535, %v3537
  %v3577 = vsel %vm3564, %v3539, %v3541
  %v3578 = vsel %vm3564, %v3541, %v3543
  %v3579 = vsel %vm3564, %v3543, %v3545
  %v3580 = vsel %vm3564, %v3545, %v3547
  %v3581 = vsel %vm3564, %v3547, %v3549
  %v3582 = vsel %vm3564, %v3549, %v3551
  %v3583 = vsel %vm3564, %v3551, %v3553
  %v3584 = vsel %vm3564, %v3553, %v3555
  %v3585 = vsel %vm3564, %v3555, %v3557
  %v3586 = vsel %vm3564, %v3557, %v3559
  %v3587 = vsel %vm3564, %v3559, %v3561
  %v3588 = vsel %vm3564, %v3561, %v3563
  %v3615 = vadd.f32 %v3336, %v3565
  %v3616 = vadd.f32 %v3337, %v3566
  %v3617 = vadd.f32 %v3338, %v3567
  %v3618 = vadd.f32 %v3339, %v3568
  %v3619 = vadd.f32 %v3340, %v3569
  %v3620 = vadd.f32 %v3341, %v3570
  %v3621 = vadd.f32 %v3342, %v3571
  %v3622 = vadd.f32 %v3343, %v3572
  %v3623 = vadd.f32 %v3344, %v3573
  %v3624 = vadd.f32 %v3345, %v3574
  %v3625 = vadd.f32 %v3346, %v3575
  %v3626 = vadd.f32 %v3347, %v3576
  %v3627 = vadd.f32 %v3348, %v3537
  %v3628 = vadd.f32 %v3349, %v3577
  %v3629 = vadd.f32 %v3350, %v3578
  %v3630 = vadd.f32 %v3351, %v3579
  %v3631 = vadd.f32 %v3352, %v3580
  %v3632 = vadd.f32 %v3353, %v3581
  %v3633 = vadd.f32 %v3354, %v3582
  %v3634 = vadd.f32 %v3355, %v3583
  %v3635 = vadd.f32 %v3356, %v3584
  %v3636 = vadd.f32 %v3357, %v3585
  %v3637 = vadd.f32 %v3358, %v3586
  %v3638 = vadd.f32 %v3359, %v3587
  %v3639 = vadd.f32 %v3360, %v3588
  %v3640 = vadd.f32 %v3361, %v3563
  %s3641 = scalar_lea.vmem %s2, 208
  %v3642 = vld [vmem:[%s3641] sm:$0xff]
  %v3643 = vld [vmem:[%s3641 + $0x8] sm:$0xff]
  %v3644 = vmul.f32 %v83, %v143
  %v3645 = vmul.f32 %v84, %v144
  %3648 = vrot.lane.b32.xlu0 %v3644, 59
  %v3649 = vpop.permute.xlu0 %3648
  %3650 = vrot.lane.b32.xlu0 %v3645, 59
  %v3651 = vpop.permute.xlu0 %3650
  %v3652 = vrot.slane %v3649, 7
  %v3653 = vrot.slane %v3651, 7
  %vm3654 = vcmask 482304
  %v3655 = vsel %vm3654, %v3652, %v3649
  %v3656 = vsel %vm307, %v3652, %v3653
  %v3657 = vsel %vm3654, %v3656, %v3651
  %v3660 = vmul.f32 %v155, %v3655
  %v3661 = vmul.f32 %v156, %v3657
  %3663 = vset.pattern.permute.xlu0 0
  %3664 = vperm.xlu0 %3663, %v3642
  %v3665 = vpop.permute.xlu0 %3664
  %3668 = vset.pattern.permute.xlu0 0
  %3669 = vperm.xlu0 %3668, %v3643
  %v3670 = vpop.permute.xlu0 %3669
  %v3674 = vlaneseq
  %v3675 = vshrl.u32 %v3674, 7
  %v3676 = vsub.s32 0, %v3675
  %v3677 = vrot.slane %v3660, %v3676
  %v3678 = vlaneseq
  %v3679 = vshrl.u32 %v3678, 7
  %v3680 = vsub.s32 1, %v3679
  %v3681 = vrot.slane %v3660, %v3680
  %v3682 = vlaneseq
  %v3683 = vshrl.u32 %v3682, 7
  %v3684 = vsub.s32 2, %v3683
  %v3685 = vrot.slane %v3660, %v3684
  %v3686 = vlaneseq
  %v3687 = vshrl.u32 %v3686, 7
  %v3688 = vsub.s32 3, %v3687
  %v3689 = vrot.slane %v3660, %v3688
  %v3690 = vlaneseq
  %v3691 = vshrl.u32 %v3690, 7
  %v3692 = vsub.s32 4, %v3691
  %v3693 = vrot.slane %v3660, %v3692
  %v3694 = vlaneseq
  %v3695 = vshrl.u32 %v3694, 7
  %v3696 = vsub.s32 5, %v3695
  %v3697 = vrot.slane %v3660, %v3696
  %v3698 = vlaneseq
  %v3699 = vshrl.u32 %v3698, 7
  %v3700 = vsub.s32 6, %v3699
  %v3701 = vrot.slane %v3660, %v3700
  %v3702 = vlaneseq
  %v3703 = vshrl.u32 %v3702, 7
  %v3704 = vsub.s32 7, %v3703
  %v3705 = vrot.slane %v3660, %v3704
  %v3706 = vlaneseq
  %v3707 = vshrl.u32 %v3706, 7
  %v3708 = vsub.s32 0, %v3707
  %v3709 = vrot.slane %v3661, %v3708
  %v3710 = vlaneseq
  %v3711 = vshrl.u32 %v3710, 7
  %v3712 = vsub.s32 1, %v3711
  %v3713 = vrot.slane %v3661, %v3712
  %v3714 = vlaneseq
  %v3715 = vshrl.u32 %v3714, 7
  %v3716 = vsub.s32 2, %v3715
  %v3717 = vrot.slane %v3661, %v3716
  %v3718 = vlaneseq
  %v3719 = vshrl.u32 %v3718, 7
  %v3720 = vsub.s32 3, %v3719
  %v3721 = vrot.slane %v3661, %v3720
  %v3722 = vlaneseq
  %v3723 = vshrl.u32 %v3722, 7
  %v3724 = vsub.s32 4, %v3723
  %v3725 = vrot.slane %v3661, %v3724
  %v3739 = vmul.f32 %v3665, %v3677
  %v3740 = vmul.f32 %v3665, %v3681
  %v3741 = vmul.f32 %v3665, %v3685
  %v3742 = vmul.f32 %v3665, %v3689
  %v3743 = vmul.f32 %v3665, %v3693
  %v3744 = vmul.f32 %v3665, %v3697
  %v3745 = vmul.f32 %v3665, %v3701
  %v3746 = vmul.f32 %v3665, %v3705
  %v3747 = vmul.f32 %v3665, %v3709
  %v3748 = vmul.f32 %v3665, %v3713
  %v3749 = vmul.f32 %v3665, %v3717
  %v3750 = vmul.f32 %v3665, %v3721
  %v3751 = vmul.f32 %v3665, %v3725
  %v3752 = vmul.f32 %v3670, %v3677
  %v3753 = vmul.f32 %v3670, %v3681
  %v3754 = vmul.f32 %v3670, %v3685
  %v3755 = vmul.f32 %v3670, %v3689
  %v3756 = vmul.f32 %v3670, %v3693
  %v3757 = vmul.f32 %v3670, %v3697
  %v3758 = vmul.f32 %v3670, %v3701
  %v3759 = vmul.f32 %v3670, %v3705
  %v3760 = vmul.f32 %v3670, %v3709
  %v3761 = vmul.f32 %v3670, %v3713
  %v3762 = vmul.f32 %v3670, %v3717
  %v3763 = vmul.f32 %v3670, %v3721
  %v3764 = vmul.f32 %v3670, %v3725
  %3791 = vrot.lane.b32.xlu0 %v3739, 69
  %v3792 = vpop.permute.xlu0 %3791
  %3793 = vrot.lane.b32.xlu0 %v3740, 69
  %v3794 = vpop.permute.xlu0 %3793
  %3795 = vrot.lane.b32.xlu0 %v3741, 69
  %v3796 = vpop.permute.xlu0 %3795
  %3797 = vrot.lane.b32.xlu0 %v3742, 69
  %v3798 = vpop.permute.xlu0 %3797
  %3799 = vrot.lane.b32.xlu0 %v3743, 69
  %v3800 = vpop.permute.xlu0 %3799
  %3801 = vrot.lane.b32.xlu0 %v3744, 69
  %v3802 = vpop.permute.xlu0 %3801
  %3803 = vrot.lane.b32.xlu0 %v3745, 69
  %v3804 = vpop.permute.xlu0 %3803
  %3805 = vrot.lane.b32.xlu0 %v3746, 69
  %v3806 = vpop.permute.xlu0 %3805
  %3807 = vrot.lane.b32.xlu0 %v3747, 69
  %v3808 = vpop.permute.xlu0 %3807
  %3809 = vrot.lane.b32.xlu0 %v3748, 69
  %v3810 = vpop.permute.xlu0 %3809
  %3811 = vrot.lane.b32.xlu0 %v3749, 69
  %v3812 = vpop.permute.xlu0 %3811
  %3813 = vrot.lane.b32.xlu0 %v3750, 69
  %v3814 = vpop.permute.xlu0 %3813
  %3815 = vrot.lane.b32.xlu0 %v3751, 69
  %v3816 = vpop.permute.xlu0 %3815
  %3817 = vrot.lane.b32.xlu0 %v3752, 69
  %v3818 = vpop.permute.xlu0 %3817
  %3819 = vrot.lane.b32.xlu0 %v3753, 69
  %v3820 = vpop.permute.xlu0 %3819
  %3821 = vrot.lane.b32.xlu0 %v3754, 69
  %v3822 = vpop.permute.xlu0 %3821
  %3823 = vrot.lane.b32.xlu0 %v3755, 69
  %v3824 = vpop.permute.xlu0 %3823
  %3825 = vrot.lane.b32.xlu0 %v3756, 69
  %v3826 = vpop.permute.xlu0 %3825
  %3827 = vrot.lane.b32.xlu0 %v3757, 69
  %v3828 = vpop.permute.xlu0 %3827
  %3829 = vrot.lane.b32.xlu0 %v3758, 69
  %v3830 = vpop.permute.xlu0 %3829
  %3831 = vrot.lane.b32.xlu0 %v3759, 69
  %v3832 = vpop.permute.xlu0 %3831
  %3833 = vrot.lane.b32.xlu0 %v3760, 69
  %v3834 = vpop.permute.xlu0 %3833
  %3835 = vrot.lane.b32.xlu0 %v3761, 69
  %v3836 = vpop.permute.xlu0 %3835
  %3837 = vrot.lane.b32.xlu0 %v3762, 69
  %v3838 = vpop.permute.xlu0 %3837
  %3839 = vrot.lane.b32.xlu0 %v3763, 69
  %v3840 = vpop.permute.xlu0 %3839
  %3841 = vrot.lane.b32.xlu0 %v3764, 69
  %v3842 = vpop.permute.xlu0 %3841
  %vm3843 = vcmask 564224
  %v3844 = vsel %vm3843, %v3792, %v3794
  %v3845 = vsel %vm3843, %v3794, %v3796
  %v3846 = vsel %vm3843, %v3796, %v3798
  %v3847 = vsel %vm3843, %v3798, %v3800
  %v3848 = vsel %vm3843, %v3800, %v3802
  %v3849 = vsel %vm3843, %v3802, %v3804
  %v3850 = vsel %vm3843, %v3804, %v3806
  %v3851 = vsel %vm3843, %v3806, %v3808
  %v3852 = vsel %vm3843, %v3808, %v3810
  %v3853 = vsel %vm3843, %v3810, %v3812
  %v3854 = vsel %vm3843, %v3812, %v3814
  %v3855 = vsel %vm3843, %v3814, %v3816
  %v3856 = vsel %vm3843, %v3818, %v3820
  %v3857 = vsel %vm3843, %v3820, %v3822
  %v3858 = vsel %vm3843, %v3822, %v3824
  %v3859 = vsel %vm3843, %v3824, %v3826
  %v3860 = vsel %vm3843, %v3826, %v3828
  %v3861 = vsel %vm3843, %v3828, %v3830
  %v3862 = vsel %vm3843, %v3830, %v3832
  %v3863 = vsel %vm3843, %v3832, %v3834
  %v3864 = vsel %vm3843, %v3834, %v3836
  %v3865 = vsel %vm3843, %v3836, %v3838
  %v3866 = vsel %vm3843, %v3838, %v3840
  %v3867 = vsel %vm3843, %v3840, %v3842
  %v3894 = vadd.f32 %v3615, %v3844
  %v3895 = vadd.f32 %v3616, %v3845
  %v3896 = vadd.f32 %v3617, %v3846
  %v3897 = vadd.f32 %v3618, %v3847
  %v3898 = vadd.f32 %v3619, %v3848
  %v3899 = vadd.f32 %v3620, %v3849
  %v3900 = vadd.f32 %v3621, %v3850
  %v3901 = vadd.f32 %v3622, %v3851
  %v3902 = vadd.f32 %v3623, %v3852
  %v3903 = vadd.f32 %v3624, %v3853
  %v3904 = vadd.f32 %v3625, %v3854
  %v3905 = vadd.f32 %v3626, %v3855
  %v3906 = vadd.f32 %v3627, %v3816
  %v3907 = vadd.f32 %v3628, %v3856
  %v3908 = vadd.f32 %v3629, %v3857
  %v3909 = vadd.f32 %v3630, %v3858
  %v3910 = vadd.f32 %v3631, %v3859
  %v3911 = vadd.f32 %v3632, %v3860
  %v3912 = vadd.f32 %v3633, %v3861
  %v3913 = vadd.f32 %v3634, %v3862
  %v3914 = vadd.f32 %v3635, %v3863
  %v3915 = vadd.f32 %v3636, %v3864
  %v3916 = vadd.f32 %v3637, %v3865
  %v3917 = vadd.f32 %v3638, %v3866
  %v3918 = vadd.f32 %v3639, %v3867
  %v3919 = vadd.f32 %v3640, %v3842
  %s3920 = scalar_lea.vmem %s2, 224
  %v3921 = vld [vmem:[%s3920] sm:$0xff]
  %v3922 = vld [vmem:[%s3920 + $0x8] sm:$0xff]
  %v3923 = vmul.f32 %v83, %v153
  %v3924 = vmul.f32 %v84, %v154
  %3927 = vrot.lane.b32.xlu0 %v3923, 60
  %v3928 = vpop.permute.xlu0 %3927
  %3929 = vrot.lane.b32.xlu0 %v3924, 60
  %v3930 = vpop.permute.xlu0 %3929
  %v3931 = vrot.slane %v3928, 7
  %v3932 = vrot.slane %v3930, 7
  %vm3933 = vcmask 490496
  %v3934 = vsel %vm3933, %v3931, %v3928
  %v3935 = vsel %vm307, %v3931, %v3932
  %v3936 = vsel %vm3933, %v3935, %v3930
  %v3939 = vmul.f32 %v155, %v3934
  %v3940 = vmul.f32 %v156, %v3936
  %3942 = vset.pattern.permute.xlu0 0
  %3943 = vperm.xlu0 %3942, %v3921
  %v3944 = vpop.permute.xlu0 %3943
  %3947 = vset.pattern.permute.xlu0 0
  %3948 = vperm.xlu0 %3947, %v3922
  %v3949 = vpop.permute.xlu0 %3948
  %v3953 = vlaneseq
  %v3954 = vshrl.u32 %v3953, 7
  %v3955 = vsub.s32 0, %v3954
  %v3956 = vrot.slane %v3939, %v3955
  %v3957 = vlaneseq
  %v3958 = vshrl.u32 %v3957, 7
  %v3959 = vsub.s32 1, %v3958
  %v3960 = vrot.slane %v3939, %v3959
  %v3961 = vlaneseq
  %v3962 = vshrl.u32 %v3961, 7
  %v3963 = vsub.s32 2, %v3962
  %v3964 = vrot.slane %v3939, %v3963
  %v3965 = vlaneseq
  %v3966 = vshrl.u32 %v3965, 7
  %v3967 = vsub.s32 3, %v3966
  %v3968 = vrot.slane %v3939, %v3967
  %v3969 = vlaneseq
  %v3970 = vshrl.u32 %v3969, 7
  %v3971 = vsub.s32 4, %v3970
  %v3972 = vrot.slane %v3939, %v3971
  %v3973 = vlaneseq
  %v3974 = vshrl.u32 %v3973, 7
  %v3975 = vsub.s32 5, %v3974
  %v3976 = vrot.slane %v3939, %v3975
  %v3977 = vlaneseq
  %v3978 = vshrl.u32 %v3977, 7
  %v3979 = vsub.s32 6, %v3978
  %v3980 = vrot.slane %v3939, %v3979
  %v3981 = vlaneseq
  %v3982 = vshrl.u32 %v3981, 7
  %v3983 = vsub.s32 7, %v3982
  %v3984 = vrot.slane %v3939, %v3983
  %v3985 = vlaneseq
  %v3986 = vshrl.u32 %v3985, 7
  %v3987 = vsub.s32 0, %v3986
  %v3988 = vrot.slane %v3940, %v3987
  %v3989 = vlaneseq
  %v3990 = vshrl.u32 %v3989, 7
  %v3991 = vsub.s32 1, %v3990
  %v3992 = vrot.slane %v3940, %v3991
  %v3993 = vlaneseq
  %v3994 = vshrl.u32 %v3993, 7
  %v3995 = vsub.s32 2, %v3994
  %v3996 = vrot.slane %v3940, %v3995
  %v3997 = vlaneseq
  %v3998 = vshrl.u32 %v3997, 7
  %v3999 = vsub.s32 3, %v3998
  %v4000 = vrot.slane %v3940, %v3999
  %v4001 = vlaneseq
  %v4002 = vshrl.u32 %v4001, 7
  %v4003 = vsub.s32 4, %v4002
  %v4004 = vrot.slane %v3940, %v4003
  %v4018 = vmul.f32 %v3944, %v3956
  %v4019 = vmul.f32 %v3944, %v3960
  %v4020 = vmul.f32 %v3944, %v3964
  %v4021 = vmul.f32 %v3944, %v3968
  %v4022 = vmul.f32 %v3944, %v3972
  %v4023 = vmul.f32 %v3944, %v3976
  %v4024 = vmul.f32 %v3944, %v3980
  %v4025 = vmul.f32 %v3944, %v3984
  %v4026 = vmul.f32 %v3944, %v3988
  %v4027 = vmul.f32 %v3944, %v3992
  %v4028 = vmul.f32 %v3944, %v3996
  %v4029 = vmul.f32 %v3944, %v4000
  %v4030 = vmul.f32 %v3944, %v4004
  %v4031 = vmul.f32 %v3949, %v3956
  %v4032 = vmul.f32 %v3949, %v3960
  %v4033 = vmul.f32 %v3949, %v3964
  %v4034 = vmul.f32 %v3949, %v3968
  %v4035 = vmul.f32 %v3949, %v3972
  %v4036 = vmul.f32 %v3949, %v3976
  %v4037 = vmul.f32 %v3949, %v3980
  %v4038 = vmul.f32 %v3949, %v3984
  %v4039 = vmul.f32 %v3949, %v3988
  %v4040 = vmul.f32 %v3949, %v3992
  %v4041 = vmul.f32 %v3949, %v3996
  %v4042 = vmul.f32 %v3949, %v4000
  %v4043 = vmul.f32 %v3949, %v4004
  %4070 = vrot.lane.b32.xlu0 %v4018, 68
  %v4071 = vpop.permute.xlu0 %4070
  %4072 = vrot.lane.b32.xlu0 %v4019, 68
  %v4073 = vpop.permute.xlu0 %4072
  %4074 = vrot.lane.b32.xlu0 %v4020, 68
  %v4075 = vpop.permute.xlu0 %4074
  %4076 = vrot.lane.b32.xlu0 %v4021, 68
  %v4077 = vpop.permute.xlu0 %4076
  %4078 = vrot.lane.b32.xlu0 %v4022, 68
  %v4079 = vpop.permute.xlu0 %4078
  %4080 = vrot.lane.b32.xlu0 %v4023, 68
  %v4081 = vpop.permute.xlu0 %4080
  %4082 = vrot.lane.b32.xlu0 %v4024, 68
  %v4083 = vpop.permute.xlu0 %4082
  %4084 = vrot.lane.b32.xlu0 %v4025, 68
  %v4085 = vpop.permute.xlu0 %4084
  %4086 = vrot.lane.b32.xlu0 %v4026, 68
  %v4087 = vpop.permute.xlu0 %4086
  %4088 = vrot.lane.b32.xlu0 %v4027, 68
  %v4089 = vpop.permute.xlu0 %4088
  %4090 = vrot.lane.b32.xlu0 %v4028, 68
  %v4091 = vpop.permute.xlu0 %4090
  %4092 = vrot.lane.b32.xlu0 %v4029, 68
  %v4093 = vpop.permute.xlu0 %4092
  %4094 = vrot.lane.b32.xlu0 %v4030, 68
  %v4095 = vpop.permute.xlu0 %4094
  %4096 = vrot.lane.b32.xlu0 %v4031, 68
  %v4097 = vpop.permute.xlu0 %4096
  %4098 = vrot.lane.b32.xlu0 %v4032, 68
  %v4099 = vpop.permute.xlu0 %4098
  %4100 = vrot.lane.b32.xlu0 %v4033, 68
  %v4101 = vpop.permute.xlu0 %4100
  %4102 = vrot.lane.b32.xlu0 %v4034, 68
  %v4103 = vpop.permute.xlu0 %4102
  %4104 = vrot.lane.b32.xlu0 %v4035, 68
  %v4105 = vpop.permute.xlu0 %4104
  %4106 = vrot.lane.b32.xlu0 %v4036, 68
  %v4107 = vpop.permute.xlu0 %4106
  %4108 = vrot.lane.b32.xlu0 %v4037, 68
  %v4109 = vpop.permute.xlu0 %4108
  %4110 = vrot.lane.b32.xlu0 %v4038, 68
  %v4111 = vpop.permute.xlu0 %4110
  %4112 = vrot.lane.b32.xlu0 %v4039, 68
  %v4113 = vpop.permute.xlu0 %4112
  %4114 = vrot.lane.b32.xlu0 %v4040, 68
  %v4115 = vpop.permute.xlu0 %4114
  %4116 = vrot.lane.b32.xlu0 %v4041, 68
  %v4117 = vpop.permute.xlu0 %4116
  %4118 = vrot.lane.b32.xlu0 %v4042, 68
  %v4119 = vpop.permute.xlu0 %4118
  %4120 = vrot.lane.b32.xlu0 %v4043, 68
  %v4121 = vpop.permute.xlu0 %4120
  %vm4122 = vcmask 556032
  %v4123 = vsel %vm4122, %v4071, %v4073
  %v4124 = vsel %vm4122, %v4073, %v4075
  %v4125 = vsel %vm4122, %v4075, %v4077
  %v4126 = vsel %vm4122, %v4077, %v4079
  %v4127 = vsel %vm4122, %v4079, %v4081
  %v4128 = vsel %vm4122, %v4081, %v4083
  %v4129 = vsel %vm4122, %v4083, %v4085
  %v4130 = vsel %vm4122, %v4085, %v4087
  %v4131 = vsel %vm4122, %v4087, %v4089
  %v4132 = vsel %vm4122, %v4089, %v4091
  %v4133 = vsel %vm4122, %v4091, %v4093
  %v4134 = vsel %vm4122, %v4093, %v4095
  %v4135 = vsel %vm4122, %v4097, %v4099
  %v4136 = vsel %vm4122, %v4099, %v4101
  %v4137 = vsel %vm4122, %v4101, %v4103
  %v4138 = vsel %vm4122, %v4103, %v4105
  %v4139 = vsel %vm4122, %v4105, %v4107
  %v4140 = vsel %vm4122, %v4107, %v4109
  %v4141 = vsel %vm4122, %v4109, %v4111
  %v4142 = vsel %vm4122, %v4111, %v4113
  %v4143 = vsel %vm4122, %v4113, %v4115
  %v4144 = vsel %vm4122, %v4115, %v4117
  %v4145 = vsel %vm4122, %v4117, %v4119
  %v4146 = vsel %vm4122, %v4119, %v4121
  %v4173 = vadd.f32 %v3894, %v4123
  %v4174 = vadd.f32 %v3895, %v4124
  %v4175 = vadd.f32 %v3896, %v4125
  %v4176 = vadd.f32 %v3897, %v4126
  %v4177 = vadd.f32 %v3898, %v4127
  %v4178 = vadd.f32 %v3899, %v4128
  %v4179 = vadd.f32 %v3900, %v4129
  %v4180 = vadd.f32 %v3901, %v4130
  %v4181 = vadd.f32 %v3902, %v4131
  %v4182 = vadd.f32 %v3903, %v4132
  %v4183 = vadd.f32 %v3904, %v4133
  %v4184 = vadd.f32 %v3905, %v4134
  %v4185 = vadd.f32 %v3906, %v4095
  %v4186 = vadd.f32 %v3907, %v4135
  %v4187 = vadd.f32 %v3908, %v4136
  %v4188 = vadd.f32 %v3909, %v4137
  %v4189 = vadd.f32 %v3910, %v4138
  %v4190 = vadd.f32 %v3911, %v4139
  %v4191 = vadd.f32 %v3912, %v4140
  %v4192 = vadd.f32 %v3913, %v4141
  %v4193 = vadd.f32 %v3914, %v4142
  %v4194 = vadd.f32 %v3915, %v4143
  %v4195 = vadd.f32 %v3916, %v4144
  %v4196 = vadd.f32 %v3917, %v4145
  %v4197 = vadd.f32 %v3918, %v4146
  %v4198 = vadd.f32 %v3919, %v4121
  %s4199 = scalar_lea.vmem %s2, 240
  %v4200 = vld [vmem:[%s4199] sm:$0xff]
  %v4201 = vld [vmem:[%s4199 + $0x8] sm:$0xff]
  %v4202 = vmul.f32 %v93, %v113
  %v4203 = vmul.f32 %v94, %v114
  %4206 = vrot.lane.b32.xlu0 %v4202, 84
  %v4207 = vpop.permute.xlu0 %4206
  %4208 = vrot.lane.b32.xlu0 %v4203, 84
  %v4209 = vpop.permute.xlu0 %4208
  %v4210 = vrot.slane %v4207, 7
  %v4211 = vrot.slane %v4209, 7
  %vm4212 = vcmask 687104
  %v4213 = vsel %vm4212, %v4210, %v4207
  %v4214 = vsel %vm307, %v4210, %v4211
  %v4215 = vsel %vm4212, %v4214, %v4209
  %v4218 = vmul.f32 %v155, %v4213
  %v4219 = vmul.f32 %v156, %v4215
  %4221 = vset.pattern.permute.xlu0 0
  %4222 = vperm.xlu0 %4221, %v4200
  %v4223 = vpop.permute.xlu0 %4222
  %4226 = vset.pattern.permute.xlu0 0
  %4227 = vperm.xlu0 %4226, %v4201
  %v4228 = vpop.permute.xlu0 %4227
  %v4232 = vlaneseq
  %v4233 = vshrl.u32 %v4232, 7
  %v4234 = vsub.s32 0, %v4233
  %v4235 = vrot.slane %v4218, %v4234
  %v4236 = vlaneseq
  %v4237 = vshrl.u32 %v4236, 7
  %v4238 = vsub.s32 1, %v4237
  %v4239 = vrot.slane %v4218, %v4238
  %v4240 = vlaneseq
  %v4241 = vshrl.u32 %v4240, 7
  %v4242 = vsub.s32 2, %v4241
  %v4243 = vrot.slane %v4218, %v4242
  %v4244 = vlaneseq
  %v4245 = vshrl.u32 %v4244, 7
  %v4246 = vsub.s32 3, %v4245
  %v4247 = vrot.slane %v4218, %v4246
  %v4248 = vlaneseq
  %v4249 = vshrl.u32 %v4248, 7
  %v4250 = vsub.s32 4, %v4249
  %v4251 = vrot.slane %v4218, %v4250
  %v4252 = vlaneseq
  %v4253 = vshrl.u32 %v4252, 7
  %v4254 = vsub.s32 5, %v4253
  %v4255 = vrot.slane %v4218, %v4254
  %v4256 = vlaneseq
  %v4257 = vshrl.u32 %v4256, 7
  %v4258 = vsub.s32 6, %v4257
  %v4259 = vrot.slane %v4218, %v4258
  %v4260 = vlaneseq
  %v4261 = vshrl.u32 %v4260, 7
  %v4262 = vsub.s32 7, %v4261
  %v4263 = vrot.slane %v4218, %v4262
  %v4264 = vlaneseq
  %v4265 = vshrl.u32 %v4264, 7
  %v4266 = vsub.s32 0, %v4265
  %v4267 = vrot.slane %v4219, %v4266
  %v4268 = vlaneseq
  %v4269 = vshrl.u32 %v4268, 7
  %v4270 = vsub.s32 1, %v4269
  %v4271 = vrot.slane %v4219, %v4270
  %v4272 = vlaneseq
  %v4273 = vshrl.u32 %v4272, 7
  %v4274 = vsub.s32 2, %v4273
  %v4275 = vrot.slane %v4219, %v4274
  %v4276 = vlaneseq
  %v4277 = vshrl.u32 %v4276, 7
  %v4278 = vsub.s32 3, %v4277
  %v4279 = vrot.slane %v4219, %v4278
  %v4280 = vlaneseq
  %v4281 = vshrl.u32 %v4280, 7
  %v4282 = vsub.s32 4, %v4281
  %v4283 = vrot.slane %v4219, %v4282
  %v4297 = vmul.f32 %v4223, %v4235
  %v4298 = vmul.f32 %v4223, %v4239
  %v4299 = vmul.f32 %v4223, %v4243
  %v4300 = vmul.f32 %v4223, %v4247
  %v4301 = vmul.f32 %v4223, %v4251
  %v4302 = vmul.f32 %v4223, %v4255
  %v4303 = vmul.f32 %v4223, %v4259
  %v4304 = vmul.f32 %v4223, %v4263
  %v4305 = vmul.f32 %v4223, %v4267
  %v4306 = vmul.f32 %v4223, %v4271
  %v4307 = vmul.f32 %v4223, %v4275
  %v4308 = vmul.f32 %v4223, %v4279
  %v4309 = vmul.f32 %v4223, %v4283
  %v4310 = vmul.f32 %v4228, %v4235
  %v4311 = vmul.f32 %v4228, %v4239
  %v4312 = vmul.f32 %v4228, %v4243
  %v4313 = vmul.f32 %v4228, %v4247
  %v4314 = vmul.f32 %v4228, %v4251
  %v4315 = vmul.f32 %v4228, %v4255
  %v4316 = vmul.f32 %v4228, %v4259
  %v4317 = vmul.f32 %v4228, %v4263
  %v4318 = vmul.f32 %v4228, %v4267
  %v4319 = vmul.f32 %v4228, %v4271
  %v4320 = vmul.f32 %v4228, %v4275
  %v4321 = vmul.f32 %v4228, %v4279
  %v4322 = vmul.f32 %v4228, %v4283
  %4349 = vrot.lane.b32.xlu0 %v4297, 44
  %v4350 = vpop.permute.xlu0 %4349
  %4351 = vrot.lane.b32.xlu0 %v4298, 44
  %v4352 = vpop.permute.xlu0 %4351
  %4353 = vrot.lane.b32.xlu0 %v4299, 44
  %v4354 = vpop.permute.xlu0 %4353
  %4355 = vrot.lane.b32.xlu0 %v4300, 44
  %v4356 = vpop.permute.xlu0 %4355
  %4357 = vrot.lane.b32.xlu0 %v4301, 44
  %v4358 = vpop.permute.xlu0 %4357
  %4359 = vrot.lane.b32.xlu0 %v4302, 44
  %v4360 = vpop.permute.xlu0 %4359
  %4361 = vrot.lane.b32.xlu0 %v4303, 44
  %v4362 = vpop.permute.xlu0 %4361
  %4363 = vrot.lane.b32.xlu0 %v4304, 44
  %v4364 = vpop.permute.xlu0 %4363
  %4365 = vrot.lane.b32.xlu0 %v4305, 44
  %v4366 = vpop.permute.xlu0 %4365
  %4367 = vrot.lane.b32.xlu0 %v4306, 44
  %v4368 = vpop.permute.xlu0 %4367
  %4369 = vrot.lane.b32.xlu0 %v4307, 44
  %v4370 = vpop.permute.xlu0 %4369
  %4371 = vrot.lane.b32.xlu0 %v4308, 44
  %v4372 = vpop.permute.xlu0 %4371
  %4373 = vrot.lane.b32.xlu0 %v4309, 44
  %v4374 = vpop.permute.xlu0 %4373
  %4375 = vrot.lane.b32.xlu0 %v4310, 44
  %v4376 = vpop.permute.xlu0 %4375
  %4377 = vrot.lane.b32.xlu0 %v4311, 44
  %v4378 = vpop.permute.xlu0 %4377
  %4379 = vrot.lane.b32.xlu0 %v4312, 44
  %v4380 = vpop.permute.xlu0 %4379
  %4381 = vrot.lane.b32.xlu0 %v4313, 44
  %v4382 = vpop.permute.xlu0 %4381
  %4383 = vrot.lane.b32.xlu0 %v4314, 44
  %v4384 = vpop.permute.xlu0 %4383
  %4385 = vrot.lane.b32.xlu0 %v4315, 44
  %v4386 = vpop.permute.xlu0 %4385
  %4387 = vrot.lane.b32.xlu0 %v4316, 44
  %v4388 = vpop.permute.xlu0 %4387
  %4389 = vrot.lane.b32.xlu0 %v4317, 44
  %v4390 = vpop.permute.xlu0 %4389
  %4391 = vrot.lane.b32.xlu0 %v4318, 44
  %v4392 = vpop.permute.xlu0 %4391
  %4393 = vrot.lane.b32.xlu0 %v4319, 44
  %v4394 = vpop.permute.xlu0 %4393
  %4395 = vrot.lane.b32.xlu0 %v4320, 44
  %v4396 = vpop.permute.xlu0 %4395
  %4397 = vrot.lane.b32.xlu0 %v4321, 44
  %v4398 = vpop.permute.xlu0 %4397
  %4399 = vrot.lane.b32.xlu0 %v4322, 44
  %v4400 = vpop.permute.xlu0 %4399
  %vm4401 = vcmask 359424
  %v4402 = vsel %vm4401, %v4350, %v4352
  %v4403 = vsel %vm4401, %v4352, %v4354
  %v4404 = vsel %vm4401, %v4354, %v4356
  %v4405 = vsel %vm4401, %v4356, %v4358
  %v4406 = vsel %vm4401, %v4358, %v4360
  %v4407 = vsel %vm4401, %v4360, %v4362
  %v4408 = vsel %vm4401, %v4362, %v4364
  %v4409 = vsel %vm4401, %v4364, %v4366
  %v4410 = vsel %vm4401, %v4366, %v4368
  %v4411 = vsel %vm4401, %v4368, %v4370
  %v4412 = vsel %vm4401, %v4370, %v4372
  %v4413 = vsel %vm4401, %v4372, %v4374
  %v4414 = vsel %vm4401, %v4376, %v4378
  %v4415 = vsel %vm4401, %v4378, %v4380
  %v4416 = vsel %vm4401, %v4380, %v4382
  %v4417 = vsel %vm4401, %v4382, %v4384
  %v4418 = vsel %vm4401, %v4384, %v4386
  %v4419 = vsel %vm4401, %v4386, %v4388
  %v4420 = vsel %vm4401, %v4388, %v4390
  %v4421 = vsel %vm4401, %v4390, %v4392
  %v4422 = vsel %vm4401, %v4392, %v4394
  %v4423 = vsel %vm4401, %v4394, %v4396
  %v4424 = vsel %vm4401, %v4396, %v4398
  %v4425 = vsel %vm4401, %v4398, %v4400
  %v4452 = vadd.f32 %v4173, %v4402
  %v4453 = vadd.f32 %v4174, %v4403
  %v4454 = vadd.f32 %v4175, %v4404
  %v4455 = vadd.f32 %v4176, %v4405
  %v4456 = vadd.f32 %v4177, %v4406
  %v4457 = vadd.f32 %v4178, %v4407
  %v4458 = vadd.f32 %v4179, %v4408
  %v4459 = vadd.f32 %v4180, %v4409
  %v4460 = vadd.f32 %v4181, %v4410
  %v4461 = vadd.f32 %v4182, %v4411
  %v4462 = vadd.f32 %v4183, %v4412
  %v4463 = vadd.f32 %v4184, %v4413
  %v4464 = vadd.f32 %v4185, %v4374
  %v4465 = vadd.f32 %v4186, %v4414
  %v4466 = vadd.f32 %v4187, %v4415
  %v4467 = vadd.f32 %v4188, %v4416
  %v4468 = vadd.f32 %v4189, %v4417
  %v4469 = vadd.f32 %v4190, %v4418
  %v4470 = vadd.f32 %v4191, %v4419
  %v4471 = vadd.f32 %v4192, %v4420
  %v4472 = vadd.f32 %v4193, %v4421
  %v4473 = vadd.f32 %v4194, %v4422
  %v4474 = vadd.f32 %v4195, %v4423
  %v4475 = vadd.f32 %v4196, %v4424
  %v4476 = vadd.f32 %v4197, %v4425
  %v4477 = vadd.f32 %v4198, %v4400
  %s4478 = scalar_lea.vmem %s2, 256
  %v4479 = vld [vmem:[%s4478] sm:$0xff]
  %v4480 = vld [vmem:[%s4478 + $0x8] sm:$0xff]
  %v4481 = vmul.f32 %v93, %v123
  %v4482 = vmul.f32 %v94, %v124
  %4485 = vrot.lane.b32.xlu0 %v4481, 85
  %v4486 = vpop.permute.xlu0 %4485
  %4487 = vrot.lane.b32.xlu0 %v4482, 85
  %v4488 = vpop.permute.xlu0 %4487
  %v4489 = vrot.slane %v4486, 7
  %v4490 = vrot.slane %v4488, 7
  %vm4491 = vcmask 695296
  %v4492 = vsel %vm4491, %v4489, %v4486
  %v4493 = vsel %vm307, %v4489, %v4490
  %v4494 = vsel %vm4491, %v4493, %v4488
  %v4497 = vmul.f32 %v155, %v4492
  %v4498 = vmul.f32 %v156, %v4494
  %4500 = vset.pattern.permute.xlu0 0
  %4501 = vperm.xlu0 %4500, %v4479
  %v4502 = vpop.permute.xlu0 %4501
  %4505 = vset.pattern.permute.xlu0 0
  %4506 = vperm.xlu0 %4505, %v4480
  %v4507 = vpop.permute.xlu0 %4506
  %v4511 = vlaneseq
  %v4512 = vshrl.u32 %v4511, 7
  %v4513 = vsub.s32 0, %v4512
  %v4514 = vrot.slane %v4497, %v4513
  %v4515 = vlaneseq
  %v4516 = vshrl.u32 %v4515, 7
  %v4517 = vsub.s32 1, %v4516
  %v4518 = vrot.slane %v4497, %v4517
  %v4519 = vlaneseq
  %v4520 = vshrl.u32 %v4519, 7
  %v4521 = vsub.s32 2, %v4520
  %v4522 = vrot.slane %v4497, %v4521
  %v4523 = vlaneseq
  %v4524 = vshrl.u32 %v4523, 7
  %v4525 = vsub.s32 3, %v4524
  %v4526 = vrot.slane %v4497, %v4525
  %v4527 = vlaneseq
  %v4528 = vshrl.u32 %v4527, 7
  %v4529 = vsub.s32 4, %v4528
  %v4530 = vrot.slane %v4497, %v4529
  %v4531 = vlaneseq
  %v4532 = vshrl.u32 %v4531, 7
  %v4533 = vsub.s32 5, %v4532
  %v4534 = vrot.slane %v4497, %v4533
  %v4535 = vlaneseq
  %v4536 = vshrl.u32 %v4535, 7
  %v4537 = vsub.s32 6, %v4536
  %v4538 = vrot.slane %v4497, %v4537
  %v4539 = vlaneseq
  %v4540 = vshrl.u32 %v4539, 7
  %v4541 = vsub.s32 7, %v4540
  %v4542 = vrot.slane %v4497, %v4541
  %v4543 = vlaneseq
  %v4544 = vshrl.u32 %v4543, 7
  %v4545 = vsub.s32 0, %v4544
  %v4546 = vrot.slane %v4498, %v4545
  %v4547 = vlaneseq
  %v4548 = vshrl.u32 %v4547, 7
  %v4549 = vsub.s32 1, %v4548
  %v4550 = vrot.slane %v4498, %v4549
  %v4551 = vlaneseq
  %v4552 = vshrl.u32 %v4551, 7
  %v4553 = vsub.s32 2, %v4552
  %v4554 = vrot.slane %v4498, %v4553
  %v4555 = vlaneseq
  %v4556 = vshrl.u32 %v4555, 7
  %v4557 = vsub.s32 3, %v4556
  %v4558 = vrot.slane %v4498, %v4557
  %v4559 = vlaneseq
  %v4560 = vshrl.u32 %v4559, 7
  %v4561 = vsub.s32 4, %v4560
  %v4562 = vrot.slane %v4498, %v4561
  %v4576 = vmul.f32 %v4502, %v4514
  %v4577 = vmul.f32 %v4502, %v4518
  %v4578 = vmul.f32 %v4502, %v4522
  %v4579 = vmul.f32 %v4502, %v4526
  %v4580 = vmul.f32 %v4502, %v4530
  %v4581 = vmul.f32 %v4502, %v4534
  %v4582 = vmul.f32 %v4502, %v4538
  %v4583 = vmul.f32 %v4502, %v4542
  %v4584 = vmul.f32 %v4502, %v4546
  %v4585 = vmul.f32 %v4502, %v4550
  %v4586 = vmul.f32 %v4502, %v4554
  %v4587 = vmul.f32 %v4502, %v4558
  %v4588 = vmul.f32 %v4502, %v4562
  %v4589 = vmul.f32 %v4507, %v4514
  %v4590 = vmul.f32 %v4507, %v4518
  %v4591 = vmul.f32 %v4507, %v4522
  %v4592 = vmul.f32 %v4507, %v4526
  %v4593 = vmul.f32 %v4507, %v4530
  %v4594 = vmul.f32 %v4507, %v4534
  %v4595 = vmul.f32 %v4507, %v4538
  %v4596 = vmul.f32 %v4507, %v4542
  %v4597 = vmul.f32 %v4507, %v4546
  %v4598 = vmul.f32 %v4507, %v4550
  %v4599 = vmul.f32 %v4507, %v4554
  %v4600 = vmul.f32 %v4507, %v4558
  %v4601 = vmul.f32 %v4507, %v4562
  %4628 = vrot.lane.b32.xlu0 %v4576, 43
  %v4629 = vpop.permute.xlu0 %4628
  %4630 = vrot.lane.b32.xlu0 %v4577, 43
  %v4631 = vpop.permute.xlu0 %4630
  %4632 = vrot.lane.b32.xlu0 %v4578, 43
  %v4633 = vpop.permute.xlu0 %4632
  %4634 = vrot.lane.b32.xlu0 %v4579, 43
  %v4635 = vpop.permute.xlu0 %4634
  %4636 = vrot.lane.b32.xlu0 %v4580, 43
  %v4637 = vpop.permute.xlu0 %4636
  %4638 = vrot.lane.b32.xlu0 %v4581, 43
  %v4639 = vpop.permute.xlu0 %4638
  %4640 = vrot.lane.b32.xlu0 %v4582, 43
  %v4641 = vpop.permute.xlu0 %4640
  %4642 = vrot.lane.b32.xlu0 %v4583, 43
  %v4643 = vpop.permute.xlu0 %4642
  %4644 = vrot.lane.b32.xlu0 %v4584, 43
  %v4645 = vpop.permute.xlu0 %4644
  %4646 = vrot.lane.b32.xlu0 %v4585, 43
  %v4647 = vpop.permute.xlu0 %4646
  %4648 = vrot.lane.b32.xlu0 %v4586, 43
  %v4649 = vpop.permute.xlu0 %4648
  %4650 = vrot.lane.b32.xlu0 %v4587, 43
  %v4651 = vpop.permute.xlu0 %4650
  %4652 = vrot.lane.b32.xlu0 %v4588, 43
  %v4653 = vpop.permute.xlu0 %4652
  %4654 = vrot.lane.b32.xlu0 %v4589, 43
  %v4655 = vpop.permute.xlu0 %4654
  %4656 = vrot.lane.b32.xlu0 %v4590, 43
  %v4657 = vpop.permute.xlu0 %4656
  %4658 = vrot.lane.b32.xlu0 %v4591, 43
  %v4659 = vpop.permute.xlu0 %4658
  %4660 = vrot.lane.b32.xlu0 %v4592, 43
  %v4661 = vpop.permute.xlu0 %4660
  %4662 = vrot.lane.b32.xlu0 %v4593, 43
  %v4663 = vpop.permute.xlu0 %4662
  %4664 = vrot.lane.b32.xlu0 %v4594, 43
  %v4665 = vpop.permute.xlu0 %4664
  %4666 = vrot.lane.b32.xlu0 %v4595, 43
  %v4667 = vpop.permute.xlu0 %4666
  %4668 = vrot.lane.b32.xlu0 %v4596, 43
  %v4669 = vpop.permute.xlu0 %4668
  %4670 = vrot.lane.b32.xlu0 %v4597, 43
  %v4671 = vpop.permute.xlu0 %4670
  %4672 = vrot.lane.b32.xlu0 %v4598, 43
  %v4673 = vpop.permute.xlu0 %4672
  %4674 = vrot.lane.b32.xlu0 %v4599, 43
  %v4675 = vpop.permute.xlu0 %4674
  %4676 = vrot.lane.b32.xlu0 %v4600, 43
  %v4677 = vpop.permute.xlu0 %4676
  %4678 = vrot.lane.b32.xlu0 %v4601, 43
  %v4679 = vpop.permute.xlu0 %4678
  %vm4680 = vcmask 351232
  %v4681 = vsel %vm4680, %v4629, %v4631
  %v4682 = vsel %vm4680, %v4631, %v4633
  %v4683 = vsel %vm4680, %v4633, %v4635
  %v4684 = vsel %vm4680, %v4635, %v4637
  %v4685 = vsel %vm4680, %v4637, %v4639
  %v4686 = vsel %vm4680, %v4639, %v4641
  %v4687 = vsel %vm4680, %v4641, %v4643
  %v4688 = vsel %vm4680, %v4643, %v4645
  %v4689 = vsel %vm4680, %v4645, %v4647
  %v4690 = vsel %vm4680, %v4647, %v4649
  %v4691 = vsel %vm4680, %v4649, %v4651
  %v4692 = vsel %vm4680, %v4651, %v4653
  %v4693 = vsel %vm4680, %v4655, %v4657
  %v4694 = vsel %vm4680, %v4657, %v4659
  %v4695 = vsel %vm4680, %v4659, %v4661
  %v4696 = vsel %vm4680, %v4661, %v4663
  %v4697 = vsel %vm4680, %v4663, %v4665
  %v4698 = vsel %vm4680, %v4665, %v4667
  %v4699 = vsel %vm4680, %v4667, %v4669
  %v4700 = vsel %vm4680, %v4669, %v4671
  %v4701 = vsel %vm4680, %v4671, %v4673
  %v4702 = vsel %vm4680, %v4673, %v4675
  %v4703 = vsel %vm4680, %v4675, %v4677
  %v4704 = vsel %vm4680, %v4677, %v4679
  %v4731 = vadd.f32 %v4452, %v4681
  %v4732 = vadd.f32 %v4453, %v4682
  %v4733 = vadd.f32 %v4454, %v4683
  %v4734 = vadd.f32 %v4455, %v4684
  %v4735 = vadd.f32 %v4456, %v4685
  %v4736 = vadd.f32 %v4457, %v4686
  %v4737 = vadd.f32 %v4458, %v4687
  %v4738 = vadd.f32 %v4459, %v4688
  %v4739 = vadd.f32 %v4460, %v4689
  %v4740 = vadd.f32 %v4461, %v4690
  %v4741 = vadd.f32 %v4462, %v4691
  %v4742 = vadd.f32 %v4463, %v4692
  %v4743 = vadd.f32 %v4464, %v4653
  %v4744 = vadd.f32 %v4465, %v4693
  %v4745 = vadd.f32 %v4466, %v4694
  %v4746 = vadd.f32 %v4467, %v4695
  %v4747 = vadd.f32 %v4468, %v4696
  %v4748 = vadd.f32 %v4469, %v4697
  %v4749 = vadd.f32 %v4470, %v4698
  %v4750 = vadd.f32 %v4471, %v4699
  %v4751 = vadd.f32 %v4472, %v4700
  %v4752 = vadd.f32 %v4473, %v4701
  %v4753 = vadd.f32 %v4474, %v4702
  %v4754 = vadd.f32 %v4475, %v4703
  %v4755 = vadd.f32 %v4476, %v4704
  %v4756 = vadd.f32 %v4477, %v4679
  %s4757 = scalar_lea.vmem %s2, 272
  %v4758 = vld [vmem:[%s4757] sm:$0xff]
  %v4759 = vld [vmem:[%s4757 + $0x8] sm:$0xff]
  %v4760 = vmul.f32 %v93, %v133
  %v4761 = vmul.f32 %v94, %v134
  %4764 = vrot.lane.b32.xlu0 %v4760, 86
  %v4765 = vpop.permute.xlu0 %4764
  %4766 = vrot.lane.b32.xlu0 %v4761, 86
  %v4767 = vpop.permute.xlu0 %4766
  %v4768 = vrot.slane %v4765, 7
  %v4769 = vrot.slane %v4767, 7
  %vm4770 = vcmask 703488
  %v4771 = vsel %vm4770, %v4768, %v4765
  %v4772 = vsel %vm307, %v4768, %v4769
  %v4773 = vsel %vm4770, %v4772, %v4767
  %v4776 = vmul.f32 %v155, %v4771
  %v4777 = vmul.f32 %v156, %v4773
  %4779 = vset.pattern.permute.xlu0 0
  %4780 = vperm.xlu0 %4779, %v4758
  %v4781 = vpop.permute.xlu0 %4780
  %4784 = vset.pattern.permute.xlu0 0
  %4785 = vperm.xlu0 %4784, %v4759
  %v4786 = vpop.permute.xlu0 %4785
  %v4790 = vlaneseq
  %v4791 = vshrl.u32 %v4790, 7
  %v4792 = vsub.s32 0, %v4791
  %v4793 = vrot.slane %v4776, %v4792
  %v4794 = vlaneseq
  %v4795 = vshrl.u32 %v4794, 7
  %v4796 = vsub.s32 1, %v4795
  %v4797 = vrot.slane %v4776, %v4796
  %v4798 = vlaneseq
  %v4799 = vshrl.u32 %v4798, 7
  %v4800 = vsub.s32 2, %v4799
  %v4801 = vrot.slane %v4776, %v4800
  %v4802 = vlaneseq
  %v4803 = vshrl.u32 %v4802, 7
  %v4804 = vsub.s32 3, %v4803
  %v4805 = vrot.slane %v4776, %v4804
  %v4806 = vlaneseq
  %v4807 = vshrl.u32 %v4806, 7
  %v4808 = vsub.s32 4, %v4807
  %v4809 = vrot.slane %v4776, %v4808
  %v4810 = vlaneseq
  %v4811 = vshrl.u32 %v4810, 7
  %v4812 = vsub.s32 5, %v4811
  %v4813 = vrot.slane %v4776, %v4812
  %v4814 = vlaneseq
  %v4815 = vshrl.u32 %v4814, 7
  %v4816 = vsub.s32 6, %v4815
  %v4817 = vrot.slane %v4776, %v4816
  %v4818 = vlaneseq
  %v4819 = vshrl.u32 %v4818, 7
  %v4820 = vsub.s32 7, %v4819
  %v4821 = vrot.slane %v4776, %v4820
  %v4822 = vlaneseq
  %v4823 = vshrl.u32 %v4822, 7
  %v4824 = vsub.s32 0, %v4823
  %v4825 = vrot.slane %v4777, %v4824
  %v4826 = vlaneseq
  %v4827 = vshrl.u32 %v4826, 7
  %v4828 = vsub.s32 1, %v4827
  %v4829 = vrot.slane %v4777, %v4828
  %v4830 = vlaneseq
  %v4831 = vshrl.u32 %v4830, 7
  %v4832 = vsub.s32 2, %v4831
  %v4833 = vrot.slane %v4777, %v4832
  %v4834 = vlaneseq
  %v4835 = vshrl.u32 %v4834, 7
  %v4836 = vsub.s32 3, %v4835
  %v4837 = vrot.slane %v4777, %v4836
  %v4838 = vlaneseq
  %v4839 = vshrl.u32 %v4838, 7
  %v4840 = vsub.s32 4, %v4839
  %v4841 = vrot.slane %v4777, %v4840
  %v4855 = vmul.f32 %v4781, %v4793
  %v4856 = vmul.f32 %v4781, %v4797
  %v4857 = vmul.f32 %v4781, %v4801
  %v4858 = vmul.f32 %v4781, %v4805
  %v4859 = vmul.f32 %v4781, %v4809
  %v4860 = vmul.f32 %v4781, %v4813
  %v4861 = vmul.f32 %v4781, %v4817
  %v4862 = vmul.f32 %v4781, %v4821
  %v4863 = vmul.f32 %v4781, %v4825
  %v4864 = vmul.f32 %v4781, %v4829
  %v4865 = vmul.f32 %v4781, %v4833
  %v4866 = vmul.f32 %v4781, %v4837
  %v4867 = vmul.f32 %v4781, %v4841
  %v4868 = vmul.f32 %v4786, %v4793
  %v4869 = vmul.f32 %v4786, %v4797
  %v4870 = vmul.f32 %v4786, %v4801
  %v4871 = vmul.f32 %v4786, %v4805
  %v4872 = vmul.f32 %v4786, %v4809
  %v4873 = vmul.f32 %v4786, %v4813
  %v4874 = vmul.f32 %v4786, %v4817
  %v4875 = vmul.f32 %v4786, %v4821
  %v4876 = vmul.f32 %v4786, %v4825
  %v4877 = vmul.f32 %v4786, %v4829
  %v4878 = vmul.f32 %v4786, %v4833
  %v4879 = vmul.f32 %v4786, %v4837
  %v4880 = vmul.f32 %v4786, %v4841
  %4907 = vrot.lane.b32.xlu0 %v4855, 42
  %v4908 = vpop.permute.xlu0 %4907
  %4909 = vrot.lane.b32.xlu0 %v4856, 42
  %v4910 = vpop.permute.xlu0 %4909
  %4911 = vrot.lane.b32.xlu0 %v4857, 42
  %v4912 = vpop.permute.xlu0 %4911
  %4913 = vrot.lane.b32.xlu0 %v4858, 42
  %v4914 = vpop.permute.xlu0 %4913
  %4915 = vrot.lane.b32.xlu0 %v4859, 42
  %v4916 = vpop.permute.xlu0 %4915
  %4917 = vrot.lane.b32.xlu0 %v4860, 42
  %v4918 = vpop.permute.xlu0 %4917
  %4919 = vrot.lane.b32.xlu0 %v4861, 42
  %v4920 = vpop.permute.xlu0 %4919
  %4921 = vrot.lane.b32.xlu0 %v4862, 42
  %v4922 = vpop.permute.xlu0 %4921
  %4923 = vrot.lane.b32.xlu0 %v4863, 42
  %v4924 = vpop.permute.xlu0 %4923
  %4925 = vrot.lane.b32.xlu0 %v4864, 42
  %v4926 = vpop.permute.xlu0 %4925
  %4927 = vrot.lane.b32.xlu0 %v4865, 42
  %v4928 = vpop.permute.xlu0 %4927
  %4929 = vrot.lane.b32.xlu0 %v4866, 42
  %v4930 = vpop.permute.xlu0 %4929
  %4931 = vrot.lane.b32.xlu0 %v4867, 42
  %v4932 = vpop.permute.xlu0 %4931
  %4933 = vrot.lane.b32.xlu0 %v4868, 42
  %v4934 = vpop.permute.xlu0 %4933
  %4935 = vrot.lane.b32.xlu0 %v4869, 42
  %v4936 = vpop.permute.xlu0 %4935
  %4937 = vrot.lane.b32.xlu0 %v4870, 42
  %v4938 = vpop.permute.xlu0 %4937
  %4939 = vrot.lane.b32.xlu0 %v4871, 42
  %v4940 = vpop.permute.xlu0 %4939
  %4941 = vrot.lane.b32.xlu0 %v4872, 42
  %v4942 = vpop.permute.xlu0 %4941
  %4943 = vrot.lane.b32.xlu0 %v4873, 42
  %v4944 = vpop.permute.xlu0 %4943
  %4945 = vrot.lane.b32.xlu0 %v4874, 42
  %v4946 = vpop.permute.xlu0 %4945
  %4947 = vrot.lane.b32.xlu0 %v4875, 42
  %v4948 = vpop.permute.xlu0 %4947
  %4949 = vrot.lane.b32.xlu0 %v4876, 42
  %v4950 = vpop.permute.xlu0 %4949
  %4951 = vrot.lane.b32.xlu0 %v4877, 42
  %v4952 = vpop.permute.xlu0 %4951
  %4953 = vrot.lane.b32.xlu0 %v4878, 42
  %v4954 = vpop.permute.xlu0 %4953
  %4955 = vrot.lane.b32.xlu0 %v4879, 42
  %v4956 = vpop.permute.xlu0 %4955
  %4957 = vrot.lane.b32.xlu0 %v4880, 42
  %v4958 = vpop.permute.xlu0 %4957
  %vm4959 = vcmask 343040
  %v4960 = vsel %vm4959, %v4908, %v4910
  %v4961 = vsel %vm4959, %v4910, %v4912
  %v4962 = vsel %vm4959, %v4912, %v4914
  %v4963 = vsel %vm4959, %v4914, %v4916
  %v4964 = vsel %vm4959, %v4916, %v4918
  %v4965 = vsel %vm4959, %v4918, %v4920
  %v4966 = vsel %vm4959, %v4920, %v4922
  %v4967 = vsel %vm4959, %v4922, %v4924
  %v4968 = vsel %vm4959, %v4924, %v4926
  %v4969 = vsel %vm4959, %v4926, %v4928
  %v4970 = vsel %vm4959, %v4928, %v4930
  %v4971 = vsel %vm4959, %v4930, %v4932
  %v4972 = vsel %vm4959, %v4934, %v4936
  %v4973 = vsel %vm4959, %v4936, %v4938
  %v4974 = vsel %vm4959, %v4938, %v4940
  %v4975 = vsel %vm4959, %v4940, %v4942
  %v4976 = vsel %vm4959, %v4942, %v4944
  %v4977 = vsel %vm4959, %v4944, %v4946
  %v4978 = vsel %vm4959, %v4946, %v4948
  %v4979 = vsel %vm4959, %v4948, %v4950
  %v4980 = vsel %vm4959, %v4950, %v4952
  %v4981 = vsel %vm4959, %v4952, %v4954
  %v4982 = vsel %vm4959, %v4954, %v4956
  %v4983 = vsel %vm4959, %v4956, %v4958
  %v5010 = vadd.f32 %v4731, %v4960
  %v5011 = vadd.f32 %v4732, %v4961
  %v5012 = vadd.f32 %v4733, %v4962
  %v5013 = vadd.f32 %v4734, %v4963
  %v5014 = vadd.f32 %v4735, %v4964
  %v5015 = vadd.f32 %v4736, %v4965
  %v5016 = vadd.f32 %v4737, %v4966
  %v5017 = vadd.f32 %v4738, %v4967
  %v5018 = vadd.f32 %v4739, %v4968
  %v5019 = vadd.f32 %v4740, %v4969
  %v5020 = vadd.f32 %v4741, %v4970
  %v5021 = vadd.f32 %v4742, %v4971
  %v5022 = vadd.f32 %v4743, %v4932
  %v5023 = vadd.f32 %v4744, %v4972
  %v5024 = vadd.f32 %v4745, %v4973
  %v5025 = vadd.f32 %v4746, %v4974
  %v5026 = vadd.f32 %v4747, %v4975
  %v5027 = vadd.f32 %v4748, %v4976
  %v5028 = vadd.f32 %v4749, %v4977
  %v5029 = vadd.f32 %v4750, %v4978
  %v5030 = vadd.f32 %v4751, %v4979
  %v5031 = vadd.f32 %v4752, %v4980
  %v5032 = vadd.f32 %v4753, %v4981
  %v5033 = vadd.f32 %v4754, %v4982
  %v5034 = vadd.f32 %v4755, %v4983
  %v5035 = vadd.f32 %v4756, %v4958
  %s5036 = scalar_lea.vmem %s2, 288
  %v5037 = vld [vmem:[%s5036] sm:$0xff]
  %v5038 = vld [vmem:[%s5036 + $0x8] sm:$0xff]
  %v5039 = vmul.f32 %v93, %v143
  %v5040 = vmul.f32 %v94, %v144
  %5043 = vrot.lane.b32.xlu0 %v5039, 87
  %v5044 = vpop.permute.xlu0 %5043
  %5045 = vrot.lane.b32.xlu0 %v5040, 87
  %v5046 = vpop.permute.xlu0 %5045
  %v5047 = vrot.slane %v5044, 7
  %v5048 = vrot.slane %v5046, 7
  %vm5049 = vcmask 711680
  %v5050 = vsel %vm5049, %v5047, %v5044
  %v5051 = vsel %vm307, %v5047, %v5048
  %v5052 = vsel %vm5049, %v5051, %v5046
  %v5055 = vmul.f32 %v155, %v5050
  %v5056 = vmul.f32 %v156, %v5052
  %5058 = vset.pattern.permute.xlu0 0
  %5059 = vperm.xlu0 %5058, %v5037
  %v5060 = vpop.permute.xlu0 %5059
  %5063 = vset.pattern.permute.xlu0 0
  %5064 = vperm.xlu0 %5063, %v5038
  %v5065 = vpop.permute.xlu0 %5064
  %v5069 = vlaneseq
  %v5070 = vshrl.u32 %v5069, 7
  %v5071 = vsub.s32 0, %v5070
  %v5072 = vrot.slane %v5055, %v5071
  %v5073 = vlaneseq
  %v5074 = vshrl.u32 %v5073, 7
  %v5075 = vsub.s32 1, %v5074
  %v5076 = vrot.slane %v5055, %v5075
  %v5077 = vlaneseq
  %v5078 = vshrl.u32 %v5077, 7
  %v5079 = vsub.s32 2, %v5078
  %v5080 = vrot.slane %v5055, %v5079
  %v5081 = vlaneseq
  %v5082 = vshrl.u32 %v5081, 7
  %v5083 = vsub.s32 3, %v5082
  %v5084 = vrot.slane %v5055, %v5083
  %v5085 = vlaneseq
  %v5086 = vshrl.u32 %v5085, 7
  %v5087 = vsub.s32 4, %v5086
  %v5088 = vrot.slane %v5055, %v5087
  %v5089 = vlaneseq
  %v5090 = vshrl.u32 %v5089, 7
  %v5091 = vsub.s32 5, %v5090
  %v5092 = vrot.slane %v5055, %v5091
  %v5093 = vlaneseq
  %v5094 = vshrl.u32 %v5093, 7
  %v5095 = vsub.s32 6, %v5094
  %v5096 = vrot.slane %v5055, %v5095
  %v5097 = vlaneseq
  %v5098 = vshrl.u32 %v5097, 7
  %v5099 = vsub.s32 7, %v5098
  %v5100 = vrot.slane %v5055, %v5099
  %v5101 = vlaneseq
  %v5102 = vshrl.u32 %v5101, 7
  %v5103 = vsub.s32 0, %v5102
  %v5104 = vrot.slane %v5056, %v5103
  %v5105 = vlaneseq
  %v5106 = vshrl.u32 %v5105, 7
  %v5107 = vsub.s32 1, %v5106
  %v5108 = vrot.slane %v5056, %v5107
  %v5109 = vlaneseq
  %v5110 = vshrl.u32 %v5109, 7
  %v5111 = vsub.s32 2, %v5110
  %v5112 = vrot.slane %v5056, %v5111
  %v5113 = vlaneseq
  %v5114 = vshrl.u32 %v5113, 7
  %v5115 = vsub.s32 3, %v5114
  %v5116 = vrot.slane %v5056, %v5115
  %v5117 = vlaneseq
  %v5118 = vshrl.u32 %v5117, 7
  %v5119 = vsub.s32 4, %v5118
  %v5120 = vrot.slane %v5056, %v5119
  %v5134 = vmul.f32 %v5060, %v5072
  %v5135 = vmul.f32 %v5060, %v5076
  %v5136 = vmul.f32 %v5060, %v5080
  %v5137 = vmul.f32 %v5060, %v5084
  %v5138 = vmul.f32 %v5060, %v5088
  %v5139 = vmul.f32 %v5060, %v5092
  %v5140 = vmul.f32 %v5060, %v5096
  %v5141 = vmul.f32 %v5060, %v5100
  %v5142 = vmul.f32 %v5060, %v5104
  %v5143 = vmul.f32 %v5060, %v5108
  %v5144 = vmul.f32 %v5060, %v5112
  %v5145 = vmul.f32 %v5060, %v5116
  %v5146 = vmul.f32 %v5060, %v5120
  %v5147 = vmul.f32 %v5065, %v5072
  %v5148 = vmul.f32 %v5065, %v5076
  %v5149 = vmul.f32 %v5065, %v5080
  %v5150 = vmul.f32 %v5065, %v5084
  %v5151 = vmul.f32 %v5065, %v5088
  %v5152 = vmul.f32 %v5065, %v5092
  %v5153 = vmul.f32 %v5065, %v5096
  %v5154 = vmul.f32 %v5065, %v5100
  %v5155 = vmul.f32 %v5065, %v5104
  %v5156 = vmul.f32 %v5065, %v5108
  %v5157 = vmul.f32 %v5065, %v5112
  %v5158 = vmul.f32 %v5065, %v5116
  %v5159 = vmul.f32 %v5065, %v5120
  %5186 = vrot.lane.b32.xlu0 %v5134, 41
  %v5187 = vpop.permute.xlu0 %5186
  %5188 = vrot.lane.b32.xlu0 %v5135, 41
  %v5189 = vpop.permute.xlu0 %5188
  %5190 = vrot.lane.b32.xlu0 %v5136, 41
  %v5191 = vpop.permute.xlu0 %5190
  %5192 = vrot.lane.b32.xlu0 %v5137, 41
  %v5193 = vpop.permute.xlu0 %5192
  %5194 = vrot.lane.b32.xlu0 %v5138, 41
  %v5195 = vpop.permute.xlu0 %5194
  %5196 = vrot.lane.b32.xlu0 %v5139, 41
  %v5197 = vpop.permute.xlu0 %5196
  %5198 = vrot.lane.b32.xlu0 %v5140, 41
  %v5199 = vpop.permute.xlu0 %5198
  %5200 = vrot.lane.b32.xlu0 %v5141, 41
  %v5201 = vpop.permute.xlu0 %5200
  %5202 = vrot.lane.b32.xlu0 %v5142, 41
  %v5203 = vpop.permute.xlu0 %5202
  %5204 = vrot.lane.b32.xlu0 %v5143, 41
  %v5205 = vpop.permute.xlu0 %5204
  %5206 = vrot.lane.b32.xlu0 %v5144, 41
  %v5207 = vpop.permute.xlu0 %5206
  %5208 = vrot.lane.b32.xlu0 %v5145, 41
  %v5209 = vpop.permute.xlu0 %5208
  %5210 = vrot.lane.b32.xlu0 %v5146, 41
  %v5211 = vpop.permute.xlu0 %5210
  %5212 = vrot.lane.b32.xlu0 %v5147, 41
  %v5213 = vpop.permute.xlu0 %5212
  %5214 = vrot.lane.b32.xlu0 %v5148, 41
  %v5215 = vpop.permute.xlu0 %5214
  %5216 = vrot.lane.b32.xlu0 %v5149, 41
  %v5217 = vpop.permute.xlu0 %5216
  %5218 = vrot.lane.b32.xlu0 %v5150, 41
  %v5219 = vpop.permute.xlu0 %5218
  %5220 = vrot.lane.b32.xlu0 %v5151, 41
  %v5221 = vpop.permute.xlu0 %5220
  %5222 = vrot.lane.b32.xlu0 %v5152, 41
  %v5223 = vpop.permute.xlu0 %5222
  %5224 = vrot.lane.b32.xlu0 %v5153, 41
  %v5225 = vpop.permute.xlu0 %5224
  %5226 = vrot.lane.b32.xlu0 %v5154, 41
  %v5227 = vpop.permute.xlu0 %5226
  %5228 = vrot.lane.b32.xlu0 %v5155, 41
  %v5229 = vpop.permute.xlu0 %5228
  %5230 = vrot.lane.b32.xlu0 %v5156, 41
  %v5231 = vpop.permute.xlu0 %5230
  %5232 = vrot.lane.b32.xlu0 %v5157, 41
  %v5233 = vpop.permute.xlu0 %5232
  %5234 = vrot.lane.b32.xlu0 %v5158, 41
  %v5235 = vpop.permute.xlu0 %5234
  %5236 = vrot.lane.b32.xlu0 %v5159, 41
  %v5237 = vpop.permute.xlu0 %5236
  %vm5238 = vcmask 334848
  %v5239 = vsel %vm5238, %v5187, %v5189
  %v5240 = vsel %vm5238, %v5189, %v5191
  %v5241 = vsel %vm5238, %v5191, %v5193
  %v5242 = vsel %vm5238, %v5193, %v5195
  %v5243 = vsel %vm5238, %v5195, %v5197
  %v5244 = vsel %vm5238, %v5197, %v5199
  %v5245 = vsel %vm5238, %v5199, %v5201
  %v5246 = vsel %vm5238, %v5201, %v5203
  %v5247 = vsel %vm5238, %v5203, %v5205
  %v5248 = vsel %vm5238, %v5205, %v5207
  %v5249 = vsel %vm5238, %v5207, %v5209
  %v5250 = vsel %vm5238, %v5209, %v5211
  %v5251 = vsel %vm5238, %v5213, %v5215
  %v5252 = vsel %vm5238, %v5215, %v5217
  %v5253 = vsel %vm5238, %v5217, %v5219
  %v5254 = vsel %vm5238, %v5219, %v5221
  %v5255 = vsel %vm5238, %v5221, %v5223
  %v5256 = vsel %vm5238, %v5223, %v5225
  %v5257 = vsel %vm5238, %v5225, %v5227
  %v5258 = vsel %vm5238, %v5227, %v5229
  %v5259 = vsel %vm5238, %v5229, %v5231
  %v5260 = vsel %vm5238, %v5231, %v5233
  %v5261 = vsel %vm5238, %v5233, %v5235
  %v5262 = vsel %vm5238, %v5235, %v5237
  %v5289 = vadd.f32 %v5010, %v5239
  %v5290 = vadd.f32 %v5011, %v5240
  %v5291 = vadd.f32 %v5012, %v5241
  %v5292 = vadd.f32 %v5013, %v5242
  %v5293 = vadd.f32 %v5014, %v5243
  %v5294 = vadd.f32 %v5015, %v5244
  %v5295 = vadd.f32 %v5016, %v5245
  %v5296 = vadd.f32 %v5017, %v5246
  %v5297 = vadd.f32 %v5018, %v5247
  %v5298 = vadd.f32 %v5019, %v5248
  %v5299 = vadd.f32 %v5020, %v5249
  %v5300 = vadd.f32 %v5021, %v5250
  %v5301 = vadd.f32 %v5022, %v5211
  %v5302 = vadd.f32 %v5023, %v5251
  %v5303 = vadd.f32 %v5024, %v5252
  %v5304 = vadd.f32 %v5025, %v5253
  %v5305 = vadd.f32 %v5026, %v5254
  %v5306 = vadd.f32 %v5027, %v5255
  %v5307 = vadd.f32 %v5028, %v5256
  %v5308 = vadd.f32 %v5029, %v5257
  %v5309 = vadd.f32 %v5030, %v5258
  %v5310 = vadd.f32 %v5031, %v5259
  %v5311 = vadd.f32 %v5032, %v5260
  %v5312 = vadd.f32 %v5033, %v5261
  %v5313 = vadd.f32 %v5034, %v5262
  %v5314 = vadd.f32 %v5035, %v5237
  %s5315 = scalar_lea.vmem %s2, 304
  %v5316 = vld [vmem:[%s5315] sm:$0xff]
  %v5317 = vld [vmem:[%s5315 + $0x8] sm:$0xff]
  %v5318 = vmul.f32 %v93, %v153
  %v5319 = vmul.f32 %v94, %v154
  %5322 = vrot.lane.b32.xlu0 %v5318, 88
  %v5323 = vpop.permute.xlu0 %5322
  %5324 = vrot.lane.b32.xlu0 %v5319, 88
  %v5325 = vpop.permute.xlu0 %5324
  %v5326 = vrot.slane %v5323, 7
  %v5327 = vrot.slane %v5325, 7
  %vm5328 = vcmask 719872
  %v5329 = vsel %vm5328, %v5326, %v5323
  %v5330 = vsel %vm307, %v5326, %v5327
  %v5331 = vsel %vm5328, %v5330, %v5325
  %v5334 = vmul.f32 %v155, %v5329
  %v5335 = vmul.f32 %v156, %v5331
  %5337 = vset.pattern.permute.xlu0 0
  %5338 = vperm.xlu0 %5337, %v5316
  %v5339 = vpop.permute.xlu0 %5338
  %5342 = vset.pattern.permute.xlu0 0
  %5343 = vperm.xlu0 %5342, %v5317
  %v5344 = vpop.permute.xlu0 %5343
  %v5348 = vlaneseq
  %v5349 = vshrl.u32 %v5348, 7
  %v5350 = vsub.s32 0, %v5349
  %v5351 = vrot.slane %v5334, %v5350
  %v5352 = vlaneseq
  %v5353 = vshrl.u32 %v5352, 7
  %v5354 = vsub.s32 1, %v5353
  %v5355 = vrot.slane %v5334, %v5354
  %v5356 = vlaneseq
  %v5357 = vshrl.u32 %v5356, 7
  %v5358 = vsub.s32 2, %v5357
  %v5359 = vrot.slane %v5334, %v5358
  %v5360 = vlaneseq
  %v5361 = vshrl.u32 %v5360, 7
  %v5362 = vsub.s32 3, %v5361
  %v5363 = vrot.slane %v5334, %v5362
  %v5364 = vlaneseq
  %v5365 = vshrl.u32 %v5364, 7
  %v5366 = vsub.s32 4, %v5365
  %v5367 = vrot.slane %v5334, %v5366
  %v5368 = vlaneseq
  %v5369 = vshrl.u32 %v5368, 7
  %v5370 = vsub.s32 5, %v5369
  %v5371 = vrot.slane %v5334, %v5370
  %v5372 = vlaneseq
  %v5373 = vshrl.u32 %v5372, 7
  %v5374 = vsub.s32 6, %v5373
  %v5375 = vrot.slane %v5334, %v5374
  %v5376 = vlaneseq
  %v5377 = vshrl.u32 %v5376, 7
  %v5378 = vsub.s32 7, %v5377
  %v5379 = vrot.slane %v5334, %v5378
  %v5380 = vlaneseq
  %v5381 = vshrl.u32 %v5380, 7
  %v5382 = vsub.s32 0, %v5381
  %v5383 = vrot.slane %v5335, %v5382
  %v5384 = vlaneseq
  %v5385 = vshrl.u32 %v5384, 7
  %v5386 = vsub.s32 1, %v5385
  %v5387 = vrot.slane %v5335, %v5386
  %v5388 = vlaneseq
  %v5389 = vshrl.u32 %v5388, 7
  %v5390 = vsub.s32 2, %v5389
  %v5391 = vrot.slane %v5335, %v5390
  %v5392 = vlaneseq
  %v5393 = vshrl.u32 %v5392, 7
  %v5394 = vsub.s32 3, %v5393
  %v5395 = vrot.slane %v5335, %v5394
  %v5396 = vlaneseq
  %v5397 = vshrl.u32 %v5396, 7
  %v5398 = vsub.s32 4, %v5397
  %v5399 = vrot.slane %v5335, %v5398
  %v5413 = vmul.f32 %v5339, %v5351
  %v5414 = vmul.f32 %v5339, %v5355
  %v5415 = vmul.f32 %v5339, %v5359
  %v5416 = vmul.f32 %v5339, %v5363
  %v5417 = vmul.f32 %v5339, %v5367
  %v5418 = vmul.f32 %v5339, %v5371
  %v5419 = vmul.f32 %v5339, %v5375
  %v5420 = vmul.f32 %v5339, %v5379
  %v5421 = vmul.f32 %v5339, %v5383
  %v5422 = vmul.f32 %v5339, %v5387
  %v5423 = vmul.f32 %v5339, %v5391
  %v5424 = vmul.f32 %v5339, %v5395
  %v5425 = vmul.f32 %v5339, %v5399
  %v5426 = vmul.f32 %v5344, %v5351
  %v5427 = vmul.f32 %v5344, %v5355
  %v5428 = vmul.f32 %v5344, %v5359
  %v5429 = vmul.f32 %v5344, %v5363
  %v5430 = vmul.f32 %v5344, %v5367
  %v5431 = vmul.f32 %v5344, %v5371
  %v5432 = vmul.f32 %v5344, %v5375
  %v5433 = vmul.f32 %v5344, %v5379
  %v5434 = vmul.f32 %v5344, %v5383
  %v5435 = vmul.f32 %v5344, %v5387
  %v5436 = vmul.f32 %v5344, %v5391
  %v5437 = vmul.f32 %v5344, %v5395
  %v5438 = vmul.f32 %v5344, %v5399
  %5465 = vrot.lane.b32.xlu0 %v5413, 40
  %v5466 = vpop.permute.xlu0 %5465
  %5467 = vrot.lane.b32.xlu0 %v5414, 40
  %v5468 = vpop.permute.xlu0 %5467
  %5469 = vrot.lane.b32.xlu0 %v5415, 40
  %v5470 = vpop.permute.xlu0 %5469
  %5471 = vrot.lane.b32.xlu0 %v5416, 40
  %v5472 = vpop.permute.xlu0 %5471
  %5473 = vrot.lane.b32.xlu0 %v5417, 40
  %v5474 = vpop.permute.xlu0 %5473
  %5475 = vrot.lane.b32.xlu0 %v5418, 40
  %v5476 = vpop.permute.xlu0 %5475
  %5477 = vrot.lane.b32.xlu0 %v5419, 40
  %v5478 = vpop.permute.xlu0 %5477
  %5479 = vrot.lane.b32.xlu0 %v5420, 40
  %v5480 = vpop.permute.xlu0 %5479
  %5481 = vrot.lane.b32.xlu0 %v5421, 40
  %v5482 = vpop.permute.xlu0 %5481
  %5483 = vrot.lane.b32.xlu0 %v5422, 40
  %v5484 = vpop.permute.xlu0 %5483
  %5485 = vrot.lane.b32.xlu0 %v5423, 40
  %v5486 = vpop.permute.xlu0 %5485
  %5487 = vrot.lane.b32.xlu0 %v5424, 40
  %v5488 = vpop.permute.xlu0 %5487
  %5489 = vrot.lane.b32.xlu0 %v5425, 40
  %v5490 = vpop.permute.xlu0 %5489
  %5491 = vrot.lane.b32.xlu0 %v5426, 40
  %v5492 = vpop.permute.xlu0 %5491
  %5493 = vrot.lane.b32.xlu0 %v5427, 40
  %v5494 = vpop.permute.xlu0 %5493
  %5495 = vrot.lane.b32.xlu0 %v5428, 40
  %v5496 = vpop.permute.xlu0 %5495
  %5497 = vrot.lane.b32.xlu0 %v5429, 40
  %v5498 = vpop.permute.xlu0 %5497
  %5499 = vrot.lane.b32.xlu0 %v5430, 40
  %v5500 = vpop.permute.xlu0 %5499
  %5501 = vrot.lane.b32.xlu0 %v5431, 40
  %v5502 = vpop.permute.xlu0 %5501
  %5503 = vrot.lane.b32.xlu0 %v5432, 40
  %v5504 = vpop.permute.xlu0 %5503
  %5505 = vrot.lane.b32.xlu0 %v5433, 40
  %v5506 = vpop.permute.xlu0 %5505
  %5507 = vrot.lane.b32.xlu0 %v5434, 40
  %v5508 = vpop.permute.xlu0 %5507
  %5509 = vrot.lane.b32.xlu0 %v5435, 40
  %v5510 = vpop.permute.xlu0 %5509
  %5511 = vrot.lane.b32.xlu0 %v5436, 40
  %v5512 = vpop.permute.xlu0 %5511
  %5513 = vrot.lane.b32.xlu0 %v5437, 40
  %v5514 = vpop.permute.xlu0 %5513
  %5515 = vrot.lane.b32.xlu0 %v5438, 40
  %v5516 = vpop.permute.xlu0 %5515
  %vm5517 = vcmask 326656
  %v5518 = vsel %vm5517, %v5466, %v5468
  %v5519 = vsel %vm5517, %v5468, %v5470
  %v5520 = vsel %vm5517, %v5470, %v5472
  %v5521 = vsel %vm5517, %v5472, %v5474
  %v5522 = vsel %vm5517, %v5474, %v5476
  %v5523 = vsel %vm5517, %v5476, %v5478
  %v5524 = vsel %vm5517, %v5478, %v5480
  %v5525 = vsel %vm5517, %v5480, %v5482
  %v5526 = vsel %vm5517, %v5482, %v5484
  %v5527 = vsel %vm5517, %v5484, %v5486
  %v5528 = vsel %vm5517, %v5486, %v5488
  %v5529 = vsel %vm5517, %v5488, %v5490
  %v5530 = vsel %vm5517, %v5492, %v5494
  %v5531 = vsel %vm5517, %v5494, %v5496
  %v5532 = vsel %vm5517, %v5496, %v5498
  %v5533 = vsel %vm5517, %v5498, %v5500
  %v5534 = vsel %vm5517, %v5500, %v5502
  %v5535 = vsel %vm5517, %v5502, %v5504
  %v5536 = vsel %vm5517, %v5504, %v5506
  %v5537 = vsel %vm5517, %v5506, %v5508
  %v5538 = vsel %vm5517, %v5508, %v5510
  %v5539 = vsel %vm5517, %v5510, %v5512
  %v5540 = vsel %vm5517, %v5512, %v5514
  %v5541 = vsel %vm5517, %v5514, %v5516
  %v5568 = vadd.f32 %v5289, %v5518
  %v5569 = vadd.f32 %v5290, %v5519
  %v5570 = vadd.f32 %v5291, %v5520
  %v5571 = vadd.f32 %v5292, %v5521
  %v5572 = vadd.f32 %v5293, %v5522
  %v5573 = vadd.f32 %v5294, %v5523
  %v5574 = vadd.f32 %v5295, %v5524
  %v5575 = vadd.f32 %v5296, %v5525
  %v5576 = vadd.f32 %v5297, %v5526
  %v5577 = vadd.f32 %v5298, %v5527
  %v5578 = vadd.f32 %v5299, %v5528
  %v5579 = vadd.f32 %v5300, %v5529
  %v5580 = vadd.f32 %v5301, %v5490
  %v5581 = vadd.f32 %v5302, %v5530
  %v5582 = vadd.f32 %v5303, %v5531
  %v5583 = vadd.f32 %v5304, %v5532
  %v5584 = vadd.f32 %v5305, %v5533
  %v5585 = vadd.f32 %v5306, %v5534
  %v5586 = vadd.f32 %v5307, %v5535
  %v5587 = vadd.f32 %v5308, %v5536
  %v5588 = vadd.f32 %v5309, %v5537
  %v5589 = vadd.f32 %v5310, %v5538
  %v5590 = vadd.f32 %v5311, %v5539
  %v5591 = vadd.f32 %v5312, %v5540
  %v5592 = vadd.f32 %v5313, %v5541
  %v5593 = vadd.f32 %v5314, %v5516
  %v5594 = vld [vmem:[%s0] sm:$0xff]
  %v5595 = vld [vmem:[%s0 + $0x8] sm:$0x3f]
  %s5596 = scalar_lea.vmem %s2, 320
  %v5597 = vld [vmem:[%s5596] sm:$0xff]
  %v5598 = vld [vmem:[%s5596 + $0x8] sm:$0xff]
  %v5599 = vmul.f32 %v103, %v113
  %v5600 = vmul.f32 %v104, %v114
  %5603 = vrot.lane.b32.xlu0 %v5599, 112
  %v5604 = vpop.permute.xlu0 %5603
  %5605 = vrot.lane.b32.xlu0 %v5600, 112
  %v5606 = vpop.permute.xlu0 %5605
  %v5607 = vrot.slane %v5604, 7
  %v5608 = vrot.slane %v5606, 7
  %vm5609 = vcmask 916480
  %v5610 = vsel %vm5609, %v5607, %v5604
  %v5611 = vsel %vm307, %v5607, %v5608
  %v5612 = vsel %vm5609, %v5611, %v5606
  %v5615 = vmul.f32 %v5594, %v5610
  %v5616 = vmul.f32 %v5595, %v5612
  %5618 = vset.pattern.permute.xlu0 0
  %5619 = vperm.xlu0 %5618, %v5597
  %v5620 = vpop.permute.xlu0 %5619
  %5623 = vset.pattern.permute.xlu0 0
  %5624 = vperm.xlu0 %5623, %v5598
  %v5625 = vpop.permute.xlu0 %5624
  %v5629 = vlaneseq
  %v5630 = vshrl.u32 %v5629, 7
  %v5631 = vsub.s32 0, %v5630
  %v5632 = vrot.slane %v5615, %v5631
  %v5633 = vlaneseq
  %v5634 = vshrl.u32 %v5633, 7
  %v5635 = vsub.s32 1, %v5634
  %v5636 = vrot.slane %v5615, %v5635
  %v5637 = vlaneseq
  %v5638 = vshrl.u32 %v5637, 7
  %v5639 = vsub.s32 2, %v5638
  %v5640 = vrot.slane %v5615, %v5639
  %v5641 = vlaneseq
  %v5642 = vshrl.u32 %v5641, 7
  %v5643 = vsub.s32 3, %v5642
  %v5644 = vrot.slane %v5615, %v5643
  %v5645 = vlaneseq
  %v5646 = vshrl.u32 %v5645, 7
  %v5647 = vsub.s32 4, %v5646
  %v5648 = vrot.slane %v5615, %v5647
  %v5649 = vlaneseq
  %v5650 = vshrl.u32 %v5649, 7
  %v5651 = vsub.s32 5, %v5650
  %v5652 = vrot.slane %v5615, %v5651
  %v5653 = vlaneseq
  %v5654 = vshrl.u32 %v5653, 7
  %v5655 = vsub.s32 6, %v5654
  %v5656 = vrot.slane %v5615, %v5655
  %v5657 = vlaneseq
  %v5658 = vshrl.u32 %v5657, 7
  %v5659 = vsub.s32 7, %v5658
  %v5660 = vrot.slane %v5615, %v5659
  %v5661 = vlaneseq
  %v5662 = vshrl.u32 %v5661, 7
  %v5663 = vsub.s32 0, %v5662
  %v5664 = vrot.slane %v5616, %v5663
  %v5665 = vlaneseq
  %v5666 = vshrl.u32 %v5665, 7
  %v5667 = vsub.s32 1, %v5666
  %v5668 = vrot.slane %v5616, %v5667
  %v5669 = vlaneseq
  %v5670 = vshrl.u32 %v5669, 7
  %v5671 = vsub.s32 2, %v5670
  %v5672 = vrot.slane %v5616, %v5671
  %v5673 = vlaneseq
  %v5674 = vshrl.u32 %v5673, 7
  %v5675 = vsub.s32 3, %v5674
  %v5676 = vrot.slane %v5616, %v5675
  %v5677 = vlaneseq
  %v5678 = vshrl.u32 %v5677, 7
  %v5679 = vsub.s32 4, %v5678
  %v5680 = vrot.slane %v5616, %v5679
  %v5681 = vlaneseq
  %v5682 = vshrl.u32 %v5681, 7
  %v5683 = vsub.s32 5, %v5682
  %v5684 = vrot.slane %v5616, %v5683
  %v5699 = vmul.f32 %v5620, %v5632
  %v5700 = vmul.f32 %v5620, %v5636
  %v5701 = vmul.f32 %v5620, %v5640
  %v5702 = vmul.f32 %v5620, %v5644
  %v5703 = vmul.f32 %v5620, %v5648
  %v5704 = vmul.f32 %v5620, %v5652
  %v5705 = vmul.f32 %v5620, %v5656
  %v5706 = vmul.f32 %v5620, %v5660
  %v5707 = vmul.f32 %v5620, %v5664
  %v5708 = vmul.f32 %v5620, %v5668
  %v5709 = vmul.f32 %v5620, %v5672
  %v5710 = vmul.f32 %v5620, %v5676
  %v5711 = vmul.f32 %v5620, %v5680
  %v5712 = vmul.f32 %v5620, %v5684
  %v5713 = vmul.f32 %v5625, %v5632
  %v5714 = vmul.f32 %v5625, %v5636
  %v5715 = vmul.f32 %v5625, %v5640
  %v5716 = vmul.f32 %v5625, %v5644
  %v5717 = vmul.f32 %v5625, %v5648
  %v5718 = vmul.f32 %v5625, %v5652
  %v5719 = vmul.f32 %v5625, %v5656
  %v5720 = vmul.f32 %v5625, %v5660
  %v5721 = vmul.f32 %v5625, %v5664
  %v5722 = vmul.f32 %v5625, %v5668
  %v5723 = vmul.f32 %v5625, %v5672
  %v5724 = vmul.f32 %v5625, %v5676
  %v5725 = vmul.f32 %v5625, %v5680
  %v5726 = vmul.f32 %v5625, %v5684
  %5755 = vrot.lane.b32.xlu0 %v5699, 16
  %v5756 = vpop.permute.xlu0 %5755
  %5757 = vrot.lane.b32.xlu0 %v5700, 16
  %v5758 = vpop.permute.xlu0 %5757
  %5759 = vrot.lane.b32.xlu0 %v5701, 16
  %v5760 = vpop.permute.xlu0 %5759
  %5761 = vrot.lane.b32.xlu0 %v5702, 16
  %v5762 = vpop.permute.xlu0 %5761
  %5763 = vrot.lane.b32.xlu0 %v5703, 16
  %v5764 = vpop.permute.xlu0 %5763
  %5765 = vrot.lane.b32.xlu0 %v5704, 16
  %v5766 = vpop.permute.xlu0 %5765
  %5767 = vrot.lane.b32.xlu0 %v5705, 16
  %v5768 = vpop.permute.xlu0 %5767
  %5769 = vrot.lane.b32.xlu0 %v5706, 16
  %v5770 = vpop.permute.xlu0 %5769
  %5771 = vrot.lane.b32.xlu0 %v5707, 16
  %v5772 = vpop.permute.xlu0 %5771
  %5773 = vrot.lane.b32.xlu0 %v5708, 16
  %v5774 = vpop.permute.xlu0 %5773
  %5775 = vrot.lane.b32.xlu0 %v5709, 16
  %v5776 = vpop.permute.xlu0 %5775
  %5777 = vrot.lane.b32.xlu0 %v5710, 16
  %v5778 = vpop.permute.xlu0 %5777
  %5779 = vrot.lane.b32.xlu0 %v5711, 16
  %v5780 = vpop.permute.xlu0 %5779
  %5781 = vrot.lane.b32.xlu0 %v5712, 16
  %v5782 = vpop.permute.xlu0 %5781
  %5783 = vrot.lane.b32.xlu0 %v5713, 16
  %v5784 = vpop.permute.xlu0 %5783
  %5785 = vrot.lane.b32.xlu0 %v5714, 16
  %v5786 = vpop.permute.xlu0 %5785
  %5787 = vrot.lane.b32.xlu0 %v5715, 16
  %v5788 = vpop.permute.xlu0 %5787
  %5789 = vrot.lane.b32.xlu0 %v5716, 16
  %v5790 = vpop.permute.xlu0 %5789
  %5791 = vrot.lane.b32.xlu0 %v5717, 16
  %v5792 = vpop.permute.xlu0 %5791
  %5793 = vrot.lane.b32.xlu0 %v5718, 16
  %v5794 = vpop.permute.xlu0 %5793
  %5795 = vrot.lane.b32.xlu0 %v5719, 16
  %v5796 = vpop.permute.xlu0 %5795
  %5797 = vrot.lane.b32.xlu0 %v5720, 16
  %v5798 = vpop.permute.xlu0 %5797
  %5799 = vrot.lane.b32.xlu0 %v5721, 16
  %v5800 = vpop.permute.xlu0 %5799
  %5801 = vrot.lane.b32.xlu0 %v5722, 16
  %v5802 = vpop.permute.xlu0 %5801
  %5803 = vrot.lane.b32.xlu0 %v5723, 16
  %v5804 = vpop.permute.xlu0 %5803
  %5805 = vrot.lane.b32.xlu0 %v5724, 16
  %v5806 = vpop.permute.xlu0 %5805
  %5807 = vrot.lane.b32.xlu0 %v5725, 16
  %v5808 = vpop.permute.xlu0 %5807
  %5809 = vrot.lane.b32.xlu0 %v5726, 16
  %v5810 = vpop.permute.xlu0 %5809
  %vm5811 = vcmask 130048
  %v5812 = vsel %vm5811, %v5756, %v5758
  %v5813 = vsel %vm5811, %v5758, %v5760
  %v5814 = vsel %vm5811, %v5760, %v5762
  %v5815 = vsel %vm5811, %v5762, %v5764
  %v5816 = vsel %vm5811, %v5764, %v5766
  %v5817 = vsel %vm5811, %v5766, %v5768
  %v5818 = vsel %vm5811, %v5768, %v5770
  %v5819 = vsel %vm5811, %v5770, %v5772
  %v5820 = vsel %vm5811, %v5772, %v5774
  %v5821 = vsel %vm5811, %v5774, %v5776
  %v5822 = vsel %vm5811, %v5776, %v5778
  %v5823 = vsel %vm5811, %v5778, %v5780
  %v5824 = vsel %vm5811, %v5780, %v5782
  %v5825 = vsel %vm5811, %v5784, %v5786
  %v5826 = vsel %vm5811, %v5786, %v5788
  %v5827 = vsel %vm5811, %v5788, %v5790
  %v5828 = vsel %vm5811, %v5790, %v5792
  %v5829 = vsel %vm5811, %v5792, %v5794
  %v5830 = vsel %vm5811, %v5794, %v5796
  %v5831 = vsel %vm5811, %v5796, %v5798
  %v5832 = vsel %vm5811, %v5798, %v5800
  %v5833 = vsel %vm5811, %v5800, %v5802
  %v5834 = vsel %vm5811, %v5802, %v5804
  %v5835 = vsel %vm5811, %v5804, %v5806
  %v5836 = vsel %vm5811, %v5806, %v5808
  %v5837 = vsel %vm5811, %v5808, %v5810
  %v5864 = vadd.f32 %v5568, %v5812
  %v5865 = vadd.f32 %v5569, %v5813
  %v5866 = vadd.f32 %v5570, %v5814
  %v5867 = vadd.f32 %v5571, %v5815
  %v5868 = vadd.f32 %v5572, %v5816
  %v5869 = vadd.f32 %v5573, %v5817
  %v5870 = vadd.f32 %v5574, %v5818
  %v5871 = vadd.f32 %v5575, %v5819
  %v5872 = vadd.f32 %v5576, %v5820
  %v5873 = vadd.f32 %v5577, %v5821
  %v5874 = vadd.f32 %v5578, %v5822
  %v5875 = vadd.f32 %v5579, %v5823
  %v5876 = vadd.f32 %v5580, %v5824
  %v5877 = vadd.f32 %v5581, %v5825
  %v5878 = vadd.f32 %v5582, %v5826
  %v5879 = vadd.f32 %v5583, %v5827
  %v5880 = vadd.f32 %v5584, %v5828
  %v5881 = vadd.f32 %v5585, %v5829
  %v5882 = vadd.f32 %v5586, %v5830
  %v5883 = vadd.f32 %v5587, %v5831
  %v5884 = vadd.f32 %v5588, %v5832
  %v5885 = vadd.f32 %v5589, %v5833
  %v5886 = vadd.f32 %v5590, %v5834
  %v5887 = vadd.f32 %v5591, %v5835
  %v5888 = vadd.f32 %v5592, %v5836
  %v5889 = vadd.f32 %v5593, %v5837
  %s5890 = scalar_lea.vmem %s2, 336
  %v5891 = vld [vmem:[%s5890] sm:$0xff]
  %v5892 = vld [vmem:[%s5890 + $0x8] sm:$0xff]
  %v5893 = vmul.f32 %v103, %v123
  %v5894 = vmul.f32 %v104, %v124
  %5897 = vrot.lane.b32.xlu0 %v5893, 113
  %v5898 = vpop.permute.xlu0 %5897
  %5899 = vrot.lane.b32.xlu0 %v5894, 113
  %v5900 = vpop.permute.xlu0 %5899
  %v5901 = vrot.slane %v5898, 7
  %v5902 = vrot.slane %v5900, 7
  %vm5903 = vcmask 924672
  %v5904 = vsel %vm5903, %v5901, %v5898
  %v5905 = vsel %vm307, %v5901, %v5902
  %v5906 = vsel %vm5903, %v5905, %v5900
  %v5909 = vmul.f32 %v5594, %v5904
  %v5910 = vmul.f32 %v5595, %v5906
  %5912 = vset.pattern.permute.xlu0 0
  %5913 = vperm.xlu0 %5912, %v5891
  %v5914 = vpop.permute.xlu0 %5913
  %5917 = vset.pattern.permute.xlu0 0
  %5918 = vperm.xlu0 %5917, %v5892
  %v5919 = vpop.permute.xlu0 %5918
  %v5923 = vlaneseq
  %v5924 = vshrl.u32 %v5923, 7
  %v5925 = vsub.s32 0, %v5924
  %v5926 = vrot.slane %v5909, %v5925
  %v5927 = vlaneseq
  %v5928 = vshrl.u32 %v5927, 7
  %v5929 = vsub.s32 1, %v5928
  %v5930 = vrot.slane %v5909, %v5929
  %v5931 = vlaneseq
  %v5932 = vshrl.u32 %v5931, 7
  %v5933 = vsub.s32 2, %v5932
  %v5934 = vrot.slane %v5909, %v5933
  %v5935 = vlaneseq
  %v5936 = vshrl.u32 %v5935, 7
  %v5937 = vsub.s32 3, %v5936
  %v5938 = vrot.slane %v5909, %v5937
  %v5939 = vlaneseq
  %v5940 = vshrl.u32 %v5939, 7
  %v5941 = vsub.s32 4, %v5940
  %v5942 = vrot.slane %v5909, %v5941
  %v5943 = vlaneseq
  %v5944 = vshrl.u32 %v5943, 7
  %v5945 = vsub.s32 5, %v5944
  %v5946 = vrot.slane %v5909, %v5945
  %v5947 = vlaneseq
  %v5948 = vshrl.u32 %v5947, 7
  %v5949 = vsub.s32 6, %v5948
  %v5950 = vrot.slane %v5909, %v5949
  %v5951 = vlaneseq
  %v5952 = vshrl.u32 %v5951, 7
  %v5953 = vsub.s32 7, %v5952
  %v5954 = vrot.slane %v5909, %v5953
  %v5955 = vlaneseq
  %v5956 = vshrl.u32 %v5955, 7
  %v5957 = vsub.s32 0, %v5956
  %v5958 = vrot.slane %v5910, %v5957
  %v5959 = vlaneseq
  %v5960 = vshrl.u32 %v5959, 7
  %v5961 = vsub.s32 1, %v5960
  %v5962 = vrot.slane %v5910, %v5961
  %v5963 = vlaneseq
  %v5964 = vshrl.u32 %v5963, 7
  %v5965 = vsub.s32 2, %v5964
  %v5966 = vrot.slane %v5910, %v5965
  %v5967 = vlaneseq
  %v5968 = vshrl.u32 %v5967, 7
  %v5969 = vsub.s32 3, %v5968
  %v5970 = vrot.slane %v5910, %v5969
  %v5971 = vlaneseq
  %v5972 = vshrl.u32 %v5971, 7
  %v5973 = vsub.s32 4, %v5972
  %v5974 = vrot.slane %v5910, %v5973
  %v5975 = vlaneseq
  %v5976 = vshrl.u32 %v5975, 7
  %v5977 = vsub.s32 5, %v5976
  %v5978 = vrot.slane %v5910, %v5977
  %v5993 = vmul.f32 %v5914, %v5926
  %v5994 = vmul.f32 %v5914, %v5930
  %v5995 = vmul.f32 %v5914, %v5934
  %v5996 = vmul.f32 %v5914, %v5938
  %v5997 = vmul.f32 %v5914, %v5942
  %v5998 = vmul.f32 %v5914, %v5946
  %v5999 = vmul.f32 %v5914, %v5950
  %v6000 = vmul.f32 %v5914, %v5954
  %v6001 = vmul.f32 %v5914, %v5958
  %v6002 = vmul.f32 %v5914, %v5962
  %v6003 = vmul.f32 %v5914, %v5966
  %v6004 = vmul.f32 %v5914, %v5970
  %v6005 = vmul.f32 %v5914, %v5974
  %v6006 = vmul.f32 %v5914, %v5978
  %v6007 = vmul.f32 %v5919, %v5926
  %v6008 = vmul.f32 %v5919, %v5930
  %v6009 = vmul.f32 %v5919, %v5934
  %v6010 = vmul.f32 %v5919, %v5938
  %v6011 = vmul.f32 %v5919, %v5942
  %v6012 = vmul.f32 %v5919, %v5946
  %v6013 = vmul.f32 %v5919, %v5950
  %v6014 = vmul.f32 %v5919, %v5954
  %v6015 = vmul.f32 %v5919, %v5958
  %v6016 = vmul.f32 %v5919, %v5962
  %v6017 = vmul.f32 %v5919, %v5966
  %v6018 = vmul.f32 %v5919, %v5970
  %v6019 = vmul.f32 %v5919, %v5974
  %v6020 = vmul.f32 %v5919, %v5978
  %6049 = vrot.lane.b32.xlu0 %v5993, 15
  %v6050 = vpop.permute.xlu0 %6049
  %6051 = vrot.lane.b32.xlu0 %v5994, 15
  %v6052 = vpop.permute.xlu0 %6051
  %6053 = vrot.lane.b32.xlu0 %v5995, 15
  %v6054 = vpop.permute.xlu0 %6053
  %6055 = vrot.lane.b32.xlu0 %v5996, 15
  %v6056 = vpop.permute.xlu0 %6055
  %6057 = vrot.lane.b32.xlu0 %v5997, 15
  %v6058 = vpop.permute.xlu0 %6057
  %6059 = vrot.lane.b32.xlu0 %v5998, 15
  %v6060 = vpop.permute.xlu0 %6059
  %6061 = vrot.lane.b32.xlu0 %v5999, 15
  %v6062 = vpop.permute.xlu0 %6061
  %6063 = vrot.lane.b32.xlu0 %v6000, 15
  %v6064 = vpop.permute.xlu0 %6063
  %6065 = vrot.lane.b32.xlu0 %v6001, 15
  %v6066 = vpop.permute.xlu0 %6065
  %6067 = vrot.lane.b32.xlu0 %v6002, 15
  %v6068 = vpop.permute.xlu0 %6067
  %6069 = vrot.lane.b32.xlu0 %v6003, 15
  %v6070 = vpop.permute.xlu0 %6069
  %6071 = vrot.lane.b32.xlu0 %v6004, 15
  %v6072 = vpop.permute.xlu0 %6071
  %6073 = vrot.lane.b32.xlu0 %v6005, 15
  %v6074 = vpop.permute.xlu0 %6073
  %6075 = vrot.lane.b32.xlu0 %v6006, 15
  %v6076 = vpop.permute.xlu0 %6075
  %6077 = vrot.lane.b32.xlu0 %v6007, 15
  %v6078 = vpop.permute.xlu0 %6077
  %6079 = vrot.lane.b32.xlu0 %v6008, 15
  %v6080 = vpop.permute.xlu0 %6079
  %6081 = vrot.lane.b32.xlu0 %v6009, 15
  %v6082 = vpop.permute.xlu0 %6081
  %6083 = vrot.lane.b32.xlu0 %v6010, 15
  %v6084 = vpop.permute.xlu0 %6083
  %6085 = vrot.lane.b32.xlu0 %v6011, 15
  %v6086 = vpop.permute.xlu0 %6085
  %6087 = vrot.lane.b32.xlu0 %v6012, 15
  %v6088 = vpop.permute.xlu0 %6087
  %6089 = vrot.lane.b32.xlu0 %v6013, 15
  %v6090 = vpop.permute.xlu0 %6089
  %6091 = vrot.lane.b32.xlu0 %v6014, 15
  %v6092 = vpop.permute.xlu0 %6091
  %6093 = vrot.lane.b32.xlu0 %v6015, 15
  %v6094 = vpop.permute.xlu0 %6093
  %6095 = vrot.lane.b32.xlu0 %v6016, 15
  %v6096 = vpop.permute.xlu0 %6095
  %6097 = vrot.lane.b32.xlu0 %v6017, 15
  %v6098 = vpop.permute.xlu0 %6097
  %6099 = vrot.lane.b32.xlu0 %v6018, 15
  %v6100 = vpop.permute.xlu0 %6099
  %6101 = vrot.lane.b32.xlu0 %v6019, 15
  %v6102 = vpop.permute.xlu0 %6101
  %6103 = vrot.lane.b32.xlu0 %v6020, 15
  %v6104 = vpop.permute.xlu0 %6103
  %vm6105 = vcmask 121856
  %v6106 = vsel %vm6105, %v6050, %v6052
  %v6107 = vsel %vm6105, %v6052, %v6054
  %v6108 = vsel %vm6105, %v6054, %v6056
  %v6109 = vsel %vm6105, %v6056, %v6058
  %v6110 = vsel %vm6105, %v6058, %v6060
  %v6111 = vsel %vm6105, %v6060, %v6062
  %v6112 = vsel %vm6105, %v6062, %v6064
  %v6113 = vsel %vm6105, %v6064, %v6066
  %v6114 = vsel %vm6105, %v6066, %v6068
  %v6115 = vsel %vm6105, %v6068, %v6070
  %v6116 = vsel %vm6105, %v6070, %v6072
  %v6117 = vsel %vm6105, %v6072, %v6074
  %v6118 = vsel %vm6105, %v6074, %v6076
  %v6119 = vsel %vm6105, %v6078, %v6080
  %v6120 = vsel %vm6105, %v6080, %v6082
  %v6121 = vsel %vm6105, %v6082, %v6084
  %v6122 = vsel %vm6105, %v6084, %v6086
  %v6123 = vsel %vm6105, %v6086, %v6088
  %v6124 = vsel %vm6105, %v6088, %v6090
  %v6125 = vsel %vm6105, %v6090, %v6092
  %v6126 = vsel %vm6105, %v6092, %v6094
  %v6127 = vsel %vm6105, %v6094, %v6096
  %v6128 = vsel %vm6105, %v6096, %v6098
  %v6129 = vsel %vm6105, %v6098, %v6100
  %v6130 = vsel %vm6105, %v6100, %v6102
  %v6131 = vsel %vm6105, %v6102, %v6104
  %v6158 = vadd.f32 %v5864, %v6106
  %v6159 = vadd.f32 %v5865, %v6107
  %v6160 = vadd.f32 %v5866, %v6108
  %v6161 = vadd.f32 %v5867, %v6109
  %v6162 = vadd.f32 %v5868, %v6110
  %v6163 = vadd.f32 %v5869, %v6111
  %v6164 = vadd.f32 %v5870, %v6112
  %v6165 = vadd.f32 %v5871, %v6113
  %v6166 = vadd.f32 %v5872, %v6114
  %v6167 = vadd.f32 %v5873, %v6115
  %v6168 = vadd.f32 %v5874, %v6116
  %v6169 = vadd.f32 %v5875, %v6117
  %v6170 = vadd.f32 %v5876, %v6118
  %v6171 = vadd.f32 %v5877, %v6119
  %v6172 = vadd.f32 %v5878, %v6120
  %v6173 = vadd.f32 %v5879, %v6121
  %v6174 = vadd.f32 %v5880, %v6122
  %v6175 = vadd.f32 %v5881, %v6123
  %v6176 = vadd.f32 %v5882, %v6124
  %v6177 = vadd.f32 %v5883, %v6125
  %v6178 = vadd.f32 %v5884, %v6126
  %v6179 = vadd.f32 %v5885, %v6127
  %v6180 = vadd.f32 %v5886, %v6128
  %v6181 = vadd.f32 %v5887, %v6129
  %v6182 = vadd.f32 %v5888, %v6130
  %v6183 = vadd.f32 %v5889, %v6131
  %s6184 = scalar_lea.vmem %s2, 352
  %v6185 = vld [vmem:[%s6184] sm:$0xff]
  %v6186 = vld [vmem:[%s6184 + $0x8] sm:$0xff]
  %v6187 = vmul.f32 %v103, %v133
  %v6188 = vmul.f32 %v104, %v134
  %6191 = vrot.lane.b32.xlu0 %v6187, 114
  %v6192 = vpop.permute.xlu0 %6191
  %6193 = vrot.lane.b32.xlu0 %v6188, 114
  %v6194 = vpop.permute.xlu0 %6193
  %v6195 = vrot.slane %v6192, 7
  %v6196 = vrot.slane %v6194, 7
  %vm6197 = vcmask 932864
  %v6198 = vsel %vm6197, %v6195, %v6192
  %v6199 = vsel %vm307, %v6195, %v6196
  %v6200 = vsel %vm6197, %v6199, %v6194
  %v6203 = vmul.f32 %v5594, %v6198
  %v6204 = vmul.f32 %v5595, %v6200
  %6206 = vset.pattern.permute.xlu0 0
  %6207 = vperm.xlu0 %6206, %v6185
  %v6208 = vpop.permute.xlu0 %6207
  %6211 = vset.pattern.permute.xlu0 0
  %6212 = vperm.xlu0 %6211, %v6186
  %v6213 = vpop.permute.xlu0 %6212
  %v6217 = vlaneseq
  %v6218 = vshrl.u32 %v6217, 7
  %v6219 = vsub.s32 0, %v6218
  %v6220 = vrot.slane %v6203, %v6219
  %v6221 = vlaneseq
  %v6222 = vshrl.u32 %v6221, 7
  %v6223 = vsub.s32 1, %v6222
  %v6224 = vrot.slane %v6203, %v6223
  %v6225 = vlaneseq
  %v6226 = vshrl.u32 %v6225, 7
  %v6227 = vsub.s32 2, %v6226
  %v6228 = vrot.slane %v6203, %v6227
  %v6229 = vlaneseq
  %v6230 = vshrl.u32 %v6229, 7
  %v6231 = vsub.s32 3, %v6230
  %v6232 = vrot.slane %v6203, %v6231
  %v6233 = vlaneseq
  %v6234 = vshrl.u32 %v6233, 7
  %v6235 = vsub.s32 4, %v6234
  %v6236 = vrot.slane %v6203, %v6235
  %v6237 = vlaneseq
  %v6238 = vshrl.u32 %v6237, 7
  %v6239 = vsub.s32 5, %v6238
  %v6240 = vrot.slane %v6203, %v6239
  %v6241 = vlaneseq
  %v6242 = vshrl.u32 %v6241, 7
  %v6243 = vsub.s32 6, %v6242
  %v6244 = vrot.slane %v6203, %v6243
  %v6245 = vlaneseq
  %v6246 = vshrl.u32 %v6245, 7
  %v6247 = vsub.s32 7, %v6246
  %v6248 = vrot.slane %v6203, %v6247
  %v6249 = vlaneseq
  %v6250 = vshrl.u32 %v6249, 7
  %v6251 = vsub.s32 0, %v6250
  %v6252 = vrot.slane %v6204, %v6251
  %v6253 = vlaneseq
  %v6254 = vshrl.u32 %v6253, 7
  %v6255 = vsub.s32 1, %v6254
  %v6256 = vrot.slane %v6204, %v6255
  %v6257 = vlaneseq
  %v6258 = vshrl.u32 %v6257, 7
  %v6259 = vsub.s32 2, %v6258
  %v6260 = vrot.slane %v6204, %v6259
  %v6261 = vlaneseq
  %v6262 = vshrl.u32 %v6261, 7
  %v6263 = vsub.s32 3, %v6262
  %v6264 = vrot.slane %v6204, %v6263
  %v6265 = vlaneseq
  %v6266 = vshrl.u32 %v6265, 7
  %v6267 = vsub.s32 4, %v6266
  %v6268 = vrot.slane %v6204, %v6267
  %v6269 = vlaneseq
  %v6270 = vshrl.u32 %v6269, 7
  %v6271 = vsub.s32 5, %v6270
  %v6272 = vrot.slane %v6204, %v6271
  %v6287 = vmul.f32 %v6208, %v6220
  %v6288 = vmul.f32 %v6208, %v6224
  %v6289 = vmul.f32 %v6208, %v6228
  %v6290 = vmul.f32 %v6208, %v6232
  %v6291 = vmul.f32 %v6208, %v6236
  %v6292 = vmul.f32 %v6208, %v6240
  %v6293 = vmul.f32 %v6208, %v6244
  %v6294 = vmul.f32 %v6208, %v6248
  %v6295 = vmul.f32 %v6208, %v6252
  %v6296 = vmul.f32 %v6208, %v6256
  %v6297 = vmul.f32 %v6208, %v6260
  %v6298 = vmul.f32 %v6208, %v6264
  %v6299 = vmul.f32 %v6208, %v6268
  %v6300 = vmul.f32 %v6208, %v6272
  %v6301 = vmul.f32 %v6213, %v6220
  %v6302 = vmul.f32 %v6213, %v6224
  %v6303 = vmul.f32 %v6213, %v6228
  %v6304 = vmul.f32 %v6213, %v6232
  %v6305 = vmul.f32 %v6213, %v6236
  %v6306 = vmul.f32 %v6213, %v6240
  %v6307 = vmul.f32 %v6213, %v6244
  %v6308 = vmul.f32 %v6213, %v6248
  %v6309 = vmul.f32 %v6213, %v6252
  %v6310 = vmul.f32 %v6213, %v6256
  %v6311 = vmul.f32 %v6213, %v6260
  %v6312 = vmul.f32 %v6213, %v6264
  %v6313 = vmul.f32 %v6213, %v6268
  %v6314 = vmul.f32 %v6213, %v6272
  %6343 = vrot.lane.b32.xlu0 %v6287, 14
  %v6344 = vpop.permute.xlu0 %6343
  %6345 = vrot.lane.b32.xlu0 %v6288, 14
  %v6346 = vpop.permute.xlu0 %6345
  %6347 = vrot.lane.b32.xlu0 %v6289, 14
  %v6348 = vpop.permute.xlu0 %6347
  %6349 = vrot.lane.b32.xlu0 %v6290, 14
  %v6350 = vpop.permute.xlu0 %6349
  %6351 = vrot.lane.b32.xlu0 %v6291, 14
  %v6352 = vpop.permute.xlu0 %6351
  %6353 = vrot.lane.b32.xlu0 %v6292, 14
  %v6354 = vpop.permute.xlu0 %6353
  %6355 = vrot.lane.b32.xlu0 %v6293, 14
  %v6356 = vpop.permute.xlu0 %6355
  %6357 = vrot.lane.b32.xlu0 %v6294, 14
  %v6358 = vpop.permute.xlu0 %6357
  %6359 = vrot.lane.b32.xlu0 %v6295, 14
  %v6360 = vpop.permute.xlu0 %6359
  %6361 = vrot.lane.b32.xlu0 %v6296, 14
  %v6362 = vpop.permute.xlu0 %6361
  %6363 = vrot.lane.b32.xlu0 %v6297, 14
  %v6364 = vpop.permute.xlu0 %6363
  %6365 = vrot.lane.b32.xlu0 %v6298, 14
  %v6366 = vpop.permute.xlu0 %6365
  %6367 = vrot.lane.b32.xlu0 %v6299, 14
  %v6368 = vpop.permute.xlu0 %6367
  %6369 = vrot.lane.b32.xlu0 %v6300, 14
  %v6370 = vpop.permute.xlu0 %6369
  %6371 = vrot.lane.b32.xlu0 %v6301, 14
  %v6372 = vpop.permute.xlu0 %6371
  %6373 = vrot.lane.b32.xlu0 %v6302, 14
  %v6374 = vpop.permute.xlu0 %6373
  %6375 = vrot.lane.b32.xlu0 %v6303, 14
  %v6376 = vpop.permute.xlu0 %6375
  %6377 = vrot.lane.b32.xlu0 %v6304, 14
  %v6378 = vpop.permute.xlu0 %6377
  %6379 = vrot.lane.b32.xlu0 %v6305, 14
  %v6380 = vpop.permute.xlu0 %6379
  %6381 = vrot.lane.b32.xlu0 %v6306, 14
  %v6382 = vpop.permute.xlu0 %6381
  %6383 = vrot.lane.b32.xlu0 %v6307, 14
  %v6384 = vpop.permute.xlu0 %6383
  %6385 = vrot.lane.b32.xlu0 %v6308, 14
  %v6386 = vpop.permute.xlu0 %6385
  %6387 = vrot.lane.b32.xlu0 %v6309, 14
  %v6388 = vpop.permute.xlu0 %6387
  %6389 = vrot.lane.b32.xlu0 %v6310, 14
  %v6390 = vpop.permute.xlu0 %6389
  %6391 = vrot.lane.b32.xlu0 %v6311, 14
  %v6392 = vpop.permute.xlu0 %6391
  %6393 = vrot.lane.b32.xlu0 %v6312, 14
  %v6394 = vpop.permute.xlu0 %6393
  %6395 = vrot.lane.b32.xlu0 %v6313, 14
  %v6396 = vpop.permute.xlu0 %6395
  %6397 = vrot.lane.b32.xlu0 %v6314, 14
  %v6398 = vpop.permute.xlu0 %6397
  %vm6399 = vcmask 113664
  %v6400 = vsel %vm6399, %v6344, %v6346
  %v6401 = vsel %vm6399, %v6346, %v6348
  %v6402 = vsel %vm6399, %v6348, %v6350
  %v6403 = vsel %vm6399, %v6350, %v6352
  %v6404 = vsel %vm6399, %v6352, %v6354
  %v6405 = vsel %vm6399, %v6354, %v6356
  %v6406 = vsel %vm6399, %v6356, %v6358
  %v6407 = vsel %vm6399, %v6358, %v6360
  %v6408 = vsel %vm6399, %v6360, %v6362
  %v6409 = vsel %vm6399, %v6362, %v6364
  %v6410 = vsel %vm6399, %v6364, %v6366
  %v6411 = vsel %vm6399, %v6366, %v6368
  %v6412 = vsel %vm6399, %v6368, %v6370
  %v6413 = vsel %vm6399, %v6372, %v6374
  %v6414 = vsel %vm6399, %v6374, %v6376
  %v6415 = vsel %vm6399, %v6376, %v6378
  %v6416 = vsel %vm6399, %v6378, %v6380
  %v6417 = vsel %vm6399, %v6380, %v6382
  %v6418 = vsel %vm6399, %v6382, %v6384
  %v6419 = vsel %vm6399, %v6384, %v6386
  %v6420 = vsel %vm6399, %v6386, %v6388
  %v6421 = vsel %vm6399, %v6388, %v6390
  %v6422 = vsel %vm6399, %v6390, %v6392
  %v6423 = vsel %vm6399, %v6392, %v6394
  %v6424 = vsel %vm6399, %v6394, %v6396
  %v6425 = vsel %vm6399, %v6396, %v6398
  %v6452 = vadd.f32 %v6158, %v6400
  %v6453 = vadd.f32 %v6159, %v6401
  %v6454 = vadd.f32 %v6160, %v6402
  %v6455 = vadd.f32 %v6161, %v6403
  %v6456 = vadd.f32 %v6162, %v6404
  %v6457 = vadd.f32 %v6163, %v6405
  %v6458 = vadd.f32 %v6164, %v6406
  %v6459 = vadd.f32 %v6165, %v6407
  %v6460 = vadd.f32 %v6166, %v6408
  %v6461 = vadd.f32 %v6167, %v6409
  %v6462 = vadd.f32 %v6168, %v6410
  %v6463 = vadd.f32 %v6169, %v6411
  %v6464 = vadd.f32 %v6170, %v6412
  %v6465 = vadd.f32 %v6171, %v6413
  %v6466 = vadd.f32 %v6172, %v6414
  %v6467 = vadd.f32 %v6173, %v6415
  %v6468 = vadd.f32 %v6174, %v6416
  %v6469 = vadd.f32 %v6175, %v6417
  %v6470 = vadd.f32 %v6176, %v6418
  %v6471 = vadd.f32 %v6177, %v6419
  %v6472 = vadd.f32 %v6178, %v6420
  %v6473 = vadd.f32 %v6179, %v6421
  %v6474 = vadd.f32 %v6180, %v6422
  %v6475 = vadd.f32 %v6181, %v6423
  %v6476 = vadd.f32 %v6182, %v6424
  %v6477 = vadd.f32 %v6183, %v6425
  %s6478 = scalar_lea.vmem %s2, 368
  %v6479 = vld [vmem:[%s6478] sm:$0xff]
  %v6480 = vld [vmem:[%s6478 + $0x8] sm:$0xff]
  %v6481 = vmul.f32 %v103, %v143
  %v6482 = vmul.f32 %v104, %v144
  %6485 = vrot.lane.b32.xlu0 %v6481, 115
  %v6486 = vpop.permute.xlu0 %6485
  %6487 = vrot.lane.b32.xlu0 %v6482, 115
  %v6488 = vpop.permute.xlu0 %6487
  %v6489 = vrot.slane %v6486, 7
  %v6490 = vrot.slane %v6488, 7
  %vm6491 = vcmask 941056
  %v6492 = vsel %vm6491, %v6489, %v6486
  %v6493 = vsel %vm307, %v6489, %v6490
  %v6494 = vsel %vm6491, %v6493, %v6488
  %v6497 = vmul.f32 %v5594, %v6492
  %v6498 = vmul.f32 %v5595, %v6494
  %6500 = vset.pattern.permute.xlu0 0
  %6501 = vperm.xlu0 %6500, %v6479
  %v6502 = vpop.permute.xlu0 %6501
  %6505 = vset.pattern.permute.xlu0 0
  %6506 = vperm.xlu0 %6505, %v6480
  %v6507 = vpop.permute.xlu0 %6506
  %v6511 = vlaneseq
  %v6512 = vshrl.u32 %v6511, 7
  %v6513 = vsub.s32 0, %v6512
  %v6514 = vrot.slane %v6497, %v6513
  %v6515 = vlaneseq
  %v6516 = vshrl.u32 %v6515, 7
  %v6517 = vsub.s32 1, %v6516
  %v6518 = vrot.slane %v6497, %v6517
  %v6519 = vlaneseq
  %v6520 = vshrl.u32 %v6519, 7
  %v6521 = vsub.s32 2, %v6520
  %v6522 = vrot.slane %v6497, %v6521
  %v6523 = vlaneseq
  %v6524 = vshrl.u32 %v6523, 7
  %v6525 = vsub.s32 3, %v6524
  %v6526 = vrot.slane %v6497, %v6525
  %v6527 = vlaneseq
  %v6528 = vshrl.u32 %v6527, 7
  %v6529 = vsub.s32 4, %v6528
  %v6530 = vrot.slane %v6497, %v6529
  %v6531 = vlaneseq
  %v6532 = vshrl.u32 %v6531, 7
  %v6533 = vsub.s32 5, %v6532
  %v6534 = vrot.slane %v6497, %v6533
  %v6535 = vlaneseq
  %v6536 = vshrl.u32 %v6535, 7
  %v6537 = vsub.s32 6, %v6536
  %v6538 = vrot.slane %v6497, %v6537
  %v6539 = vlaneseq
  %v6540 = vshrl.u32 %v6539, 7
  %v6541 = vsub.s32 7, %v6540
  %v6542 = vrot.slane %v6497, %v6541
  %v6543 = vlaneseq
  %v6544 = vshrl.u32 %v6543, 7
  %v6545 = vsub.s32 0, %v6544
  %v6546 = vrot.slane %v6498, %v6545
  %v6547 = vlaneseq
  %v6548 = vshrl.u32 %v6547, 7
  %v6549 = vsub.s32 1, %v6548
  %v6550 = vrot.slane %v6498, %v6549
  %v6551 = vlaneseq
  %v6552 = vshrl.u32 %v6551, 7
  %v6553 = vsub.s32 2, %v6552
  %v6554 = vrot.slane %v6498, %v6553
  %v6555 = vlaneseq
  %v6556 = vshrl.u32 %v6555, 7
  %v6557 = vsub.s32 3, %v6556
  %v6558 = vrot.slane %v6498, %v6557
  %v6559 = vlaneseq
  %v6560 = vshrl.u32 %v6559, 7
  %v6561 = vsub.s32 4, %v6560
  %v6562 = vrot.slane %v6498, %v6561
  %v6563 = vlaneseq
  %v6564 = vshrl.u32 %v6563, 7
  %v6565 = vsub.s32 5, %v6564
  %v6566 = vrot.slane %v6498, %v6565
  %v6581 = vmul.f32 %v6502, %v6514
  %v6582 = vmul.f32 %v6502, %v6518
  %v6583 = vmul.f32 %v6502, %v6522
  %v6584 = vmul.f32 %v6502, %v6526
  %v6585 = vmul.f32 %v6502, %v6530
  %v6586 = vmul.f32 %v6502, %v6534
  %v6587 = vmul.f32 %v6502, %v6538
  %v6588 = vmul.f32 %v6502, %v6542
  %v6589 = vmul.f32 %v6502, %v6546
  %v6590 = vmul.f32 %v6502, %v6550
  %v6591 = vmul.f32 %v6502, %v6554
  %v6592 = vmul.f32 %v6502, %v6558
  %v6593 = vmul.f32 %v6502, %v6562
  %v6594 = vmul.f32 %v6502, %v6566
  %v6595 = vmul.f32 %v6507, %v6514
  %v6596 = vmul.f32 %v6507, %v6518
  %v6597 = vmul.f32 %v6507, %v6522
  %v6598 = vmul.f32 %v6507, %v6526
  %v6599 = vmul.f32 %v6507, %v6530
  %v6600 = vmul.f32 %v6507, %v6534
  %v6601 = vmul.f32 %v6507, %v6538
  %v6602 = vmul.f32 %v6507, %v6542
  %v6603 = vmul.f32 %v6507, %v6546
  %v6604 = vmul.f32 %v6507, %v6550
  %v6605 = vmul.f32 %v6507, %v6554
  %v6606 = vmul.f32 %v6507, %v6558
  %v6607 = vmul.f32 %v6507, %v6562
  %v6608 = vmul.f32 %v6507, %v6566
  %6637 = vrot.lane.b32.xlu0 %v6581, 13
  %v6638 = vpop.permute.xlu0 %6637
  %6639 = vrot.lane.b32.xlu0 %v6582, 13
  %v6640 = vpop.permute.xlu0 %6639
  %6641 = vrot.lane.b32.xlu0 %v6583, 13
  %v6642 = vpop.permute.xlu0 %6641
  %6643 = vrot.lane.b32.xlu0 %v6584, 13
  %v6644 = vpop.permute.xlu0 %6643
  %6645 = vrot.lane.b32.xlu0 %v6585, 13
  %v6646 = vpop.permute.xlu0 %6645
  %6647 = vrot.lane.b32.xlu0 %v6586, 13
  %v6648 = vpop.permute.xlu0 %6647
  %6649 = vrot.lane.b32.xlu0 %v6587, 13
  %v6650 = vpop.permute.xlu0 %6649
  %6651 = vrot.lane.b32.xlu0 %v6588, 13
  %v6652 = vpop.permute.xlu0 %6651
  %6653 = vrot.lane.b32.xlu0 %v6589, 13
  %v6654 = vpop.permute.xlu0 %6653
  %6655 = vrot.lane.b32.xlu0 %v6590, 13
  %v6656 = vpop.permute.xlu0 %6655
  %6657 = vrot.lane.b32.xlu0 %v6591, 13
  %v6658 = vpop.permute.xlu0 %6657
  %6659 = vrot.lane.b32.xlu0 %v6592, 13
  %v6660 = vpop.permute.xlu0 %6659
  %6661 = vrot.lane.b32.xlu0 %v6593, 13
  %v6662 = vpop.permute.xlu0 %6661
  %6663 = vrot.lane.b32.xlu0 %v6594, 13
  %v6664 = vpop.permute.xlu0 %6663
  %6665 = vrot.lane.b32.xlu0 %v6595, 13
  %v6666 = vpop.permute.xlu0 %6665
  %6667 = vrot.lane.b32.xlu0 %v6596, 13
  %v6668 = vpop.permute.xlu0 %6667
  %6669 = vrot.lane.b32.xlu0 %v6597, 13
  %v6670 = vpop.permute.xlu0 %6669
  %6671 = vrot.lane.b32.xlu0 %v6598, 13
  %v6672 = vpop.permute.xlu0 %6671
  %6673 = vrot.lane.b32.xlu0 %v6599, 13
  %v6674 = vpop.permute.xlu0 %6673
  %6675 = vrot.lane.b32.xlu0 %v6600, 13
  %v6676 = vpop.permute.xlu0 %6675
  %6677 = vrot.lane.b32.xlu0 %v6601, 13
  %v6678 = vpop.permute.xlu0 %6677
  %6679 = vrot.lane.b32.xlu0 %v6602, 13
  %v6680 = vpop.permute.xlu0 %6679
  %6681 = vrot.lane.b32.xlu0 %v6603, 13
  %v6682 = vpop.permute.xlu0 %6681
  %6683 = vrot.lane.b32.xlu0 %v6604, 13
  %v6684 = vpop.permute.xlu0 %6683
  %6685 = vrot.lane.b32.xlu0 %v6605, 13
  %v6686 = vpop.permute.xlu0 %6685
  %6687 = vrot.lane.b32.xlu0 %v6606, 13
  %v6688 = vpop.permute.xlu0 %6687
  %6689 = vrot.lane.b32.xlu0 %v6607, 13
  %v6690 = vpop.permute.xlu0 %6689
  %6691 = vrot.lane.b32.xlu0 %v6608, 13
  %v6692 = vpop.permute.xlu0 %6691
  %vm6693 = vcmask 105472
  %v6694 = vsel %vm6693, %v6638, %v6640
  %v6695 = vsel %vm6693, %v6640, %v6642
  %v6696 = vsel %vm6693, %v6642, %v6644
  %v6697 = vsel %vm6693, %v6644, %v6646
  %v6698 = vsel %vm6693, %v6646, %v6648
  %v6699 = vsel %vm6693, %v6648, %v6650
  %v6700 = vsel %vm6693, %v6650, %v6652
  %v6701 = vsel %vm6693, %v6652, %v6654
  %v6702 = vsel %vm6693, %v6654, %v6656
  %v6703 = vsel %vm6693, %v6656, %v6658
  %v6704 = vsel %vm6693, %v6658, %v6660
  %v6705 = vsel %vm6693, %v6660, %v6662
  %v6706 = vsel %vm6693, %v6662, %v6664
  %v6707 = vsel %vm6693, %v6666, %v6668
  %v6708 = vsel %vm6693, %v6668, %v6670
  %v6709 = vsel %vm6693, %v6670, %v6672
  %v6710 = vsel %vm6693, %v6672, %v6674
  %v6711 = vsel %vm6693, %v6674, %v6676
  %v6712 = vsel %vm6693, %v6676, %v6678
  %v6713 = vsel %vm6693, %v6678, %v6680
  %v6714 = vsel %vm6693, %v6680, %v6682
  %v6715 = vsel %vm6693, %v6682, %v6684
  %v6716 = vsel %vm6693, %v6684, %v6686
  %v6717 = vsel %vm6693, %v6686, %v6688
  %v6718 = vsel %vm6693, %v6688, %v6690
  %v6719 = vsel %vm6693, %v6690, %v6692
  %v6746 = vadd.f32 %v6452, %v6694
  %v6747 = vadd.f32 %v6453, %v6695
  %v6748 = vadd.f32 %v6454, %v6696
  %v6749 = vadd.f32 %v6455, %v6697
  %v6750 = vadd.f32 %v6456, %v6698
  %v6751 = vadd.f32 %v6457, %v6699
  %v6752 = vadd.f32 %v6458, %v6700
  %v6753 = vadd.f32 %v6459, %v6701
  %v6754 = vadd.f32 %v6460, %v6702
  %v6755 = vadd.f32 %v6461, %v6703
  %v6756 = vadd.f32 %v6462, %v6704
  %v6757 = vadd.f32 %v6463, %v6705
  %v6758 = vadd.f32 %v6464, %v6706
  %v6759 = vadd.f32 %v6465, %v6707
  %v6760 = vadd.f32 %v6466, %v6708
  %v6761 = vadd.f32 %v6467, %v6709
  %v6762 = vadd.f32 %v6468, %v6710
  %v6763 = vadd.f32 %v6469, %v6711
  %v6764 = vadd.f32 %v6470, %v6712
  %v6765 = vadd.f32 %v6471, %v6713
  %v6766 = vadd.f32 %v6472, %v6714
  %v6767 = vadd.f32 %v6473, %v6715
  %v6768 = vadd.f32 %v6474, %v6716
  %v6769 = vadd.f32 %v6475, %v6717
  %v6770 = vadd.f32 %v6476, %v6718
  %v6771 = vadd.f32 %v6477, %v6719
  %s6772 = scalar_lea.vmem %s2, 384
  %v6773 = vld [vmem:[%s6772] sm:$0xff]
  %v6774 = vld [vmem:[%s6772 + $0x8] sm:$0xff]
  %v6775 = vmul.f32 %v103, %v153
  %v6776 = vmul.f32 %v104, %v154
  %6779 = vrot.lane.b32.xlu0 %v6775, 116
  %v6780 = vpop.permute.xlu0 %6779
  %6781 = vrot.lane.b32.xlu0 %v6776, 116
  %v6782 = vpop.permute.xlu0 %6781
  %v6783 = vrot.slane %v6780, 7
  %v6784 = vrot.slane %v6782, 7
  %vm6785 = vcmask 949248
  %v6786 = vsel %vm6785, %v6783, %v6780
  %v6787 = vsel %vm307, %v6783, %v6784
  %v6788 = vsel %vm6785, %v6787, %v6782
  %v6791 = vmul.f32 %v5594, %v6786
  %v6792 = vmul.f32 %v5595, %v6788
  %6794 = vset.pattern.permute.xlu0 0
  %6795 = vperm.xlu0 %6794, %v6773
  %v6796 = vpop.permute.xlu0 %6795
  %6799 = vset.pattern.permute.xlu0 0
  %6800 = vperm.xlu0 %6799, %v6774
  %v6801 = vpop.permute.xlu0 %6800
  %v6805 = vlaneseq
  %v6806 = vshrl.u32 %v6805, 7
  %v6807 = vsub.s32 0, %v6806
  %v6808 = vrot.slane %v6791, %v6807
  %v6809 = vlaneseq
  %v6810 = vshrl.u32 %v6809, 7
  %v6811 = vsub.s32 1, %v6810
  %v6812 = vrot.slane %v6791, %v6811
  %v6813 = vlaneseq
  %v6814 = vshrl.u32 %v6813, 7
  %v6815 = vsub.s32 2, %v6814
  %v6816 = vrot.slane %v6791, %v6815
  %v6817 = vlaneseq
  %v6818 = vshrl.u32 %v6817, 7
  %v6819 = vsub.s32 3, %v6818
  %v6820 = vrot.slane %v6791, %v6819
  %v6821 = vlaneseq
  %v6822 = vshrl.u32 %v6821, 7
  %v6823 = vsub.s32 4, %v6822
  %v6824 = vrot.slane %v6791, %v6823
  %v6825 = vlaneseq
  %v6826 = vshrl.u32 %v6825, 7
  %v6827 = vsub.s32 5, %v6826
  %v6828 = vrot.slane %v6791, %v6827
  %v6829 = vlaneseq
  %v6830 = vshrl.u32 %v6829, 7
  %v6831 = vsub.s32 6, %v6830
  %v6832 = vrot.slane %v6791, %v6831
  %v6833 = vlaneseq
  %v6834 = vshrl.u32 %v6833, 7
  %v6835 = vsub.s32 7, %v6834
  %v6836 = vrot.slane %v6791, %v6835
  %v6837 = vlaneseq
  %v6838 = vshrl.u32 %v6837, 7
  %v6839 = vsub.s32 0, %v6838
  %v6840 = vrot.slane %v6792, %v6839
  %v6841 = vlaneseq
  %v6842 = vshrl.u32 %v6841, 7
  %v6843 = vsub.s32 1, %v6842
  %v6844 = vrot.slane %v6792, %v6843
  %v6845 = vlaneseq
  %v6846 = vshrl.u32 %v6845, 7
  %v6847 = vsub.s32 2, %v6846
  %v6848 = vrot.slane %v6792, %v6847
  %v6849 = vlaneseq
  %v6850 = vshrl.u32 %v6849, 7
  %v6851 = vsub.s32 3, %v6850
  %v6852 = vrot.slane %v6792, %v6851
  %v6853 = vlaneseq
  %v6854 = vshrl.u32 %v6853, 7
  %v6855 = vsub.s32 4, %v6854
  %v6856 = vrot.slane %v6792, %v6855
  %v6857 = vlaneseq
  %v6858 = vshrl.u32 %v6857, 7
  %v6859 = vsub.s32 5, %v6858
  %v6860 = vrot.slane %v6792, %v6859
  %v6875 = vmul.f32 %v6796, %v6808
  %v6876 = vmul.f32 %v6796, %v6812
  %v6877 = vmul.f32 %v6796, %v6816
  %v6878 = vmul.f32 %v6796, %v6820
  %v6879 = vmul.f32 %v6796, %v6824
  %v6880 = vmul.f32 %v6796, %v6828
  %v6881 = vmul.f32 %v6796, %v6832
  %v6882 = vmul.f32 %v6796, %v6836
  %v6883 = vmul.f32 %v6796, %v6840
  %v6884 = vmul.f32 %v6796, %v6844
  %v6885 = vmul.f32 %v6796, %v6848
  %v6886 = vmul.f32 %v6796, %v6852
  %v6887 = vmul.f32 %v6796, %v6856
  %v6888 = vmul.f32 %v6796, %v6860
  %v6889 = vmul.f32 %v6801, %v6808
  %v6890 = vmul.f32 %v6801, %v6812
  %v6891 = vmul.f32 %v6801, %v6816
  %v6892 = vmul.f32 %v6801, %v6820
  %v6893 = vmul.f32 %v6801, %v6824
  %v6894 = vmul.f32 %v6801, %v6828
  %v6895 = vmul.f32 %v6801, %v6832
  %v6896 = vmul.f32 %v6801, %v6836
  %v6897 = vmul.f32 %v6801, %v6840
  %v6898 = vmul.f32 %v6801, %v6844
  %v6899 = vmul.f32 %v6801, %v6848
  %v6900 = vmul.f32 %v6801, %v6852
  %v6901 = vmul.f32 %v6801, %v6856
  %v6902 = vmul.f32 %v6801, %v6860
  %6931 = vrot.lane.b32.xlu0 %v6875, 12
  %v6932 = vpop.permute.xlu0 %6931
  %6933 = vrot.lane.b32.xlu0 %v6876, 12
  %v6934 = vpop.permute.xlu0 %6933
  %6935 = vrot.lane.b32.xlu0 %v6877, 12
  %v6936 = vpop.permute.xlu0 %6935
  %6937 = vrot.lane.b32.xlu0 %v6878, 12
  %v6938 = vpop.permute.xlu0 %6937
  %6939 = vrot.lane.b32.xlu0 %v6879, 12
  %v6940 = vpop.permute.xlu0 %6939
  %6941 = vrot.lane.b32.xlu0 %v6880, 12
  %v6942 = vpop.permute.xlu0 %6941
  %6943 = vrot.lane.b32.xlu0 %v6881, 12
  %v6944 = vpop.permute.xlu0 %6943
  %6945 = vrot.lane.b32.xlu0 %v6882, 12
  %v6946 = vpop.permute.xlu0 %6945
  %6947 = vrot.lane.b32.xlu0 %v6883, 12
  %v6948 = vpop.permute.xlu0 %6947
  %6949 = vrot.lane.b32.xlu0 %v6884, 12
  %v6950 = vpop.permute.xlu0 %6949
  %6951 = vrot.lane.b32.xlu0 %v6885, 12
  %v6952 = vpop.permute.xlu0 %6951
  %6953 = vrot.lane.b32.xlu0 %v6886, 12
  %v6954 = vpop.permute.xlu0 %6953
  %6955 = vrot.lane.b32.xlu0 %v6887, 12
  %v6956 = vpop.permute.xlu0 %6955
  %6957 = vrot.lane.b32.xlu0 %v6888, 12
  %v6958 = vpop.permute.xlu0 %6957
  %6959 = vrot.lane.b32.xlu0 %v6889, 12
  %v6960 = vpop.permute.xlu0 %6959
  %6961 = vrot.lane.b32.xlu0 %v6890, 12
  %v6962 = vpop.permute.xlu0 %6961
  %6963 = vrot.lane.b32.xlu0 %v6891, 12
  %v6964 = vpop.permute.xlu0 %6963
  %6965 = vrot.lane.b32.xlu0 %v6892, 12
  %v6966 = vpop.permute.xlu0 %6965
  %6967 = vrot.lane.b32.xlu0 %v6893, 12
  %v6968 = vpop.permute.xlu0 %6967
  %6969 = vrot.lane.b32.xlu0 %v6894, 12
  %v6970 = vpop.permute.xlu0 %6969
  %6971 = vrot.lane.b32.xlu0 %v6895, 12
  %v6972 = vpop.permute.xlu0 %6971
  %6973 = vrot.lane.b32.xlu0 %v6896, 12
  %v6974 = vpop.permute.xlu0 %6973
  %6975 = vrot.lane.b32.xlu0 %v6897, 12
  %v6976 = vpop.permute.xlu0 %6975
  %6977 = vrot.lane.b32.xlu0 %v6898, 12
  %v6978 = vpop.permute.xlu0 %6977
  %6979 = vrot.lane.b32.xlu0 %v6899, 12
  %v6980 = vpop.permute.xlu0 %6979
  %6981 = vrot.lane.b32.xlu0 %v6900, 12
  %v6982 = vpop.permute.xlu0 %6981
  %6983 = vrot.lane.b32.xlu0 %v6901, 12
  %v6984 = vpop.permute.xlu0 %6983
  %6985 = vrot.lane.b32.xlu0 %v6902, 12
  %v6986 = vpop.permute.xlu0 %6985
  %vm6987 = vcmask 97280
  %v6988 = vsel %vm6987, %v6932, %v6934
  %v6989 = vsel %vm6987, %v6934, %v6936
  %v6990 = vsel %vm6987, %v6936, %v6938
  %v6991 = vsel %vm6987, %v6938, %v6940
  %v6992 = vsel %vm6987, %v6940, %v6942
  %v6993 = vsel %vm6987, %v6942, %v6944
  %v6994 = vsel %vm6987, %v6944, %v6946
  %v6995 = vsel %vm6987, %v6946, %v6948
  %v6996 = vsel %vm6987, %v6948, %v6950
  %v6997 = vsel %vm6987, %v6950, %v6952
  %v6998 = vsel %vm6987, %v6952, %v6954
  %v6999 = vsel %vm6987, %v6954, %v6956
  %v7000 = vsel %vm6987, %v6956, %v6958
  %v7001 = vsel %vm6987, %v6960, %v6962
  %v7002 = vsel %vm6987, %v6962, %v6964
  %v7003 = vsel %vm6987, %v6964, %v6966
  %v7004 = vsel %vm6987, %v6966, %v6968
  %v7005 = vsel %vm6987, %v6968, %v6970
  %v7006 = vsel %vm6987, %v6970, %v6972
  %v7007 = vsel %vm6987, %v6972, %v6974
  %v7008 = vsel %vm6987, %v6974, %v6976
  %v7009 = vsel %vm6987, %v6976, %v6978
  %v7010 = vsel %vm6987, %v6978, %v6980
  %v7011 = vsel %vm6987, %v6980, %v6982
  %v7012 = vsel %vm6987, %v6982, %v6984
  %v7013 = vsel %vm6987, %v6984, %v6986
  %v7040 = vadd.f32 %v6746, %v6988
  %v7041 = vadd.f32 %v6747, %v6989
  %v7042 = vadd.f32 %v6748, %v6990
  %v7043 = vadd.f32 %v6749, %v6991
  %v7044 = vadd.f32 %v6750, %v6992
  %v7045 = vadd.f32 %v6751, %v6993
  %v7046 = vadd.f32 %v6752, %v6994
  %v7047 = vadd.f32 %v6753, %v6995
  %v7048 = vadd.f32 %v6754, %v6996
  %v7049 = vadd.f32 %v6755, %v6997
  %v7050 = vadd.f32 %v6756, %v6998
  %v7051 = vadd.f32 %v6757, %v6999
  %v7052 = vadd.f32 %v6758, %v7000
  %v7053 = vadd.f32 %v6759, %v7001
  %v7054 = vadd.f32 %v6760, %v7002
  %v7055 = vadd.f32 %v6761, %v7003
  %v7056 = vadd.f32 %v6762, %v7004
  %v7057 = vadd.f32 %v6763, %v7005
  %v7058 = vadd.f32 %v6764, %v7006
  %v7059 = vadd.f32 %v6765, %v7007
  %v7060 = vadd.f32 %v6766, %v7008
  %v7061 = vadd.f32 %v6767, %v7009
  %v7062 = vadd.f32 %v6768, %v7010
  %v7063 = vadd.f32 %v6769, %v7011
  %v7064 = vadd.f32 %v6770, %v7012
  %v7065 = vadd.f32 %v6771, %v7013
  %v7066 = vadd.f32 %v7040, %v7041
  %v7067 = vadd.f32 %v7066, %v7042
  %v7068 = vadd.f32 %v7067, %v7043
  %v7069 = vadd.f32 %v7068, %v7044
  %v7070 = vadd.f32 %v7069, %v7045
  %v7071 = vadd.f32 %v7070, %v7046
  %v7072 = vadd.f32 %v7071, %v7047
  %v7073 = vadd.f32 %v7072, %v7048
  %v7074 = vadd.f32 %v7073, %v7049
  %v7075 = vadd.f32 %v7074, %v7050
  %v7076 = vadd.f32 %v7075, %v7051
  %v7077 = vsel %vm2538, %v7052, 0.0
  %v7078 = vadd.f32 %v7076, %v7077
  %7079 = vadd.xlane.f32.xlu0 %v7078
  %v7080 = vpop.xlane.xlu0 %7079
  %v7081 = vadd.f32 %v7053, %v7054
  %v7082 = vadd.f32 %v7081, %v7055
  %v7083 = vadd.f32 %v7082, %v7056
  %v7084 = vadd.f32 %v7083, %v7057
  %v7085 = vadd.f32 %v7084, %v7058
  %v7086 = vadd.f32 %v7085, %v7059
  %v7087 = vadd.f32 %v7086, %v7060
  %v7088 = vadd.f32 %v7087, %v7061
  %v7089 = vadd.f32 %v7088, %v7062
  %v7090 = vadd.f32 %v7089, %v7063
  %v7091 = vadd.f32 %v7090, %v7064
  %v7092 = vsel %vm2538, %v7065, 0.0
  %v7093 = vadd.f32 %v7091, %v7092
  %7094 = vadd.xlane.f32.xlu0 %v7093
  %v7095 = vpop.xlane.xlu0 %7094
  %v7096 = vrcp.pop 1568.0
  %v7097 = vmul.f32 %v7080, %v7096
  %v7098 = vmul.f32 %v7095, %v7096
  %v7099 = vmul.f32 %v7040, %v7040
  %v7100 = vmul.f32 %v7041, %v7041
  %v7101 = vmul.f32 %v7042, %v7042
  %v7102 = vmul.f32 %v7043, %v7043
  %v7103 = vmul.f32 %v7044, %v7044
  %v7104 = vmul.f32 %v7045, %v7045
  %v7105 = vmul.f32 %v7046, %v7046
  %v7106 = vmul.f32 %v7047, %v7047
  %v7107 = vmul.f32 %v7048, %v7048
  %v7108 = vmul.f32 %v7049, %v7049
  %v7109 = vmul.f32 %v7050, %v7050
  %v7110 = vmul.f32 %v7051, %v7051
  %v7111 = vmul.f32 %v7052, %v7052
  %v7112 = vmul.f32 %v7053, %v7053
  %v7113 = vmul.f32 %v7054, %v7054
  %v7114 = vmul.f32 %v7055, %v7055
  %v7115 = vmul.f32 %v7056, %v7056
  %v7116 = vmul.f32 %v7057, %v7057
  %v7117 = vmul.f32 %v7058, %v7058
  %v7118 = vmul.f32 %v7059, %v7059
  %v7119 = vmul.f32 %v7060, %v7060
  %v7120 = vmul.f32 %v7061, %v7061
  %v7121 = vmul.f32 %v7062, %v7062
  %v7122 = vmul.f32 %v7063, %v7063
  %v7123 = vmul.f32 %v7064, %v7064
  %v7124 = vmul.f32 %v7065, %v7065
  %v7125 = vadd.f32 %v7099, %v7100
  %v7126 = vadd.f32 %v7125, %v7101
  %v7127 = vadd.f32 %v7126, %v7102
  %v7128 = vadd.f32 %v7127, %v7103
  %v7129 = vadd.f32 %v7128, %v7104
  %v7130 = vadd.f32 %v7129, %v7105
  %v7131 = vadd.f32 %v7130, %v7106
  %v7132 = vadd.f32 %v7131, %v7107
  %v7133 = vadd.f32 %v7132, %v7108
  %v7134 = vadd.f32 %v7133, %v7109
  %v7135 = vadd.f32 %v7134, %v7110
  %v7136 = vsel %vm2538, %v7111, 0.0
  %v7137 = vadd.f32 %v7135, %v7136
  %7138 = vadd.xlane.f32.xlu0 %v7137
  %v7139 = vpop.xlane.xlu0 %7138
  %v7140 = vadd.f32 %v7112, %v7113
  %v7141 = vadd.f32 %v7140, %v7114
  %v7142 = vadd.f32 %v7141, %v7115
  %v7143 = vadd.f32 %v7142, %v7116
  %v7144 = vadd.f32 %v7143, %v7117
  %v7145 = vadd.f32 %v7144, %v7118
  %v7146 = vadd.f32 %v7145, %v7119
  %v7147 = vadd.f32 %v7146, %v7120
  %v7148 = vadd.f32 %v7147, %v7121
  %v7149 = vadd.f32 %v7148, %v7122
  %v7150 = vadd.f32 %v7149, %v7123
  %v7151 = vsel %vm2538, %v7124, 0.0
  %v7152 = vadd.f32 %v7150, %v7151
  %7153 = vadd.xlane.f32.xlu0 %v7152
  %v7154 = vpop.xlane.xlu0 %7153
  %v7155 = vmul.f32 %v7139, %v7096
  %v7156 = vmul.f32 %v7154, %v7096
  %v7157 = vmul.f32 %v7097, %v7097
  %v7158 = vmul.f32 %v7098, %v7098
  %v7159 = vsub.f32 %v7155, %v7157
  %v7160 = vsub.f32 %v7156, %v7158
  %v7161 = vmax.f32 %v7159, 0.0
  %v7162 = vmax.f32 %v7160, 0.0
  %v7163 = vsub.f32 %v7040, %v7097
  %v7164 = vsub.f32 %v7041, %v7097
  %v7165 = vsub.f32 %v7042, %v7097
  %v7166 = vsub.f32 %v7043, %v7097
  %v7167 = vsub.f32 %v7044, %v7097
  %v7168 = vsub.f32 %v7045, %v7097
  %v7169 = vsub.f32 %v7046, %v7097
  %v7170 = vsub.f32 %v7047, %v7097
  %v7171 = vsub.f32 %v7048, %v7097
  %v7172 = vsub.f32 %v7049, %v7097
  %v7173 = vsub.f32 %v7050, %v7097
  %v7174 = vsub.f32 %v7051, %v7097
  %v7175 = vsub.f32 %v7052, %v7097
  %v7176 = vsub.f32 %v7053, %v7098
  %v7177 = vsub.f32 %v7054, %v7098
  %v7178 = vsub.f32 %v7055, %v7098
  %v7179 = vsub.f32 %v7056, %v7098
  %v7180 = vsub.f32 %v7057, %v7098
  %v7181 = vsub.f32 %v7058, %v7098
  %v7182 = vsub.f32 %v7059, %v7098
  %v7183 = vsub.f32 %v7060, %v7098
  %v7184 = vsub.f32 %v7061, %v7098
  %v7185 = vsub.f32 %v7062, %v7098
  %v7186 = vsub.f32 %v7063, %v7098
  %v7187 = vsub.f32 %v7064, %v7098
  %v7188 = vsub.f32 %v7065, %v7098
  %v7189 = vadd.f32 %v7161, 1e-05
  %v7190 = vadd.f32 %v7162, 1e-05
  %v7191 = vrsqrt.pop %v7189
  %v7192 = vrsqrt.pop %v7190
  %v7193 = vmul.f32 %v7163, %v7191
  %v7194 = vmul.f32 %v7164, %v7191
  %v7195 = vmul.f32 %v7165, %v7191
  %v7196 = vmul.f32 %v7166, %v7191
  %v7197 = vmul.f32 %v7167, %v7191
  %v7198 = vmul.f32 %v7168, %v7191
  %v7199 = vmul.f32 %v7169, %v7191
  %v7200 = vmul.f32 %v7170, %v7191
  %v7201 = vmul.f32 %v7171, %v7191
  %v7202 = vmul.f32 %v7172, %v7191
  %v7203 = vmul.f32 %v7173, %v7191
  %v7204 = vmul.f32 %v7174, %v7191
  %v7205 = vmul.f32 %v7175, %v7191
  %v7206 = vmul.f32 %v7176, %v7192
  %v7207 = vmul.f32 %v7177, %v7192
  %v7208 = vmul.f32 %v7178, %v7192
  %v7209 = vmul.f32 %v7179, %v7192
  %v7210 = vmul.f32 %v7180, %v7192
  %v7211 = vmul.f32 %v7181, %v7192
  %v7212 = vmul.f32 %v7182, %v7192
  %v7213 = vmul.f32 %v7183, %v7192
  %v7214 = vmul.f32 %v7184, %v7192
  %v7215 = vmul.f32 %v7185, %v7192
  %v7216 = vmul.f32 %v7186, %v7192
  %v7217 = vmul.f32 %v7187, %v7192
  %v7218 = vmul.f32 %v7188, %v7192
  %v7219 = vld [vmem:[%s3] sm:$0xff]
  %v7220 = vld [vmem:[%s3 + $0x8] sm:$0xff]
  %7222 = vset.pattern.permute.xlu0 0
  %7223 = vperm.xlu0 %7222, %v7219
  %v7224 = vpop.permute.xlu0 %7223
  %7227 = vset.pattern.permute.xlu0 0
  %7228 = vperm.xlu0 %7227, %v7220
  %v7229 = vpop.permute.xlu0 %7228
  %v7231 = vmul.f32 %v7193, %v7224
  %v7232 = vmul.f32 %v7194, %v7224
  %v7233 = vmul.f32 %v7195, %v7224
  %v7234 = vmul.f32 %v7196, %v7224
  %v7235 = vmul.f32 %v7197, %v7224
  %v7236 = vmul.f32 %v7198, %v7224
  %v7237 = vmul.f32 %v7199, %v7224
  %v7238 = vmul.f32 %v7200, %v7224
  %v7239 = vmul.f32 %v7201, %v7224
  %v7240 = vmul.f32 %v7202, %v7224
  %v7241 = vmul.f32 %v7203, %v7224
  %v7242 = vmul.f32 %v7204, %v7224
  %v7243 = vmul.f32 %v7205, %v7224
  %v7244 = vmul.f32 %v7206, %v7229
  %v7245 = vmul.f32 %v7207, %v7229
  %v7246 = vmul.f32 %v7208, %v7229
  %v7247 = vmul.f32 %v7209, %v7229
  %v7248 = vmul.f32 %v7210, %v7229
  %v7249 = vmul.f32 %v7211, %v7229
  %v7250 = vmul.f32 %v7212, %v7229
  %v7251 = vmul.f32 %v7213, %v7229
  %v7252 = vmul.f32 %v7214, %v7229
  %v7253 = vmul.f32 %v7215, %v7229
  %v7254 = vmul.f32 %v7216, %v7229
  %v7255 = vmul.f32 %v7217, %v7229
  %v7256 = vmul.f32 %v7218, %v7229
  %v7257 = vld [vmem:[%s4] sm:$0xff]
  %v7258 = vld [vmem:[%s4 + $0x8] sm:$0xff]
  %7260 = vset.pattern.permute.xlu0 0
  %7261 = vperm.xlu0 %7260, %v7257
  %v7262 = vpop.permute.xlu0 %7261
  %7265 = vset.pattern.permute.xlu0 0
  %7266 = vperm.xlu0 %7265, %v7258
  %v7267 = vpop.permute.xlu0 %7266
  %v7269 = vadd.f32 %v7231, %v7262
  %v7270 = vadd.f32 %v7232, %v7262
  %v7271 = vadd.f32 %v7233, %v7262
  %v7272 = vadd.f32 %v7234, %v7262
  %v7273 = vadd.f32 %v7235, %v7262
  %v7274 = vadd.f32 %v7236, %v7262
  %v7275 = vadd.f32 %v7237, %v7262
  %v7276 = vadd.f32 %v7238, %v7262
  %v7277 = vadd.f32 %v7239, %v7262
  %v7278 = vadd.f32 %v7240, %v7262
  %v7279 = vadd.f32 %v7241, %v7262
  %v7280 = vadd.f32 %v7242, %v7262
  %v7281 = vadd.f32 %v7243, %v7262
  %v7282 = vadd.f32 %v7244, %v7267
  %v7283 = vadd.f32 %v7245, %v7267
  %v7284 = vadd.f32 %v7246, %v7267
  %v7285 = vadd.f32 %v7247, %v7267
  %v7286 = vadd.f32 %v7248, %v7267
  %v7287 = vadd.f32 %v7249, %v7267
  %v7288 = vadd.f32 %v7250, %v7267
  %v7289 = vadd.f32 %v7251, %v7267
  %v7290 = vadd.f32 %v7252, %v7267
  %v7291 = vadd.f32 %v7253, %v7267
  %v7292 = vadd.f32 %v7254, %v7267
  %v7293 = vadd.f32 %v7255, %v7267
  %v7294 = vadd.f32 %v7256, %v7267
  %v7295 = vmax.f32 %v7269, 0.0
  %v7296 = vmax.f32 %v7270, 0.0
  %v7297 = vmax.f32 %v7271, 0.0
  %v7298 = vmax.f32 %v7272, 0.0
  %v7299 = vmax.f32 %v7273, 0.0
  %v7300 = vmax.f32 %v7274, 0.0
  %v7301 = vmax.f32 %v7275, 0.0
  %v7302 = vmax.f32 %v7276, 0.0
  %v7303 = vmax.f32 %v7277, 0.0
  %v7304 = vmax.f32 %v7278, 0.0
  %v7305 = vmax.f32 %v7279, 0.0
  %v7306 = vmax.f32 %v7280, 0.0
  %v7307 = vmax.f32 %v7281, 0.0
  %v7308 = vmax.f32 %v7282, 0.0
  %v7309 = vmax.f32 %v7283, 0.0
  %v7310 = vmax.f32 %v7284, 0.0
  %v7311 = vmax.f32 %v7285, 0.0
  %v7312 = vmax.f32 %v7286, 0.0
  %v7313 = vmax.f32 %v7287, 0.0
  %v7314 = vmax.f32 %v7288, 0.0
  %v7315 = vmax.f32 %v7289, 0.0
  %v7316 = vmax.f32 %v7290, 0.0
  %v7317 = vmax.f32 %v7291, 0.0
  %v7318 = vmax.f32 %v7292, 0.0
  %v7319 = vmax.f32 %v7293, 0.0
  %v7320 = vmax.f32 %v7294, 0.0
  %7321 = vst [vmem:[#allocation2] sm:$0xff] %v7295
  %7322 = vst [vmem:[#allocation2 + $0x8] sm:$0xff] %v7296
  %7323 = vst [vmem:[#allocation2 + $0x10] sm:$0xff] %v7297
  %7324 = vst [vmem:[#allocation2 + $0x18] sm:$0xff] %v7298
  %7325 = vst [vmem:[#allocation2 + $0x20] sm:$0xff] %v7299
  %7326 = vst [vmem:[#allocation2 + $0x28] sm:$0xff] %v7300
  %7327 = vst [vmem:[#allocation2 + $0x30] sm:$0xff] %v7301
  %7328 = vst [vmem:[#allocation2 + $0x38] sm:$0xff] %v7302
  %7329 = vst [vmem:[#allocation2 + $0x40] sm:$0xff] %v7303
  %7330 = vst [vmem:[#allocation2 + $0x48] sm:$0xff] %v7304
  %7331 = vst [vmem:[#allocation2 + $0x50] sm:$0xff] %v7305
  %7332 = vst [vmem:[#allocation2 + $0x58] sm:$0xff] %v7306
  %7333 = vst.msk [vmem:[#allocation2 + $0x60] sm:$0xff] %vm2538, %v7307
  %7334 = vst [vmem:[#allocation2 + $0x68] sm:$0xff] %v7308
  %7335 = vst [vmem:[#allocation2 + $0x70] sm:$0xff] %v7309
  %7336 = vst [vmem:[#allocation2 + $0x78] sm:$0xff] %v7310
  %7337 = vst [vmem:[#allocation2 + $0x80] sm:$0xff] %v7311
  %7338 = vst [vmem:[#allocation2 + $0x88] sm:$0xff] %v7312
  %7339 = vst [vmem:[#allocation2 + $0x90] sm:$0xff] %v7313
  %7340 = vst [vmem:[#allocation2 + $0x98] sm:$0xff] %v7314
  %7341 = vst [vmem:[#allocation2 + $0xa0] sm:$0xff] %v7315
  %7342 = vst [vmem:[#allocation2 + $0xa8] sm:$0xff] %v7316
  %7343 = vst [vmem:[#allocation2 + $0xb0] sm:$0xff] %v7317
  %7344 = vst [vmem:[#allocation2 + $0xb8] sm:$0xff] %v7318
  %7345 = vst [vmem:[#allocation2 + $0xc0] sm:$0xff] %v7319
  %7346 = vst.msk [vmem:[#allocation2 + $0xc8] sm:$0xff] %vm2538, %v7320
  %vm7347 = vcmask 523520
  %7348 = vst.msk [vmem:[#allocation2 + $0x60] sm:$0xff] %vm7347, 0.0
  %7349 = vst.msk [vmem:[#allocation2 + $0xc8] sm:$0xff] %vm7347, 0.0
  %v7350 = vld [vmem:[#allocation2] sm:$0xff]
  %v7351 = vld [vmem:[#allocation2 + $0x8] sm:$0xff]
  %v7352 = vld [vmem:[#allocation2 + $0x10] sm:$0xff]
  %v7353 = vld [vmem:[#allocation2 + $0x18] sm:$0xff]
  %v7354 = vld [vmem:[#allocation2 + $0x20] sm:$0xff]
  %v7355 = vld [vmem:[#allocation2 + $0x28] sm:$0xff]
  %v7356 = vld [vmem:[#allocation2 + $0x30] sm:$0xff]
  %v7357 = vld [vmem:[#allocation2 + $0x38] sm:$0xff]
  %v7358 = vld [vmem:[#allocation2 + $0x40] sm:$0xff]
  %v7359 = vld [vmem:[#allocation2 + $0x48] sm:$0xff]
  %v7360 = vld [vmem:[#allocation2 + $0x50] sm:$0xff]
  %v7361 = vld [vmem:[#allocation2 + $0x58] sm:$0xff]
  %v7362 = vld [vmem:[#allocation2 + $0x60] sm:$0xff]
  %v7363 = vld [vmem:[#allocation2 + $0x68] sm:$0xff]
  %v7364 = vld [vmem:[#allocation2 + $0x70] sm:$0xff]
  %v7365 = vld [vmem:[#allocation2 + $0x78] sm:$0xff]
  %v7366 = vld [vmem:[#allocation2 + $0x80] sm:$0xff]
  %v7367 = vld [vmem:[#allocation2 + $0x88] sm:$0xff]
  %v7368 = vld [vmem:[#allocation2 + $0x90] sm:$0xff]
  %v7369 = vld [vmem:[#allocation2 + $0x98] sm:$0xff]
  %v7370 = vld [vmem:[#allocation2 + $0xa0] sm:$0xff]
  %v7371 = vld [vmem:[#allocation2 + $0xa8] sm:$0xff]
  %v7372 = vld [vmem:[#allocation2 + $0xb0] sm:$0xff]
  %v7373 = vld [vmem:[#allocation2 + $0xb8] sm:$0xff]
  %v7374 = vld [vmem:[#allocation2 + $0xc0] sm:$0xff]
  %v7375 = vld [vmem:[#allocation2 + $0xc8] sm:$0xff]
  %7402 = vrot.lane.b32.xlu0 %v7350, 127
  %v7403 = vpop.permute.xlu0 %7402
  %7404 = vrot.lane.b32.xlu0 %v7351, 127
  %v7405 = vpop.permute.xlu0 %7404
  %7406 = vrot.lane.b32.xlu0 %v7352, 127
  %v7407 = vpop.permute.xlu0 %7406
  %7408 = vrot.lane.b32.xlu0 %v7353, 127
  %v7409 = vpop.permute.xlu0 %7408
  %7410 = vrot.lane.b32.xlu0 %v7354, 127
  %v7411 = vpop.permute.xlu0 %7410
  %7412 = vrot.lane.b32.xlu0 %v7355, 127
  %v7413 = vpop.permute.xlu0 %7412
  %7414 = vrot.lane.b32.xlu0 %v7356, 127
  %v7415 = vpop.permute.xlu0 %7414
  %7416 = vrot.lane.b32.xlu0 %v7357, 127
  %v7417 = vpop.permute.xlu0 %7416
  %7418 = vrot.lane.b32.xlu0 %v7358, 127
  %v7419 = vpop.permute.xlu0 %7418
  %7420 = vrot.lane.b32.xlu0 %v7359, 127
  %v7421 = vpop.permute.xlu0 %7420
  %7422 = vrot.lane.b32.xlu0 %v7360, 127
  %v7423 = vpop.permute.xlu0 %7422
  %7424 = vrot.lane.b32.xlu0 %v7361, 127
  %v7425 = vpop.permute.xlu0 %7424
  %7426 = vrot.lane.b32.xlu0 %v7362, 127
  %v7427 = vpop.permute.xlu0 %7426
  %7428 = vrot.lane.b32.xlu0 %v7363, 127
  %v7429 = vpop.permute.xlu0 %7428
  %7430 = vrot.lane.b32.xlu0 %v7364, 127
  %v7431 = vpop.permute.xlu0 %7430
  %7432 = vrot.lane.b32.xlu0 %v7365, 127
  %v7433 = vpop.permute.xlu0 %7432
  %7434 = vrot.lane.b32.xlu0 %v7366, 127
  %v7435 = vpop.permute.xlu0 %7434
  %7436 = vrot.lane.b32.xlu0 %v7367, 127
  %v7437 = vpop.permute.xlu0 %7436
  %7438 = vrot.lane.b32.xlu0 %v7368, 127
  %v7439 = vpop.permute.xlu0 %7438
  %7440 = vrot.lane.b32.xlu0 %v7369, 127
  %v7441 = vpop.permute.xlu0 %7440
  %7442 = vrot.lane.b32.xlu0 %v7370, 127
  %v7443 = vpop.permute.xlu0 %7442
  %7444 = vrot.lane.b32.xlu0 %v7371, 127
  %v7445 = vpop.permute.xlu0 %7444
  %7446 = vrot.lane.b32.xlu0 %v7372, 127
  %v7447 = vpop.permute.xlu0 %7446
  %7448 = vrot.lane.b32.xlu0 %v7373, 127
  %v7449 = vpop.permute.xlu0 %7448
  %7450 = vrot.lane.b32.xlu0 %v7374, 127
  %v7451 = vpop.permute.xlu0 %7450
  %7452 = vrot.lane.b32.xlu0 %v7375, 127
  %v7453 = vpop.permute.xlu0 %7452
  %v7454 = vsel %vm495, %v7403, %v7405
  %v7455 = vsel %vm495, %v7405, %v7407
  %v7456 = vsel %vm495, %v7407, %v7409
  %v7457 = vsel %vm495, %v7409, %v7411
  %v7458 = vsel %vm495, %v7411, %v7413
  %v7459 = vsel %vm495, %v7413, %v7415
  %v7460 = vsel %vm495, %v7415, %v7417
  %v7461 = vsel %vm495, %v7417, %v7419
  %v7462 = vsel %vm495, %v7419, %v7421
  %v7463 = vsel %vm495, %v7421, %v7423
  %v7464 = vsel %vm495, %v7423, %v7425
  %v7465 = vsel %vm495, %v7425, %v7427
  %v7466 = vsel %vm495, %v7429, %v7431
  %v7467 = vsel %vm495, %v7431, %v7433
  %v7468 = vsel %vm495, %v7433, %v7435
  %v7469 = vsel %vm495, %v7435, %v7437
  %v7470 = vsel %vm495, %v7437, %v7439
  %v7471 = vsel %vm495, %v7439, %v7441
  %v7472 = vsel %vm495, %v7441, %v7443
  %v7473 = vsel %vm495, %v7443, %v7445
  %v7474 = vsel %vm495, %v7445, %v7447
  %v7475 = vsel %vm495, %v7447, %v7449
  %v7476 = vsel %vm495, %v7449, %v7451
  %v7477 = vsel %vm495, %v7451, %v7453
  %v7504 = vmax.f32 %v7350, %v7454
  %v7505 = vmax.f32 %v7351, %v7455
  %v7506 = vmax.f32 %v7352, %v7456
  %v7507 = vmax.f32 %v7353, %v7457
  %v7508 = vmax.f32 %v7354, %v7458
  %v7509 = vmax.f32 %v7355, %v7459
  %v7510 = vmax.f32 %v7356, %v7460
  %v7511 = vmax.f32 %v7357, %v7461
  %v7512 = vmax.f32 %v7358, %v7462
  %v7513 = vmax.f32 %v7359, %v7463
  %v7514 = vmax.f32 %v7360, %v7464
  %v7515 = vmax.f32 %v7361, %v7465
  %v7516 = vmax.f32 %v7362, %v7427
  %v7517 = vmax.f32 %v7363, %v7466
  %v7518 = vmax.f32 %v7364, %v7467
  %v7519 = vmax.f32 %v7365, %v7468
  %v7520 = vmax.f32 %v7366, %v7469
  %v7521 = vmax.f32 %v7367, %v7470
  %v7522 = vmax.f32 %v7368, %v7471
  %v7523 = vmax.f32 %v7369, %v7472
  %v7524 = vmax.f32 %v7370, %v7473
  %v7525 = vmax.f32 %v7371, %v7474
  %v7526 = vmax.f32 %v7372, %v7475
  %v7527 = vmax.f32 %v7373, %v7476
  %v7528 = vmax.f32 %v7374, %v7477
  %v7529 = vmax.f32 %v7375, %v7453
  %7556 = vrot.lane.b32.xlu0 %v7504, 100
  %v7557 = vpop.permute.xlu0 %7556
  %7558 = vrot.lane.b32.xlu0 %v7505, 100
  %v7559 = vpop.permute.xlu0 %7558
  %7560 = vrot.lane.b32.xlu0 %v7506, 100
  %v7561 = vpop.permute.xlu0 %7560
  %7562 = vrot.lane.b32.xlu0 %v7507, 100
  %v7563 = vpop.permute.xlu0 %7562
  %7564 = vrot.lane.b32.xlu0 %v7508, 100
  %v7565 = vpop.permute.xlu0 %7564
  %7566 = vrot.lane.b32.xlu0 %v7509, 100
  %v7567 = vpop.permute.xlu0 %7566
  %7568 = vrot.lane.b32.xlu0 %v7510, 100
  %v7569 = vpop.permute.xlu0 %7568
  %7570 = vrot.lane.b32.xlu0 %v7511, 100
  %v7571 = vpop.permute.xlu0 %7570
  %7572 = vrot.lane.b32.xlu0 %v7512, 100
  %v7573 = vpop.permute.xlu0 %7572
  %7574 = vrot.lane.b32.xlu0 %v7513, 100
  %v7575 = vpop.permute.xlu0 %7574
  %7576 = vrot.lane.b32.xlu0 %v7514, 100
  %v7577 = vpop.permute.xlu0 %7576
  %7578 = vrot.lane.b32.xlu0 %v7515, 100
  %v7579 = vpop.permute.xlu0 %7578
  %7580 = vrot.lane.b32.xlu0 %v7516, 100
  %v7581 = vpop.permute.xlu0 %7580
  %7582 = vrot.lane.b32.xlu0 %v7517, 100
  %v7583 = vpop.permute.xlu0 %7582
  %7584 = vrot.lane.b32.xlu0 %v7518, 100
  %v7585 = vpop.permute.xlu0 %7584
  %7586 = vrot.lane.b32.xlu0 %v7519, 100
  %v7587 = vpop.permute.xlu0 %7586
  %7588 = vrot.lane.b32.xlu0 %v7520, 100
  %v7589 = vpop.permute.xlu0 %7588
  %7590 = vrot.lane.b32.xlu0 %v7521, 100
  %v7591 = vpop.permute.xlu0 %7590
  %7592 = vrot.lane.b32.xlu0 %v7522, 100
  %v7593 = vpop.permute.xlu0 %7592
  %7594 = vrot.lane.b32.xlu0 %v7523, 100
  %v7595 = vpop.permute.xlu0 %7594
  %7596 = vrot.lane.b32.xlu0 %v7524, 100
  %v7597 = vpop.permute.xlu0 %7596
  %7598 = vrot.lane.b32.xlu0 %v7525, 100
  %v7599 = vpop.permute.xlu0 %7598
  %7600 = vrot.lane.b32.xlu0 %v7526, 100
  %v7601 = vpop.permute.xlu0 %7600
  %7602 = vrot.lane.b32.xlu0 %v7527, 100
  %v7603 = vpop.permute.xlu0 %7602
  %7604 = vrot.lane.b32.xlu0 %v7528, 100
  %v7605 = vpop.permute.xlu0 %7604
  %7606 = vrot.lane.b32.xlu0 %v7529, 100
  %v7607 = vpop.permute.xlu0 %7606
  %v7608 = vsel %vm1611, %v7557, %v7559
  %v7609 = vsel %vm1611, %v7559, %v7561
  %v7610 = vsel %vm1611, %v7561, %v7563
  %v7611 = vsel %vm1611, %v7563, %v7565
  %v7612 = vsel %vm1611, %v7565, %v7567
  %v7613 = vsel %vm1611, %v7567, %v7569
  %v7614 = vsel %vm1611, %v7569, %v7571
  %v7615 = vsel %vm1611, %v7571, %v7573
  %v7616 = vsel %vm1611, %v7573, %v7575
  %v7617 = vsel %vm1611, %v7575, %v7577
  %v7618 = vsel %vm1611, %v7577, %v7579
  %v7619 = vsel %vm1611, %v7579, %v7581
  %v7620 = vsel %vm1611, %v7583, %v7585
  %v7621 = vsel %vm1611, %v7585, %v7587
  %v7622 = vsel %vm1611, %v7587, %v7589
  %v7623 = vsel %vm1611, %v7589, %v7591
  %v7624 = vsel %vm1611, %v7591, %v7593
  %v7625 = vsel %vm1611, %v7593, %v7595
  %v7626 = vsel %vm1611, %v7595, %v7597
  %v7627 = vsel %vm1611, %v7597, %v7599
  %v7628 = vsel %vm1611, %v7599, %v7601
  %v7629 = vsel %vm1611, %v7601, %v7603
  %v7630 = vsel %vm1611, %v7603, %v7605
  %v7631 = vsel %vm1611, %v7605, %v7607
  %v7658 = vmax.f32 %v7504, %v7608
  %v7659 = vmax.f32 %v7505, %v7609
  %v7660 = vmax.f32 %v7506, %v7610
  %v7661 = vmax.f32 %v7507, %v7611
  %v7662 = vmax.f32 %v7508, %v7612
  %v7663 = vmax.f32 %v7509, %v7613
  %v7664 = vmax.f32 %v7510, %v7614
  %v7665 = vmax.f32 %v7511, %v7615
  %v7666 = vmax.f32 %v7512, %v7616
  %v7667 = vmax.f32 %v7513, %v7617
  %v7668 = vmax.f32 %v7514, %v7618
  %v7669 = vmax.f32 %v7515, %v7619
  %v7670 = vmax.f32 %v7516, %v7581
  %v7671 = vmax.f32 %v7517, %v7620
  %v7672 = vmax.f32 %v7518, %v7621
  %v7673 = vmax.f32 %v7519, %v7622
  %v7674 = vmax.f32 %v7520, %v7623
  %v7675 = vmax.f32 %v7521, %v7624
  %v7676 = vmax.f32 %v7522, %v7625
  %v7677 = vmax.f32 %v7523, %v7626
  %v7678 = vmax.f32 %v7524, %v7627
  %v7679 = vmax.f32 %v7525, %v7628
  %v7680 = vmax.f32 %v7526, %v7629
  %v7681 = vmax.f32 %v7527, %v7630
  %v7682 = vmax.f32 %v7528, %v7631
  %v7683 = vmax.f32 %v7529, %v7607
  %7684 = vst.msk [vmem:[#allocation3] sm:$0xff] %vm1980, 0
  %vm7685 = vcmask 556336
  %7686 = vst.msk [vmem:[#allocation3 + $0x18] sm:$0xff] %vm7685, 0
  %v7687 = vld [vmem:[%s5] sm:$0xff]
  %v7688 = vld [vmem:[%s5 + $0x8] sm:$0xff]
  %v7689 = vld [vmem:[%s5 + $0x10] sm:$0xff]
  %v7690 = vld [vmem:[%s5 + $0x18] sm:$0xff]
  %v7691 = vld [vmem:[%s5 + $0x20] sm:$0xff]
  %v7692 = vld [vmem:[%s5 + $0x28] sm:$0xff]
  %v7693 = vld [vmem:[%s5 + $0x30] sm:$0xff]
  %v7694 = vld [vmem:[%s5 + $0x38] sm:$0xff]
  %v7695 = vld [vmem:[%s5 + $0x40] sm:$0xff]
  %v7696 = vld [vmem:[%s5 + $0x48] sm:$0xff]
  %v7697 = vld [vmem:[%s5 + $0x50] sm:$0xff]
  %v7698 = vld [vmem:[%s5 + $0x58] sm:$0xff]
  %v7699 = vld [vmem:[%s5 + $0x60] sm:$0xff]
  %v7700 = vld [vmem:[%s5 + $0x68] sm:$0xff]
  %v7701 = vld [vmem:[%s5 + $0x70] sm:$0xff]
  %v7702 = vld [vmem:[%s5 + $0x78] sm:$0xff]
  %v7703 = vld [vmem:[%s5 + $0x80] sm:$0xff]
  %v7704 = vld [vmem:[%s5 + $0x88] sm:$0xff]
  %v7705 = vld [vmem:[%s5 + $0x90] sm:$0xff]
  %v7706 = vld [vmem:[%s5 + $0x98] sm:$0xff]
  %v7707 = vld [vmem:[%s5 + $0xa0] sm:$0xff]
  %v7708 = vld [vmem:[%s5 + $0xa8] sm:$0xff]
  %v7709 = vld [vmem:[%s5 + $0xb0] sm:$0xff]
  %v7710 = vld [vmem:[%s5 + $0xb8] sm:$0xff]
  %v7711 = vld [vmem:[%s5 + $0xc0] sm:$0xff]
  %v7712 = vld [vmem:[%s5 + $0xc8] sm:$0xff]
  %v7713 = vld [vmem:[%s5 + $0xd0] sm:$0xff]
  %v7714 = vld [vmem:[%s5 + $0xd8] sm:$0xff]
  %v7715 = vld [vmem:[%s5 + $0xe0] sm:$0xff]
  %v7716 = vld [vmem:[%s5 + $0xe8] sm:$0xff]
  %v7717 = vld [vmem:[%s5 + $0xf0] sm:$0xff]
  %v7718 = vld [vmem:[%s5 + $0xf8] sm:$0xff]
  %v7719 = vld [vmem:[%s5 + $0x100] sm:$0xff]
  %v7720 = vld [vmem:[%s5 + $0x108] sm:$0xff]
  %v7721 = vld [vmem:[%s5 + $0x110] sm:$0xff]
  %v7722 = vld [vmem:[%s5 + $0x118] sm:$0xff]
  %v7723 = vld [vmem:[%s5 + $0x120] sm:$0xff]
  %v7724 = vld [vmem:[%s5 + $0x128] sm:$0xff]
  %v7725 = vld [vmem:[%s5 + $0x130] sm:$0xff]
  %v7726 = vld [vmem:[%s5 + $0x138] sm:$0xff]
  %v7727 = vld [vmem:[%s5 + $0x140] sm:$0xff]
  %v7728 = vld [vmem:[%s5 + $0x148] sm:$0xff]
  %v7729 = vld [vmem:[%s5 + $0x150] sm:$0xff]
  %v7730 = vld [vmem:[%s5 + $0x158] sm:$0xff]
  %v7731 = vld [vmem:[%s5 + $0x160] sm:$0xff]
  %v7732 = vld [vmem:[%s5 + $0x168] sm:$0xff]
  %v7733 = vld [vmem:[%s5 + $0x170] sm:$0xff]
  %v7734 = vld [vmem:[%s5 + $0x178] sm:$0xff]
  %v7735 = vld [vmem:[%s5 + $0x180] sm:$0xff]
  %v7736 = vld [vmem:[%s5 + $0x188] sm:$0xff]
  %v7737 = vld [vmem:[%s5 + $0x190] sm:$0xff]
  %v7738 = vld [vmem:[%s5 + $0x198] sm:$0xff]
  %v7739 = vld [vmem:[%s5 + $0x1a0] sm:$0xff]
  %v7740 = vld [vmem:[%s5 + $0x1a8] sm:$0xff]
  %v7741 = vld [vmem:[%s5 + $0x1b0] sm:$0xff]
  %v7742 = vld [vmem:[%s5 + $0x1b8] sm:$0xff]
  %v7743 = vld [vmem:[%s5 + $0x1c0] sm:$0xff]
  %v7744 = vld [vmem:[%s5 + $0x1c8] sm:$0xff]
  %v7745 = vld [vmem:[%s5 + $0x1d0] sm:$0xff]
  %v7746 = vld [vmem:[%s5 + $0x1d8] sm:$0xff]
  %v7747 = vld [vmem:[%s5 + $0x1e0] sm:$0xff]
  %v7748 = vld [vmem:[%s5 + $0x1e8] sm:$0xff]
  %v7749 = vld [vmem:[%s5 + $0x1f0] sm:$0xff]
  %v7750 = vld [vmem:[%s5 + $0x1f8] sm:$0xff]
  %v7751 = vld [vmem:[%s5 + $0x200] sm:$0xff]
  %v7752 = vld [vmem:[%s5 + $0x208] sm:$0xff]
  %v7753 = vld [vmem:[%s5 + $0x210] sm:$0xff]
  %v7754 = vld [vmem:[%s5 + $0x218] sm:$0xff]
  %v7755 = vld [vmem:[%s5 + $0x220] sm:$0xff]
  %v7756 = vld [vmem:[%s5 + $0x228] sm:$0xff]
  %v7757 = vld [vmem:[%s5 + $0x230] sm:$0xff]
  %v7758 = vld [vmem:[%s5 + $0x238] sm:$0xff]
  %v7759 = vld [vmem:[%s5 + $0x240] sm:$0xff]
  %v7760 = vld [vmem:[%s5 + $0x248] sm:$0xff]
  %v7761 = vld [vmem:[%s5 + $0x250] sm:$0xff]
  %v7762 = vld [vmem:[%s5 + $0x258] sm:$0xff]
  %v7763 = vld [vmem:[%s5 + $0x260] sm:$0xff]
  %v7764 = vld [vmem:[%s5 + $0x268] sm:$0xff]
  %v7765 = vld [vmem:[%s5 + $0x270] sm:$0xff]
  %v7766 = vld [vmem:[%s5 + $0x278] sm:$0xff]
  %v7767 = vld [vmem:[%s5 + $0x280] sm:$0xff]
  %v7768 = vld [vmem:[%s5 + $0x288] sm:$0xff]
  %v7769 = vld [vmem:[%s5 + $0x290] sm:$0xff]
  %v7770 = vld [vmem:[%s5 + $0x298] sm:$0xff]
  %v7771 = vld [vmem:[%s5 + $0x2a0] sm:$0xff]
  %v7772 = vld [vmem:[%s5 + $0x2a8] sm:$0xff]
  %v7773 = vld [vmem:[%s5 + $0x2b0] sm:$0xff]
  %v7774 = vld [vmem:[%s5 + $0x2b8] sm:$0xff]
  %v7775 = vld [vmem:[%s5 + $0x2c0] sm:$0xff]
  %v7776 = vld [vmem:[%s5 + $0x2c8] sm:$0xff]
  %v7777 = vld [vmem:[%s5 + $0x2d0] sm:$0xff]
  %v7778 = vld [vmem:[%s5 + $0x2d8] sm:$0xff]
  %v7779 = vld [vmem:[%s5 + $0x2e0] sm:$0xff]
  %v7780 = vld [vmem:[%s5 + $0x2e8] sm:$0xff]
  %v7781 = vld [vmem:[%s5 + $0x2f0] sm:$0xff]
  %v7782 = vld [vmem:[%s5 + $0x2f8] sm:$0xff]
  %v7783 = vld [vmem:[%s5 + $0x300] sm:$0xff]
  %v7784 = vld [vmem:[%s5 + $0x308] sm:$0xff]
  %v7785 = vpack.c.bf16 %v7671, %v7658
  %v7786 = vpack.c.bf16 %v7672, %v7659
  %v7787 = vpack.c.bf16 %v7673, %v7660
  %v7788 = vpack.c.bf16 %v7674, %v7661
  %v7789 = vpack.c.bf16 %v7675, %v7662
  %v7790 = vpack.c.bf16 %v7676, %v7663
  %v7791 = vpack.c.bf16 %v7677, %v7664
  %v7890 = vunpack.c.l.b16 %v7687
  %v7891 = vunpack.c.h.b16 %v7687
  %v7892 = vunpack.c.l.b16 %v7688
  %v7893 = vunpack.c.h.b16 %v7688
  %v7894 = vunpack.c.l.b16 %v7689
  %v7895 = vunpack.c.h.b16 %v7689
  %v7896 = vunpack.c.l.b16 %v7690
  %v7897 = vunpack.c.h.b16 %v7690
  %v7898 = vunpack.c.l.b16 %v7691
  %v7899 = vunpack.c.h.b16 %v7691
  %v7900 = vunpack.c.l.b16 %v7692
  %v7901 = vunpack.c.h.b16 %v7692
  %v7902 = vunpack.c.l.b16 %v7693
  %v7903 = vunpack.c.h.b16 %v7693
  %v7904 = vunpack.c.l.b16 %v7694
  %v7905 = vunpack.c.h.b16 %v7694
  %v7906 = vunpack.c.l.b16 %v7695
  %v7907 = vunpack.c.h.b16 %v7695
  %v7908 = vunpack.c.l.b16 %v7696
  %v7909 = vunpack.c.h.b16 %v7696
  %v7910 = vunpack.c.l.b16 %v7697
  %v7911 = vunpack.c.h.b16 %v7697
  %v7912 = vunpack.c.l.b16 %v7698
  %v7913 = vunpack.c.h.b16 %v7698
  %v7914 = vunpack.c.l.b16 %v7699
  %v7915 = vunpack.c.h.b16 %v7699
  %v7916 = vunpack.c.l.b16 %v7700
  %v7917 = vunpack.c.h.b16 %v7700
  %v7918 = vunpack.c.l.b16 %v7701
  %v7919 = vunpack.c.h.b16 %v7701
  %v7920 = vunpack.c.l.b16 %v7702
  %v7921 = vunpack.c.h.b16 %v7702
  %v7922 = vunpack.c.l.b16 %v7703
  %v7923 = vunpack.c.h.b16 %v7703
  %v7924 = vunpack.c.l.b16 %v7704
  %v7925 = vunpack.c.h.b16 %v7704
  %v7926 = vunpack.c.l.b16 %v7705
  %v7927 = vunpack.c.h.b16 %v7705
  %v7928 = vunpack.c.l.b16 %v7706
  %v7929 = vunpack.c.h.b16 %v7706
  %v7930 = vunpack.c.l.b16 %v7707
  %v7931 = vunpack.c.h.b16 %v7707
  %v7932 = vunpack.c.l.b16 %v7708
  %v7933 = vunpack.c.h.b16 %v7708
  %v7934 = vunpack.c.l.b16 %v7709
  %v7935 = vunpack.c.h.b16 %v7709
  %v7936 = vunpack.c.l.b16 %v7710
  %v7937 = vunpack.c.h.b16 %v7710
  %v7938 = vunpack.c.l.b16 %v7711
  %v7939 = vunpack.c.h.b16 %v7711
  %v7940 = vunpack.c.l.b16 %v7712
  %v7941 = vunpack.c.h.b16 %v7712
  %v7942 = vunpack.c.l.b16 %v7713
  %v7943 = vunpack.c.h.b16 %v7713
  %v7944 = vunpack.c.l.b16 %v7714
  %v7945 = vunpack.c.h.b16 %v7714
  %v7946 = vunpack.c.l.b16 %v7715
  %v7947 = vunpack.c.h.b16 %v7715
  %v7948 = vunpack.c.l.b16 %v7716
  %v7949 = vunpack.c.h.b16 %v7716
  %v7950 = vunpack.c.l.b16 %v7717
  %v7951 = vunpack.c.h.b16 %v7717
  %v7952 = vunpack.c.l.b16 %v7718
  %v7953 = vunpack.c.h.b16 %v7718
  %v7954 = vunpack.c.l.b16 %v7719
  %v7955 = vunpack.c.h.b16 %v7719
  %v7956 = vunpack.c.l.b16 %v7720
  %v7957 = vunpack.c.h.b16 %v7720
  %v7958 = vunpack.c.l.b16 %v7721
  %v7959 = vunpack.c.h.b16 %v7721
  %v7960 = vunpack.c.l.b16 %v7722
  %v7961 = vunpack.c.h.b16 %v7722
  %v7962 = vunpack.c.l.b16 %v7723
  %v7963 = vunpack.c.h.b16 %v7723
  %v7964 = vunpack.c.l.b16 %v7724
  %v7965 = vunpack.c.h.b16 %v7724
  %v7966 = vunpack.c.l.b16 %v7725
  %v7967 = vunpack.c.h.b16 %v7725
  %v7968 = vunpack.c.l.b16 %v7726
  %v7969 = vunpack.c.h.b16 %v7726
  %v7970 = vunpack.c.l.b16 %v7727
  %v7971 = vunpack.c.h.b16 %v7727
  %v7972 = vunpack.c.l.b16 %v7728
  %v7973 = vunpack.c.h.b16 %v7728
  %v7974 = vunpack.c.l.b16 %v7729
  %v7975 = vunpack.c.h.b16 %v7729
  %v7976 = vunpack.c.l.b16 %v7730
  %v7977 = vunpack.c.h.b16 %v7730
  %v7978 = vunpack.c.l.b16 %v7731
  %v7979 = vunpack.c.h.b16 %v7731
  %v7980 = vunpack.c.l.b16 %v7732
  %v7981 = vunpack.c.h.b16 %v7732
  %v7982 = vunpack.c.l.b16 %v7733
  %v7983 = vunpack.c.h.b16 %v7733
  %v7984 = vunpack.c.l.b16 %v7734
  %v7985 = vunpack.c.h.b16 %v7734
  %v7986 = vunpack.c.l.b16 %v7735
  %v7987 = vunpack.c.h.b16 %v7735
  %v7988 = vunpack.c.l.b16 %v7736
  %v7989 = vunpack.c.h.b16 %v7736
  %v7990 = vunpack.c.l.b16 %v7737
  %v7991 = vunpack.c.h.b16 %v7737
  %v7992 = vunpack.c.l.b16 %v7738
  %v7993 = vunpack.c.h.b16 %v7738
  %v7994 = vunpack.c.l.b16 %v7739
  %v7995 = vunpack.c.h.b16 %v7739
  %v7996 = vunpack.c.l.b16 %v7740
  %v7997 = vunpack.c.h.b16 %v7740
  %v7998 = vunpack.c.l.b16 %v7741
  %v7999 = vunpack.c.h.b16 %v7741
  %v8000 = vunpack.c.l.b16 %v7742
  %v8001 = vunpack.c.h.b16 %v7742
  %v8002 = vunpack.c.l.b16 %v7743
  %v8003 = vunpack.c.h.b16 %v7743
  %v8004 = vunpack.c.l.b16 %v7744
  %v8005 = vunpack.c.h.b16 %v7744
  %v8006 = vunpack.c.l.b16 %v7745
  %v8007 = vunpack.c.h.b16 %v7745
  %v8008 = vunpack.c.l.b16 %v7746
  %v8009 = vunpack.c.h.b16 %v7746
  %v8010 = vunpack.c.l.b16 %v7747
  %v8011 = vunpack.c.h.b16 %v7747
  %v8012 = vunpack.c.l.b16 %v7748
  %v8013 = vunpack.c.h.b16 %v7748
  %v8014 = vunpack.c.l.b16 %v7749
  %v8015 = vunpack.c.h.b16 %v7749
  %v8016 = vunpack.c.l.b16 %v7750
  %v8017 = vunpack.c.h.b16 %v7750
  %v8018 = vunpack.c.l.b16 %v7751
  %v8019 = vunpack.c.h.b16 %v7751
  %v8020 = vunpack.c.l.b16 %v7752
  %v8021 = vunpack.c.h.b16 %v7752
  %v8022 = vunpack.c.l.b16 %v7753
  %v8023 = vunpack.c.h.b16 %v7753
  %v8024 = vunpack.c.l.b16 %v7754
  %v8025 = vunpack.c.h.b16 %v7754
  %v8026 = vunpack.c.l.b16 %v7755
  %v8027 = vunpack.c.h.b16 %v7755
  %v8028 = vunpack.c.l.b16 %v7756
  %v8029 = vunpack.c.h.b16 %v7756
  %v8030 = vunpack.c.l.b16 %v7757
  %v8031 = vunpack.c.h.b16 %v7757
  %v8032 = vunpack.c.l.b16 %v7758
  %v8033 = vunpack.c.h.b16 %v7758
  %v8034 = vunpack.c.l.b16 %v7759
  %v8035 = vunpack.c.h.b16 %v7759
  %v8036 = vunpack.c.l.b16 %v7760
  %v8037 = vunpack.c.h.b16 %v7760
  %v8038 = vunpack.c.l.b16 %v7761
  %v8039 = vunpack.c.h.b16 %v7761
  %v8040 = vunpack.c.l.b16 %v7762
  %v8041 = vunpack.c.h.b16 %v7762
  %v8042 = vunpack.c.l.b16 %v7763
  %v8043 = vunpack.c.h.b16 %v7763
  %v8044 = vunpack.c.l.b16 %v7764
  %v8045 = vunpack.c.h.b16 %v7764
  %v8046 = vunpack.c.l.b16 %v7765
  %v8047 = vunpack.c.h.b16 %v7765
  %v8048 = vunpack.c.l.b16 %v7766
  %v8049 = vunpack.c.h.b16 %v7766
  %v8050 = vunpack.c.l.b16 %v7767
  %v8051 = vunpack.c.h.b16 %v7767
  %v8052 = vunpack.c.l.b16 %v7768
  %v8053 = vunpack.c.h.b16 %v7768
  %v8054 = vunpack.c.l.b16 %v7769
  %v8055 = vunpack.c.h.b16 %v7769
  %v8056 = vunpack.c.l.b16 %v7770
  %v8057 = vunpack.c.h.b16 %v7770
  %v8058 = vunpack.c.l.b16 %v7771
  %v8059 = vunpack.c.h.b16 %v7771
  %v8060 = vunpack.c.l.b16 %v7772
  %v8061 = vunpack.c.h.b16 %v7772
  %v8062 = vunpack.c.l.b16 %v7773
  %v8063 = vunpack.c.h.b16 %v7773
  %v8064 = vunpack.c.l.b16 %v7774
  %v8065 = vunpack.c.h.b16 %v7774
  %v8066 = vunpack.c.l.b16 %v7775
  %v8067 = vunpack.c.h.b16 %v7775
  %v8068 = vunpack.c.l.b16 %v7776
  %v8069 = vunpack.c.h.b16 %v7776
  %v8070 = vunpack.c.l.b16 %v7777
  %v8071 = vunpack.c.h.b16 %v7777
  %v8072 = vunpack.c.l.b16 %v7778
  %v8073 = vunpack.c.h.b16 %v7778
  %v8074 = vunpack.c.l.b16 %v7779
  %v8075 = vunpack.c.h.b16 %v7779
  %v8076 = vunpack.c.l.b16 %v7780
  %v8077 = vunpack.c.h.b16 %v7780
  %v8078 = vunpack.c.l.b16 %v7781
  %v8079 = vunpack.c.h.b16 %v7781
  %v8080 = vunpack.c.l.b16 %v7782
  %v8081 = vunpack.c.h.b16 %v7782
  %v8082 = vunpack.c.l.b16 %v7783
  %v8083 = vunpack.c.h.b16 %v7783
  %v8084 = vunpack.c.l.b16 %v7784
  %v8085 = vunpack.c.h.b16 %v7784
  %v8086 = vpack.c.b16 %v7892, %v7890
  %v8087 = vpack.c.b16 %v7893, %v7891
  %v8088 = vpack.c.b16 %v7896, %v7894
  %v8089 = vpack.c.b16 %v7897, %v7895
  %v8090 = vpack.c.b16 %v7900, %v7898
  %v8091 = vpack.c.b16 %v7901, %v7899
  %v8092 = vpack.c.b16 %v7904, %v7902
  %v8093 = vpack.c.b16 %v7905, %v7903
  %v8094 = vpack.c.b16 %v7908, %v7906
  %v8095 = vpack.c.b16 %v7909, %v7907
  %v8096 = vpack.c.b16 %v7912, %v7910
  %v8097 = vpack.c.b16 %v7913, %v7911
  %v8098 = vpack.c.b16 %v7916, %v7914
  %v8099 = vpack.c.b16 %v7917, %v7915
  %v8100 = vpack.c.b16 %v7920, %v7918
  %v8101 = vpack.c.b16 %v7921, %v7919
  %v8102 = vpack.c.b16 %v7924, %v7922
  %v8103 = vpack.c.b16 %v7925, %v7923
  %v8104 = vpack.c.b16 %v7928, %v7926
  %v8105 = vpack.c.b16 %v7929, %v7927
  %v8106 = vpack.c.b16 %v7932, %v7930
  %v8107 = vpack.c.b16 %v7933, %v7931
  %v8108 = vpack.c.b16 %v7936, %v7934
  %v8109 = vpack.c.b16 %v7937, %v7935
  %v8110 = vpack.c.b16 %v7940, %v7938
  %v8111 = vpack.c.b16 %v7941, %v7939
  %v8112 = vpack.c.b16 %v7944, %v7942
  %v8113 = vpack.c.b16 %v7945, %v7943
  %v8114 = vpack.c.b16 %v7948, %v7946
  %v8115 = vpack.c.b16 %v7949, %v7947
  %v8116 = vpack.c.b16 %v7952, %v7950
  %v8117 = vpack.c.b16 %v7953, %v7951
  %v8118 = vpack.c.b16 %v7956, %v7954
  %v8119 = vpack.c.b16 %v7957, %v7955
  %v8120 = vpack.c.b16 %v7960, %v7958
  %v8121 = vpack.c.b16 %v7961, %v7959
  %v8122 = vpack.c.b16 %v7964, %v7962
  %v8123 = vpack.c.b16 %v7965, %v7963
  %v8124 = vpack.c.b16 %v7968, %v7966
  %v8125 = vpack.c.b16 %v7969, %v7967
  %v8126 = vpack.c.b16 %v7972, %v7970
  %v8127 = vpack.c.b16 %v7973, %v7971
  %v8128 = vpack.c.b16 %v7976, %v7974
  %v8129 = vpack.c.b16 %v7977, %v7975
  %v8130 = vpack.c.b16 %v7980, %v7978
  %v8131 = vpack.c.b16 %v7981, %v7979
  %v8132 = vpack.c.b16 %v7984, %v7982
  %v8133 = vpack.c.b16 %v7985, %v7983
  %v8134 = vpack.c.b16 %v7988, %v7986
  %v8135 = vpack.c.b16 %v7989, %v7987
  %v8136 = vpack.c.b16 %v7992, %v7990
  %v8137 = vpack.c.b16 %v7993, %v7991
  %v8138 = vpack.c.b16 %v7996, %v7994
  %v8139 = vpack.c.b16 %v7997, %v7995
  %v8140 = vpack.c.b16 %v8000, %v7998
  %v8141 = vpack.c.b16 %v8001, %v7999
  %v8142 = vpack.c.b16 %v8004, %v8002
  %v8143 = vpack.c.b16 %v8005, %v8003
  %v8144 = vpack.c.b16 %v8008, %v8006
  %v8145 = vpack.c.b16 %v8009, %v8007
  %v8146 = vpack.c.b16 %v8012, %v8010
  %v8147 = vpack.c.b16 %v8013, %v8011
  %v8148 = vpack.c.b16 %v8016, %v8014
  %v8149 = vpack.c.b16 %v8017, %v8015
  %v8150 = vpack.c.b16 %v8020, %v8018
  %v8151 = vpack.c.b16 %v8021, %v8019
  %v8152 = vpack.c.b16 %v8024, %v8022
  %v8153 = vpack.c.b16 %v8025, %v8023
  %v8154 = vpack.c.b16 %v8028, %v8026
  %v8155 = vpack.c.b16 %v8029, %v8027
  %v8156 = vpack.c.b16 %v8032, %v8030
  %v8157 = vpack.c.b16 %v8033, %v8031
  %v8158 = vpack.c.b16 %v8036, %v8034
  %v8159 = vpack.c.b16 %v8037, %v8035
  %v8160 = vpack.c.b16 %v8040, %v8038
  %v8161 = vpack.c.b16 %v8041, %v8039
  %v8162 = vpack.c.b16 %v8044, %v8042
  %v8163 = vpack.c.b16 %v8045, %v8043
  %v8164 = vpack.c.b16 %v8048, %v8046
  %v8165 = vpack.c.b16 %v8049, %v8047
  %v8166 = vpack.c.b16 %v8052, %v8050
  %v8167 = vpack.c.b16 %v8053, %v8051
  %v8168 = vpack.c.b16 %v8056, %v8054
  %v8169 = vpack.c.b16 %v8057, %v8055
  %v8170 = vpack.c.b16 %v8060, %v8058
  %v8171 = vpack.c.b16 %v8061, %v8059
  %v8172 = vpack.c.b16 %v8064, %v8062
  %v8173 = vpack.c.b16 %v8065, %v8063
  %v8174 = vpack.c.b16 %v8068, %v8066
  %v8175 = vpack.c.b16 %v8069, %v8067
  %v8176 = vpack.c.b16 %v8072, %v8070
  %v8177 = vpack.c.b16 %v8073, %v8071
  %v8178 = vpack.c.b16 %v8076, %v8074
  %v8179 = vpack.c.b16 %v8077, %v8075
  %v8180 = vpack.c.b16 %v8080, %v8078
  %v8181 = vpack.c.b16 %v8081, %v8079
  %v8182 = vpack.c.b16 %v8084, %v8082
  %v8183 = vpack.c.b16 %v8085, %v8083
  %v8283 = vsel %vm5811, %v7791, 0
  %8285 = vmatprep.subr.bf16.mxu0 %v8087
  %8286 = vmatpush1.bf16.msra.mxu0 %v8086
  %8287 = vmatprep.subr.bf16.mxu0 %v8089
  %8288 = vmatpush1.bf16.msra.mxu0 %v8088
  %8289 = vmatprep.subr.bf16.mxu0 %v8091
  %8290 = vmatpush1.bf16.msra.mxu0 %v8090
  %8291 = vmatprep.subr.bf16.mxu0 %v8093
  %8292 = vmatpush1.bf16.msra.mxu0 %v8092
  %8293 = vmatprep.subr.bf16.mxu0 %v8095
  %8294 = vmatpush1.bf16.msra.mxu0 %v8094
  %8295 = vmatprep.subr.bf16.mxu0 %v8097
  %8296 = vmatpush1.bf16.msra.mxu0 %v8096
  %8297 = vmatprep.subr.bf16.mxu0 %v8099
  %8298 = vmatpush1.bf16.msra.mxu0 %v8098
  %8299 = vmatprep.subr.bf16.mxu0 %v8101
  %8300 = vmatpush1.bf16.msra.mxu0 %v8100
  %8301 = vmatprep.subr.bf16.mxu0 %v8103
  %8302 = vmatpush1.bf16.msra.mxu0 %v8102
  %8303 = vmatprep.subr.bf16.mxu0 %v8105
  %8304 = vmatpush1.bf16.msra.mxu0 %v8104
  %8305 = vmatprep.subr.bf16.mxu0 %v8107
  %8306 = vmatpush1.bf16.msra.mxu0 %v8106
  %8307 = vmatprep.subr.bf16.mxu0 %v8109
  %8308 = vmatpush1.bf16.msra.mxu0 %v8108
  %8309 = vmatprep.subr.bf16.mxu0 %v8111
  %8310 = vmatpush1.bf16.msra.mxu0 %v8110
  %8311 = vmatprep.subr.bf16.mxu0 %v8113
  %8312 = vmatpush1.bf16.msra.mxu0 %v8112
  %8313 = vmatprep.subr.bf16.mxu0 %v8115
  %8314 = vmatpush1.bf16.msra.mxu0 %v8114
  %8315 = vmatprep.subr.bf16.mxu0 %v8117
  %8316 = vmatpush1.bf16.msra.mxu0 %v8116
  %8317 = vmatprep.mubr.bf16.mxu0 %v7786
  %8318 = vmatmul.mubr.bf16.gmra.mrb[0].mxu0 %v7785
  %v8319 = vpop.f32.mrb[0].mxu0
  %v8320 = vadd.f32 0.0, %v8319
  %v8321 = vpop.f32.mrb[0].mxu0
  %v8322 = vadd.f32 0.0, %v8321
  %v8323 = vpop.f32.mrb[0].mxu0
  %v8324 = vadd.f32 0.0, %v8323
  %v8325 = vpop.f32.mrb[0].mxu0
  %v8326 = vadd.f32 0.0, %v8325
  %8327 = vdwg.mxu0
  %8328 = vmatprep.subr.bf16.mxu0 %v8119
  %8329 = vmatpush1.bf16.msra.mxu0 %v8118
  %8330 = vmatprep.subr.bf16.mxu0 %v8121
  %8331 = vmatpush1.bf16.msra.mxu0 %v8120
  %8332 = vmatprep.subr.bf16.mxu0 %v8123
  %8333 = vmatpush1.bf16.msra.mxu0 %v8122
  %8334 = vmatprep.subr.bf16.mxu0 %v8125
  %8335 = vmatpush1.bf16.msra.mxu0 %v8124
  %8336 = vmatprep.subr.bf16.mxu0 %v8127
  %8337 = vmatpush1.bf16.msra.mxu0 %v8126
  %8338 = vmatprep.subr.bf16.mxu0 %v8129
  %8339 = vmatpush1.bf16.msra.mxu0 %v8128
  %8340 = vmatprep.subr.bf16.mxu0 %v8131
  %8341 = vmatpush1.bf16.msra.mxu0 %v8130
  %8342 = vmatprep.subr.bf16.mxu0 %v8133
  %8343 = vmatpush1.bf16.msra.mxu0 %v8132
  %8344 = vmatprep.subr.bf16.mxu0 %v8135
  %8345 = vmatpush1.bf16.msra.mxu0 %v8134
  %8346 = vmatprep.subr.bf16.mxu0 %v8137
  %8347 = vmatpush1.bf16.msra.mxu0 %v8136
  %8348 = vmatprep.subr.bf16.mxu0 %v8139
  %8349 = vmatpush1.bf16.msra.mxu0 %v8138
  %8350 = vmatprep.subr.bf16.mxu0 %v8141
  %8351 = vmatpush1.bf16.msra.mxu0 %v8140
  %8352 = vmatprep.subr.bf16.mxu0 %v8143
  %8353 = vmatpush1.bf16.msra.mxu0 %v8142
  %8354 = vmatprep.subr.bf16.mxu0 %v8145
  %8355 = vmatpush1.bf16.msra.mxu0 %v8144
  %8356 = vmatprep.subr.bf16.mxu0 %v8147
  %8357 = vmatpush1.bf16.msra.mxu0 %v8146
  %8358 = vmatprep.subr.bf16.mxu0 %v8149
  %8359 = vmatpush1.bf16.msra.mxu0 %v8148
  %8360 = vmatprep.mubr.bf16.mxu0 %v7788
  %8361 = vmatmul.mubr.bf16.gmra.mrb[0].mxu0 %v7787
  %v8362 = vpop.f32.mrb[0].mxu0
  %v8363 = vadd.f32 %v8320, %v8362
  %v8364 = vpop.f32.mrb[0].mxu0
  %v8365 = vadd.f32 %v8322, %v8364
  %v8366 = vpop.f32.mrb[0].mxu0
  %v8367 = vadd.f32 %v8324, %v8366
  %v8368 = vpop.f32.mrb[0].mxu0
  %v8369 = vadd.f32 %v8326, %v8368
  %8370 = vdwg.mxu0
  %8371 = vmatprep.subr.bf16.mxu0 %v8151
  %8372 = vmatpush1.bf16.msra.mxu0 %v8150
  %8373 = vmatprep.subr.bf16.mxu0 %v8153
  %8374 = vmatpush1.bf16.msra.mxu0 %v8152
  %8375 = vmatprep.subr.bf16.mxu0 %v8155
  %8376 = vmatpush1.bf16.msra.mxu0 %v8154
  %8377 = vmatprep.subr.bf16.mxu0 %v8157
  %8378 = vmatpush1.bf16.msra.mxu0 %v8156
  %8379 = vmatprep.subr.bf16.mxu0 %v8159
  %8380 = vmatpush1.bf16.msra.mxu0 %v8158
  %8381 = vmatprep.subr.bf16.mxu0 %v8161
  %8382 = vmatpush1.bf16.msra.mxu0 %v8160
  %8383 = vmatprep.subr.bf16.mxu0 %v8163
  %8384 = vmatpush1.bf16.msra.mxu0 %v8162
  %8385 = vmatprep.subr.bf16.mxu0 %v8165
  %8386 = vmatpush1.bf16.msra.mxu0 %v8164
  %8387 = vmatprep.subr.bf16.mxu0 %v8167
  %8388 = vmatpush1.bf16.msra.mxu0 %v8166
  %8389 = vmatprep.subr.bf16.mxu0 %v8169
  %8390 = vmatpush1.bf16.msra.mxu0 %v8168
  %8391 = vmatprep.subr.bf16.mxu0 %v8171
  %8392 = vmatpush1.bf16.msra.mxu0 %v8170
  %8393 = vmatprep.subr.bf16.mxu0 %v8173
  %8394 = vmatpush1.bf16.msra.mxu0 %v8172
  %8395 = vmatprep.subr.bf16.mxu0 %v8175
  %8396 = vmatpush1.bf16.msra.mxu0 %v8174
  %8397 = vmatprep.subr.bf16.mxu0 %v8177
  %8398 = vmatpush1.bf16.msra.mxu0 %v8176
  %8399 = vmatprep.subr.bf16.mxu0 %v8179
  %8400 = vmatpush1.bf16.msra.mxu0 %v8178
  %8401 = vmatprep.subr.bf16.mxu0 %v8181
  %8402 = vmatpush1.bf16.msra.mxu0 %v8180
  %8403 = vmatprep.mubr.bf16.mxu0 %v7790
  %8404 = vmatmul.mubr.bf16.gmra.mrb[0].mxu0 %v7789
  %v8405 = vpop.f32.mrb[0].mxu0
  %v8406 = vadd.f32 %v8363, %v8405
  %v8407 = vpop.f32.mrb[0].mxu0
  %v8408 = vadd.f32 %v8365, %v8407
  %v8409 = vpop.f32.mrb[0].mxu0
  %v8410 = vadd.f32 %v8367, %v8409
  %v8411 = vpop.f32.mrb[0].mxu0
  %v8412 = vadd.f32 %v8369, %v8411
  %8413 = vdwg.mxu0
  %8414 = vmatprep.subr.bf16.mxu0 %v8183
  %8415 = vmatpush1.bf16.msra.mxu0 %v8182
  %8416 = vmatprep.subr.bf16.mxu0 0
  %8417 = vmatpush1.bf16.msra.mxu0 0
  %8418 = vmatprep.subr.bf16.mxu0 0
  %8419 = vmatpush1.bf16.msra.mxu0 0
  %8420 = vmatprep.subr.bf16.mxu0 0
  %8421 = vmatpush1.bf16.msra.mxu0 0
  %8422 = vmatprep.subr.bf16.mxu0 0
  %8423 = vmatpush1.bf16.msra.mxu0 0
  %8424 = vmatprep.subr.bf16.mxu0 0
  %8425 = vmatpush1.bf16.msra.mxu0 0
  %8426 = vmatprep.subr.bf16.mxu0 0
  %8427 = vmatpush1.bf16.msra.mxu0 0
  %8428 = vmatprep.subr.bf16.mxu0 0
  %8429 = vmatpush1.bf16.msra.mxu0 0
  %8430 = vmatprep.subr.bf16.mxu0 0
  %8431 = vmatpush1.bf16.msra.mxu0 0
  %8432 = vmatprep.subr.bf16.mxu0 0
  %8433 = vmatpush1.bf16.msra.mxu0 0
  %8434 = vmatprep.subr.bf16.mxu0 0
  %8435 = vmatpush1.bf16.msra.mxu0 0
  %8436 = vmatprep.subr.bf16.mxu0 0
  %8437 = vmatpush1.bf16.msra.mxu0 0
  %8438 = vmatprep.subr.bf16.mxu0 0
  %8439 = vmatpush1.bf16.msra.mxu0 0
  %8440 = vmatprep.subr.bf16.mxu0 0
  %8441 = vmatpush1.bf16.msra.mxu0 0
  %8442 = vmatprep.subr.bf16.mxu0 0
  %8443 = vmatpush1.bf16.msra.mxu0 0
  %8444 = vmatprep.subr.bf16.mxu0 0
  %8445 = vmatpush1.bf16.msra.mxu0 0
  %8446 = vmatprep.mubr.bf16.mxu0 0
  %8447 = vmatmul.mubr.bf16.gmra.mrb[0].mxu0 %v8283
  %v8448 = vpop.f32.mrb[0].mxu0
  %v8449 = vadd.f32 %v8406, %v8448
  %v8450 = vpop.f32.mrb[0].mxu0
  %v8451 = vadd.f32 %v8408, %v8450
  %v8452 = vpop.f32.mrb[0].mxu0
  %v8453 = vadd.f32 %v8410, %v8452
  %v8454 = vpop.f32.mrb[0].mxu0
  %v8455 = vadd.f32 %v8412, %v8454
  %8456 = vdwg.mxu0
  %v8457 = vpack.c.bf16 %v8453, %v8449
  %v8458 = vpack.c.bf16 %v8455, %v8451
  %8461 = vrot.lane.b32.xlu0 %v8457, 30
  %v8462 = vpop.permute.xlu0 %8461
  %8463 = vrot.lane.b32.xlu0 %v8458, 30
  %v8464 = vpop.permute.xlu0 %8463
  %vm8465 = vcmask 244736
  %v8466 = vsel %vm8465, %v8462, %v8464
  %vm8469 = vcmask 1047792
  %8470 = vst.msk [vmem:[#allocation3] sm:$0xff] %vm8469, %v8462
  %8471 = vst.msk [vmem:[#allocation3 + $0x8] sm:$0xff] %vm2169, %v8466
  %v8472 = vpack.c.bf16 %v7678, %v7665
  %v8473 = vpack.c.bf16 %v7679, %v7666
  %v8474 = vpack.c.bf16 %v7680, %v7667
  %v8475 = vpack.c.bf16 %v7681, %v7668
  %v8476 = vpack.c.bf16 %v7682, %v7669
  %v8477 = vpack.c.bf16 %v7683, %v7670
  %8485 = vrot.lane.b32.xlu0 %v7791, 112
  %v8486 = vpop.permute.xlu0 %8485
  %8487 = vrot.lane.b32.xlu0 %v8472, 112
  %v8488 = vpop.permute.xlu0 %8487
  %8489 = vrot.lane.b32.xlu0 %v8473, 112
  %v8490 = vpop.permute.xlu0 %8489
  %8491 = vrot.lane.b32.xlu0 %v8474, 112
  %v8492 = vpop.permute.xlu0 %8491
  %8493 = vrot.lane.b32.xlu0 %v8475, 112
  %v8494 = vpop.permute.xlu0 %8493
  %8495 = vrot.lane.b32.xlu0 %v8476, 112
  %v8496 = vpop.permute.xlu0 %8495
  %8497 = vrot.lane.b32.xlu0 %v8477, 112
  %v8498 = vpop.permute.xlu0 %8497
  %vm8499 = vcmask 916480
  %v8500 = vsel %vm8499, %v8486, %v8488
  %v8501 = vsel %vm8499, %v8488, %v8490
  %v8502 = vsel %vm8499, %v8490, %v8492
  %v8503 = vsel %vm8499, %v8492, %v8494
  %v8504 = vsel %vm8499, %v8494, %v8496
  %v8505 = vsel %vm8499, %v8496, %v8498
  %v8513 = vsel %vm5811, %v8498, 0
  %8515 = vmatprep.subr.bf16.mxu0 %v8087
  %8516 = vmatpush1.bf16.msra.mxu0 %v8086
  %8517 = vmatprep.subr.bf16.mxu0 %v8089
  %8518 = vmatpush1.bf16.msra.mxu0 %v8088
  %8519 = vmatprep.subr.bf16.mxu0 %v8091
  %8520 = vmatpush1.bf16.msra.mxu0 %v8090
  %8521 = vmatprep.subr.bf16.mxu0 %v8093
  %8522 = vmatpush1.bf16.msra.mxu0 %v8092
  %8523 = vmatprep.subr.bf16.mxu0 %v8095
  %8524 = vmatpush1.bf16.msra.mxu0 %v8094
  %8525 = vmatprep.subr.bf16.mxu0 %v8097
  %8526 = vmatpush1.bf16.msra.mxu0 %v8096
  %8527 = vmatprep.subr.bf16.mxu0 %v8099
  %8528 = vmatpush1.bf16.msra.mxu0 %v8098
  %8529 = vmatprep.subr.bf16.mxu0 %v8101
  %8530 = vmatpush1.bf16.msra.mxu0 %v8100
  %8531 = vmatprep.subr.bf16.mxu0 %v8103
  %8532 = vmatpush1.bf16.msra.mxu0 %v8102
  %8533 = vmatprep.subr.bf16.mxu0 %v8105
  %8534 = vmatpush1.bf16.msra.mxu0 %v8104
  %8535 = vmatprep.subr.bf16.mxu0 %v8107
  %8536 = vmatpush1.bf16.msra.mxu0 %v8106
  %8537 = vmatprep.subr.bf16.mxu0 %v8109
  %8538 = vmatpush1.bf16.msra.mxu0 %v8108
  %8539 = vmatprep.subr.bf16.mxu0 %v8111
  %8540 = vmatpush1.bf16.msra.mxu0 %v8110
  %8541 = vmatprep.subr.bf16.mxu0 %v8113
  %8542 = vmatpush1.bf16.msra.mxu0 %v8112
  %8543 = vmatprep.subr.bf16.mxu0 %v8115
  %8544 = vmatpush1.bf16.msra.mxu0 %v8114
  %8545 = vmatprep.subr.bf16.mxu0 %v8117
  %8546 = vmatpush1.bf16.msra.mxu0 %v8116
  %8547 = vmatprep.mubr.bf16.mxu0 %v8501
  %8548 = vmatmul.mubr.bf16.gmra.mrb[0].mxu0 %v8500
  %v8549 = vpop.f32.mrb[0].mxu0
  %v8550 = vadd.f32 0.0, %v8549
  %v8551 = vpop.f32.mrb[0].mxu0
  %v8552 = vadd.f32 0.0, %v8551
  %v8553 = vpop.f32.mrb[0].mxu0
  %v8554 = vadd.f32 0.0, %v8553
  %v8555 = vpop.f32.mrb[0].mxu0
  %v8556 = vadd.f32 0.0, %v8555
  %8557 = vdwg.mxu0
  %8558 = vmatprep.subr.bf16.mxu0 %v8119
  %8559 = vmatpush1.bf16.msra.mxu0 %v8118
  %8560 = vmatprep.subr.bf16.mxu0 %v8121
  %8561 = vmatpush1.bf16.msra.mxu0 %v8120
  %8562 = vmatprep.subr.bf16.mxu0 %v8123
  %8563 = vmatpush1.bf16.msra.mxu0 %v8122
  %8564 = vmatprep.subr.bf16.mxu0 %v8125
  %8565 = vmatpush1.bf16.msra.mxu0 %v8124
  %8566 = vmatprep.subr.bf16.mxu0 %v8127
  %8567 = vmatpush1.bf16.msra.mxu0 %v8126
  %8568 = vmatprep.subr.bf16.mxu0 %v8129
  %8569 = vmatpush1.bf16.msra.mxu0 %v8128
  %8570 = vmatprep.subr.bf16.mxu0 %v8131
  %8571 = vmatpush1.bf16.msra.mxu0 %v8130
  %8572 = vmatprep.subr.bf16.mxu0 %v8133
  %8573 = vmatpush1.bf16.msra.mxu0 %v8132
  %8574 = vmatprep.subr.bf16.mxu0 %v8135
  %8575 = vmatpush1.bf16.msra.mxu0 %v8134
  %8576 = vmatprep.subr.bf16.mxu0 %v8137
  %8577 = vmatpush1.bf16.msra.mxu0 %v8136
  %8578 = vmatprep.subr.bf16.mxu0 %v8139
  %8579 = vmatpush1.bf16.msra.mxu0 %v8138
  %8580 = vmatprep.subr.bf16.mxu0 %v8141
  %8581 = vmatpush1.bf16.msra.mxu0 %v8140
  %8582 = vmatprep.subr.bf16.mxu0 %v8143
  %8583 = vmatpush1.bf16.msra.mxu0 %v8142
  %8584 = vmatprep.subr.bf16.mxu0 %v8145
  %8585 = vmatpush1.bf16.msra.mxu0 %v8144
  %8586 = vmatprep.subr.bf16.mxu0 %v8147
  %8587 = vmatpush1.bf16.msra.mxu0 %v8146
  %8588 = vmatprep.subr.bf16.mxu0 %v8149
  %8589 = vmatpush1.bf16.msra.mxu0 %v8148
  %8590 = vmatprep.mubr.bf16.mxu0 %v8503
  %8591 = vmatmul.mubr.bf16.gmra.mrb[0].mxu0 %v8502
  %v8592 = vpop.f32.mrb[0].mxu0
  %v8593 = vadd.f32 %v8550, %v8592
  %v8594 = vpop.f32.mrb[0].mxu0
  %v8595 = vadd.f32 %v8552, %v8594
  %v8596 = vpop.f32.mrb[0].mxu0
  %v8597 = vadd.f32 %v8554, %v8596
  %v8598 = vpop.f32.mrb[0].mxu0
  %v8599 = vadd.f32 %v8556, %v8598
  %8600 = vdwg.mxu0
  %8601 = vmatprep.subr.bf16.mxu0 %v8151
  %8602 = vmatpush1.bf16.msra.mxu0 %v8150
  %8603 = vmatprep.subr.bf16.mxu0 %v8153
  %8604 = vmatpush1.bf16.msra.mxu0 %v8152
  %8605 = vmatprep.subr.bf16.mxu0 %v8155
  %8606 = vmatpush1.bf16.msra.mxu0 %v8154
  %8607 = vmatprep.subr.bf16.mxu0 %v8157
  %8608 = vmatpush1.bf16.msra.mxu0 %v8156
  %8609 = vmatprep.subr.bf16.mxu0 %v8159
  %8610 = vmatpush1.bf16.msra.mxu0 %v8158
  %8611 = vmatprep.subr.bf16.mxu0 %v8161
  %8612 = vmatpush1.bf16.msra.mxu0 %v8160
  %8613 = vmatprep.subr.bf16.mxu0 %v8163
  %8614 = vmatpush1.bf16.msra.mxu0 %v8162
  %8615 = vmatprep.subr.bf16.mxu0 %v8165
  %8616 = vmatpush1.bf16.msra.mxu0 %v8164
  %8617 = vmatprep.subr.bf16.mxu0 %v8167
  %8618 = vmatpush1.bf16.msra.mxu0 %v8166
  %8619 = vmatprep.subr.bf16.mxu0 %v8169
  %8620 = vmatpush1.bf16.msra.mxu0 %v8168
  %8621 = vmatprep.subr.bf16.mxu0 %v8171
  %8622 = vmatpush1.bf16.msra.mxu0 %v8170
  %8623 = vmatprep.subr.bf16.mxu0 %v8173
  %8624 = vmatpush1.bf16.msra.mxu0 %v8172
  %8625 = vmatprep.subr.bf16.mxu0 %v8175
  %8626 = vmatpush1.bf16.msra.mxu0 %v8174
  %8627 = vmatprep.subr.bf16.mxu0 %v8177
  %8628 = vmatpush1.bf16.msra.mxu0 %v8176
  %8629 = vmatprep.subr.bf16.mxu0 %v8179
  %8630 = vmatpush1.bf16.msra.mxu0 %v8178
  %8631 = vmatprep.subr.bf16.mxu0 %v8181
  %8632 = vmatpush1.bf16.msra.mxu0 %v8180
  %8633 = vmatprep.mubr.bf16.mxu0 %v8505
  %8634 = vmatmul.mubr.bf16.gmra.mrb[0].mxu0 %v8504
  %v8635 = vpop.f32.mrb[0].mxu0
  %v8636 = vadd.f32 %v8593, %v8635
  %v8637 = vpop.f32.mrb[0].mxu0
  %v8638 = vadd.f32 %v8595, %v8637
  %v8639 = vpop.f32.mrb[0].mxu0
  %v8640 = vadd.f32 %v8597, %v8639
  %v8641 = vpop.f32.mrb[0].mxu0
  %v8642 = vadd.f32 %v8599, %v8641
  %8643 = vdwg.mxu0
  %8644 = vmatprep.subr.bf16.mxu0 %v8183
  %8645 = vmatpush1.bf16.msra.mxu0 %v8182
  %8646 = vmatprep.subr.bf16.mxu0 0
  %8647 = vmatpush1.bf16.msra.mxu0 0
  %8648 = vmatprep.subr.bf16.mxu0 0
  %8649 = vmatpush1.bf16.msra.mxu0 0
  %8650 = vmatprep.subr.bf16.mxu0 0
  %8651 = vmatpush1.bf16.msra.mxu0 0
  %8652 = vmatprep.subr.bf16.mxu0 0
  %8653 = vmatpush1.bf16.msra.mxu0 0
  %8654 = vmatprep.subr.bf16.mxu0 0
  %8655 = vmatpush1.bf16.msra.mxu0 0
  %8656 = vmatprep.subr.bf16.mxu0 0
  %8657 = vmatpush1.bf16.msra.mxu0 0
  %8658 = vmatprep.subr.bf16.mxu0 0
  %8659 = vmatpush1.bf16.msra.mxu0 0
  %8660 = vmatprep.subr.bf16.mxu0 0
  %8661 = vmatpush1.bf16.msra.mxu0 0
  %8662 = vmatprep.subr.bf16.mxu0 0
  %8663 = vmatpush1.bf16.msra.mxu0 0
  %8664 = vmatprep.subr.bf16.mxu0 0
  %8665 = vmatpush1.bf16.msra.mxu0 0
  %8666 = vmatprep.subr.bf16.mxu0 0
  %8667 = vmatpush1.bf16.msra.mxu0 0
  %8668 = vmatprep.subr.bf16.mxu0 0
  %8669 = vmatpush1.bf16.msra.mxu0 0
  %8670 = vmatprep.subr.bf16.mxu0 0
  %8671 = vmatpush1.bf16.msra.mxu0 0
  %8672 = vmatprep.subr.bf16.mxu0 0
  %8673 = vmatpush1.bf16.msra.mxu0 0
  %8674 = vmatprep.subr.bf16.mxu0 0
  %8675 = vmatpush1.bf16.msra.mxu0 0
  %8676 = vmatprep.mubr.bf16.mxu0 0
  %8677 = vmatmul.mubr.bf16.gmra.mrb[0].mxu0 %v8513
  %v8678 = vpop.f32.mrb[0].mxu0
  %v8679 = vadd.f32 %v8636, %v8678
  %v8680 = vpop.f32.mrb[0].mxu0
  %v8681 = vadd.f32 %v8638, %v8680
  %v8682 = vpop.f32.mrb[0].mxu0
  %v8683 = vadd.f32 %v8640, %v8682
  %v8684 = vpop.f32.mrb[0].mxu0
  %v8685 = vadd.f32 %v8642, %v8684
  %8686 = vdwg.mxu0
  %v8687 = vpack.c.bf16 %v8683, %v8679
  %v8688 = vpack.c.bf16 %v8685, %v8681
  %8691 = vrot.lane.b32.xlu0 %v8687, 98
  %v8692 = vpop.permute.xlu0 %8691
  %8693 = vrot.lane.b32.xlu0 %v8688, 98
  %v8694 = vpop.permute.xlu0 %8693
  %vm8695 = vcmask 801792
  %v8696 = vsel %vm8695, %v8692, %v8694
  %vm8700 = vcmask 1048336
  %8701 = vst.msk [vmem:[#allocation3 + $0x8] sm:$0xff] %vm8700, %v8692
  %8702 = vst [vmem:[#allocation3 + $0x10] sm:$0xff] %v8696
  %vm8703 = vcmask 310272
  %8704 = vst.msk [vmem:[#allocation3 + $0x18] sm:$0xff] %vm8703, %v8694
  %v8705 = vld [vmem:[%s6] ss:$2 sm:$0xf]
  %s8706 = scalar_lea.vmem %s6, 1
  %v8707 = vld [vmem:[%s8706] ss:$2 sm:$0xf]
  %vm8708 = vcmp.ge.s32.totalorder %v8705, 2
  %vm8709 = vcmp.lt.s32.totalorder %v8705, 16
  %vm8710 = vmand %vm8708, %vm8709
  %v8711 = vsel %vm8710, 1, 0
  %v8712 = vcvt.s32.f32 %v8711
  %vm8713 = vcmp.ge.s32.totalorder %v8705, 1
  %vm8714 = vcmp.lt.s32.totalorder %v8705, 15
  %vm8715 = vmand %vm8713, %vm8714
  %v8716 = vsel %vm8715, 1, 0
  %v8717 = vcvt.s32.f32 %v8716
  %vm8718 = vcmp.ge.s32.totalorder %v8705, 0
  %vm8719 = vcmp.lt.s32.totalorder %v8705, 14
  %vm8720 = vmand %vm8718, %vm8719
  %v8721 = vsel %vm8720, 1, 0
  %v8722 = vcvt.s32.f32 %v8721
  %vm8723 = vcmp.ge.s32.totalorder %v8705, 4294967295
  %vm8724 = vcmp.lt.s32.totalorder %v8705, 13
  %vm8725 = vmand %vm8723, %vm8724
  %v8726 = vsel %vm8725, 1, 0
  %v8727 = vcvt.s32.f32 %v8726
  %vm8728 = vcmp.ge.s32.totalorder %v8705, 4294967294
  %vm8729 = vcmp.lt.s32.totalorder %v8705, 12
  %vm8730 = vmand %vm8728, %vm8729
  %v8731 = vsel %vm8730, 1, 0
  %v8732 = vcvt.s32.f32 %v8731
  %vm8733 = vcmp.ge.s32.totalorder %v8707, 2
  %vm8734 = vcmp.lt.s32.totalorder %v8707, 16
  %vm8735 = vmand %vm8733, %vm8734
  %v8736 = vsel %vm8735, 1, 0
  %v8737 = vcvt.s32.f32 %v8736
  %vm8738 = vcmp.ge.s32.totalorder %v8707, 1
  %vm8739 = vcmp.lt.s32.totalorder %v8707, 15
  %vm8740 = vmand %vm8738, %vm8739
  %v8741 = vsel %vm8740, 1, 0
  %v8742 = vcvt.s32.f32 %v8741
  %vm8743 = vcmp.ge.s32.totalorder %v8707, 0
  %vm8744 = vcmp.lt.s32.totalorder %v8707, 14
  %vm8745 = vmand %vm8743, %vm8744
  %v8746 = vsel %vm8745, 1, 0
  %v8747 = vcvt.s32.f32 %v8746
  %vm8748 = vcmp.ge.s32.totalorder %v8707, 4294967295
  %vm8749 = vcmp.lt.s32.totalorder %v8707, 13
  %vm8750 = vmand %vm8748, %vm8749
  %v8751 = vsel %vm8750, 1, 0
  %v8752 = vcvt.s32.f32 %v8751
  %vm8753 = vcmp.ge.s32.totalorder %v8707, 4294967294
  %vm8754 = vcmp.lt.s32.totalorder %v8707, 12
  %vm8755 = vmand %vm8753, %vm8754
  %v8756 = vsel %vm8755, 1, 0
  %v8757 = vcvt.s32.f32 %v8756
  %v8758 = vld [vmem:[#allocation3] sm:$0xff]
  %v8759 = vld [vmem:[#allocation3 + $0x8] sm:$0xff]
  %v8760 = vld [vmem:[#allocation3 + $0x10] sm:$0xff]
  %v8761 = vld [vmem:[#allocation3 + $0x18] sm:$0xff]
  %v8762 = vmul.f32 %v8712, %v8737
  %v8764 = vlaneseq
  %v8765 = vshrl.u32 %v8764, 7
  %v8766 = vsub.s32 0, %v8765
  %v8767 = vrot.slane %v8762, %v8766
  %v8768 = vlaneseq
  %v8769 = vshrl.u32 %v8768, 7
  %v8770 = vsub.s32 1, %v8769
  %v8771 = vrot.slane %v8762, %v8770
  %v8772 = vlaneseq
  %v8773 = vshrl.u32 %v8772, 7
  %v8774 = vsub.s32 2, %v8773
  %v8775 = vrot.slane %v8762, %v8774
  %v8776 = vlaneseq
  %v8777 = vshrl.u32 %v8776, 7
  %v8778 = vsub.s32 3, %v8777
  %v8779 = vrot.slane %v8762, %v8778
  %v8784 = vpack.c.bf16 %v8767, %v8767
  %v8785 = vpack.c.bf16 %v8771, %v8771
  %v8786 = vpack.c.bf16 %v8775, %v8775
  %v8787 = vpack.c.bf16 %v8779, %v8779
  %v8789 = vpack.i.b16 %v8784, %v8784
  %v8791 = vlaneseq
  %v8792 = vshrl.u32 %v8791, 7
  %v8793 = vsub.s32 0, %v8792
  %v8794 = vrot.slane %v8789, %v8793
  %v8796 = vpack.i.b16 %v8785, %v8785
  %v8798 = vlaneseq
  %v8799 = vshrl.u32 %v8798, 7
  %v8800 = vsub.s32 0, %v8799
  %v8801 = vrot.slane %v8796, %v8800
  %v8803 = vpack.i.b16 %v8786, %v8786
  %v8805 = vlaneseq
  %v8806 = vshrl.u32 %v8805, 7
  %v8807 = vsub.s32 0, %v8806
  %v8808 = vrot.slane %v8803, %v8807
  %v8810 = vpack.i.b16 %v8787, %v8787
  %v8812 = vlaneseq
  %v8813 = vshrl.u32 %v8812, 7
  %v8814 = vsub.s32 0, %v8813
  %v8815 = vrot.slane %v8810, %v8814
  %v8816 = vmul.bf16 %v8758, %v8794
  %v8817 = vmul.bf16 %v8759, %v8801
  %v8818 = vmul.bf16 %v8760, %v8808
  %v8819 = vmul.bf16 %v8761, %v8815
  %8820 = vst [vmem:[#allocation4] sm:$0xff] %v8816
  %8821 = vst [vmem:[#allocation4 + $0x8] sm:$0xff] %v8817
  %8822 = vst [vmem:[#allocation4 + $0x10] sm:$0xff] %v8818
  %vm8823 = vcmask 64512
  %8824 = vst.msk [vmem:[#allocation4 + $0x18] sm:$0xff] %vm8823, %v8819
  %v8825 = vld [vmem:[#allocation3] sm:$0xff]
  %v8826 = vld [vmem:[#allocation3 + $0x8] sm:$0xff]
  %v8827 = vld [vmem:[#allocation3 + $0x10] sm:$0xff]
  %v8828 = vld [vmem:[#allocation3 + $0x18] sm:$0xff]
  %v8829 = vmul.f32 %v8712, %v8742
  %v8831 = vlaneseq
  %v8832 = vshrl.u32 %v8831, 7
  %v8833 = vsub.s32 0, %v8832
  %v8834 = vrot.slane %v8829, %v8833
  %v8835 = vlaneseq
  %v8836 = vshrl.u32 %v8835, 7
  %v8837 = vsub.s32 1, %v8836
  %v8838 = vrot.slane %v8829, %v8837
  %v8839 = vlaneseq
  %v8840 = vshrl.u32 %v8839, 7
  %v8841 = vsub.s32 2, %v8840
  %v8842 = vrot.slane %v8829, %v8841
  %v8843 = vlaneseq
  %v8844 = vshrl.u32 %v8843, 7
  %v8845 = vsub.s32 3, %v8844
  %v8846 = vrot.slane %v8829, %v8845
  %v8851 = vpack.c.bf16 %v8834, %v8834
  %v8852 = vpack.c.bf16 %v8838, %v8838
  %v8853 = vpack.c.bf16 %v8842, %v8842
  %v8854 = vpack.c.bf16 %v8846, %v8846
  %v8856 = vpack.i.b16 %v8851, %v8851
  %v8858 = vlaneseq
  %v8859 = vshrl.u32 %v8858, 7
  %v8860 = vsub.s32 0, %v8859
  %v8861 = vrot.slane %v8856, %v8860
  %v8863 = vpack.i.b16 %v8852, %v8852
  %v8865 = vlaneseq
  %v8866 = vshrl.u32 %v8865, 7
  %v8867 = vsub.s32 0, %v8866
  %v8868 = vrot.slane %v8863, %v8867
  %v8870 = vpack.i.b16 %v8853, %v8853
  %v8872 = vlaneseq
  %v8873 = vshrl.u32 %v8872, 7
  %v8874 = vsub.s32 0, %v8873
  %v8875 = vrot.slane %v8870, %v8874
  %v8877 = vpack.i.b16 %v8854, %v8854
  %v8879 = vlaneseq
  %v8880 = vshrl.u32 %v8879, 7
  %v8881 = vsub.s32 0, %v8880
  %v8882 = vrot.slane %v8877, %v8881
  %8887 = vrot.lane.b32.xlu0 %v8861, 1
  %v8888 = vpop.permute.xlu0 %8887
  %8889 = vrot.lane.b32.xlu0 %v8868, 1
  %v8890 = vpop.permute.xlu0 %8889
  %8891 = vrot.lane.b32.xlu0 %v8875, 1
  %v8892 = vpop.permute.xlu0 %8891
  %8893 = vrot.lane.b32.xlu0 %v8882, 1
  %v8894 = vpop.permute.xlu0 %8893
  %vm8895 = vcmask 7168
  %v8896 = vsel %vm8895, %v8888, %v8890
  %v8897 = vsel %vm8895, %v8890, %v8892
  %v8898 = vsel %vm8895, %v8892, %v8894
  %v8903 = vmul.bf16 %v8825, %v8888
  %v8904 = vmul.bf16 %v8826, %v8896
  %v8905 = vmul.bf16 %v8827, %v8897
  %v8906 = vmul.bf16 %v8828, %v8898
  %8911 = vrot.lane.b32.xlu0 %v8903, 127
  %v8912 = vpop.permute.xlu0 %8911
  %8913 = vrot.lane.b32.xlu0 %v8904, 127
  %v8914 = vpop.permute.xlu0 %8913
  %8915 = vrot.lane.b32.xlu0 %v8905, 127
  %v8916 = vpop.permute.xlu0 %8915
  %8917 = vrot.lane.b32.xlu0 %v8906, 127
  %v8918 = vpop.permute.xlu0 %8917
  %vm8919 = vcmask 1039360
  %v8920 = vsel %vm8919, %v8912, %v8914
  %v8921 = vsel %vm8919, %v8914, %v8916
  %v8922 = vsel %vm8919, %v8916, %v8918
  %8927 = vst [vmem:[#allocation4 + $0x20] sm:$0xff] %v8920
  %8928 = vst [vmem:[#allocation4 + $0x28] sm:$0xff] %v8921
  %8929 = vst [vmem:[#allocation4 + $0x30] sm:$0xff] %v8922
  %8930 = vst.msk [vmem:[#allocation4 + $0x38] sm:$0xff] %vm8823, %v8918
  %v8931 = vld [vmem:[#allocation3] sm:$0xff]
  %v8932 = vld [vmem:[#allocation3 + $0x8] sm:$0xff]
  %v8933 = vld [vmem:[#allocation3 + $0x10] sm:$0xff]
  %v8934 = vld [vmem:[#allocation3 + $0x18] sm:$0xff]
  %v8935 = vmul.f32 %v8712, %v8747
  %v8937 = vlaneseq
  %v8938 = vshrl.u32 %v8937, 7
  %v8939 = vsub.s32 0, %v8938
  %v8940 = vrot.slane %v8935, %v8939
  %v8941 = vlaneseq
  %v8942 = vshrl.u32 %v8941, 7
  %v8943 = vsub.s32 1, %v8942
  %v8944 = vrot.slane %v8935, %v8943
  %v8945 = vlaneseq
  %v8946 = vshrl.u32 %v8945, 7
  %v8947 = vsub.s32 2, %v8946
  %v8948 = vrot.slane %v8935, %v8947
  %v8949 = vlaneseq
  %v8950 = vshrl.u32 %v8949, 7
  %v8951 = vsub.s32 3, %v8950
  %v8952 = vrot.slane %v8935, %v8951
  %v8957 = vpack.c.bf16 %v8940, %v8940
  %v8958 = vpack.c.bf16 %v8944, %v8944
  %v8959 = vpack.c.bf16 %v8948, %v8948
  %v8960 = vpack.c.bf16 %v8952, %v8952
  %v8962 = vpack.i.b16 %v8957, %v8957
  %v8964 = vlaneseq
  %v8965 = vshrl.u32 %v8964, 7
  %v8966 = vsub.s32 0, %v8965
  %v8967 = vrot.slane %v8962, %v8966
  %v8969 = vpack.i.b16 %v8958, %v8958
  %v8971 = vlaneseq
  %v8972 = vshrl.u32 %v8971, 7
  %v8973 = vsub.s32 0, %v8972
  %v8974 = vrot.slane %v8969, %v8973
  %v8976 = vpack.i.b16 %v8959, %v8959
  %v8978 = vlaneseq
  %v8979 = vshrl.u32 %v8978, 7
  %v8980 = vsub.s32 0, %v8979
  %v8981 = vrot.slane %v8976, %v8980
  %v8983 = vpack.i.b16 %v8960, %v8960
  %v8985 = vlaneseq
  %v8986 = vshrl.u32 %v8985, 7
  %v8987 = vsub.s32 0, %v8986
  %v8988 = vrot.slane %v8983, %v8987
  %8993 = vrot.lane.b32.xlu0 %v8967, 2
  %v8994 = vpop.permute.xlu0 %8993
  %8995 = vrot.lane.b32.xlu0 %v8974, 2
  %v8996 = vpop.permute.xlu0 %8995
  %8997 = vrot.lane.b32.xlu0 %v8981, 2
  %v8998 = vpop.permute.xlu0 %8997
  %8999 = vrot.lane.b32.xlu0 %v8988, 2
  %v9000 = vpop.permute.xlu0 %8999
  %vm9001 = vcmask 15360
  %v9002 = vsel %vm9001, %v8994, %v8996
  %v9003 = vsel %vm9001, %v8996, %v8998
  %v9004 = vsel %vm9001, %v8998, %v9000
  %v9009 = vmul.bf16 %v8931, %v8994
  %v9010 = vmul.bf16 %v8932, %v9002
  %v9011 = vmul.bf16 %v8933, %v9003
  %v9012 = vmul.bf16 %v8934, %v9004
  %9017 = vrot.lane.b32.xlu0 %v9009, 126
  %v9018 = vpop.permute.xlu0 %9017
  %9019 = vrot.lane.b32.xlu0 %v9010, 126
  %v9020 = vpop.permute.xlu0 %9019
  %9021 = vrot.lane.b32.xlu0 %v9011, 126
  %v9022 = vpop.permute.xlu0 %9021
  %9023 = vrot.lane.b32.xlu0 %v9012, 126
  %v9024 = vpop.permute.xlu0 %9023
  %vm9025 = vcmask 1031168
  %v9026 = vsel %vm9025, %v9018, %v9020
  %v9027 = vsel %vm9025, %v9020, %v9022
  %v9028 = vsel %vm9025, %v9022, %v9024
  %9033 = vst [vmem:[#allocation4 + $0x40] sm:$0xff] %v9026
  %9034 = vst [vmem:[#allocation4 + $0x48] sm:$0xff] %v9027
  %9035 = vst [vmem:[#allocation4 + $0x50] sm:$0xff] %v9028
  %9036 = vst.msk [vmem:[#allocation4 + $0x58] sm:$0xff] %vm8823, %v9024
  %v9037 = vld [vmem:[#allocation3] sm:$0xff]
  %v9038 = vld [vmem:[#allocation3 + $0x8] sm:$0xff]
  %v9039 = vld [vmem:[#allocation3 + $0x10] sm:$0xff]
  %v9040 = vld [vmem:[#allocation3 + $0x18] sm:$0xff]
  %v9041 = vmul.f32 %v8712, %v8752
  %v9043 = vlaneseq
  %v9044 = vshrl.u32 %v9043, 7
  %v9045 = vsub.s32 0, %v9044
  %v9046 = vrot.slane %v9041, %v9045
  %v9047 = vlaneseq
  %v9048 = vshrl.u32 %v9047, 7
  %v9049 = vsub.s32 1, %v9048
  %v9050 = vrot.slane %v9041, %v9049
  %v9051 = vlaneseq
  %v9052 = vshrl.u32 %v9051, 7
  %v9053 = vsub.s32 2, %v9052
  %v9054 = vrot.slane %v9041, %v9053
  %v9055 = vlaneseq
  %v9056 = vshrl.u32 %v9055, 7
  %v9057 = vsub.s32 3, %v9056
  %v9058 = vrot.slane %v9041, %v9057
  %v9063 = vpack.c.bf16 %v9046, %v9046
  %v9064 = vpack.c.bf16 %v9050, %v9050
  %v9065 = vpack.c.bf16 %v9054, %v9054
  %v9066 = vpack.c.bf16 %v9058, %v9058
  %v9068 = vpack.i.b16 %v9063, %v9063
  %v9070 = vlaneseq
  %v9071 = vshrl.u32 %v9070, 7
  %v9072 = vsub.s32 0, %v9071
  %v9073 = vrot.slane %v9068, %v9072
  %v9075 = vpack.i.b16 %v9064, %v9064
  %v9077 = vlaneseq
  %v9078 = vshrl.u32 %v9077, 7
  %v9079 = vsub.s32 0, %v9078
  %v9080 = vrot.slane %v9075, %v9079
  %v9082 = vpack.i.b16 %v9065, %v9065
  %v9084 = vlaneseq
  %v9085 = vshrl.u32 %v9084, 7
  %v9086 = vsub.s32 0, %v9085
  %v9087 = vrot.slane %v9082, %v9086
  %v9089 = vpack.i.b16 %v9066, %v9066
  %v9091 = vlaneseq
  %v9092 = vshrl.u32 %v9091, 7
  %v9093 = vsub.s32 0, %v9092
  %v9094 = vrot.slane %v9089, %v9093
  %9099 = vrot.lane.b32.xlu0 %v9073, 3
  %v9100 = vpop.permute.xlu0 %9099
  %9101 = vrot.lane.b32.xlu0 %v9080, 3
  %v9102 = vpop.permute.xlu0 %9101
  %9103 = vrot.lane.b32.xlu0 %v9087, 3
  %v9104 = vpop.permute.xlu0 %9103
  %9105 = vrot.lane.b32.xlu0 %v9094, 3
  %v9106 = vpop.permute.xlu0 %9105
  %vm9107 = vcmask 23552
  %v9108 = vsel %vm9107, %v9100, %v9102
  %v9109 = vsel %vm9107, %v9102, %v9104
  %v9110 = vsel %vm9107, %v9104, %v9106
  %v9115 = vmul.bf16 %v9037, %v9100
  %v9116 = vmul.bf16 %v9038, %v9108
  %v9117 = vmul.bf16 %v9039, %v9109
  %v9118 = vmul.bf16 %v9040, %v9110
  %9123 = vrot.lane.b32.xlu0 %v9115, 125
  %v9124 = vpop.permute.xlu0 %9123
  %9125 = vrot.lane.b32.xlu0 %v9116, 125
  %v9126 = vpop.permute.xlu0 %9125
  %9127 = vrot.lane.b32.xlu0 %v9117, 125
  %v9128 = vpop.permute.xlu0 %9127
  %9129 = vrot.lane.b32.xlu0 %v9118, 125
  %v9130 = vpop.permute.xlu0 %9129
  %vm9131 = vcmask 1022976
  %v9132 = vsel %vm9131, %v9124, %v9126
  %v9133 = vsel %vm9131, %v9126, %v9128
  %v9134 = vsel %vm9131, %v9128, %v9130
  %9139 = vst [vmem:[#allocation4 + $0x60] sm:$0xff] %v9132
  %9140 = vst [vmem:[#allocation4 + $0x68] sm:$0xff] %v9133
  %9141 = vst [vmem:[#allocation4 + $0x70] sm:$0xff] %v9134
  %9142 = vst.msk [vmem:[#allocation4 + $0x78] sm:$0xff] %vm8823, %v9130
  %v9143 = vld [vmem:[#allocation3] sm:$0xff]
  %v9144 = vld [vmem:[#allocation3 + $0x8] sm:$0xff]
  %v9145 = vld [vmem:[#allocation3 + $0x10] sm:$0xff]
  %v9146 = vld [vmem:[#allocation3 + $0x18] sm:$0xff]
  %v9147 = vmul.f32 %v8712, %v8757
  %v9149 = vlaneseq
  %v9150 = vshrl.u32 %v9149, 7
  %v9151 = vsub.s32 0, %v9150
  %v9152 = vrot.slane %v9147, %v9151
  %v9153 = vlaneseq
  %v9154 = vshrl.u32 %v9153, 7
  %v9155 = vsub.s32 1, %v9154
  %v9156 = vrot.slane %v9147, %v9155
  %v9157 = vlaneseq
  %v9158 = vshrl.u32 %v9157, 7
  %v9159 = vsub.s32 2, %v9158
  %v9160 = vrot.slane %v9147, %v9159
  %v9161 = vlaneseq
  %v9162 = vshrl.u32 %v9161, 7
  %v9163 = vsub.s32 3, %v9162
  %v9164 = vrot.slane %v9147, %v9163
  %v9169 = vpack.c.bf16 %v9152, %v9152
  %v9170 = vpack.c.bf16 %v9156, %v9156
  %v9171 = vpack.c.bf16 %v9160, %v9160
  %v9172 = vpack.c.bf16 %v9164, %v9164
  %v9174 = vpack.i.b16 %v9169, %v9169
  %v9176 = vlaneseq
  %v9177 = vshrl.u32 %v9176, 7
  %v9178 = vsub.s32 0, %v9177
  %v9179 = vrot.slane %v9174, %v9178
  %v9181 = vpack.i.b16 %v9170, %v9170
  %v9183 = vlaneseq
  %v9184 = vshrl.u32 %v9183, 7
  %v9185 = vsub.s32 0, %v9184
  %v9186 = vrot.slane %v9181, %v9185
  %v9188 = vpack.i.b16 %v9171, %v9171
  %v9190 = vlaneseq
  %v9191 = vshrl.u32 %v9190, 7
  %v9192 = vsub.s32 0, %v9191
  %v9193 = vrot.slane %v9188, %v9192
  %v9195 = vpack.i.b16 %v9172, %v9172
  %v9197 = vlaneseq
  %v9198 = vshrl.u32 %v9197, 7
  %v9199 = vsub.s32 0, %v9198
  %v9200 = vrot.slane %v9195, %v9199
  %9205 = vrot.lane.b32.xlu0 %v9179, 4
  %v9206 = vpop.permute.xlu0 %9205
  %9207 = vrot.lane.b32.xlu0 %v9186, 4
  %v9208 = vpop.permute.xlu0 %9207
  %9209 = vrot.lane.b32.xlu0 %v9193, 4
  %v9210 = vpop.permute.xlu0 %9209
  %9211 = vrot.lane.b32.xlu0 %v9200, 4
  %v9212 = vpop.permute.xlu0 %9211
  %vm9213 = vcmask 31744
  %v9214 = vsel %vm9213, %v9206, %v9208
  %v9215 = vsel %vm9213, %v9208, %v9210
  %v9216 = vsel %vm9213, %v9210, %v9212
  %v9221 = vmul.bf16 %v9143, %v9206
  %v9222 = vmul.bf16 %v9144, %v9214
  %v9223 = vmul.bf16 %v9145, %v9215
  %v9224 = vmul.bf16 %v9146, %v9216
  %9229 = vrot.lane.b32.xlu0 %v9221, 124
  %v9230 = vpop.permute.xlu0 %9229
  %9231 = vrot.lane.b32.xlu0 %v9222, 124
  %v9232 = vpop.permute.xlu0 %9231
  %9233 = vrot.lane.b32.xlu0 %v9223, 124
  %v9234 = vpop.permute.xlu0 %9233
  %9235 = vrot.lane.b32.xlu0 %v9224, 124
  %v9236 = vpop.permute.xlu0 %9235
  %vm9237 = vcmask 1014784
  %v9238 = vsel %vm9237, %v9230, %v9232
  %v9239 = vsel %vm9237, %v9232, %v9234
  %v9240 = vsel %vm9237, %v9234, %v9236
  %9245 = vst [vmem:[#allocation4 + $0x80] sm:$0xff] %v9238
  %9246 = vst [vmem:[#allocation4 + $0x88] sm:$0xff] %v9239
  %9247 = vst [vmem:[#allocation4 + $0x90] sm:$0xff] %v9240
  %9248 = vst.msk [vmem:[#allocation4 + $0x98] sm:$0xff] %vm8823, %v9236
  %v9249 = vld [vmem:[#allocation3] sm:$0xff]
  %v9250 = vld [vmem:[#allocation3 + $0x8] sm:$0xff]
  %v9251 = vld [vmem:[#allocation3 + $0x10] sm:$0xff]
  %v9252 = vld [vmem:[#allocation3 + $0x18] sm:$0xff]
  %v9253 = vmul.f32 %v8717, %v8737
  %v9255 = vlaneseq
  %v9256 = vshrl.u32 %v9255, 7
  %v9257 = vsub.s32 0, %v9256
  %v9258 = vrot.slane %v9253, %v9257
  %v9259 = vlaneseq
  %v9260 = vshrl.u32 %v9259, 7
  %v9261 = vsub.s32 1, %v9260
  %v9262 = vrot.slane %v9253, %v9261
  %v9263 = vlaneseq
  %v9264 = vshrl.u32 %v9263, 7
  %v9265 = vsub.s32 2, %v9264
  %v9266 = vrot.slane %v9253, %v9265
  %v9267 = vlaneseq
  %v9268 = vshrl.u32 %v9267, 7
  %v9269 = vsub.s32 3, %v9268
  %v9270 = vrot.slane %v9253, %v9269
  %v9275 = vpack.c.bf16 %v9258, %v9258
  %v9276 = vpack.c.bf16 %v9262, %v9262
  %v9277 = vpack.c.bf16 %v9266, %v9266
  %v9278 = vpack.c.bf16 %v9270, %v9270
  %v9280 = vpack.i.b16 %v9275, %v9275
  %v9282 = vlaneseq
  %v9283 = vshrl.u32 %v9282, 7
  %v9284 = vsub.s32 0, %v9283
  %v9285 = vrot.slane %v9280, %v9284
  %v9287 = vpack.i.b16 %v9276, %v9276
  %v9289 = vlaneseq
  %v9290 = vshrl.u32 %v9289, 7
  %v9291 = vsub.s32 0, %v9290
  %v9292 = vrot.slane %v9287, %v9291
  %v9294 = vpack.i.b16 %v9277, %v9277
  %v9296 = vlaneseq
  %v9297 = vshrl.u32 %v9296, 7
  %v9298 = vsub.s32 0, %v9297
  %v9299 = vrot.slane %v9294, %v9298
  %v9301 = vpack.i.b16 %v9278, %v9278
  %v9303 = vlaneseq
  %v9304 = vshrl.u32 %v9303, 7
  %v9305 = vsub.s32 0, %v9304
  %v9306 = vrot.slane %v9301, %v9305
  %9311 = vrot.lane.b32.xlu0 %v9285, 14
  %v9312 = vpop.permute.xlu0 %9311
  %9313 = vrot.lane.b32.xlu0 %v9292, 14
  %v9314 = vpop.permute.xlu0 %9313
  %9315 = vrot.lane.b32.xlu0 %v9299, 14
  %v9316 = vpop.permute.xlu0 %9315
  %9317 = vrot.lane.b32.xlu0 %v9306, 14
  %v9318 = vpop.permute.xlu0 %9317
  %vm9319 = vcmask 113664
  %v9320 = vsel %vm9319, %v9312, %v9314
  %v9321 = vsel %vm9319, %v9314, %v9316
  %v9322 = vsel %vm9319, %v9316, %v9318
  %v9327 = vmul.bf16 %v9249, %v9312
  %v9328 = vmul.bf16 %v9250, %v9320
  %v9329 = vmul.bf16 %v9251, %v9321
  %v9330 = vmul.bf16 %v9252, %v9322
  %9335 = vrot.lane.b32.xlu0 %v9327, 114
  %v9336 = vpop.permute.xlu0 %9335
  %9337 = vrot.lane.b32.xlu0 %v9328, 114
  %v9338 = vpop.permute.xlu0 %9337
  %9339 = vrot.lane.b32.xlu0 %v9329, 114
  %v9340 = vpop.permute.xlu0 %9339
  %9341 = vrot.lane.b32.xlu0 %v9330, 114
  %v9342 = vpop.permute.xlu0 %9341
  %vm9343 = vcmask 932864
  %v9344 = vsel %vm9343, %v9336, %v9338
  %v9345 = vsel %vm9343, %v9338, %v9340
  %v9346 = vsel %vm9343, %v9340, %v9342
  %9351 = vst [vmem:[#allocation4 + $0xa0] sm:$0xff] %v9344
  %9352 = vst [vmem:[#allocation4 + $0xa8] sm:$0xff] %v9345
  %9353 = vst [vmem:[#allocation4 + $0xb0] sm:$0xff] %v9346
  %9354 = vst.msk [vmem:[#allocation4 + $0xb8] sm:$0xff] %vm8823, %v9342
  %v9355 = vld [vmem:[#allocation3] sm:$0xff]
  %v9356 = vld [vmem:[#allocation3 + $0x8] sm:$0xff]
  %v9357 = vld [vmem:[#allocation3 + $0x10] sm:$0xff]
  %v9358 = vld [vmem:[#allocation3 + $0x18] sm:$0xff]
  %v9359 = vmul.f32 %v8717, %v8742
  %v9361 = vlaneseq
  %v9362 = vshrl.u32 %v9361, 7
  %v9363 = vsub.s32 0, %v9362
  %v9364 = vrot.slane %v9359, %v9363
  %v9365 = vlaneseq
  %v9366 = vshrl.u32 %v9365, 7
  %v9367 = vsub.s32 1, %v9366
  %v9368 = vrot.slane %v9359, %v9367
  %v9369 = vlaneseq
  %v9370 = vshrl.u32 %v9369, 7
  %v9371 = vsub.s32 2, %v9370
  %v9372 = vrot.slane %v9359, %v9371
  %v9373 = vlaneseq
  %v9374 = vshrl.u32 %v9373, 7
  %v9375 = vsub.s32 3, %v9374
  %v9376 = vrot.slane %v9359, %v9375
  %v9381 = vpack.c.bf16 %v9364, %v9364
  %v9382 = vpack.c.bf16 %v9368, %v9368
  %v9383 = vpack.c.bf16 %v9372, %v9372
  %v9384 = vpack.c.bf16 %v9376, %v9376
  %v9386 = vpack.i.b16 %v9381, %v9381
  %v9388 = vlaneseq
  %v9389 = vshrl.u32 %v9388, 7
  %v9390 = vsub.s32 0, %v9389
  %v9391 = vrot.slane %v9386, %v9390
  %v9393 = vpack.i.b16 %v9382, %v9382
  %v9395 = vlaneseq
  %v9396 = vshrl.u32 %v9395, 7
  %v9397 = vsub.s32 0, %v9396
  %v9398 = vrot.slane %v9393, %v9397
  %v9400 = vpack.i.b16 %v9383, %v9383
  %v9402 = vlaneseq
  %v9403 = vshrl.u32 %v9402, 7
  %v9404 = vsub.s32 0, %v9403
  %v9405 = vrot.slane %v9400, %v9404
  %v9407 = vpack.i.b16 %v9384, %v9384
  %v9409 = vlaneseq
  %v9410 = vshrl.u32 %v9409, 7
  %v9411 = vsub.s32 0, %v9410
  %v9412 = vrot.slane %v9407, %v9411
  %9417 = vrot.lane.b32.xlu0 %v9391, 15
  %v9418 = vpop.permute.xlu0 %9417
  %9419 = vrot.lane.b32.xlu0 %v9398, 15
  %v9420 = vpop.permute.xlu0 %9419
  %9421 = vrot.lane.b32.xlu0 %v9405, 15
  %v9422 = vpop.permute.xlu0 %9421
  %9423 = vrot.lane.b32.xlu0 %v9412, 15
  %v9424 = vpop.permute.xlu0 %9423
  %vm9425 = vcmask 121856
  %v9426 = vsel %vm9425, %v9418, %v9420
  %v9427 = vsel %vm9425, %v9420, %v9422
  %v9428 = vsel %vm9425, %v9422, %v9424
  %v9433 = vmul.bf16 %v9355, %v9418
  %v9434 = vmul.bf16 %v9356, %v9426
  %v9435 = vmul.bf16 %v9357, %v9427
  %v9436 = vmul.bf16 %v9358, %v9428
  %9441 = vrot.lane.b32.xlu0 %v9433, 113
  %v9442 = vpop.permute.xlu0 %9441
  %9443 = vrot.lane.b32.xlu0 %v9434, 113
  %v9444 = vpop.permute.xlu0 %9443
  %9445 = vrot.lane.b32.xlu0 %v9435, 113
  %v9446 = vpop.permute.xlu0 %9445
  %9447 = vrot.lane.b32.xlu0 %v9436, 113
  %v9448 = vpop.permute.xlu0 %9447
  %vm9449 = vcmask 924672
  %v9450 = vsel %vm9449, %v9442, %v9444
  %v9451 = vsel %vm9449, %v9444, %v9446
  %v9452 = vsel %vm9449, %v9446, %v9448
  %9457 = vst [vmem:[#allocation4 + $0xc0] sm:$0xff] %v9450
  %9458 = vst [vmem:[#allocation4 + $0xc8] sm:$0xff] %v9451
  %9459 = vst [vmem:[#allocation4 + $0xd0] sm:$0xff] %v9452
  %9460 = vst.msk [vmem:[#allocation4 + $0xd8] sm:$0xff] %vm8823, %v9448
  %v9461 = vld [vmem:[#allocation3] sm:$0xff]
  %v9462 = vld [vmem:[#allocation3 + $0x8] sm:$0xff]
  %v9463 = vld [vmem:[#allocation3 + $0x10] sm:$0xff]
  %v9464 = vld [vmem:[#allocation3 + $0x18] sm:$0xff]
  %v9465 = vmul.f32 %v8717, %v8747
  %v9467 = vlaneseq
  %v9468 = vshrl.u32 %v9467, 7
  %v9469 = vsub.s32 0, %v9468
  %v9470 = vrot.slane %v9465, %v9469
  %v9471 = vlaneseq
  %v9472 = vshrl.u32 %v9471, 7
  %v9473 = vsub.s32 1, %v9472
  %v9474 = vrot.slane %v9465, %v9473
  %v9475 = vlaneseq
  %v9476 = vshrl.u32 %v9475, 7
  %v9477 = vsub.s32 2, %v9476
  %v9478 = vrot.slane %v9465, %v9477
  %v9479 = vlaneseq
  %v9480 = vshrl.u32 %v9479, 7
  %v9481 = vsub.s32 3, %v9480
  %v9482 = vrot.slane %v9465, %v9481
  %v9487 = vpack.c.bf16 %v9470, %v9470
  %v9488 = vpack.c.bf16 %v9474, %v9474
  %v9489 = vpack.c.bf16 %v9478, %v9478
  %v9490 = vpack.c.bf16 %v9482, %v9482
  %v9492 = vpack.i.b16 %v9487, %v9487
  %v9494 = vlaneseq
  %v9495 = vshrl.u32 %v9494, 7
  %v9496 = vsub.s32 0, %v9495
  %v9497 = vrot.slane %v9492, %v9496
  %v9499 = vpack.i.b16 %v9488, %v9488
  %v9501 = vlaneseq
  %v9502 = vshrl.u32 %v9501, 7
  %v9503 = vsub.s32 0, %v9502
  %v9504 = vrot.slane %v9499, %v9503
  %v9506 = vpack.i.b16 %v9489, %v9489
  %v9508 = vlaneseq
  %v9509 = vshrl.u32 %v9508, 7
  %v9510 = vsub.s32 0, %v9509
  %v9511 = vrot.slane %v9506, %v9510
  %v9513 = vpack.i.b16 %v9490, %v9490
  %v9515 = vlaneseq
  %v9516 = vshrl.u32 %v9515, 7
  %v9517 = vsub.s32 0, %v9516
  %v9518 = vrot.slane %v9513, %v9517
  %9523 = vrot.lane.b32.xlu0 %v9497, 16
  %v9524 = vpop.permute.xlu0 %9523
  %9525 = vrot.lane.b32.xlu0 %v9504, 16
  %v9526 = vpop.permute.xlu0 %9525
  %9527 = vrot.lane.b32.xlu0 %v9511, 16
  %v9528 = vpop.permute.xlu0 %9527
  %9529 = vrot.lane.b32.xlu0 %v9518, 16
  %v9530 = vpop.permute.xlu0 %9529
  %vm9531 = vcmask 130048
  %v9532 = vsel %vm9531, %v9524, %v9526
  %v9533 = vsel %vm9531, %v9526, %v9528
  %v9534 = vsel %vm9531, %v9528, %v9530
  %v9539 = vmul.bf16 %v9461, %v9524
  %v9540 = vmul.bf16 %v9462, %v9532
  %v9541 = vmul.bf16 %v9463, %v9533
  %v9542 = vmul.bf16 %v9464, %v9534
  %9547 = vrot.lane.b32.xlu0 %v9539, 112
  %v9548 = vpop.permute.xlu0 %9547
  %9549 = vrot.lane.b32.xlu0 %v9540, 112
  %v9550 = vpop.permute.xlu0 %9549
  %9551 = vrot.lane.b32.xlu0 %v9541, 112
  %v9552 = vpop.permute.xlu0 %9551
  %9553 = vrot.lane.b32.xlu0 %v9542, 112
  %v9554 = vpop.permute.xlu0 %9553
  %v9555 = vsel %vm8499, %v9548, %v9550
  %v9556 = vsel %vm8499, %v9550, %v9552
  %v9557 = vsel %vm8499, %v9552, %v9554
  %9562 = vst [vmem:[#allocation4 + $0xe0] sm:$0xff] %v9555
  %9563 = vst [vmem:[#allocation4 + $0xe8] sm:$0xff] %v9556
  %9564 = vst [vmem:[#allocation4 + $0xf0] sm:$0xff] %v9557
  %9565 = vst.msk [vmem:[#allocation4 + $0xf8] sm:$0xff] %vm8823, %v9554
  %v9566 = vld [vmem:[#allocation3] sm:$0xff]
  %v9567 = vld [vmem:[#allocation3 + $0x8] sm:$0xff]
  %v9568 = vld [vmem:[#allocation3 + $0x10] sm:$0xff]
  %v9569 = vld [vmem:[#allocation3 + $0x18] sm:$0xff]
  %v9570 = vmul.f32 %v8717, %v8752
  %v9572 = vlaneseq
  %v9573 = vshrl.u32 %v9572, 7
  %v9574 = vsub.s32 0, %v9573
  %v9575 = vrot.slane %v9570, %v9574
  %v9576 = vlaneseq
  %v9577 = vshrl.u32 %v9576, 7
  %v9578 = vsub.s32 1, %v9577
  %v9579 = vrot.slane %v9570, %v9578
  %v9580 = vlaneseq
  %v9581 = vshrl.u32 %v9580, 7
  %v9582 = vsub.s32 2, %v9581
  %v9583 = vrot.slane %v9570, %v9582
  %v9584 = vlaneseq
  %v9585 = vshrl.u32 %v9584, 7
  %v9586 = vsub.s32 3, %v9585
  %v9587 = vrot.slane %v9570, %v9586
  %v9592 = vpack.c.bf16 %v9575, %v9575
  %v9593 = vpack.c.bf16 %v9579, %v9579
  %v9594 = vpack.c.bf16 %v9583, %v9583
  %v9595 = vpack.c.bf16 %v9587, %v9587
  %v9597 = vpack.i.b16 %v9592, %v9592
  %v9599 = vlaneseq
  %v9600 = vshrl.u32 %v9599, 7
  %v9601 = vsub.s32 0, %v9600
  %v9602 = vrot.slane %v9597, %v9601
  %v9604 = vpack.i.b16 %v9593, %v9593
  %v9606 = vlaneseq
  %v9607 = vshrl.u32 %v9606, 7
  %v9608 = vsub.s32 0, %v9607
  %v9609 = vrot.slane %v9604, %v9608
  %v9611 = vpack.i.b16 %v9594, %v9594
  %v9613 = vlaneseq
  %v9614 = vshrl.u32 %v9613, 7
  %v9615 = vsub.s32 0, %v9614
  %v9616 = vrot.slane %v9611, %v9615
  %v9618 = vpack.i.b16 %v9595, %v9595
  %v9620 = vlaneseq
  %v9621 = vshrl.u32 %v9620, 7
  %v9622 = vsub.s32 0, %v9621
  %v9623 = vrot.slane %v9618, %v9622
  %9628 = vrot.lane.b32.xlu0 %v9602, 17
  %v9629 = vpop.permute.xlu0 %9628
  %9630 = vrot.lane.b32.xlu0 %v9609, 17
  %v9631 = vpop.permute.xlu0 %9630
  %9632 = vrot.lane.b32.xlu0 %v9616, 17
  %v9633 = vpop.permute.xlu0 %9632
  %9634 = vrot.lane.b32.xlu0 %v9623, 17
  %v9635 = vpop.permute.xlu0 %9634
  %vm9636 = vcmask 138240
  %v9637 = vsel %vm9636, %v9629, %v9631
  %v9638 = vsel %vm9636, %v9631, %v9633
  %v9639 = vsel %vm9636, %v9633, %v9635
  %v9644 = vmul.bf16 %v9566, %v9629
  %v9645 = vmul.bf16 %v9567, %v9637
  %v9646 = vmul.bf16 %v9568, %v9638
  %v9647 = vmul.bf16 %v9569, %v9639
  %9652 = vrot.lane.b32.xlu0 %v9644, 111
  %v9653 = vpop.permute.xlu0 %9652
  %9654 = vrot.lane.b32.xlu0 %v9645, 111
  %v9655 = vpop.permute.xlu0 %9654
  %9656 = vrot.lane.b32.xlu0 %v9646, 111
  %v9657 = vpop.permute.xlu0 %9656
  %9658 = vrot.lane.b32.xlu0 %v9647, 111
  %v9659 = vpop.permute.xlu0 %9658
  %vm9660 = vcmask 908288
  %v9661 = vsel %vm9660, %v9653, %v9655
  %v9662 = vsel %vm9660, %v9655, %v9657
  %v9663 = vsel %vm9660, %v9657, %v9659
  %9668 = vst [vmem:[#allocation4 + $0x100] sm:$0xff] %v9661
  %9669 = vst [vmem:[#allocation4 + $0x108] sm:$0xff] %v9662
  %9670 = vst [vmem:[#allocation4 + $0x110] sm:$0xff] %v9663
  %9671 = vst.msk [vmem:[#allocation4 + $0x118] sm:$0xff] %vm8823, %v9659
  %v9672 = vld [vmem:[#allocation3] sm:$0xff]
  %v9673 = vld [vmem:[#allocation3 + $0x8] sm:$0xff]
  %v9674 = vld [vmem:[#allocation3 + $0x10] sm:$0xff]
  %v9675 = vld [vmem:[#allocation3 + $0x18] sm:$0xff]
  %v9676 = vmul.f32 %v8717, %v8757
  %v9678 = vlaneseq
  %v9679 = vshrl.u32 %v9678, 7
  %v9680 = vsub.s32 0, %v9679
  %v9681 = vrot.slane %v9676, %v9680
  %v9682 = vlaneseq
  %v9683 = vshrl.u32 %v9682, 7
  %v9684 = vsub.s32 1, %v9683
  %v9685 = vrot.slane %v9676, %v9684
  %v9686 = vlaneseq
  %v9687 = vshrl.u32 %v9686, 7
  %v9688 = vsub.s32 2, %v9687
  %v9689 = vrot.slane %v9676, %v9688
  %v9690 = vlaneseq
  %v9691 = vshrl.u32 %v9690, 7
  %v9692 = vsub.s32 3, %v9691
  %v9693 = vrot.slane %v9676, %v9692
  %v9698 = vpack.c.bf16 %v9681, %v9681
  %v9699 = vpack.c.bf16 %v9685, %v9685
  %v9700 = vpack.c.bf16 %v9689, %v9689
  %v9701 = vpack.c.bf16 %v9693, %v9693
  %v9703 = vpack.i.b16 %v9698, %v9698
  %v9705 = vlaneseq
  %v9706 = vshrl.u32 %v9705, 7
  %v9707 = vsub.s32 0, %v9706
  %v9708 = vrot.slane %v9703, %v9707
  %v9710 = vpack.i.b16 %v9699, %v9699
  %v9712 = vlaneseq
  %v9713 = vshrl.u32 %v9712, 7
  %v9714 = vsub.s32 0, %v9713
  %v9715 = vrot.slane %v9710, %v9714
  %v9717 = vpack.i.b16 %v9700, %v9700
  %v9719 = vlaneseq
  %v9720 = vshrl.u32 %v9719, 7
  %v9721 = vsub.s32 0, %v9720
  %v9722 = vrot.slane %v9717, %v9721
  %v9724 = vpack.i.b16 %v9701, %v9701
  %v9726 = vlaneseq
  %v9727 = vshrl.u32 %v9726, 7
  %v9728 = vsub.s32 0, %v9727
  %v9729 = vrot.slane %v9724, %v9728
  %9734 = vrot.lane.b32.xlu0 %v9708, 18
  %v9735 = vpop.permute.xlu0 %9734
  %9736 = vrot.lane.b32.xlu0 %v9715, 18
  %v9737 = vpop.permute.xlu0 %9736
  %9738 = vrot.lane.b32.xlu0 %v9722, 18
  %v9739 = vpop.permute.xlu0 %9738
  %9740 = vrot.lane.b32.xlu0 %v9729, 18
  %v9741 = vpop.permute.xlu0 %9740
  %vm9742 = vcmask 146432
  %v9743 = vsel %vm9742, %v9735, %v9737
  %v9744 = vsel %vm9742, %v9737, %v9739
  %v9745 = vsel %vm9742, %v9739, %v9741
  %v9750 = vmul.bf16 %v9672, %v9735
  %v9751 = vmul.bf16 %v9673, %v9743
  %v9752 = vmul.bf16 %v9674, %v9744
  %v9753 = vmul.bf16 %v9675, %v9745
  %9758 = vrot.lane.b32.xlu0 %v9750, 110
  %v9759 = vpop.permute.xlu0 %9758
  %9760 = vrot.lane.b32.xlu0 %v9751, 110
  %v9761 = vpop.permute.xlu0 %9760
  %9762 = vrot.lane.b32.xlu0 %v9752, 110
  %v9763 = vpop.permute.xlu0 %9762
  %9764 = vrot.lane.b32.xlu0 %v9753, 110
  %v9765 = vpop.permute.xlu0 %9764
  %vm9766 = vcmask 900096
  %v9767 = vsel %vm9766, %v9759, %v9761
  %v9768 = vsel %vm9766, %v9761, %v9763
  %v9769 = vsel %vm9766, %v9763, %v9765
  %9774 = vst [vmem:[#allocation4 + $0x120] sm:$0xff] %v9767
  %9775 = vst [vmem:[#allocation4 + $0x128] sm:$0xff] %v9768
  %9776 = vst [vmem:[#allocation4 + $0x130] sm:$0xff] %v9769
  %9777 = vst.msk [vmem:[#allocation4 + $0x138] sm:$0xff] %vm8823, %v9765
  %v9778 = vld [vmem:[#allocation3] sm:$0xff]
  %v9779 = vld [vmem:[#allocation3 + $0x8] sm:$0xff]
  %v9780 = vld [vmem:[#allocation3 + $0x10] sm:$0xff]
  %v9781 = vld [vmem:[#allocation3 + $0x18] sm:$0xff]
  %v9782 = vmul.f32 %v8722, %v8737
  %v9784 = vlaneseq
  %v9785 = vshrl.u32 %v9784, 7
  %v9786 = vsub.s32 0, %v9785
  %v9787 = vrot.slane %v9782, %v9786
  %v9788 = vlaneseq
  %v9789 = vshrl.u32 %v9788, 7
  %v9790 = vsub.s32 1, %v9789
  %v9791 = vrot.slane %v9782, %v9790
  %v9792 = vlaneseq
  %v9793 = vshrl.u32 %v9792, 7
  %v9794 = vsub.s32 2, %v9793
  %v9795 = vrot.slane %v9782, %v9794
  %v9796 = vlaneseq
  %v9797 = vshrl.u32 %v9796, 7
  %v9798 = vsub.s32 3, %v9797
  %v9799 = vrot.slane %v9782, %v9798
  %v9804 = vpack.c.bf16 %v9787, %v9787
  %v9805 = vpack.c.bf16 %v9791, %v9791
  %v9806 = vpack.c.bf16 %v9795, %v9795
  %v9807 = vpack.c.bf16 %v9799, %v9799
  %v9809 = vpack.i.b16 %v9804, %v9804
  %v9811 = vlaneseq
  %v9812 = vshrl.u32 %v9811, 7
  %v9813 = vsub.s32 0, %v9812
  %v9814 = vrot.slane %v9809, %v9813
  %v9816 = vpack.i.b16 %v9805, %v9805
  %v9818 = vlaneseq
  %v9819 = vshrl.u32 %v9818, 7
  %v9820 = vsub.s32 0, %v9819
  %v9821 = vrot.slane %v9816, %v9820
  %v9823 = vpack.i.b16 %v9806, %v9806
  %v9825 = vlaneseq
  %v9826 = vshrl.u32 %v9825, 7
  %v9827 = vsub.s32 0, %v9826
  %v9828 = vrot.slane %v9823, %v9827
  %v9830 = vpack.i.b16 %v9807, %v9807
  %v9832 = vlaneseq
  %v9833 = vshrl.u32 %v9832, 7
  %v9834 = vsub.s32 0, %v9833
  %v9835 = vrot.slane %v9830, %v9834
  %9840 = vrot.lane.b32.xlu0 %v9814, 28
  %v9841 = vpop.permute.xlu0 %9840
  %9842 = vrot.lane.b32.xlu0 %v9821, 28
  %v9843 = vpop.permute.xlu0 %9842
  %9844 = vrot.lane.b32.xlu0 %v9828, 28
  %v9845 = vpop.permute.xlu0 %9844
  %9846 = vrot.lane.b32.xlu0 %v9835, 28
  %v9847 = vpop.permute.xlu0 %9846
  %vm9848 = vcmask 228352
  %v9849 = vsel %vm9848, %v9841, %v9843
  %v9850 = vsel %vm9848, %v9843, %v9845
  %v9851 = vsel %vm9848, %v9845, %v9847
  %v9856 = vmul.bf16 %v9778, %v9841
  %v9857 = vmul.bf16 %v9779, %v9849
  %v9858 = vmul.bf16 %v9780, %v9850
  %v9859 = vmul.bf16 %v9781, %v9851
  %9864 = vrot.lane.b32.xlu0 %v9856, 100
  %v9865 = vpop.permute.xlu0 %9864
  %9866 = vrot.lane.b32.xlu0 %v9857, 100
  %v9867 = vpop.permute.xlu0 %9866
  %9868 = vrot.lane.b32.xlu0 %v9858, 100
  %v9869 = vpop.permute.xlu0 %9868
  %9870 = vrot.lane.b32.xlu0 %v9859, 100
  %v9871 = vpop.permute.xlu0 %9870
  %vm9872 = vcmask 818176
  %v9873 = vsel %vm9872, %v9865, %v9867
  %v9874 = vsel %vm9872, %v9867, %v9869
  %v9875 = vsel %vm9872, %v9869, %v9871
  %9880 = vst [vmem:[#allocation4 + $0x140] sm:$0xff] %v9873
  %9881 = vst [vmem:[#allocation4 + $0x148] sm:$0xff] %v9874
  %9882 = vst [vmem:[#allocation4 + $0x150] sm:$0xff] %v9875
  %9883 = vst.msk [vmem:[#allocation4 + $0x158] sm:$0xff] %vm8823, %v9871
  %v9884 = vld [vmem:[#allocation3] sm:$0xff]
  %v9885 = vld [vmem:[#allocation3 + $0x8] sm:$0xff]
  %v9886 = vld [vmem:[#allocation3 + $0x10] sm:$0xff]
  %v9887 = vld [vmem:[#allocation3 + $0x18] sm:$0xff]
  %v9888 = vmul.f32 %v8722, %v8742
  %v9890 = vlaneseq
  %v9891 = vshrl.u32 %v9890, 7
  %v9892 = vsub.s32 0, %v9891
  %v9893 = vrot.slane %v9888, %v9892
  %v9894 = vlaneseq
  %v9895 = vshrl.u32 %v9894, 7
  %v9896 = vsub.s32 1, %v9895
  %v9897 = vrot.slane %v9888, %v9896
  %v9898 = vlaneseq
  %v9899 = vshrl.u32 %v9898, 7
  %v9900 = vsub.s32 2, %v9899
  %v9901 = vrot.slane %v9888, %v9900
  %v9902 = vlaneseq
  %v9903 = vshrl.u32 %v9902, 7
  %v9904 = vsub.s32 3, %v9903
  %v9905 = vrot.slane %v9888, %v9904
  %v9910 = vpack.c.bf16 %v9893, %v9893
  %v9911 = vpack.c.bf16 %v9897, %v9897
  %v9912 = vpack.c.bf16 %v9901, %v9901
  %v9913 = vpack.c.bf16 %v9905, %v9905
  %v9915 = vpack.i.b16 %v9910, %v9910
  %v9917 = vlaneseq
  %v9918 = vshrl.u32 %v9917, 7
  %v9919 = vsub.s32 0, %v9918
  %v9920 = vrot.slane %v9915, %v9919
  %v9922 = vpack.i.b16 %v9911, %v9911
  %v9924 = vlaneseq
  %v9925 = vshrl.u32 %v9924, 7
  %v9926 = vsub.s32 0, %v9925
  %v9927 = vrot.slane %v9922, %v9926
  %v9929 = vpack.i.b16 %v9912, %v9912
  %v9931 = vlaneseq
  %v9932 = vshrl.u32 %v9931, 7
  %v9933 = vsub.s32 0, %v9932
  %v9934 = vrot.slane %v9929, %v9933
  %v9936 = vpack.i.b16 %v9913, %v9913
  %v9938 = vlaneseq
  %v9939 = vshrl.u32 %v9938, 7
  %v9940 = vsub.s32 0, %v9939
  %v9941 = vrot.slane %v9936, %v9940
  %9946 = vrot.lane.b32.xlu0 %v9920, 29
  %v9947 = vpop.permute.xlu0 %9946
  %9948 = vrot.lane.b32.xlu0 %v9927, 29
  %v9949 = vpop.permute.xlu0 %9948
  %9950 = vrot.lane.b32.xlu0 %v9934, 29
  %v9951 = vpop.permute.xlu0 %9950
  %9952 = vrot.lane.b32.xlu0 %v9941, 29
  %v9953 = vpop.permute.xlu0 %9952
  %vm9954 = vcmask 236544
  %v9955 = vsel %vm9954, %v9947, %v9949
  %v9956 = vsel %vm9954, %v9949, %v9951
  %v9957 = vsel %vm9954, %v9951, %v9953
  %v9962 = vmul.bf16 %v9884, %v9947
  %v9963 = vmul.bf16 %v9885, %v9955
  %v9964 = vmul.bf16 %v9886, %v9956
  %v9965 = vmul.bf16 %v9887, %v9957
  %9970 = vrot.lane.b32.xlu0 %v9962, 99
  %v9971 = vpop.permute.xlu0 %9970
  %9972 = vrot.lane.b32.xlu0 %v9963, 99
  %v9973 = vpop.permute.xlu0 %9972
  %9974 = vrot.lane.b32.xlu0 %v9964, 99
  %v9975 = vpop.permute.xlu0 %9974
  %9976 = vrot.lane.b32.xlu0 %v9965, 99
  %v9977 = vpop.permute.xlu0 %9976
  %vm9978 = vcmask 809984
  %v9979 = vsel %vm9978, %v9971, %v9973
  %v9980 = vsel %vm9978, %v9973, %v9975
  %v9981 = vsel %vm9978, %v9975, %v9977
  %9986 = vst [vmem:[#allocation4 + $0x160] sm:$0xff] %v9979
  %9987 = vst [vmem:[#allocation4 + $0x168] sm:$0xff] %v9980
  %9988 = vst [vmem:[#allocation4 + $0x170] sm:$0xff] %v9981
  %9989 = vst.msk [vmem:[#allocation4 + $0x178] sm:$0xff] %vm8823, %v9977
  %v9990 = vld [vmem:[#allocation3] sm:$0xff]
  %v9991 = vld [vmem:[#allocation3 + $0x8] sm:$0xff]
  %v9992 = vld [vmem:[#allocation3 + $0x10] sm:$0xff]
  %v9993 = vld [vmem:[#allocation3 + $0x18] sm:$0xff]
  %v9994 = vmul.f32 %v8722, %v8747
  %v9996 = vlaneseq
  %v9997 = vshrl.u32 %v9996, 7
  %v9998 = vsub.s32 0, %v9997
  %v9999 = vrot.slane %v9994, %v9998
  %v10000 = vlaneseq
  %v10001 = vshrl.u32 %v10000, 7
  %v10002 = vsub.s32 1, %v10001
  %v10003 = vrot.slane %v9994, %v10002
  %v10004 = vlaneseq
  %v10005 = vshrl.u32 %v10004, 7
  %v10006 = vsub.s32 2, %v10005
  %v10007 = vrot.slane %v9994, %v10006
  %v10008 = vlaneseq
  %v10009 = vshrl.u32 %v10008, 7
  %v10010 = vsub.s32 3, %v10009
  %v10011 = vrot.slane %v9994, %v10010
  %v10016 = vpack.c.bf16 %v9999, %v9999
  %v10017 = vpack.c.bf16 %v10003, %v10003
  %v10018 = vpack.c.bf16 %v10007, %v10007
  %v10019 = vpack.c.bf16 %v10011, %v10011
  %v10021 = vpack.i.b16 %v10016, %v10016
  %v10023 = vlaneseq
  %v10024 = vshrl.u32 %v10023, 7
  %v10025 = vsub.s32 0, %v10024
  %v10026 = vrot.slane %v10021, %v10025
  %v10028 = vpack.i.b16 %v10017, %v10017
  %v10030 = vlaneseq
  %v10031 = vshrl.u32 %v10030, 7
  %v10032 = vsub.s32 0, %v10031
  %v10033 = vrot.slane %v10028, %v10032
  %v10035 = vpack.i.b16 %v10018, %v10018
  %v10037 = vlaneseq
  %v10038 = vshrl.u32 %v10037, 7
  %v10039 = vsub.s32 0, %v10038
  %v10040 = vrot.slane %v10035, %v10039
  %v10042 = vpack.i.b16 %v10019, %v10019
  %v10044 = vlaneseq
  %v10045 = vshrl.u32 %v10044, 7
  %v10046 = vsub.s32 0, %v10045
  %v10047 = vrot.slane %v10042, %v10046
  %10052 = vrot.lane.b32.xlu0 %v10026, 30
  %v10053 = vpop.permute.xlu0 %10052
  %10054 = vrot.lane.b32.xlu0 %v10033, 30
  %v10055 = vpop.permute.xlu0 %10054
  %10056 = vrot.lane.b32.xlu0 %v10040, 30
  %v10057 = vpop.permute.xlu0 %10056
  %10058 = vrot.lane.b32.xlu0 %v10047, 30
  %v10059 = vpop.permute.xlu0 %10058
  %v10060 = vsel %vm8465, %v10053, %v10055
  %v10061 = vsel %vm8465, %v10055, %v10057
  %v10062 = vsel %vm8465, %v10057, %v10059
  %v10067 = vmul.bf16 %v9990, %v10053
  %v10068 = vmul.bf16 %v9991, %v10060
  %v10069 = vmul.bf16 %v9992, %v10061
  %v10070 = vmul.bf16 %v9993, %v10062
  %10075 = vrot.lane.b32.xlu0 %v10067, 98
  %v10076 = vpop.permute.xlu0 %10075
  %10077 = vrot.lane.b32.xlu0 %v10068, 98
  %v10078 = vpop.permute.xlu0 %10077
  %10079 = vrot.lane.b32.xlu0 %v10069, 98
  %v10080 = vpop.permute.xlu0 %10079
  %10081 = vrot.lane.b32.xlu0 %v10070, 98
  %v10082 = vpop.permute.xlu0 %10081
  %v10083 = vsel %vm8695, %v10076, %v10078
  %v10084 = vsel %vm8695, %v10078, %v10080
  %v10085 = vsel %vm8695, %v10080, %v10082
  %10090 = vst [vmem:[#allocation4 + $0x180] sm:$0xff] %v10083
  %10091 = vst [vmem:[#allocation4 + $0x188] sm:$0xff] %v10084
  %10092 = vst [vmem:[#allocation4 + $0x190] sm:$0xff] %v10085
  %10093 = vst.msk [vmem:[#allocation4 + $0x198] sm:$0xff] %vm8823, %v10082
  %v10094 = vld [vmem:[#allocation3] sm:$0xff]
  %v10095 = vld [vmem:[#allocation3 + $0x8] sm:$0xff]
  %v10096 = vld [vmem:[#allocation3 + $0x10] sm:$0xff]
  %v10097 = vld [vmem:[#allocation3 + $0x18] sm:$0xff]
  %v10098 = vmul.f32 %v8722, %v8752
  %v10100 = vlaneseq
  %v10101 = vshrl.u32 %v10100, 7
  %v10102 = vsub.s32 0, %v10101
  %v10103 = vrot.slane %v10098, %v10102
  %v10104 = vlaneseq
  %v10105 = vshrl.u32 %v10104, 7
  %v10106 = vsub.s32 1, %v10105
  %v10107 = vrot.slane %v10098, %v10106
  %v10108 = vlaneseq
  %v10109 = vshrl.u32 %v10108, 7
  %v10110 = vsub.s32 2, %v10109
  %v10111 = vrot.slane %v10098, %v10110
  %v10112 = vlaneseq
  %v10113 = vshrl.u32 %v10112, 7
  %v10114 = vsub.s32 3, %v10113
  %v10115 = vrot.slane %v10098, %v10114
  %v10120 = vpack.c.bf16 %v10103, %v10103
  %v10121 = vpack.c.bf16 %v10107, %v10107
  %v10122 = vpack.c.bf16 %v10111, %v10111
  %v10123 = vpack.c.bf16 %v10115, %v10115
  %v10125 = vpack.i.b16 %v10120, %v10120
  %v10127 = vlaneseq
  %v10128 = vshrl.u32 %v10127, 7
  %v10129 = vsub.s32 0, %v10128
  %v10130 = vrot.slane %v10125, %v10129
  %v10132 = vpack.i.b16 %v10121, %v10121
  %v10134 = vlaneseq
  %v10135 = vshrl.u32 %v10134, 7
  %v10136 = vsub.s32 0, %v10135
  %v10137 = vrot.slane %v10132, %v10136
  %v10139 = vpack.i.b16 %v10122, %v10122
  %v10141 = vlaneseq
  %v10142 = vshrl.u32 %v10141, 7
  %v10143 = vsub.s32 0, %v10142
  %v10144 = vrot.slane %v10139, %v10143
  %v10146 = vpack.i.b16 %v10123, %v10123
  %v10148 = vlaneseq
  %v10149 = vshrl.u32 %v10148, 7
  %v10150 = vsub.s32 0, %v10149
  %v10151 = vrot.slane %v10146, %v10150
  %10156 = vrot.lane.b32.xlu0 %v10130, 31
  %v10157 = vpop.permute.xlu0 %10156
  %10158 = vrot.lane.b32.xlu0 %v10137, 31
  %v10159 = vpop.permute.xlu0 %10158
  %10160 = vrot.lane.b32.xlu0 %v10144, 31
  %v10161 = vpop.permute.xlu0 %10160
  %10162 = vrot.lane.b32.xlu0 %v10151, 31
  %v10163 = vpop.permute.xlu0 %10162
  %vm10164 = vcmask 252928
  %v10165 = vsel %vm10164, %v10157, %v10159
  %v10166 = vsel %vm10164, %v10159, %v10161
  %v10167 = vsel %vm10164, %v10161, %v10163
  %v10172 = vmul.bf16 %v10094, %v10157
  %v10173 = vmul.bf16 %v10095, %v10165
  %v10174 = vmul.bf16 %v10096, %v10166
  %v10175 = vmul.bf16 %v10097, %v10167
  %10180 = vrot.lane.b32.xlu0 %v10172, 97
  %v10181 = vpop.permute.xlu0 %10180
  %10182 = vrot.lane.b32.xlu0 %v10173, 97
  %v10183 = vpop.permute.xlu0 %10182
  %10184 = vrot.lane.b32.xlu0 %v10174, 97
  %v10185 = vpop.permute.xlu0 %10184
  %10186 = vrot.lane.b32.xlu0 %v10175, 97
  %v10187 = vpop.permute.xlu0 %10186
  %vm10188 = vcmask 793600
  %v10189 = vsel %vm10188, %v10181, %v10183
  %v10190 = vsel %vm10188, %v10183, %v10185
  %v10191 = vsel %vm10188, %v10185, %v10187
  %10196 = vst [vmem:[#allocation4 + $0x1a0] sm:$0xff] %v10189
  %10197 = vst [vmem:[#allocation4 + $0x1a8] sm:$0xff] %v10190
  %10198 = vst [vmem:[#allocation4 + $0x1b0] sm:$0xff] %v10191
  %10199 = vst.msk [vmem:[#allocation4 + $0x1b8] sm:$0xff] %vm8823, %v10187
  %v10200 = vld [vmem:[#allocation3] sm:$0xff]
  %v10201 = vld [vmem:[#allocation3 + $0x8] sm:$0xff]
  %v10202 = vld [vmem:[#allocation3 + $0x10] sm:$0xff]
  %v10203 = vld [vmem:[#allocation3 + $0x18] sm:$0xff]
  %v10204 = vmul.f32 %v8722, %v8757
  %v10206 = vlaneseq
  %v10207 = vshrl.u32 %v10206, 7
  %v10208 = vsub.s32 0, %v10207
  %v10209 = vrot.slane %v10204, %v10208
  %v10210 = vlaneseq
  %v10211 = vshrl.u32 %v10210, 7
  %v10212 = vsub.s32 1, %v10211
  %v10213 = vrot.slane %v10204, %v10212
  %v10214 = vlaneseq
  %v10215 = vshrl.u32 %v10214, 7
  %v10216 = vsub.s32 2, %v10215
  %v10217 = vrot.slane %v10204, %v10216
  %v10218 = vlaneseq
  %v10219 = vshrl.u32 %v10218, 7
  %v10220 = vsub.s32 3, %v10219
  %v10221 = vrot.slane %v10204, %v10220
  %v10226 = vpack.c.bf16 %v10209, %v10209
  %v10227 = vpack.c.bf16 %v10213, %v10213
  %v10228 = vpack.c.bf16 %v10217, %v10217
  %v10229 = vpack.c.bf16 %v10221, %v10221
  %v10231 = vpack.i.b16 %v10226, %v10226
  %v10233 = vlaneseq
  %v10234 = vshrl.u32 %v10233, 7
  %v10235 = vsub.s32 0, %v10234
  %v10236 = vrot.slane %v10231, %v10235
  %v10238 = vpack.i.b16 %v10227, %v10227
  %v10240 = vlaneseq
  %v10241 = vshrl.u32 %v10240, 7
  %v10242 = vsub.s32 0, %v10241
  %v10243 = vrot.slane %v10238, %v10242
  %v10245 = vpack.i.b16 %v10228, %v10228
  %v10247 = vlaneseq
  %v10248 = vshrl.u32 %v10247, 7
  %v10249 = vsub.s32 0, %v10248
  %v10250 = vrot.slane %v10245, %v10249
  %v10252 = vpack.i.b16 %v10229, %v10229
  %v10254 = vlaneseq
  %v10255 = vshrl.u32 %v10254, 7
  %v10256 = vsub.s32 0, %v10255
  %v10257 = vrot.slane %v10252, %v10256
  %10262 = vrot.lane.b32.xlu0 %v10236, 32
  %v10263 = vpop.permute.xlu0 %10262
  %10264 = vrot.lane.b32.xlu0 %v10243, 32
  %v10265 = vpop.permute.xlu0 %10264
  %10266 = vrot.lane.b32.xlu0 %v10250, 32
  %v10267 = vpop.permute.xlu0 %10266
  %10268 = vrot.lane.b32.xlu0 %v10257, 32
  %v10269 = vpop.permute.xlu0 %10268
  %vm10270 = vcmask 261120
  %v10271 = vsel %vm10270, %v10263, %v10265
  %v10272 = vsel %vm10270, %v10265, %v10267
  %v10273 = vsel %vm10270, %v10267, %v10269
  %v10278 = vmul.bf16 %v10200, %v10263
  %v10279 = vmul.bf16 %v10201, %v10271
  %v10280 = vmul.bf16 %v10202, %v10272
  %v10281 = vmul.bf16 %v10203, %v10273
  %10286 = vrot.lane.b32.xlu0 %v10278, 96
  %v10287 = vpop.permute.xlu0 %10286
  %10288 = vrot.lane.b32.xlu0 %v10279, 96
  %v10289 = vpop.permute.xlu0 %10288
  %10290 = vrot.lane.b32.xlu0 %v10280, 96
  %v10291 = vpop.permute.xlu0 %10290
  %10292 = vrot.lane.b32.xlu0 %v10281, 96
  %v10293 = vpop.permute.xlu0 %10292
  %vm10294 = vcmask 785408
  %v10295 = vsel %vm10294, %v10287, %v10289
  %v10296 = vsel %vm10294, %v10289, %v10291
  %v10297 = vsel %vm10294, %v10291, %v10293
  %10302 = vst [vmem:[#allocation4 + $0x1c0] sm:$0xff] %v10295
  %10303 = vst [vmem:[#allocation4 + $0x1c8] sm:$0xff] %v10296
  %10304 = vst [vmem:[#allocation4 + $0x1d0] sm:$0xff] %v10297
  %10305 = vst.msk [vmem:[#allocation4 + $0x1d8] sm:$0xff] %vm8823, %v10293
  %v10306 = vld [vmem:[#allocation3] sm:$0xff]
  %v10307 = vld [vmem:[#allocation3 + $0x8] sm:$0xff]
  %v10308 = vld [vmem:[#allocation3 + $0x10] sm:$0xff]
  %v10309 = vld [vmem:[#allocation3 + $0x18] sm:$0xff]
  %v10310 = vmul.f32 %v8727, %v8737
  %v10312 = vlaneseq
  %v10313 = vshrl.u32 %v10312, 7
  %v10314 = vsub.s32 0, %v10313
  %v10315 = vrot.slane %v10310, %v10314
  %v10316 = vlaneseq
  %v10317 = vshrl.u32 %v10316, 7
  %v10318 = vsub.s32 1, %v10317
  %v10319 = vrot.slane %v10310, %v10318
  %v10320 = vlaneseq
  %v10321 = vshrl.u32 %v10320, 7
  %v10322 = vsub.s32 2, %v10321
  %v10323 = vrot.slane %v10310, %v10322
  %v10324 = vlaneseq
  %v10325 = vshrl.u32 %v10324, 7
  %v10326 = vsub.s32 3, %v10325
  %v10327 = vrot.slane %v10310, %v10326
  %v10332 = vpack.c.bf16 %v10315, %v10315
  %v10333 = vpack.c.bf16 %v10319, %v10319
  %v10334 = vpack.c.bf16 %v10323, %v10323
  %v10335 = vpack.c.bf16 %v10327, %v10327
  %v10337 = vpack.i.b16 %v10332, %v10332
  %v10339 = vlaneseq
  %v10340 = vshrl.u32 %v10339, 7
  %v10341 = vsub.s32 0, %v10340
  %v10342 = vrot.slane %v10337, %v10341
  %v10344 = vpack.i.b16 %v10333, %v10333
  %v10346 = vlaneseq
  %v10347 = vshrl.u32 %v10346, 7
  %v10348 = vsub.s32 0, %v10347
  %v10349 = vrot.slane %v10344, %v10348
  %v10351 = vpack.i.b16 %v10334, %v10334
  %v10353 = vlaneseq
  %v10354 = vshrl.u32 %v10353, 7
  %v10355 = vsub.s32 0, %v10354
  %v10356 = vrot.slane %v10351, %v10355
  %v10358 = vpack.i.b16 %v10335, %v10335
  %v10360 = vlaneseq
  %v10361 = vshrl.u32 %v10360, 7
  %v10362 = vsub.s32 0, %v10361
  %v10363 = vrot.slane %v10358, %v10362
  %10368 = vrot.lane.b32.xlu0 %v10342, 42
  %v10369 = vpop.permute.xlu0 %10368
  %10370 = vrot.lane.b32.xlu0 %v10349, 42
  %v10371 = vpop.permute.xlu0 %10370
  %10372 = vrot.lane.b32.xlu0 %v10356, 42
  %v10373 = vpop.permute.xlu0 %10372
  %10374 = vrot.lane.b32.xlu0 %v10363, 42
  %v10375 = vpop.permute.xlu0 %10374
  %vm10376 = vcmask 343040
  %v10377 = vsel %vm10376, %v10369, %v10371
  %v10378 = vsel %vm10376, %v10371, %v10373
  %v10379 = vsel %vm10376, %v10373, %v10375
  %v10384 = vmul.bf16 %v10306, %v10369
  %v10385 = vmul.bf16 %v10307, %v10377
  %v10386 = vmul.bf16 %v10308, %v10378
  %v10387 = vmul.bf16 %v10309, %v10379
  %10392 = vrot.lane.b32.xlu0 %v10384, 86
  %v10393 = vpop.permute.xlu0 %10392
  %10394 = vrot.lane.b32.xlu0 %v10385, 86
  %v10395 = vpop.permute.xlu0 %10394
  %10396 = vrot.lane.b32.xlu0 %v10386, 86
  %v10397 = vpop.permute.xlu0 %10396
  %10398 = vrot.lane.b32.xlu0 %v10387, 86
  %v10399 = vpop.permute.xlu0 %10398
  %vm10400 = vcmask 703488
  %v10401 = vsel %vm10400, %v10393, %v10395
  %v10402 = vsel %vm10400, %v10395, %v10397
  %v10403 = vsel %vm10400, %v10397, %v10399
  %10408 = vst [vmem:[#allocation4 + $0x1e0] sm:$0xff] %v10401
  %10409 = vst [vmem:[#allocation4 + $0x1e8] sm:$0xff] %v10402
  %10410 = vst [vmem:[#allocation4 + $0x1f0] sm:$0xff] %v10403
  %10411 = vst.msk [vmem:[#allocation4 + $0x1f8] sm:$0xff] %vm8823, %v10399
  %v10412 = vld [vmem:[#allocation3] sm:$0xff]
  %v10413 = vld [vmem:[#allocation3 + $0x8] sm:$0xff]
  %v10414 = vld [vmem:[#allocation3 + $0x10] sm:$0xff]
  %v10415 = vld [vmem:[#allocation3 + $0x18] sm:$0xff]
  %v10416 = vmul.f32 %v8727, %v8742
  %v10418 = vlaneseq
  %v10419 = vshrl.u32 %v10418, 7
  %v10420 = vsub.s32 0, %v10419
  %v10421 = vrot.slane %v10416, %v10420
  %v10422 = vlaneseq
  %v10423 = vshrl.u32 %v10422, 7
  %v10424 = vsub.s32 1, %v10423
  %v10425 = vrot.slane %v10416, %v10424
  %v10426 = vlaneseq
  %v10427 = vshrl.u32 %v10426, 7
  %v10428 = vsub.s32 2, %v10427
  %v10429 = vrot.slane %v10416, %v10428
  %v10430 = vlaneseq
  %v10431 = vshrl.u32 %v10430, 7
  %v10432 = vsub.s32 3, %v10431
  %v10433 = vrot.slane %v10416, %v10432
  %v10438 = vpack.c.bf16 %v10421, %v10421
  %v10439 = vpack.c.bf16 %v10425, %v10425
  %v10440 = vpack.c.bf16 %v10429, %v10429
  %v10441 = vpack.c.bf16 %v10433, %v10433
  %v10443 = vpack.i.b16 %v10438, %v10438
  %v10445 = vlaneseq
  %v10446 = vshrl.u32 %v10445, 7
  %v10447 = vsub.s32 0, %v10446
  %v10448 = vrot.slane %v10443, %v10447
  %v10450 = vpack.i.b16 %v10439, %v10439
  %v10452 = vlaneseq
  %v10453 = vshrl.u32 %v10452, 7
  %v10454 = vsub.s32 0, %v10453
  %v10455 = vrot.slane %v10450, %v10454
  %v10457 = vpack.i.b16 %v10440, %v10440
  %v10459 = vlaneseq
  %v10460 = vshrl.u32 %v10459, 7
  %v10461 = vsub.s32 0, %v10460
  %v10462 = vrot.slane %v10457, %v10461
  %v10464 = vpack.i.b16 %v10441, %v10441
  %v10466 = vlaneseq
  %v10467 = vshrl.u32 %v10466, 7
  %v10468 = vsub.s32 0, %v10467
  %v10469 = vrot.slane %v10464, %v10468
  %10474 = vrot.lane.b32.xlu0 %v10448, 43
  %v10475 = vpop.permute.xlu0 %10474
  %10476 = vrot.lane.b32.xlu0 %v10455, 43
  %v10477 = vpop.permute.xlu0 %10476
  %10478 = vrot.lane.b32.xlu0 %v10462, 43
  %v10479 = vpop.permute.xlu0 %10478
  %10480 = vrot.lane.b32.xlu0 %v10469, 43
  %v10481 = vpop.permute.xlu0 %10480
  %vm10482 = vcmask 351232
  %v10483 = vsel %vm10482, %v10475, %v10477
  %v10484 = vsel %vm10482, %v10477, %v10479
  %v10485 = vsel %vm10482, %v10479, %v10481
  %v10490 = vmul.bf16 %v10412, %v10475
  %v10491 = vmul.bf16 %v10413, %v10483
  %v10492 = vmul.bf16 %v10414, %v10484
  %v10493 = vmul.bf16 %v10415, %v10485
  %10498 = vrot.lane.b32.xlu0 %v10490, 85
  %v10499 = vpop.permute.xlu0 %10498
  %10500 = vrot.lane.b32.xlu0 %v10491, 85
  %v10501 = vpop.permute.xlu0 %10500
  %10502 = vrot.lane.b32.xlu0 %v10492, 85
  %v10503 = vpop.permute.xlu0 %10502
  %10504 = vrot.lane.b32.xlu0 %v10493, 85
  %v10505 = vpop.permute.xlu0 %10504
  %vm10506 = vcmask 695296
  %v10507 = vsel %vm10506, %v10499, %v10501
  %v10508 = vsel %vm10506, %v10501, %v10503
  %v10509 = vsel %vm10506, %v10503, %v10505
  %10514 = vst [vmem:[#allocation4 + $0x200] sm:$0xff] %v10507
  %10515 = vst [vmem:[#allocation4 + $0x208] sm:$0xff] %v10508
  %10516 = vst [vmem:[#allocation4 + $0x210] sm:$0xff] %v10509
  %10517 = vst.msk [vmem:[#allocation4 + $0x218] sm:$0xff] %vm8823, %v10505
  %v10518 = vld [vmem:[#allocation3] sm:$0xff]
  %v10519 = vld [vmem:[#allocation3 + $0x8] sm:$0xff]
  %v10520 = vld [vmem:[#allocation3 + $0x10] sm:$0xff]
  %v10521 = vld [vmem:[#allocation3 + $0x18] sm:$0xff]
  %v10522 = vmul.f32 %v8727, %v8747
  %v10524 = vlaneseq
  %v10525 = vshrl.u32 %v10524, 7
  %v10526 = vsub.s32 0, %v10525
  %v10527 = vrot.slane %v10522, %v10526
  %v10528 = vlaneseq
  %v10529 = vshrl.u32 %v10528, 7
  %v10530 = vsub.s32 1, %v10529
  %v10531 = vrot.slane %v10522, %v10530
  %v10532 = vlaneseq
  %v10533 = vshrl.u32 %v10532, 7
  %v10534 = vsub.s32 2, %v10533
  %v10535 = vrot.slane %v10522, %v10534
  %v10536 = vlaneseq
  %v10537 = vshrl.u32 %v10536, 7
  %v10538 = vsub.s32 3, %v10537
  %v10539 = vrot.slane %v10522, %v10538
  %v10544 = vpack.c.bf16 %v10527, %v10527
  %v10545 = vpack.c.bf16 %v10531, %v10531
  %v10546 = vpack.c.bf16 %v10535, %v10535
  %v10547 = vpack.c.bf16 %v10539, %v10539
  %v10549 = vpack.i.b16 %v10544, %v10544
  %v10551 = vlaneseq
  %v10552 = vshrl.u32 %v10551, 7
  %v10553 = vsub.s32 0, %v10552
  %v10554 = vrot.slane %v10549, %v10553
  %v10556 = vpack.i.b16 %v10545, %v10545
  %v10558 = vlaneseq
  %v10559 = vshrl.u32 %v10558, 7
  %v10560 = vsub.s32 0, %v10559
  %v10561 = vrot.slane %v10556, %v10560
  %v10563 = vpack.i.b16 %v10546, %v10546
  %v10565 = vlaneseq
  %v10566 = vshrl.u32 %v10565, 7
  %v10567 = vsub.s32 0, %v10566
  %v10568 = vrot.slane %v10563, %v10567
  %v10570 = vpack.i.b16 %v10547, %v10547
  %v10572 = vlaneseq
  %v10573 = vshrl.u32 %v10572, 7
  %v10574 = vsub.s32 0, %v10573
  %v10575 = vrot.slane %v10570, %v10574
  %10580 = vrot.lane.b32.xlu0 %v10554, 44
  %v10581 = vpop.permute.xlu0 %10580
  %10582 = vrot.lane.b32.xlu0 %v10561, 44
  %v10583 = vpop.permute.xlu0 %10582
  %10584 = vrot.lane.b32.xlu0 %v10568, 44
  %v10585 = vpop.permute.xlu0 %10584
  %10586 = vrot.lane.b32.xlu0 %v10575, 44
  %v10587 = vpop.permute.xlu0 %10586
  %vm10588 = vcmask 359424
  %v10589 = vsel %vm10588, %v10581, %v10583
  %v10590 = vsel %vm10588, %v10583, %v10585
  %v10591 = vsel %vm10588, %v10585, %v10587
  %v10596 = vmul.bf16 %v10518, %v10581
  %v10597 = vmul.bf16 %v10519, %v10589
  %v10598 = vmul.bf16 %v10520, %v10590
  %v10599 = vmul.bf16 %v10521, %v10591
  %10604 = vrot.lane.b32.xlu0 %v10596, 84
  %v10605 = vpop.permute.xlu0 %10604
  %10606 = vrot.lane.b32.xlu0 %v10597, 84
  %v10607 = vpop.permute.xlu0 %10606
  %10608 = vrot.lane.b32.xlu0 %v10598, 84
  %v10609 = vpop.permute.xlu0 %10608
  %10610 = vrot.lane.b32.xlu0 %v10599, 84
  %v10611 = vpop.permute.xlu0 %10610
  %vm10612 = vcmask 687104
  %v10613 = vsel %vm10612, %v10605, %v10607
  %v10614 = vsel %vm10612, %v10607, %v10609
  %v10615 = vsel %vm10612, %v10609, %v10611
  %10620 = vst [vmem:[#allocation4 + $0x220] sm:$0xff] %v10613
  %10621 = vst [vmem:[#allocation4 + $0x228] sm:$0xff] %v10614
  %10622 = vst [vmem:[#allocation4 + $0x230] sm:$0xff] %v10615
  %10623 = vst.msk [vmem:[#allocation4 + $0x238] sm:$0xff] %vm8823, %v10611
  %v10624 = vld [vmem:[#allocation3] sm:$0xff]
  %v10625 = vld [vmem:[#allocation3 + $0x8] sm:$0xff]
  %v10626 = vld [vmem:[#allocation3 + $0x10] sm:$0xff]
  %v10627 = vld [vmem:[#allocation3 + $0x18] sm:$0xff]
  %v10628 = vmul.f32 %v8727, %v8752
  %v10630 = vlaneseq
  %v10631 = vshrl.u32 %v10630, 7
  %v10632 = vsub.s32 0, %v10631
  %v10633 = vrot.slane %v10628, %v10632
  %v10634 = vlaneseq
  %v10635 = vshrl.u32 %v10634, 7
  %v10636 = vsub.s32 1, %v10635
  %v10637 = vrot.slane %v10628, %v10636
  %v10638 = vlaneseq
  %v10639 = vshrl.u32 %v10638, 7
  %v10640 = vsub.s32 2, %v10639
  %v10641 = vrot.slane %v10628, %v10640
  %v10642 = vlaneseq
  %v10643 = vshrl.u32 %v10642, 7
  %v10644 = vsub.s32 3, %v10643
  %v10645 = vrot.slane %v10628, %v10644
  %v10650 = vpack.c.bf16 %v10633, %v10633
  %v10651 = vpack.c.bf16 %v10637, %v10637
  %v10652 = vpack.c.bf16 %v10641, %v10641
  %v10653 = vpack.c.bf16 %v10645, %v10645
  %v10655 = vpack.i.b16 %v10650, %v10650
  %v10657 = vlaneseq
  %v10658 = vshrl.u32 %v10657, 7
  %v10659 = vsub.s32 0, %v10658
  %v10660 = vrot.slane %v10655, %v10659
  %v10662 = vpack.i.b16 %v10651, %v10651
  %v10664 = vlaneseq
  %v10665 = vshrl.u32 %v10664, 7
  %v10666 = vsub.s32 0, %v10665
  %v10667 = vrot.slane %v10662, %v10666
  %v10669 = vpack.i.b16 %v10652, %v10652
  %v10671 = vlaneseq
  %v10672 = vshrl.u32 %v10671, 7
  %v10673 = vsub.s32 0, %v10672
  %v10674 = vrot.slane %v10669, %v10673
  %v10676 = vpack.i.b16 %v10653, %v10653
  %v10678 = vlaneseq
  %v10679 = vshrl.u32 %v10678, 7
  %v10680 = vsub.s32 0, %v10679
  %v10681 = vrot.slane %v10676, %v10680
  %10686 = vrot.lane.b32.xlu0 %v10660, 45
  %v10687 = vpop.permute.xlu0 %10686
  %10688 = vrot.lane.b32.xlu0 %v10667, 45
  %v10689 = vpop.permute.xlu0 %10688
  %10690 = vrot.lane.b32.xlu0 %v10674, 45
  %v10691 = vpop.permute.xlu0 %10690
  %10692 = vrot.lane.b32.xlu0 %v10681, 45
  %v10693 = vpop.permute.xlu0 %10692
  %vm10694 = vcmask 367616
  %v10695 = vsel %vm10694, %v10687, %v10689
  %v10696 = vsel %vm10694, %v10689, %v10691
  %v10697 = vsel %vm10694, %v10691, %v10693
  %v10702 = vmul.bf16 %v10624, %v10687
  %v10703 = vmul.bf16 %v10625, %v10695
  %v10704 = vmul.bf16 %v10626, %v10696
  %v10705 = vmul.bf16 %v10627, %v10697
  %10710 = vrot.lane.b32.xlu0 %v10702, 83
  %v10711 = vpop.permute.xlu0 %10710
  %10712 = vrot.lane.b32.xlu0 %v10703, 83
  %v10713 = vpop.permute.xlu0 %10712
  %10714 = vrot.lane.b32.xlu0 %v10704, 83
  %v10715 = vpop.permute.xlu0 %10714
  %10716 = vrot.lane.b32.xlu0 %v10705, 83
  %v10717 = vpop.permute.xlu0 %10716
  %vm10718 = vcmask 678912
  %v10719 = vsel %vm10718, %v10711, %v10713
  %v10720 = vsel %vm10718, %v10713, %v10715
  %v10721 = vsel %vm10718, %v10715, %v10717
  %10726 = vst [vmem:[#allocation4 + $0x240] sm:$0xff] %v10719
  %10727 = vst [vmem:[#allocation4 + $0x248] sm:$0xff] %v10720
  %10728 = vst [vmem:[#allocation4 + $0x250] sm:$0xff] %v10721
  %10729 = vst.msk [vmem:[#allocation4 + $0x258] sm:$0xff] %vm8823, %v10717
  %v10730 = vld [vmem:[#allocation3] sm:$0xff]
  %v10731 = vld [vmem:[#allocation3 + $0x8] sm:$0xff]
  %v10732 = vld [vmem:[#allocation3 + $0x10] sm:$0xff]
  %v10733 = vld [vmem:[#allocation3 + $0x18] sm:$0xff]
  %v10734 = vmul.f32 %v8727, %v8757
  %v10736 = vlaneseq
  %v10737 = vshrl.u32 %v10736, 7
  %v10738 = vsub.s32 0, %v10737
  %v10739 = vrot.slane %v10734, %v10738
  %v10740 = vlaneseq
  %v10741 = vshrl.u32 %v10740, 7
  %v10742 = vsub.s32 1, %v10741
  %v10743 = vrot.slane %v10734, %v10742
  %v10744 = vlaneseq
  %v10745 = vshrl.u32 %v10744, 7
  %v10746 = vsub.s32 2, %v10745
  %v10747 = vrot.slane %v10734, %v10746
  %v10748 = vlaneseq
  %v10749 = vshrl.u32 %v10748, 7
  %v10750 = vsub.s32 3, %v10749
  %v10751 = vrot.slane %v10734, %v10750
  %v10756 = vpack.c.bf16 %v10739, %v10739
  %v10757 = vpack.c.bf16 %v10743, %v10743
  %v10758 = vpack.c.bf16 %v10747, %v10747
  %v10759 = vpack.c.bf16 %v10751, %v10751
  %v10761 = vpack.i.b16 %v10756, %v10756
  %v10763 = vlaneseq
  %v10764 = vshrl.u32 %v10763, 7
  %v10765 = vsub.s32 0, %v10764
  %v10766 = vrot.slane %v10761, %v10765
  %v10768 = vpack.i.b16 %v10757, %v10757
  %v10770 = vlaneseq
  %v10771 = vshrl.u32 %v10770, 7
  %v10772 = vsub.s32 0, %v10771
  %v10773 = vrot.slane %v10768, %v10772
  %v10775 = vpack.i.b16 %v10758, %v10758
  %v10777 = vlaneseq
  %v10778 = vshrl.u32 %v10777, 7
  %v10779 = vsub.s32 0, %v10778
  %v10780 = vrot.slane %v10775, %v10779
  %v10782 = vpack.i.b16 %v10759, %v10759
  %v10784 = vlaneseq
  %v10785 = vshrl.u32 %v10784, 7
  %v10786 = vsub.s32 0, %v10785
  %v10787 = vrot.slane %v10782, %v10786
  %10792 = vrot.lane.b32.xlu0 %v10766, 46
  %v10793 = vpop.permute.xlu0 %10792
  %10794 = vrot.lane.b32.xlu0 %v10773, 46
  %v10795 = vpop.permute.xlu0 %10794
  %10796 = vrot.lane.b32.xlu0 %v10780, 46
  %v10797 = vpop.permute.xlu0 %10796
  %10798 = vrot.lane.b32.xlu0 %v10787, 46
  %v10799 = vpop.permute.xlu0 %10798
  %vm10800 = vcmask 375808
  %v10801 = vsel %vm10800, %v10793, %v10795
  %v10802 = vsel %vm10800, %v10795, %v10797
  %v10803 = vsel %vm10800, %v10797, %v10799
  %v10808 = vmul.bf16 %v10730, %v10793
  %v10809 = vmul.bf16 %v10731, %v10801
  %v10810 = vmul.bf16 %v10732, %v10802
  %v10811 = vmul.bf16 %v10733, %v10803
  %10816 = vrot.lane.b32.xlu0 %v10808, 82
  %v10817 = vpop.permute.xlu0 %10816
  %10818 = vrot.lane.b32.xlu0 %v10809, 82
  %v10819 = vpop.permute.xlu0 %10818
  %10820 = vrot.lane.b32.xlu0 %v10810, 82
  %v10821 = vpop.permute.xlu0 %10820
  %10822 = vrot.lane.b32.xlu0 %v10811, 82
  %v10823 = vpop.permute.xlu0 %10822
  %vm10824 = vcmask 670720
  %v10825 = vsel %vm10824, %v10817, %v10819
  %v10826 = vsel %vm10824, %v10819, %v10821
  %v10827 = vsel %vm10824, %v10821, %v10823
  %10832 = vst [vmem:[#allocation4 + $0x260] sm:$0xff] %v10825
  %10833 = vst [vmem:[#allocation4 + $0x268] sm:$0xff] %v10826
  %10834 = vst [vmem:[#allocation4 + $0x270] sm:$0xff] %v10827
  %10835 = vst.msk [vmem:[#allocation4 + $0x278] sm:$0xff] %vm8823, %v10823
  %v10836 = vld [vmem:[#allocation3] sm:$0xff]
  %v10837 = vld [vmem:[#allocation3 + $0x8] sm:$0xff]
  %v10838 = vld [vmem:[#allocation3 + $0x10] sm:$0xff]
  %v10839 = vld [vmem:[#allocation3 + $0x18] sm:$0xff]
  %v10840 = vmul.f32 %v8732, %v8737
  %v10842 = vlaneseq
  %v10843 = vshrl.u32 %v10842, 7
  %v10844 = vsub.s32 0, %v10843
  %v10845 = vrot.slane %v10840, %v10844
  %v10846 = vlaneseq
  %v10847 = vshrl.u32 %v10846, 7
  %v10848 = vsub.s32 1, %v10847
  %v10849 = vrot.slane %v10840, %v10848
  %v10850 = vlaneseq
  %v10851 = vshrl.u32 %v10850, 7
  %v10852 = vsub.s32 2, %v10851
  %v10853 = vrot.slane %v10840, %v10852
  %v10854 = vlaneseq
  %v10855 = vshrl.u32 %v10854, 7
  %v10856 = vsub.s32 3, %v10855
  %v10857 = vrot.slane %v10840, %v10856
  %v10862 = vpack.c.bf16 %v10845, %v10845
  %v10863 = vpack.c.bf16 %v10849, %v10849
  %v10864 = vpack.c.bf16 %v10853, %v10853
  %v10865 = vpack.c.bf16 %v10857, %v10857
  %v10867 = vpack.i.b16 %v10862, %v10862
  %v10869 = vlaneseq
  %v10870 = vshrl.u32 %v10869, 7
  %v10871 = vsub.s32 0, %v10870
  %v10872 = vrot.slane %v10867, %v10871
  %v10874 = vpack.i.b16 %v10863, %v10863
  %v10876 = vlaneseq
  %v10877 = vshrl.u32 %v10876, 7
  %v10878 = vsub.s32 0, %v10877
  %v10879 = vrot.slane %v10874, %v10878
  %v10881 = vpack.i.b16 %v10864, %v10864
  %v10883 = vlaneseq
  %v10884 = vshrl.u32 %v10883, 7
  %v10885 = vsub.s32 0, %v10884
  %v10886 = vrot.slane %v10881, %v10885
  %v10888 = vpack.i.b16 %v10865, %v10865
  %v10890 = vlaneseq
  %v10891 = vshrl.u32 %v10890, 7
  %v10892 = vsub.s32 0, %v10891
  %v10893 = vrot.slane %v10888, %v10892
  %10898 = vrot.lane.b32.xlu0 %v10872, 56
  %v10899 = vpop.permute.xlu0 %10898
  %10900 = vrot.lane.b32.xlu0 %v10879, 56
  %v10901 = vpop.permute.xlu0 %10900
  %10902 = vrot.lane.b32.xlu0 %v10886, 56
  %v10903 = vpop.permute.xlu0 %10902
  %10904 = vrot.lane.b32.xlu0 %v10893, 56
  %v10905 = vpop.permute.xlu0 %10904
  %vm10906 = vcmask 457728
  %v10907 = vsel %vm10906, %v10899, %v10901
  %v10908 = vsel %vm10906, %v10901, %v10903
  %v10909 = vsel %vm10906, %v10903, %v10905
  %v10914 = vmul.bf16 %v10836, %v10899
  %v10915 = vmul.bf16 %v10837, %v10907
  %v10916 = vmul.bf16 %v10838, %v10908
  %v10917 = vmul.bf16 %v10839, %v10909
  %10922 = vrot.lane.b32.xlu0 %v10914, 72
  %v10923 = vpop.permute.xlu0 %10922
  %10924 = vrot.lane.b32.xlu0 %v10915, 72
  %v10925 = vpop.permute.xlu0 %10924
  %10926 = vrot.lane.b32.xlu0 %v10916, 72
  %v10927 = vpop.permute.xlu0 %10926
  %10928 = vrot.lane.b32.xlu0 %v10917, 72
  %v10929 = vpop.permute.xlu0 %10928
  %vm10930 = vcmask 588800
  %v10931 = vsel %vm10930, %v10923, %v10925
  %v10932 = vsel %vm10930, %v10925, %v10927
  %v10933 = vsel %vm10930, %v10927, %v10929
  %10938 = vst [vmem:[#allocation4 + $0x280] sm:$0xff] %v10931
  %10939 = vst [vmem:[#allocation4 + $0x288] sm:$0xff] %v10932
  %10940 = vst [vmem:[#allocation4 + $0x290] sm:$0xff] %v10933
  %10941 = vst.msk [vmem:[#allocation4 + $0x298] sm:$0xff] %vm8823, %v10929
  %v10942 = vld [vmem:[#allocation3] sm:$0xff]
  %v10943 = vld [vmem:[#allocation3 + $0x8] sm:$0xff]
  %v10944 = vld [vmem:[#allocation3 + $0x10] sm:$0xff]
  %v10945 = vld [vmem:[#allocation3 + $0x18] sm:$0xff]
  %v10946 = vmul.f32 %v8732, %v8742
  %v10948 = vlaneseq
  %v10949 = vshrl.u32 %v10948, 7
  %v10950 = vsub.s32 0, %v10949
  %v10951 = vrot.slane %v10946, %v10950
  %v10952 = vlaneseq
  %v10953 = vshrl.u32 %v10952, 7
  %v10954 = vsub.s32 1, %v10953
  %v10955 = vrot.slane %v10946, %v10954
  %v10956 = vlaneseq
  %v10957 = vshrl.u32 %v10956, 7
  %v10958 = vsub.s32 2, %v10957
  %v10959 = vrot.slane %v10946, %v10958
  %v10960 = vlaneseq
  %v10961 = vshrl.u32 %v10960, 7
  %v10962 = vsub.s32 3, %v10961
  %v10963 = vrot.slane %v10946, %v10962
  %v10968 = vpack.c.bf16 %v10951, %v10951
  %v10969 = vpack.c.bf16 %v10955, %v10955
  %v10970 = vpack.c.bf16 %v10959, %v10959
  %v10971 = vpack.c.bf16 %v10963, %v10963
  %v10973 = vpack.i.b16 %v10968, %v10968
  %v10975 = vlaneseq
  %v10976 = vshrl.u32 %v10975, 7
  %v10977 = vsub.s32 0, %v10976
  %v10978 = vrot.slane %v10973, %v10977
  %v10980 = vpack.i.b16 %v10969, %v10969
  %v10982 = vlaneseq
  %v10983 = vshrl.u32 %v10982, 7
  %v10984 = vsub.s32 0, %v10983
  %v10985 = vrot.slane %v10980, %v10984
  %v10987 = vpack.i.b16 %v10970, %v10970
  %v10989 = vlaneseq
  %v10990 = vshrl.u32 %v10989, 7
  %v10991 = vsub.s32 0, %v10990
  %v10992 = vrot.slane %v10987, %v10991
  %v10994 = vpack.i.b16 %v10971, %v10971
  %v10996 = vlaneseq
  %v10997 = vshrl.u32 %v10996, 7
  %v10998 = vsub.s32 0, %v10997
  %v10999 = vrot.slane %v10994, %v10998
  %11004 = vrot.lane.b32.xlu0 %v10978, 57
  %v11005 = vpop.permute.xlu0 %11004
  %11006 = vrot.lane.b32.xlu0 %v10985, 57
  %v11007 = vpop.permute.xlu0 %11006
  %11008 = vrot.lane.b32.xlu0 %v10992, 57
  %v11009 = vpop.permute.xlu0 %11008
  %11010 = vrot.lane.b32.xlu0 %v10999, 57
  %v11011 = vpop.permute.xlu0 %11010
  %vm11012 = vcmask 465920
  %v11013 = vsel %vm11012, %v11005, %v11007
  %v11014 = vsel %vm11012, %v11007, %v11009
  %v11015 = vsel %vm11012, %v11009, %v11011
  %v11020 = vmul.bf16 %v10942, %v11005
  %v11021 = vmul.bf16 %v10943, %v11013
  %v11022 = vmul.bf16 %v10944, %v11014
  %v11023 = vmul.bf16 %v10945, %v11015
  %11028 = vrot.lane.b32.xlu0 %v11020, 71
  %v11029 = vpop.permute.xlu0 %11028
  %11030 = vrot.lane.b32.xlu0 %v11021, 71
  %v11031 = vpop.permute.xlu0 %11030
  %11032 = vrot.lane.b32.xlu0 %v11022, 71
  %v11033 = vpop.permute.xlu0 %11032
  %11034 = vrot.lane.b32.xlu0 %v11023, 71
  %v11035 = vpop.permute.xlu0 %11034
  %vm11036 = vcmask 580608
  %v11037 = vsel %vm11036, %v11029, %v11031
  %v11038 = vsel %vm11036, %v11031, %v11033
  %v11039 = vsel %vm11036, %v11033, %v11035
  %11044 = vst [vmem:[#allocation4 + $0x2a0] sm:$0xff] %v11037
  %11045 = vst [vmem:[#allocation4 + $0x2a8] sm:$0xff] %v11038
  %11046 = vst [vmem:[#allocation4 + $0x2b0] sm:$0xff] %v11039
  %11047 = vst.msk [vmem:[#allocation4 + $0x2b8] sm:$0xff] %vm8823, %v11035
  %v11048 = vld [vmem:[#allocation3] sm:$0xff]
  %v11049 = vld [vmem:[#allocation3 + $0x8] sm:$0xff]
  %v11050 = vld [vmem:[#allocation3 + $0x10] sm:$0xff]
  %v11051 = vld [vmem:[#allocation3 + $0x18] sm:$0xff]
  %v11052 = vmul.f32 %v8732, %v8747
  %v11054 = vlaneseq
  %v11055 = vshrl.u32 %v11054, 7
  %v11056 = vsub.s32 0, %v11055
  %v11057 = vrot.slane %v11052, %v11056
  %v11058 = vlaneseq
  %v11059 = vshrl.u32 %v11058, 7
  %v11060 = vsub.s32 1, %v11059
  %v11061 = vrot.slane %v11052, %v11060
  %v11062 = vlaneseq
  %v11063 = vshrl.u32 %v11062, 7
  %v11064 = vsub.s32 2, %v11063
  %v11065 = vrot.slane %v11052, %v11064
  %v11066 = vlaneseq
  %v11067 = vshrl.u32 %v11066, 7
  %v11068 = vsub.s32 3, %v11067
  %v11069 = vrot.slane %v11052, %v11068
  %v11074 = vpack.c.bf16 %v11057, %v11057
  %v11075 = vpack.c.bf16 %v11061, %v11061
  %v11076 = vpack.c.bf16 %v11065, %v11065
  %v11077 = vpack.c.bf16 %v11069, %v11069
  %v11079 = vpack.i.b16 %v11074, %v11074
  %v11081 = vlaneseq
  %v11082 = vshrl.u32 %v11081, 7
  %v11083 = vsub.s32 0, %v11082
  %v11084 = vrot.slane %v11079, %v11083
  %v11086 = vpack.i.b16 %v11075, %v11075
  %v11088 = vlaneseq
  %v11089 = vshrl.u32 %v11088, 7
  %v11090 = vsub.s32 0, %v11089
  %v11091 = vrot.slane %v11086, %v11090
  %v11093 = vpack.i.b16 %v11076, %v11076
  %v11095 = vlaneseq
  %v11096 = vshrl.u32 %v11095, 7
  %v11097 = vsub.s32 0, %v11096
  %v11098 = vrot.slane %v11093, %v11097
  %v11100 = vpack.i.b16 %v11077, %v11077
  %v11102 = vlaneseq
  %v11103 = vshrl.u32 %v11102, 7
  %v11104 = vsub.s32 0, %v11103
  %v11105 = vrot.slane %v11100, %v11104
  %11110 = vrot.lane.b32.xlu0 %v11084, 58
  %v11111 = vpop.permute.xlu0 %11110
  %11112 = vrot.lane.b32.xlu0 %v11091, 58
  %v11113 = vpop.permute.xlu0 %11112
  %11114 = vrot.lane.b32.xlu0 %v11098, 58
  %v11115 = vpop.permute.xlu0 %11114
  %11116 = vrot.lane.b32.xlu0 %v11105, 58
  %v11117 = vpop.permute.xlu0 %11116
  %vm11118 = vcmask 474112
  %v11119 = vsel %vm11118, %v11111, %v11113
  %v11120 = vsel %vm11118, %v11113, %v11115
  %v11121 = vsel %vm11118, %v11115, %v11117
  %v11126 = vmul.bf16 %v11048, %v11111
  %v11127 = vmul.bf16 %v11049, %v11119
  %v11128 = vmul.bf16 %v11050, %v11120
  %v11129 = vmul.bf16 %v11051, %v11121
  %11134 = vrot.lane.b32.xlu0 %v11126, 70
  %v11135 = vpop.permute.xlu0 %11134
  %11136 = vrot.lane.b32.xlu0 %v11127, 70
  %v11137 = vpop.permute.xlu0 %11136
  %11138 = vrot.lane.b32.xlu0 %v11128, 70
  %v11139 = vpop.permute.xlu0 %11138
  %11140 = vrot.lane.b32.xlu0 %v11129, 70
  %v11141 = vpop.permute.xlu0 %11140
  %vm11142 = vcmask 572416
  %v11143 = vsel %vm11142, %v11135, %v11137
  %v11144 = vsel %vm11142, %v11137, %v11139
  %v11145 = vsel %vm11142, %v11139, %v11141
  %11150 = vst [vmem:[#allocation4 + $0x2c0] sm:$0xff] %v11143
  %11151 = vst [vmem:[#allocation4 + $0x2c8] sm:$0xff] %v11144
  %11152 = vst [vmem:[#allocation4 + $0x2d0] sm:$0xff] %v11145
  %11153 = vst.msk [vmem:[#allocation4 + $0x2d8] sm:$0xff] %vm8823, %v11141
  %v11154 = vld [vmem:[#allocation3] sm:$0xff]
  %v11155 = vld [vmem:[#allocation3 + $0x8] sm:$0xff]
  %v11156 = vld [vmem:[#allocation3 + $0x10] sm:$0xff]
  %v11157 = vld [vmem:[#allocation3 + $0x18] sm:$0xff]
  %v11158 = vmul.f32 %v8732, %v8752
  %v11160 = vlaneseq
  %v11161 = vshrl.u32 %v11160, 7
  %v11162 = vsub.s32 0, %v11161
  %v11163 = vrot.slane %v11158, %v11162
  %v11164 = vlaneseq
  %v11165 = vshrl.u32 %v11164, 7
  %v11166 = vsub.s32 1, %v11165
  %v11167 = vrot.slane %v11158, %v11166
  %v11168 = vlaneseq
  %v11169 = vshrl.u32 %v11168, 7
  %v11170 = vsub.s32 2, %v11169
  %v11171 = vrot.slane %v11158, %v11170
  %v11172 = vlaneseq
  %v11173 = vshrl.u32 %v11172, 7
  %v11174 = vsub.s32 3, %v11173
  %v11175 = vrot.slane %v11158, %v11174
  %v11180 = vpack.c.bf16 %v11163, %v11163
  %v11181 = vpack.c.bf16 %v11167, %v11167
  %v11182 = vpack.c.bf16 %v11171, %v11171
  %v11183 = vpack.c.bf16 %v11175, %v11175
  %v11185 = vpack.i.b16 %v11180, %v11180
  %v11187 = vlaneseq
  %v11188 = vshrl.u32 %v11187, 7
  %v11189 = vsub.s32 0, %v11188
  %v11190 = vrot.slane %v11185, %v11189
  %v11192 = vpack.i.b16 %v11181, %v11181
  %v11194 = vlaneseq
  %v11195 = vshrl.u32 %v11194, 7
  %v11196 = vsub.s32 0, %v11195
  %v11197 = vrot.slane %v11192, %v11196
  %v11199 = vpack.i.b16 %v11182, %v11182
  %v11201 = vlaneseq
  %v11202 = vshrl.u32 %v11201, 7
  %v11203 = vsub.s32 0, %v11202
  %v11204 = vrot.slane %v11199, %v11203
  %v11206 = vpack.i.b16 %v11183, %v11183
  %v11208 = vlaneseq
  %v11209 = vshrl.u32 %v11208, 7
  %v11210 = vsub.s32 0, %v11209
  %v11211 = vrot.slane %v11206, %v11210
  %11216 = vrot.lane.b32.xlu0 %v11190, 59
  %v11217 = vpop.permute.xlu0 %11216
  %11218 = vrot.lane.b32.xlu0 %v11197, 59
  %v11219 = vpop.permute.xlu0 %11218
  %11220 = vrot.lane.b32.xlu0 %v11204, 59
  %v11221 = vpop.permute.xlu0 %11220
  %11222 = vrot.lane.b32.xlu0 %v11211, 59
  %v11223 = vpop.permute.xlu0 %11222
  %vm11224 = vcmask 482304
  %v11225 = vsel %vm11224, %v11217, %v11219
  %v11226 = vsel %vm11224, %v11219, %v11221
  %v11227 = vsel %vm11224, %v11221, %v11223
  %v11232 = vmul.bf16 %v11154, %v11217
  %v11233 = vmul.bf16 %v11155, %v11225
  %v11234 = vmul.bf16 %v11156, %v11226
  %v11235 = vmul.bf16 %v11157, %v11227
  %11240 = vrot.lane.b32.xlu0 %v11232, 69
  %v11241 = vpop.permute.xlu0 %11240
  %11242 = vrot.lane.b32.xlu0 %v11233, 69
  %v11243 = vpop.permute.xlu0 %11242
  %11244 = vrot.lane.b32.xlu0 %v11234, 69
  %v11245 = vpop.permute.xlu0 %11244
  %11246 = vrot.lane.b32.xlu0 %v11235, 69
  %v11247 = vpop.permute.xlu0 %11246
  %vm11248 = vcmask 564224
  %v11249 = vsel %vm11248, %v11241, %v11243
  %v11250 = vsel %vm11248, %v11243, %v11245
  %v11251 = vsel %vm11248, %v11245, %v11247
  %11256 = vst [vmem:[#allocation4 + $0x2e0] sm:$0xff] %v11249
  %11257 = vst [vmem:[#allocation4 + $0x2e8] sm:$0xff] %v11250
  %11258 = vst [vmem:[#allocation4 + $0x2f0] sm:$0xff] %v11251
  %11259 = vst.msk [vmem:[#allocation4 + $0x2f8] sm:$0xff] %vm8823, %v11247
  %v11260 = vld [vmem:[#allocation3] sm:$0xff]
  %v11261 = vld [vmem:[#allocation3 + $0x8] sm:$0xff]
  %v11262 = vld [vmem:[#allocation3 + $0x10] sm:$0xff]
  %v11263 = vld [vmem:[#allocation3 + $0x18] sm:$0xff]
  %v11264 = vmul.f32 %v8732, %v8757
  %v11266 = vlaneseq
  %v11267 = vshrl.u32 %v11266, 7
  %v11268 = vsub.s32 0, %v11267
  %v11269 = vrot.slane %v11264, %v11268
  %v11270 = vlaneseq
  %v11271 = vshrl.u32 %v11270, 7
  %v11272 = vsub.s32 1, %v11271
  %v11273 = vrot.slane %v11264, %v11272
  %v11274 = vlaneseq
  %v11275 = vshrl.u32 %v11274, 7
  %v11276 = vsub.s32 2, %v11275
  %v11277 = vrot.slane %v11264, %v11276
  %v11278 = vlaneseq
  %v11279 = vshrl.u32 %v11278, 7
  %v11280 = vsub.s32 3, %v11279
  %v11281 = vrot.slane %v11264, %v11280
  %v11286 = vpack.c.bf16 %v11269, %v11269
  %v11287 = vpack.c.bf16 %v11273, %v11273
  %v11288 = vpack.c.bf16 %v11277, %v11277
  %v11289 = vpack.c.bf16 %v11281, %v11281
  %v11291 = vpack.i.b16 %v11286, %v11286
  %v11293 = vlaneseq
  %v11294 = vshrl.u32 %v11293, 7
  %v11295 = vsub.s32 0, %v11294
  %v11296 = vrot.slane %v11291, %v11295
  %v11298 = vpack.i.b16 %v11287, %v11287
  %v11300 = vlaneseq
  %v11301 = vshrl.u32 %v11300, 7
  %v11302 = vsub.s32 0, %v11301
  %v11303 = vrot.slane %v11298, %v11302
  %v11305 = vpack.i.b16 %v11288, %v11288
  %v11307 = vlaneseq
  %v11308 = vshrl.u32 %v11307, 7
  %v11309 = vsub.s32 0, %v11308
  %v11310 = vrot.slane %v11305, %v11309
  %v11312 = vpack.i.b16 %v11289, %v11289
  %v11314 = vlaneseq
  %v11315 = vshrl.u32 %v11314, 7
  %v11316 = vsub.s32 0, %v11315
  %v11317 = vrot.slane %v11312, %v11316
  %11322 = vrot.lane.b32.xlu0 %v11296, 60
  %v11323 = vpop.permute.xlu0 %11322
  %11324 = vrot.lane.b32.xlu0 %v11303, 60
  %v11325 = vpop.permute.xlu0 %11324
  %11326 = vrot.lane.b32.xlu0 %v11310, 60
  %v11327 = vpop.permute.xlu0 %11326
  %11328 = vrot.lane.b32.xlu0 %v11317, 60
  %v11329 = vpop.permute.xlu0 %11328
  %vm11330 = vcmask 490496
  %v11331 = vsel %vm11330, %v11323, %v11325
  %v11332 = vsel %vm11330, %v11325, %v11327
  %v11333 = vsel %vm11330, %v11327, %v11329
  %v11338 = vmul.bf16 %v11260, %v11323
  %v11339 = vmul.bf16 %v11261, %v11331
  %v11340 = vmul.bf16 %v11262, %v11332
  %v11341 = vmul.bf16 %v11263, %v11333
  %11346 = vrot.lane.b32.xlu0 %v11338, 68
  %v11347 = vpop.permute.xlu0 %11346
  %11348 = vrot.lane.b32.xlu0 %v11339, 68
  %v11349 = vpop.permute.xlu0 %11348
  %11350 = vrot.lane.b32.xlu0 %v11340, 68
  %v11351 = vpop.permute.xlu0 %11350
  %11352 = vrot.lane.b32.xlu0 %v11341, 68
  %v11353 = vpop.permute.xlu0 %11352
  %vm11354 = vcmask 556032
  %v11355 = vsel %vm11354, %v11347, %v11349
  %v11356 = vsel %vm11354, %v11349, %v11351
  %v11357 = vsel %vm11354, %v11351, %v11353
  %11362 = vst [vmem:[#allocation4 + $0x300] sm:$0xff] %v11355
  %11363 = vst [vmem:[#allocation4 + $0x308] sm:$0xff] %v11356
  %11364 = vst [vmem:[#allocation4 + $0x310] sm:$0xff] %v11357
  %11365 = vst.msk [vmem:[#allocation4 + $0x318] sm:$0xff] %vm8823, %v11353
  %v11366 = vld [vmem:[%s7] sm:$0xff]
  %v11367 = vld [vmem:[%s7 + $0x8] sm:$0xff]
  %v11368 = vld [vmem:[%s7 + $0x10] sm:$0xff]
  %v11369 = vld [vmem:[%s7 + $0x18] sm:$0xff]
  %v11370 = vld [vmem:[%s7 + $0x20] sm:$0xff]
  %v11371 = vld [vmem:[%s7 + $0x28] sm:$0xff]
  %v11372 = vld [vmem:[%s7 + $0x30] sm:$0xff]
  %v11373 = vld [vmem:[%s7 + $0x38] sm:$0xff]
  %v11374 = vld [vmem:[#allocation4] sm:$0xff]
  %v11375 = vld [vmem:[#allocation4 + $0x8] sm:$0xff]
  %v11376 = vld [vmem:[#allocation4 + $0x10] sm:$0xff]
  %v11377 = vld [vmem:[#allocation4 + $0x18] sm:$0xff]
  %v11378 = vld [vmem:[#allocation4 + $0x20] sm:$0xff]
  %v11379 = vld [vmem:[#allocation4 + $0x28] sm:$0xff]
  %v11380 = vld [vmem:[#allocation4 + $0x30] sm:$0xff]
  %v11381 = vld [vmem:[#allocation4 + $0x38] sm:$0xff]
  %v11382 = vld [vmem:[#allocation4 + $0x40] sm:$0xff]
  %v11383 = vld [vmem:[#allocation4 + $0x48] sm:$0xff]
  %v11384 = vld [vmem:[#allocation4 + $0x50] sm:$0xff]
  %v11385 = vld [vmem:[#allocation4 + $0x58] sm:$0xff]
  %v11386 = vld [vmem:[#allocation4 + $0x60] sm:$0xff]
  %v11387 = vld [vmem:[#allocation4 + $0x68] sm:$0xff]
  %v11388 = vld [vmem:[#allocation4 + $0x70] sm:$0xff]
  %v11389 = vld [vmem:[#allocation4 + $0x78] sm:$0xff]
  %v11390 = vld [vmem:[#allocation4 + $0x80] sm:$0xff]
  %v11391 = vld [vmem:[#allocation4 + $0x88] sm:$0xff]
  %v11392 = vld [vmem:[#allocation4 + $0x90] sm:$0xff]
  %v11393 = vld [vmem:[#allocation4 + $0x98] sm:$0xff]
  %v11394 = vld [vmem:[#allocation4 + $0xa0] sm:$0xff]
  %v11395 = vld [vmem:[#allocation4 + $0xa8] sm:$0xff]
  %v11396 = vld [vmem:[#allocation4 + $0xb0] sm:$0xff]
  %v11397 = vld [vmem:[#allocation4 + $0xb8] sm:$0xff]
  %v11398 = vld [vmem:[#allocation4 + $0xc0] sm:$0xff]
  %v11399 = vld [vmem:[#allocation4 + $0xc8] sm:$0xff]
  %v11400 = vld [vmem:[#allocation4 + $0xd0] sm:$0xff]
  %v11401 = vld [vmem:[#allocation4 + $0xd8] sm:$0xff]
  %v11402 = vld [vmem:[#allocation4 + $0xe0] sm:$0xff]
  %v11403 = vld [vmem:[#allocation4 + $0xe8] sm:$0xff]
  %v11404 = vld [vmem:[#allocation4 + $0xf0] sm:$0xff]
  %v11405 = vld [vmem:[#allocation4 + $0xf8] sm:$0xff]
  %v11406 = vld [vmem:[#allocation4 + $0x100] sm:$0xff]
  %v11407 = vld [vmem:[#allocation4 + $0x108] sm:$0xff]
  %v11408 = vld [vmem:[#allocation4 + $0x110] sm:$0xff]
  %v11409 = vld [vmem:[#allocation4 + $0x118] sm:$0xff]
  %v11410 = vld [vmem:[#allocation4 + $0x120] sm:$0xff]
  %v11411 = vld [vmem:[#allocation4 + $0x128] sm:$0xff]
  %v11412 = vld [vmem:[#allocation4 + $0x130] sm:$0xff]
  %v11413 = vld [vmem:[#allocation4 + $0x138] sm:$0xff]
  %v11414 = vld [vmem:[#allocation4 + $0x140] sm:$0xff]
  %v11415 = vld [vmem:[#allocation4 + $0x148] sm:$0xff]
  %v11416 = vld [vmem:[#allocation4 + $0x150] sm:$0xff]
  %v11417 = vld [vmem:[#allocation4 + $0x158] sm:$0xff]
  %v11418 = vld [vmem:[#allocation4 + $0x160] sm:$0xff]
  %v11419 = vld [vmem:[#allocation4 + $0x168] sm:$0xff]
  %v11420 = vld [vmem:[#allocation4 + $0x170] sm:$0xff]
  %v11421 = vld [vmem:[#allocation4 + $0x178] sm:$0xff]
  %v11422 = vld [vmem:[#allocation4 + $0x180] sm:$0xff]
  %v11423 = vld [vmem:[#allocation4 + $0x188] sm:$0xff]
  %v11424 = vld [vmem:[#allocation4 + $0x190] sm:$0xff]
  %v11425 = vld [vmem:[#allocation4 + $0x198] sm:$0xff]
  %v11426 = vld [vmem:[#allocation4 + $0x1a0] sm:$0xff]
  %v11427 = vld [vmem:[#allocation4 + $0x1a8] sm:$0xff]
  %v11428 = vld [vmem:[#allocation4 + $0x1b0] sm:$0xff]
  %v11429 = vld [vmem:[#allocation4 + $0x1b8] sm:$0xff]
  %v11430 = vld [vmem:[#allocation4 + $0x1c0] sm:$0xff]
  %v11431 = vld [vmem:[#allocation4 + $0x1c8] sm:$0xff]
  %v11432 = vld [vmem:[#allocation4 + $0x1d0] sm:$0xff]
  %v11433 = vld [vmem:[#allocation4 + $0x1d8] sm:$0xff]
  %v11434 = vld [vmem:[#allocation4 + $0x1e0] sm:$0xff]
  %v11435 = vld [vmem:[#allocation4 + $0x1e8] sm:$0xff]
  %v11436 = vld [vmem:[#allocation4 + $0x1f0] sm:$0xff]
  %v11437 = vld [vmem:[#allocation4 + $0x1f8] sm:$0xff]
  %v11438 = vld [vmem:[#allocation4 + $0x200] sm:$0xff]
  %v11439 = vld [vmem:[#allocation4 + $0x208] sm:$0xff]
  %v11440 = vld [vmem:[#allocation4 + $0x210] sm:$0xff]
  %v11441 = vld [vmem:[#allocation4 + $0x218] sm:$0xff]
  %v11442 = vld [vmem:[#allocation4 + $0x220] sm:$0xff]
  %v11443 = vld [vmem:[#allocation4 + $0x228] sm:$0xff]
  %v11444 = vld [vmem:[#allocation4 + $0x230] sm:$0xff]
  %v11445 = vld [vmem:[#allocation4 + $0x238] sm:$0xff]
  %v11446 = vld [vmem:[#allocation4 + $0x240] sm:$0xff]
  %v11447 = vld [vmem:[#allocation4 + $0x248] sm:$0xff]
  %v11448 = vld [vmem:[#allocation4 + $0x250] sm:$0xff]
  %v11449 = vld [vmem:[#allocation4 + $0x258] sm:$0xff]
  %v11450 = vld [vmem:[#allocation4 + $0x260] sm:$0xff]
  %v11451 = vld [vmem:[#allocation4 + $0x268] sm:$0xff]
  %v11452 = vld [vmem:[#allocation4 + $0x270] sm:$0xff]
  %v11453 = vld [vmem:[#allocation4 + $0x278] sm:$0xff]
  %v11454 = vld [vmem:[#allocation4 + $0x280] sm:$0xff]
  %v11455 = vld [vmem:[#allocation4 + $0x288] sm:$0xff]
  %v11456 = vld [vmem:[#allocation4 + $0x290] sm:$0xff]
  %v11457 = vld [vmem:[#allocation4 + $0x298] sm:$0xff]
  %v11458 = vld [vmem:[#allocation4 + $0x2a0] sm:$0xff]
  %v11459 = vld [vmem:[#allocation4 + $0x2a8] sm:$0xff]
  %v11460 = vld [vmem:[#allocation4 + $0x2b0] sm:$0xff]
  %v11461 = vld [vmem:[#allocation4 + $0x2b8] sm:$0xff]
  %v11462 = vld [vmem:[#allocation4 + $0x2c0] sm:$0xff]
  %v11463 = vld [vmem:[#allocation4 + $0x2c8] sm:$0xff]
  %v11464 = vld [vmem:[#allocation4 + $0x2d0] sm:$0xff]
  %v11465 = vld [vmem:[#allocation4 + $0x2d8] sm:$0xff]
  %v11466 = vld [vmem:[#allocation4 + $0x2e0] sm:$0xff]
  %v11467 = vld [vmem:[#allocation4 + $0x2e8] sm:$0xff]
  %v11468 = vld [vmem:[#allocation4 + $0x2f0] sm:$0xff]
  %v11469 = vld [vmem:[#allocation4 + $0x2f8] sm:$0xff]
  %v11470 = vld [vmem:[#allocation4 + $0x300] sm:$0xff]
  %v11471 = vld [vmem:[#allocation4 + $0x308] sm:$0xff]
  %v11472 = vld [vmem:[#allocation4 + $0x310] sm:$0xff]
  %v11473 = vld [vmem:[#allocation4 + $0x318] sm:$0xff]
  %v11482 = vunpack.c.l.b16 %v11366
  %v11483 = vunpack.c.h.b16 %v11366
  %v11484 = vunpack.c.l.b16 %v11367
  %v11485 = vunpack.c.h.b16 %v11367
  %v11486 = vunpack.c.l.b16 %v11368
  %v11487 = vunpack.c.h.b16 %v11368
  %v11488 = vunpack.c.l.b16 %v11369
  %v11489 = vunpack.c.h.b16 %v11369
  %v11490 = vunpack.c.l.b16 %v11370
  %v11491 = vunpack.c.h.b16 %v11370
  %v11492 = vunpack.c.l.b16 %v11371
  %v11493 = vunpack.c.h.b16 %v11371
  %v11494 = vunpack.c.l.b16 %v11372
  %v11495 = vunpack.c.h.b16 %v11372
  %v11496 = vunpack.c.l.b16 %v11373
  %v11497 = vunpack.c.h.b16 %v11373
  %v11498 = vpack.c.b16 %v11486, %v11482
  %v11499 = vpack.c.b16 %v11487, %v11483
  %v11500 = vpack.c.b16 %v11488, %v11484
  %v11501 = vpack.c.b16 %v11489, %v11485
  %v11502 = vpack.c.b16 %v11494, %v11490
  %v11503 = vpack.c.b16 %v11495, %v11491
  %v11504 = vpack.c.b16 %v11496, %v11492
  %v11505 = vpack.c.b16 %v11497, %v11493
  %v11513 = vsel %vm5811, %v11501, 0
  %v11516 = vsel %vm5811, %v11505, 0
  %11518 = vmatprep.subr.bf16.mxu0 %v11375
  %11519 = vmatpush1.bf16.msra.mxu0 %v11374
  %11520 = vmatprep.subr.bf16.mxu0 %v11379
  %11521 = vmatpush1.bf16.msra.mxu0 %v11378
  %11522 = vmatprep.subr.bf16.mxu0 %v11383
  %11523 = vmatpush1.bf16.msra.mxu0 %v11382
  %11524 = vmatprep.subr.bf16.mxu0 %v11387
  %11525 = vmatpush1.bf16.msra.mxu0 %v11386
  %11526 = vmatprep.subr.bf16.mxu0 %v11391
  %11527 = vmatpush1.bf16.msra.mxu0 %v11390
  %11528 = vmatprep.subr.bf16.mxu0 %v11395
  %11529 = vmatpush1.bf16.msra.mxu0 %v11394
  %11530 = vmatprep.subr.bf16.mxu0 %v11399
  %11531 = vmatpush1.bf16.msra.mxu0 %v11398
  %11532 = vmatprep.subr.bf16.mxu0 %v11403
  %11533 = vmatpush1.bf16.msra.mxu0 %v11402
  %11534 = vmatprep.subr.bf16.mxu0 %v11407
  %11535 = vmatpush1.bf16.msra.mxu0 %v11406
  %11536 = vmatprep.subr.bf16.mxu0 %v11411
  %11537 = vmatpush1.bf16.msra.mxu0 %v11410
  %11538 = vmatprep.subr.bf16.mxu0 %v11415
  %11539 = vmatpush1.bf16.msra.mxu0 %v11414
  %11540 = vmatprep.subr.bf16.mxu0 %v11419
  %11541 = vmatpush1.bf16.msra.mxu0 %v11418
  %11542 = vmatprep.subr.bf16.mxu0 %v11423
  %11543 = vmatpush1.bf16.msra.mxu0 %v11422
  %11544 = vmatprep.subr.bf16.mxu0 %v11427
  %11545 = vmatpush1.bf16.msra.mxu0 %v11426
  %11546 = vmatprep.subr.bf16.mxu0 %v11431
  %11547 = vmatpush1.bf16.msra.mxu0 %v11430
  %11548 = vmatprep.subr.bf16.mxu0 %v11435
  %11549 = vmatpush1.bf16.msra.mxu0 %v11434
  %11550 = vmatprep.mubr.bf16.mxu0 %v11499
  %11551 = vmatmul.mubr.bf16.gmra.mrb[0].mxu0 %v11498
  %v11552 = vpop.f32.mrb[0].mxu0
  %v11553 = vadd.f32 0.0, %v11552
  %v11554 = vpop.f32.mrb[0].mxu0
  %v11555 = vadd.f32 0.0, %v11554
  %v11556 = vpop.f32.mrb[0].mxu0
  %v11557 = vadd.f32 0.0, %v11556
  %v11558 = vpop.f32.mrb[0].mxu0
  %v11559 = vadd.f32 0.0, %v11558
  %11560 = vmatprep.mubr.bf16.mxu0 %v11503
  %11561 = vmatmul.mubr.bf16.gmra.mrb[0].mxu0 %v11502
  %v11562 = vpop.f32.mrb[0].mxu0
  %v11563 = vadd.f32 0.0, %v11562
  %v11564 = vpop.f32.mrb[0].mxu0
  %v11565 = vadd.f32 0.0, %v11564
  %v11566 = vpop.f32.mrb[0].mxu0
  %v11567 = vadd.f32 0.0, %v11566
  %v11568 = vpop.f32.mrb[0].mxu0
  %v11569 = vadd.f32 0.0, %v11568
  %11570 = vdwg.mxu0
  %11571 = vmatprep.subr.bf16.mxu0 %v11439
  %11572 = vmatpush1.bf16.msra.mxu0 %v11438
  %11573 = vmatprep.subr.bf16.mxu0 %v11443
  %11574 = vmatpush1.bf16.msra.mxu0 %v11442
  %11575 = vmatprep.subr.bf16.mxu0 %v11447
  %11576 = vmatpush1.bf16.msra.mxu0 %v11446
  %11577 = vmatprep.subr.bf16.mxu0 %v11451
  %11578 = vmatpush1.bf16.msra.mxu0 %v11450
  %11579 = vmatprep.subr.bf16.mxu0 %v11455
  %11580 = vmatpush1.bf16.msra.mxu0 %v11454
  %11581 = vmatprep.subr.bf16.mxu0 %v11459
  %11582 = vmatpush1.bf16.msra.mxu0 %v11458
  %11583 = vmatprep.subr.bf16.mxu0 %v11463
  %11584 = vmatpush1.bf16.msra.mxu0 %v11462
  %11585 = vmatprep.subr.bf16.mxu0 %v11467
  %11586 = vmatpush1.bf16.msra.mxu0 %v11466
  %11587 = vmatprep.subr.bf16.mxu0 %v11471
  %11588 = vmatpush1.bf16.msra.mxu0 %v11470
  %11589 = vmatprep.subr.bf16.mxu0 0
  %11590 = vmatpush1.bf16.msra.mxu0 0
  %11591 = vmatprep.subr.bf16.mxu0 0
  %11592 = vmatpush1.bf16.msra.mxu0 0
  %11593 = vmatprep.subr.bf16.mxu0 0
  %11594 = vmatpush1.bf16.msra.mxu0 0
  %11595 = vmatprep.subr.bf16.mxu0 0
  %11596 = vmatpush1.bf16.msra.mxu0 0
  %11597 = vmatprep.subr.bf16.mxu0 0
  %11598 = vmatpush1.bf16.msra.mxu0 0
  %11599 = vmatprep.subr.bf16.mxu0 0
  %11600 = vmatpush1.bf16.msra.mxu0 0
  %11601 = vmatprep.subr.bf16.mxu0 0
  %11602 = vmatpush1.bf16.msra.mxu0 0
  %11603 = vmatprep.mubr.bf16.mxu0 %v11513
  %11604 = vmatmul.mubr.bf16.gmra.mrb[0].mxu0 %v11500
  %v11605 = vpop.f32.mrb[0].mxu0
  %v11606 = vadd.f32 %v11553, %v11605
  %v11607 = vpop.f32.mrb[0].mxu0
  %v11608 = vadd.f32 %v11555, %v11607
  %v11609 = vpop.f32.mrb[0].mxu0
  %v11610 = vadd.f32 %v11557, %v11609
  %v11611 = vpop.f32.mrb[0].mxu0
  %v11612 = vadd.f32 %v11559, %v11611
  %11613 = vmatprep.mubr.bf16.mxu0 %v11516
  %11614 = vmatmul.mubr.bf16.gmra.mrb[0].mxu0 %v11504
  %v11615 = vpop.f32.mrb[0].mxu0
  %v11616 = vadd.f32 %v11563, %v11615
  %v11617 = vpop.f32.mrb[0].mxu0
  %v11618 = vadd.f32 %v11565, %v11617
  %v11619 = vpop.f32.mrb[0].mxu0
  %v11620 = vadd.f32 %v11567, %v11619
  %v11621 = vpop.f32.mrb[0].mxu0
  %v11622 = vadd.f32 %v11569, %v11621
  %11623 = vdwg.mxu0
  %11624 = vmatprep.subr.bf16.mxu0 %v11377
  %11625 = vmatpush1.bf16.msra.mxu0 %v11376
  %11626 = vmatprep.subr.bf16.mxu0 %v11381
  %11627 = vmatpush1.bf16.msra.mxu0 %v11380
  %11628 = vmatprep.subr.bf16.mxu0 %v11385
  %11629 = vmatpush1.bf16.msra.mxu0 %v11384
  %11630 = vmatprep.subr.bf16.mxu0 %v11389
  %11631 = vmatpush1.bf16.msra.mxu0 %v11388
  %11632 = vmatprep.subr.bf16.mxu0 %v11393
  %11633 = vmatpush1.bf16.msra.mxu0 %v11392
  %11634 = vmatprep.subr.bf16.mxu0 %v11397
  %11635 = vmatpush1.bf16.msra.mxu0 %v11396
  %11636 = vmatprep.subr.bf16.mxu0 %v11401
  %11637 = vmatpush1.bf16.msra.mxu0 %v11400
  %11638 = vmatprep.subr.bf16.mxu0 %v11405
  %11639 = vmatpush1.bf16.msra.mxu0 %v11404
  %11640 = vmatprep.subr.bf16.mxu0 %v11409
  %11641 = vmatpush1.bf16.msra.mxu0 %v11408
  %11642 = vmatprep.subr.bf16.mxu0 %v11413
  %11643 = vmatpush1.bf16.msra.mxu0 %v11412
  %11644 = vmatprep.subr.bf16.mxu0 %v11417
  %11645 = vmatpush1.bf16.msra.mxu0 %v11416
  %11646 = vmatprep.subr.bf16.mxu0 %v11421
  %11647 = vmatpush1.bf16.msra.mxu0 %v11420
  %11648 = vmatprep.subr.bf16.mxu0 %v11425
  %11649 = vmatpush1.bf16.msra.mxu0 %v11424
  %11650 = vmatprep.subr.bf16.mxu0 %v11429
  %11651 = vmatpush1.bf16.msra.mxu0 %v11428
  %11652 = vmatprep.subr.bf16.mxu0 %v11433
  %11653 = vmatpush1.bf16.msra.mxu0 %v11432
  %11654 = vmatprep.subr.bf16.mxu0 %v11437
  %11655 = vmatpush1.bf16.msra.mxu0 %v11436
  %11656 = vmatprep.mubr.bf16.mxu0 %v11499
  %11657 = vmatmul.mubr.bf16.gmra.mrb[0].mxu0 %v11498
  %v11658 = vpop.f32.mrb[0].mxu0
  %v11659 = vadd.f32 0.0, %v11658
  %v11660 = vpop.f32.mrb[0].mxu0
  %v11661 = vadd.f32 0.0, %v11660
  %v11662 = vpop.f32.mrb[0].mxu0
  %v11663 = vadd.f32 0.0, %v11662
  %v11664 = vpop.f32.mrb[0].mxu0
  %v11665 = vadd.f32 0.0, %v11664
  %11666 = vmatprep.mubr.bf16.mxu0 %v11503
  %11667 = vmatmul.mubr.bf16.gmra.mrb[0].mxu0 %v11502
  %v11668 = vpop.f32.mrb[0].mxu0
  %v11669 = vadd.f32 0.0, %v11668
  %v11670 = vpop.f32.mrb[0].mxu0
  %v11671 = vadd.f32 0.0, %v11670
  %v11672 = vpop.f32.mrb[0].mxu0
  %v11673 = vadd.f32 0.0, %v11672
  %v11674 = vpop.f32.mrb[0].mxu0
  %v11675 = vadd.f32 0.0, %v11674
  %11676 = vdwg.mxu0
  %11677 = vmatprep.subr.bf16.mxu0 %v11441
  %11678 = vmatpush1.bf16.msra.mxu0 %v11440
  %11679 = vmatprep.subr.bf16.mxu0 %v11445
  %11680 = vmatpush1.bf16.msra.mxu0 %v11444
  %11681 = vmatprep.subr.bf16.mxu0 %v11449
  %11682 = vmatpush1.bf16.msra.mxu0 %v11448
  %11683 = vmatprep.subr.bf16.mxu0 %v11453
  %11684 = vmatpush1.bf16.msra.mxu0 %v11452
  %11685 = vmatprep.subr.bf16.mxu0 %v11457
  %11686 = vmatpush1.bf16.msra.mxu0 %v11456
  %11687 = vmatprep.subr.bf16.mxu0 %v11461
  %11688 = vmatpush1.bf16.msra.mxu0 %v11460
  %11689 = vmatprep.subr.bf16.mxu0 %v11465
  %11690 = vmatpush1.bf16.msra.mxu0 %v11464
  %11691 = vmatprep.subr.bf16.mxu0 %v11469
  %11692 = vmatpush1.bf16.msra.mxu0 %v11468
  %11693 = vmatprep.subr.bf16.mxu0 %v11473
  %11694 = vmatpush1.bf16.msra.mxu0 %v11472
  %11695 = vmatprep.subr.bf16.mxu0 0
  %11696 = vmatpush1.bf16.msra.mxu0 0
  %11697 = vmatprep.subr.bf16.mxu0 0
  %11698 = vmatpush1.bf16.msra.mxu0 0
  %11699 = vmatprep.subr.bf16.mxu0 0
  %11700 = vmatpush1.bf16.msra.mxu0 0
  %11701 = vmatprep.subr.bf16.mxu0 0
  %11702 = vmatpush1.bf16.msra.mxu0 0
  %11703 = vmatprep.subr.bf16.mxu0 0
  %11704 = vmatpush1.bf16.msra.mxu0 0
  %11705 = vmatprep.subr.bf16.mxu0 0
  %11706 = vmatpush1.bf16.msra.mxu0 0
  %11707 = vmatprep.subr.bf16.mxu0 0
  %11708 = vmatpush1.bf16.msra.mxu0 0
  %11709 = vmatprep.mubr.bf16.mxu0 %v11513
  %11710 = vmatmul.mubr.bf16.gmra.mrb[0].mxu0 %v11500
  %v11711 = vpop.f32.mrb[0].mxu0
  %v11712 = vadd.f32 %v11659, %v11711
  %v11713 = vpop.f32.mrb[0].mxu0
  %v11714 = vadd.f32 %v11661, %v11713
  %v11715 = vpop.f32.mrb[0].mxu0
  %v11716 = vadd.f32 %v11663, %v11715
  %v11717 = vpop.f32.mrb[0].mxu0
  %v11718 = vadd.f32 %v11665, %v11717
  %11719 = vmatprep.mubr.bf16.mxu0 %v11516
  %11720 = vmatmul.mubr.bf16.gmra.mrb[0].mxu0 %v11504
  %v11721 = vpop.f32.mrb[0].mxu0
  %v11722 = vadd.f32 %v11669, %v11721
  %v11723 = vpop.f32.mrb[0].mxu0
  %v11724 = vadd.f32 %v11671, %v11723
  %v11725 = vpop.f32.mrb[0].mxu0
  %v11726 = vadd.f32 %v11673, %v11725
  %v11727 = vpop.f32.mrb[0].mxu0
  %v11728 = vadd.f32 %v11675, %v11727
  %11729 = vdwg.mxu0
  %v11730 = vadd.f32 %v11606, %v11608
  %v11731 = vadd.f32 %v11730, %v11712
  %v11732 = vsel %vm8823, %v11714, 0.0
  %v11733 = vadd.f32 %v11731, %v11732
  %11734 = vadd.xlane.f32.xlu0 %v11733
  %v11735 = vpop.xlane.xlu0 %11734
  %v11736 = vadd.f32 %v11610, %v11612
  %v11737 = vadd.f32 %v11736, %v11716
  %v11738 = vsel %vm8823, %v11718, 0.0
  %v11739 = vadd.f32 %v11737, %v11738
  %11740 = vadd.xlane.f32.xlu0 %v11739
  %v11741 = vpop.xlane.xlu0 %11740
  %v11742 = vadd.f32 %v11616, %v11618
  %v11743 = vadd.f32 %v11742, %v11722
  %v11744 = vsel %vm8823, %v11724, 0.0
  %v11745 = vadd.f32 %v11743, %v11744
  %11746 = vadd.xlane.f32.xlu0 %v11745
  %v11747 = vpop.xlane.xlu0 %11746
  %v11748 = vadd.f32 %v11620, %v11622
  %v11749 = vadd.f32 %v11748, %v11726
  %v11750 = vsel %vm8823, %v11728, 0.0
  %v11751 = vadd.f32 %v11749, %v11750
  %11752 = vadd.xlane.f32.xlu0 %v11751
  %v11753 = vpop.xlane.xlu0 %11752
  %v11754 = vrcp.pop 392.0
  %v11755 = vmul.f32 %v11735, %v11754
  %v11756 = vmul.f32 %v11741, %v11754
  %v11757 = vmul.f32 %v11747, %v11754
  %v11758 = vmul.f32 %v11753, %v11754
  %v11759 = vmul.f32 %v11606, %v11606
  %v11760 = vmul.f32 %v11608, %v11608
  %v11761 = vmul.f32 %v11712, %v11712
  %v11762 = vmul.f32 %v11714, %v11714
  %v11763 = vmul.f32 %v11610, %v11610
  %v11764 = vmul.f32 %v11612, %v11612
  %v11765 = vmul.f32 %v11716, %v11716
  %v11766 = vmul.f32 %v11718, %v11718
  %v11767 = vmul.f32 %v11616, %v11616
  %v11768 = vmul.f32 %v11618, %v11618
  %v11769 = vmul.f32 %v11722, %v11722
  %v11770 = vmul.f32 %v11724, %v11724
  %v11771 = vmul.f32 %v11620, %v11620
  %v11772 = vmul.f32 %v11622, %v11622
  %v11773 = vmul.f32 %v11726, %v11726
  %v11774 = vmul.f32 %v11728, %v11728
  %v11775 = vadd.f32 %v11759, %v11760
  %v11776 = vadd.f32 %v11775, %v11761
  %v11777 = vsel %vm8823, %v11762, 0.0
  %v11778 = vadd.f32 %v11776, %v11777
  %11779 = vadd.xlane.f32.xlu0 %v11778
  %v11780 = vpop.xlane.xlu0 %11779
  %v11781 = vadd.f32 %v11763, %v11764
  %v11782 = vadd.f32 %v11781, %v11765
  %v11783 = vsel %vm8823, %v11766, 0.0
  %v11784 = vadd.f32 %v11782, %v11783
  %11785 = vadd.xlane.f32.xlu0 %v11784
  %v11786 = vpop.xlane.xlu0 %11785
  %v11787 = vadd.f32 %v11767, %v11768
  %v11788 = vadd.f32 %v11787, %v11769
  %v11789 = vsel %vm8823, %v11770, 0.0
  %v11790 = vadd.f32 %v11788, %v11789
  %11791 = vadd.xlane.f32.xlu0 %v11790
  %v11792 = vpop.xlane.xlu0 %11791
  %v11793 = vadd.f32 %v11771, %v11772
  %v11794 = vadd.f32 %v11793, %v11773
  %v11795 = vsel %vm8823, %v11774, 0.0
  %v11796 = vadd.f32 %v11794, %v11795
  %11797 = vadd.xlane.f32.xlu0 %v11796
  %v11798 = vpop.xlane.xlu0 %11797
  %v11799 = vmul.f32 %v11780, %v11754
  %v11800 = vmul.f32 %v11786, %v11754
  %v11801 = vmul.f32 %v11792, %v11754
  %v11802 = vmul.f32 %v11798, %v11754
  %v11803 = vmul.f32 %v11755, %v11755
  %v11804 = vmul.f32 %v11756, %v11756
  %v11805 = vmul.f32 %v11757, %v11757
  %v11806 = vmul.f32 %v11758, %v11758
  %v11807 = vsub.f32 %v11799, %v11803
  %v11808 = vsub.f32 %v11800, %v11804
  %v11809 = vsub.f32 %v11801, %v11805
  %v11810 = vsub.f32 %v11802, %v11806
  %v11811 = vmax.f32 %v11807, 0.0
  %v11812 = vmax.f32 %v11808, 0.0
  %v11813 = vmax.f32 %v11809, 0.0
  %v11814 = vmax.f32 %v11810, 0.0
  %v11815 = vsub.f32 %v11606, %v11755
  %v11816 = vsub.f32 %v11608, %v11755
  %v11817 = vsub.f32 %v11712, %v11755
  %v11818 = vsub.f32 %v11714, %v11755
  %v11819 = vsub.f32 %v11610, %v11756
  %v11820 = vsub.f32 %v11612, %v11756
  %v11821 = vsub.f32 %v11716, %v11756
  %v11822 = vsub.f32 %v11718, %v11756
  %v11823 = vsub.f32 %v11616, %v11757
  %v11824 = vsub.f32 %v11618, %v11757
  %v11825 = vsub.f32 %v11722, %v11757
  %v11826 = vsub.f32 %v11724, %v11757
  %v11827 = vsub.f32 %v11620, %v11758
  %v11828 = vsub.f32 %v11622, %v11758
  %v11829 = vsub.f32 %v11726, %v11758
  %v11830 = vsub.f32 %v11728, %v11758
  %v11831 = vadd.f32 %v11811, 1e-05
  %v11832 = vadd.f32 %v11812, 1e-05
  %v11833 = vadd.f32 %v11813, 1e-05
  %v11834 = vadd.f32 %v11814, 1e-05
  %v11835 = vrsqrt.pop %v11831
  %v11836 = vrsqrt.pop %v11832
  %v11837 = vrsqrt.pop %v11833
  %v11838 = vrsqrt.pop %v11834
  %v11839 = vmul.f32 %v11815, %v11835
  %v11840 = vmul.f32 %v11816, %v11835
  %v11841 = vmul.f32 %v11817, %v11835
  %v11842 = vmul.f32 %v11818, %v11835
  %v11843 = vmul.f32 %v11819, %v11836
  %v11844 = vmul.f32 %v11820, %v11836
  %v11845 = vmul.f32 %v11821, %v11836
  %v11846 = vmul.f32 %v11822, %v11836
  %v11847 = vmul.f32 %v11823, %v11837
  %v11848 = vmul.f32 %v11824, %v11837
  %v11849 = vmul.f32 %v11825, %v11837
  %v11850 = vmul.f32 %v11826, %v11837
  %v11851 = vmul.f32 %v11827, %v11838
  %v11852 = vmul.f32 %v11828, %v11838
  %v11853 = vmul.f32 %v11829, %v11838
  %v11854 = vmul.f32 %v11830, %v11838
  %v11855 = vld [vmem:[%s8] sm:$0xff]
  %v11856 = vld [vmem:[%s8 + $0x8] sm:$0xff]
  %v11857 = vld [vmem:[%s8 + $0x10] sm:$0xff]
  %v11858 = vld [vmem:[%s8 + $0x18] sm:$0xff]
  %11860 = vset.pattern.permute.xlu0 0
  %11861 = vperm.xlu0 %11860, %v11855
  %v11862 = vpop.permute.xlu0 %11861
  %11865 = vset.pattern.permute.xlu0 0
  %11866 = vperm.xlu0 %11865, %v11856
  %v11867 = vpop.permute.xlu0 %11866
  %11870 = vset.pattern.permute.xlu0 0
  %11871 = vperm.xlu0 %11870, %v11857
  %v11872 = vpop.permute.xlu0 %11871
  %11875 = vset.pattern.permute.xlu0 0
  %11876 = vperm.xlu0 %11875, %v11858
  %v11877 = vpop.permute.xlu0 %11876
  %v11879 = vmul.f32 %v11839, %v11862
  %v11880 = vmul.f32 %v11840, %v11862
  %v11881 = vmul.f32 %v11841, %v11862
  %v11882 = vmul.f32 %v11842, %v11862
  %v11883 = vmul.f32 %v11843, %v11867
  %v11884 = vmul.f32 %v11844, %v11867
  %v11885 = vmul.f32 %v11845, %v11867
  %v11886 = vmul.f32 %v11846, %v11867
  %v11887 = vmul.f32 %v11847, %v11872
  %v11888 = vmul.f32 %v11848, %v11872
  %v11889 = vmul.f32 %v11849, %v11872
  %v11890 = vmul.f32 %v11850, %v11872
  %v11891 = vmul.f32 %v11851, %v11877
  %v11892 = vmul.f32 %v11852, %v11877
  %v11893 = vmul.f32 %v11853, %v11877
  %v11894 = vmul.f32 %v11854, %v11877
  %v11895 = vld [vmem:[%s9] sm:$0xff]
  %v11896 = vld [vmem:[%s9 + $0x8] sm:$0xff]
  %v11897 = vld [vmem:[%s9 + $0x10] sm:$0xff]
  %v11898 = vld [vmem:[%s9 + $0x18] sm:$0xff]
  %11900 = vset.pattern.permute.xlu0 0
  %11901 = vperm.xlu0 %11900, %v11895
  %v11902 = vpop.permute.xlu0 %11901
  %11905 = vset.pattern.permute.xlu0 0
  %11906 = vperm.xlu0 %11905, %v11896
  %v11907 = vpop.permute.xlu0 %11906
  %11910 = vset.pattern.permute.xlu0 0
  %11911 = vperm.xlu0 %11910, %v11897
  %v11912 = vpop.permute.xlu0 %11911
  %11915 = vset.pattern.permute.xlu0 0
  %11916 = vperm.xlu0 %11915, %v11898
  %v11917 = vpop.permute.xlu0 %11916
  %v11919 = vadd.f32 %v11879, %v11902
  %v11920 = vadd.f32 %v11880, %v11902
  %v11921 = vadd.f32 %v11881, %v11902
  %v11922 = vadd.f32 %v11882, %v11902
  %v11923 = vadd.f32 %v11883, %v11907
  %v11924 = vadd.f32 %v11884, %v11907
  %v11925 = vadd.f32 %v11885, %v11907
  %v11926 = vadd.f32 %v11886, %v11907
  %v11927 = vadd.f32 %v11887, %v11912
  %v11928 = vadd.f32 %v11888, %v11912
  %v11929 = vadd.f32 %v11889, %v11912
  %v11930 = vadd.f32 %v11890, %v11912
  %v11931 = vadd.f32 %v11891, %v11917
  %v11932 = vadd.f32 %v11892, %v11917
  %v11933 = vadd.f32 %v11893, %v11917
  %v11934 = vadd.f32 %v11894, %v11917
  %v11935 = vmax.f32 %v11919, 0.0
  %v11936 = vmax.f32 %v11920, 0.0
  %v11937 = vmax.f32 %v11921, 0.0
  %v11938 = vmax.f32 %v11922, 0.0
  %v11939 = vmax.f32 %v11923, 0.0
  %v11940 = vmax.f32 %v11924, 0.0
  %v11941 = vmax.f32 %v11925, 0.0
  %v11942 = vmax.f32 %v11926, 0.0
  %v11943 = vmax.f32 %v11927, 0.0
  %v11944 = vmax.f32 %v11928, 0.0
  %v11945 = vmax.f32 %v11929, 0.0
  %v11946 = vmax.f32 %v11930, 0.0
  %v11947 = vmax.f32 %v11931, 0.0
  %v11948 = vmax.f32 %v11932, 0.0
  %v11949 = vmax.f32 %v11933, 0.0
  %v11950 = vmax.f32 %v11934, 0.0
  %11951 = vst [vmem:[#allocation5] sm:$0xff] %v11935
  %11952 = vst [vmem:[#allocation5 + $0x8] sm:$0xff] %v11936
  %11953 = vst [vmem:[#allocation5 + $0x10] sm:$0xff] %v11937
  %11954 = vst.msk [vmem:[#allocation5 + $0x18] sm:$0xff] %vm8823, %v11938
  %11955 = vst [vmem:[#allocation5 + $0x20] sm:$0xff] %v11939
  %11956 = vst [vmem:[#allocation5 + $0x28] sm:$0xff] %v11940
  %11957 = vst [vmem:[#allocation5 + $0x30] sm:$0xff] %v11941
  %11958 = vst.msk [vmem:[#allocation5 + $0x38] sm:$0xff] %vm8823, %v11942
  %11959 = vst [vmem:[#allocation5 + $0x40] sm:$0xff] %v11943
  %11960 = vst [vmem:[#allocation5 + $0x48] sm:$0xff] %v11944
  %11961 = vst [vmem:[#allocation5 + $0x50] sm:$0xff] %v11945
  %11962 = vst.msk [vmem:[#allocation5 + $0x58] sm:$0xff] %vm8823, %v11946
  %11963 = vst [vmem:[#allocation5 + $0x60] sm:$0xff] %v11947
  %11964 = vst [vmem:[#allocation5 + $0x68] sm:$0xff] %v11948
  %11965 = vst [vmem:[#allocation5 + $0x70] sm:$0xff] %v11949
  %11966 = vst.msk [vmem:[#allocation5 + $0x78] sm:$0xff] %vm8823, %v11950
  %vm11967 = vcmask 195648
  %11968 = vst.msk [vmem:[#allocation5 + $0x18] sm:$0xff] %vm11967, 0.0
  %11969 = vst.msk [vmem:[#allocation5 + $0x38] sm:$0xff] %vm11967, 0.0
  %11970 = vst.msk [vmem:[#allocation5 + $0x58] sm:$0xff] %vm11967, 0.0
  %11971 = vst.msk [vmem:[#allocation5 + $0x78] sm:$0xff] %vm11967, 0.0
  %v11972 = vld [vmem:[#allocation5] sm:$0xff]
  %v11973 = vld [vmem:[#allocation5 + $0x8] sm:$0xff]
  %v11974 = vld [vmem:[#allocation5 + $0x10] sm:$0xff]
  %v11975 = vld [vmem:[#allocation5 + $0x18] sm:$0xff]
  %v11976 = vld [vmem:[#allocation5 + $0x20] sm:$0xff]
  %v11977 = vld [vmem:[#allocation5 + $0x28] sm:$0xff]
  %v11978 = vld [vmem:[#allocation5 + $0x30] sm:$0xff]
  %v11979 = vld [vmem:[#allocation5 + $0x38] sm:$0xff]
  %v11980 = vld [vmem:[#allocation5 + $0x40] sm:$0xff]
  %v11981 = vld [vmem:[#allocation5 + $0x48] sm:$0xff]
  %v11982 = vld [vmem:[#allocation5 + $0x50] sm:$0xff]
  %v11983 = vld [vmem:[#allocation5 + $0x58] sm:$0xff]
  %v11984 = vld [vmem:[#allocation5 + $0x60] sm:$0xff]
  %v11985 = vld [vmem:[#allocation5 + $0x68] sm:$0xff]
  %v11986 = vld [vmem:[#allocation5 + $0x70] sm:$0xff]
  %v11987 = vld [vmem:[#allocation5 + $0x78] sm:$0xff]
  %12004 = vrot.lane.b32.xlu0 %v11972, 127
  %v12005 = vpop.permute.xlu0 %12004
  %12006 = vrot.lane.b32.xlu0 %v11973, 127
  %v12007 = vpop.permute.xlu0 %12006
  %12008 = vrot.lane.b32.xlu0 %v11974, 127
  %v12009 = vpop.permute.xlu0 %12008
  %12010 = vrot.lane.b32.xlu0 %v11975, 127
  %v12011 = vpop.permute.xlu0 %12010
  %12012 = vrot.lane.b32.xlu0 %v11976, 127
  %v12013 = vpop.permute.xlu0 %12012
  %12014 = vrot.lane.b32.xlu0 %v11977, 127
  %v12015 = vpop.permute.xlu0 %12014
  %12016 = vrot.lane.b32.xlu0 %v11978, 127
  %v12017 = vpop.permute.xlu0 %12016
  %12018 = vrot.lane.b32.xlu0 %v11979, 127
  %v12019 = vpop.permute.xlu0 %12018
  %12020 = vrot.lane.b32.xlu0 %v11980, 127
  %v12021 = vpop.permute.xlu0 %12020
  %12022 = vrot.lane.b32.xlu0 %v11981, 127
  %v12023 = vpop.permute.xlu0 %12022
  %12024 = vrot.lane.b32.xlu0 %v11982, 127
  %v12025 = vpop.permute.xlu0 %12024
  %12026 = vrot.lane.b32.xlu0 %v11983, 127
  %v12027 = vpop.permute.xlu0 %12026
  %12028 = vrot.lane.b32.xlu0 %v11984, 127
  %v12029 = vpop.permute.xlu0 %12028
  %12030 = vrot.lane.b32.xlu0 %v11985, 127
  %v12031 = vpop.permute.xlu0 %12030
  %12032 = vrot.lane.b32.xlu0 %v11986, 127
  %v12033 = vpop.permute.xlu0 %12032
  %12034 = vrot.lane.b32.xlu0 %v11987, 127
  %v12035 = vpop.permute.xlu0 %12034
  %v12036 = vsel %vm495, %v12005, %v12007
  %v12037 = vsel %vm495, %v12007, %v12009
  %v12038 = vsel %vm495, %v12009, %v12011
  %v12039 = vsel %vm495, %v12013, %v12015
  %v12040 = vsel %vm495, %v12015, %v12017
  %v12041 = vsel %vm495, %v12017, %v12019
  %v12042 = vsel %vm495, %v12021, %v12023
  %v12043 = vsel %vm495, %v12023, %v12025
  %v12044 = vsel %vm495, %v12025, %v12027
  %v12045 = vsel %vm495, %v12029, %v12031
  %v12046 = vsel %vm495, %v12031, %v12033
  %v12047 = vsel %vm495, %v12033, %v12035
  %v12064 = vmax.f32 %v11972, %v12036
  %v12065 = vmax.f32 %v11973, %v12037
  %v12066 = vmax.f32 %v11974, %v12038
  %v12067 = vmax.f32 %v11975, %v12011
  %v12068 = vmax.f32 %v11976, %v12039
  %v12069 = vmax.f32 %v11977, %v12040
  %v12070 = vmax.f32 %v11978, %v12041
  %v12071 = vmax.f32 %v11979, %v12019
  %v12072 = vmax.f32 %v11980, %v12042
  %v12073 = vmax.f32 %v11981, %v12043
  %v12074 = vmax.f32 %v11982, %v12044
  %v12075 = vmax.f32 %v11983, %v12027
  %v12076 = vmax.f32 %v11984, %v12045
  %v12077 = vmax.f32 %v11985, %v12046
  %v12078 = vmax.f32 %v11986, %v12047
  %v12079 = vmax.f32 %v11987, %v12035
  %12096 = vrot.lane.b32.xlu0 %v12064, 114
  %v12097 = vpop.permute.xlu0 %12096
  %12098 = vrot.lane.b32.xlu0 %v12065, 114
  %v12099 = vpop.permute.xlu0 %12098
  %12100 = vrot.lane.b32.xlu0 %v12066, 114
  %v12101 = vpop.permute.xlu0 %12100
  %12102 = vrot.lane.b32.xlu0 %v12067, 114
  %v12103 = vpop.permute.xlu0 %12102
  %12104 = vrot.lane.b32.xlu0 %v12068, 114
  %v12105 = vpop.permute.xlu0 %12104
  %12106 = vrot.lane.b32.xlu0 %v12069, 114
  %v12107 = vpop.permute.xlu0 %12106
  %12108 = vrot.lane.b32.xlu0 %v12070, 114
  %v12109 = vpop.permute.xlu0 %12108
  %12110 = vrot.lane.b32.xlu0 %v12071, 114
  %v12111 = vpop.permute.xlu0 %12110
  %12112 = vrot.lane.b32.xlu0 %v12072, 114
  %v12113 = vpop.permute.xlu0 %12112
  %12114 = vrot.lane.b32.xlu0 %v12073, 114
  %v12115 = vpop.permute.xlu0 %12114
  %12116 = vrot.lane.b32.xlu0 %v12074, 114
  %v12117 = vpop.permute.xlu0 %12116
  %12118 = vrot.lane.b32.xlu0 %v12075, 114
  %v12119 = vpop.permute.xlu0 %12118
  %12120 = vrot.lane.b32.xlu0 %v12076, 114
  %v12121 = vpop.permute.xlu0 %12120
  %12122 = vrot.lane.b32.xlu0 %v12077, 114
  %v12123 = vpop.permute.xlu0 %12122
  %12124 = vrot.lane.b32.xlu0 %v12078, 114
  %v12125 = vpop.permute.xlu0 %12124
  %12126 = vrot.lane.b32.xlu0 %v12079, 114
  %v12127 = vpop.permute.xlu0 %12126
  %v12128 = vsel %vm6197, %v12097, %v12099
  %v12129 = vsel %vm6197, %v12099, %v12101
  %v12130 = vsel %vm6197, %v12101, %v12103
  %v12131 = vsel %vm6197, %v12105, %v12107
  %v12132 = vsel %vm6197, %v12107, %v12109
  %v12133 = vsel %vm6197, %v12109, %v12111
  %v12134 = vsel %vm6197, %v12113, %v12115
  %v12135 = vsel %vm6197, %v12115, %v12117
  %v12136 = vsel %vm6197, %v12117, %v12119
  %v12137 = vsel %vm6197, %v12121, %v12123
  %v12138 = vsel %vm6197, %v12123, %v12125
  %v12139 = vsel %vm6197, %v12125, %v12127
  %v12156 = vmax.f32 %v12064, %v12128
  %v12157 = vmax.f32 %v12065, %v12129
  %v12158 = vmax.f32 %v12066, %v12130
  %v12159 = vmax.f32 %v12067, %v12103
  %v12160 = vmax.f32 %v12068, %v12131
  %v12161 = vmax.f32 %v12069, %v12132
  %v12162 = vmax.f32 %v12070, %v12133
  %v12163 = vmax.f32 %v12071, %v12111
  %v12164 = vmax.f32 %v12072, %v12134
  %v12165 = vmax.f32 %v12073, %v12135
  %v12166 = vmax.f32 %v12074, %v12136
  %v12167 = vmax.f32 %v12075, %v12119
  %v12168 = vmax.f32 %v12076, %v12137
  %v12169 = vmax.f32 %v12077, %v12138
  %v12170 = vmax.f32 %v12078, %v12139
  %v12171 = vmax.f32 %v12079, %v12127
  %v12172 = vld [vmem:[%s10] sm:$0xff]
  %v12173 = vld [vmem:[%s10 + $0x8] sm:$0xff]
  %v12174 = vld [vmem:[%s10 + $0x10] sm:$0xff]
  %v12175 = vld [vmem:[%s10 + $0x18] sm:$0xff]
  %v12176 = vld [vmem:[%s10 + $0x20] sm:$0xff]
  %v12177 = vld [vmem:[%s10 + $0x28] sm:$0xff]
  %v12178 = vld [vmem:[%s10 + $0x30] sm:$0xff]
  %v12179 = vld [vmem:[%s10 + $0x38] sm:$0xff]
  %v12180 = vld [vmem:[%s10 + $0x40] sm:$0xff]
  %v12181 = vld [vmem:[%s10 + $0x48] sm:$0xff]
  %v12182 = vld [vmem:[%s10 + $0x50] sm:$0xff]
  %v12183 = vld [vmem:[%s10 + $0x58] sm:$0xff]
  %v12184 = vld [vmem:[%s10 + $0x60] sm:$0xff]
  %v12185 = vld [vmem:[%s10 + $0x68] sm:$0xff]
  %v12186 = vld [vmem:[%s10 + $0x70] sm:$0xff]
  %v12187 = vld [vmem:[%s10 + $0x78] sm:$0xff]
  %v12188 = vld [vmem:[%s10 + $0x80] sm:$0xff]
  %v12189 = vld [vmem:[%s10 + $0x88] sm:$0xff]
  %v12190 = vld [vmem:[%s10 + $0x90] sm:$0xff]
  %v12191 = vld [vmem:[%s10 + $0x98] sm:$0xff]
  %v12192 = vld [vmem:[%s10 + $0xa0] sm:$0xff]
  %v12193 = vld [vmem:[%s10 + $0xa8] sm:$0xff]
  %v12194 = vld [vmem:[%s10 + $0xb0] sm:$0xff]
  %v12195 = vld [vmem:[%s10 + $0xb8] sm:$0xff]
  %v12196 = vld [vmem:[%s10 + $0xc0] sm:$0xff]
  %v12197 = vld [vmem:[%s10 + $0xc8] sm:$0xff]
  %v12198 = vld [vmem:[%s10 + $0xd0] sm:$0xff]
  %v12199 = vld [vmem:[%s10 + $0xd8] sm:$0xff]
  %v12200 = vld [vmem:[%s10 + $0xe0] sm:$0xff]
  %v12201 = vld [vmem:[%s10 + $0xe8] sm:$0xff]
  %v12202 = vld [vmem:[%s10 + $0xf0] sm:$0xff]
  %v12203 = vld [vmem:[%s10 + $0xf8] sm:$0xff]
  %v12204 = vld [vmem:[%s10 + $0x100] sm:$0xff]
  %v12205 = vld [vmem:[%s10 + $0x108] sm:$0xff]
  %v12206 = vld [vmem:[%s10 + $0x110] sm:$0xff]
  %v12207 = vld [vmem:[%s10 + $0x118] sm:$0xff]
  %v12208 = vld [vmem:[%s10 + $0x120] sm:$0xff]
  %v12209 = vld [vmem:[%s10 + $0x128] sm:$0xff]
  %v12210 = vld [vmem:[%s10 + $0x130] sm:$0xff]
  %v12211 = vld [vmem:[%s10 + $0x138] sm:$0xff]
  %v12212 = vld [vmem:[%s10 + $0x140] sm:$0xff]
  %v12213 = vld [vmem:[%s10 + $0x148] sm:$0xff]
  %v12214 = vld [vmem:[%s10 + $0x150] sm:$0xff]
  %v12215 = vld [vmem:[%s10 + $0x158] sm:$0xff]
  %v12216 = vld [vmem:[%s10 + $0x160] sm:$0xff]
  %v12217 = vld [vmem:[%s10 + $0x168] sm:$0xff]
  %v12218 = vld [vmem:[%s10 + $0x170] sm:$0xff]
  %v12219 = vld [vmem:[%s10 + $0x178] sm:$0xff]
  %v12220 = vld [vmem:[%s10 + $0x180] sm:$0xff]
  %v12221 = vld [vmem:[%s10 + $0x188] sm:$0xff]
  %v12222 = vld [vmem:[%s10 + $0x190] sm:$0xff]
  %v12223 = vld [vmem:[%s10 + $0x198] sm:$0xff]
  %v12224 = vld [vmem:[%s10 + $0x1a0] sm:$0xff]
  %v12225 = vld [vmem:[%s10 + $0x1a8] sm:$0xff]
  %v12226 = vld [vmem:[%s10 + $0x1b0] sm:$0xff]
  %v12227 = vld [vmem:[%s10 + $0x1b8] sm:$0xff]
  %v12228 = vld [vmem:[%s10 + $0x1c0] sm:$0xff]
  %v12229 = vld [vmem:[%s10 + $0x1c8] sm:$0xff]
  %v12230 = vld [vmem:[%s10 + $0x1d0] sm:$0xff]
  %v12231 = vld [vmem:[%s10 + $0x1d8] sm:$0xff]
  %v12232 = vld [vmem:[%s10 + $0x1e0] sm:$0xff]
  %v12233 = vld [vmem:[%s10 + $0x1e8] sm:$0xff]
  %v12234 = vld [vmem:[%s10 + $0x1f0] sm:$0xff]
  %v12235 = vld [vmem:[%s10 + $0x1f8] sm:$0xff]
  %v12236 = vld [vmem:[%s10 + $0x200] sm:$0xff]
  %v12237 = vld [vmem:[%s10 + $0x208] sm:$0xff]
  %v12238 = vld [vmem:[%s10 + $0x210] sm:$0xff]
  %v12239 = vld [vmem:[%s10 + $0x218] sm:$0xff]
  %v12240 = vld [vmem:[%s10 + $0x220] sm:$0xff]
  %v12241 = vld [vmem:[%s10 + $0x228] sm:$0xff]
  %v12242 = vld [vmem:[%s10 + $0x230] sm:$0xff]
  %v12243 = vld [vmem:[%s10 + $0x238] sm:$0xff]
  %v12244 = vld [vmem:[%s10 + $0x240] sm:$0xf]
  %v12245 = vld [vmem:[%s10 + $0x248] sm:$0xf]
  %v12246 = vld [vmem:[%s10 + $0x250] sm:$0xf]
  %v12247 = vld [vmem:[%s11] sm:$0xff]
  %v12248 = vld [vmem:[%s11 + $0x8] sm:$0xff]
  %v12249 = vld [vmem:[%s11 + $0x10] sm:$0xff]
  %v12250 = vld [vmem:[%s11 + $0x18] sm:$0xff]
  %v12251 = vld [vmem:[%s11 + $0x20] sm:$0xff]
  %v12252 = vld [vmem:[%s11 + $0x28] sm:$0xff]
  %v12253 = vld [vmem:[%s11 + $0x30] sm:$0xff]
  %v12254 = vld [vmem:[%s11 + $0x38] sm:$0xff]
  %v12255 = vld [vmem:[%s11 + $0x40] sm:$0xff]
  %v12256 = vld [vmem:[%s11 + $0x48] sm:$0xff]
  %v12257 = vld [vmem:[%s11 + $0x50] sm:$0xff]
  %v12258 = vld [vmem:[%s11 + $0x58] sm:$0xff]
  %v12259 = vld [vmem:[%s12] sm:$0xff]
  %v12260 = vld [vmem:[%s12 + $0x8] sm:$0xff]
  %v12261 = vld [vmem:[%s12 + $0x10] sm:$0xff]
  %v12262 = vld [vmem:[%s12 + $0x18] sm:$0xff]
  %v12263 = vld [vmem:[%s12 + $0x20] sm:$0xff]
  %v12264 = vld [vmem:[%s12 + $0x28] sm:$0xff]
  %v12265 = vld [vmem:[%s12 + $0x30] sm:$0xff]
  %v12266 = vld [vmem:[%s12 + $0x38] sm:$0xff]
  %v12267 = vld [vmem:[%s12 + $0x40] sm:$0xff]
  %v12268 = vld [vmem:[%s12 + $0x48] sm:$0xff]
  %v12269 = vld [vmem:[%s12 + $0x50] sm:$0xff]
  %v12270 = vld [vmem:[%s12 + $0x58] sm:$0xff]
  %v12271 = vld [vmem:[%s12 + $0x60] sm:$0xff]
  %v12272 = vld [vmem:[%s12 + $0x68] sm:$0xff]
  %v12273 = vld [vmem:[%s12 + $0x70] sm:$0xff]
  %v12274 = vld [vmem:[%s12 + $0x78] sm:$0xff]
  %v12275 = vld [vmem:[%s12 + $0x80] sm:$0xff]
  %v12276 = vld [vmem:[%s12 + $0x88] sm:$0xff]
  %v12277 = vld [vmem:[%s12 + $0x90] sm:$0xff]
  %v12278 = vld [vmem:[%s12 + $0x98] sm:$0xff]
  %v12279 = vld [vmem:[%s12 + $0xa0] sm:$0xff]
  %v12280 = vld [vmem:[%s12 + $0xa8] sm:$0xff]
  %v12281 = vld [vmem:[%s12 + $0xb0] sm:$0xff]
  %v12282 = vld [vmem:[%s12 + $0xb8] sm:$0xff]
  %v12283 = vld [vmem:[%s12 + $0xc0] sm:$0xff]
  %v12284 = vld [vmem:[%s12 + $0xc8] sm:$0xff]
  %v12285 = vld [vmem:[%s12 + $0xd0] sm:$0xff]
  %v12286 = vld [vmem:[%s12 + $0xd8] sm:$0xff]
  %v12287 = vld [vmem:[%s12 + $0xe0] sm:$0xff]
  %v12288 = vld [vmem:[%s12 + $0xe8] sm:$0xff]
  %v12289 = vld [vmem:[%s12 + $0xf0] sm:$0xff]
  %v12290 = vld [vmem:[%s12 + $0xf8] sm:$0xff]
  %v12291 = vld [vmem:[%s12 + $0x100] sm:$0xff]
  %v12292 = vld [vmem:[%s12 + $0x108] sm:$0xff]
  %v12293 = vld [vmem:[%s12 + $0x110] sm:$0xff]
  %v12294 = vld [vmem:[%s12 + $0x118] sm:$0xff]
  %v12295 = vld [vmem:[%s12 + $0x120] sm:$0xff]
  %v12296 = vld [vmem:[%s12 + $0x128] sm:$0xff]
  %v12297 = vld [vmem:[%s12 + $0x130] sm:$0xff]
  %v12298 = vld [vmem:[%s12 + $0x138] sm:$0xff]
  %v12299 = vld [vmem:[%s13] sm:$0x1]
  %v12301 = vsel %vm4122, %v12157, 0
  %v12304 = vsel %vm4122, %v12161, 0
  %v12307 = vsel %vm4122, %v12165, 0
  %v12310 = vsel %vm4122, %v12169, 0
  %vm12312 = vcmask 1043456
  %v12314 = vsel %vm12312, %v12244, 0
  %v12317 = vsel %vm12312, %v12245, 0
  %v12320 = vsel %vm12312, %v12246, 0
  %12322 = vmatprep.subr.mxu0 %v12173
  %12323 = vmatpush1.msra.mxu0 %v12172
  %12324 = vmatprep.subr.mxu0 %v12176
  %12325 = vmatpush1.msra.mxu0 %v12175
  %12326 = vmatprep.subr.mxu0 %v12179
  %12327 = vmatpush1.msra.mxu0 %v12178
  %12328 = vmatprep.subr.mxu0 %v12182
  %12329 = vmatpush1.msra.mxu0 %v12181
  %12330 = vmatprep.subr.mxu0 %v12185
  %12331 = vmatpush1.msra.mxu0 %v12184
  %12332 = vmatprep.subr.mxu0 %v12188
  %12333 = vmatpush1.msra.mxu0 %v12187
  %12334 = vmatprep.subr.mxu0 %v12191
  %12335 = vmatpush1.msra.mxu0 %v12190
  %12336 = vmatprep.subr.mxu0 %v12194
  %12337 = vmatpush1.msra.mxu0 %v12193
  %12338 = vmatprep.subr.mxu0 %v12197
  %12339 = vmatpush1.msra.mxu0 %v12196
  %12340 = vmatprep.subr.mxu0 %v12200
  %12341 = vmatpush1.msra.mxu0 %v12199
  %12342 = vmatprep.subr.mxu0 %v12203
  %12343 = vmatpush1.msra.mxu0 %v12202
  %12344 = vmatprep.subr.mxu0 %v12206
  %12345 = vmatpush1.msra.mxu0 %v12205
  %12346 = vmatprep.subr.mxu0 %v12209
  %12347 = vmatpush1.msra.mxu0 %v12208
  %12348 = vmatprep.subr.mxu0 %v12212
  %12349 = vmatpush1.msra.mxu0 %v12211
  %12350 = vmatprep.subr.mxu0 %v12215
  %12351 = vmatpush1.msra.mxu0 %v12214
  %12352 = vmatprep.subr.mxu0 %v12218
  %12353 = vmatpush1.msra.mxu0 %v12217
  %12354 = vmatprep.subr.mxu0 %v12221
  %12355 = vmatpush1.msra.mxu0 %v12220
  %12356 = vmatprep.subr.mxu0 %v12224
  %12357 = vmatpush1.msra.mxu0 %v12223
  %12358 = vmatprep.subr.mxu0 %v12227
  %12359 = vmatpush1.msra.mxu0 %v12226
  %12360 = vmatprep.subr.mxu0 %v12230
  %12361 = vmatpush1.msra.mxu0 %v12229
  %12362 = vmatprep.subr.mxu0 %v12233
  %12363 = vmatpush1.msra.mxu0 %v12232
  %12364 = vmatprep.subr.mxu0 %v12236
  %12365 = vmatpush1.msra.mxu0 %v12235
  %12366 = vmatprep.subr.mxu0 %v12239
  %12367 = vmatpush1.msra.mxu0 %v12238
  %12368 = vmatprep.subr.mxu0 %v12242
  %12369 = vmatpush1.msra.mxu0 %v12241
  %12370 = vmatprep.subr.mxu0 %v12317
  %12371 = vmatpush1.msra.mxu0 %v12314
  %12372 = vmatprep.subr.mxu0 0.0
  %12373 = vmatpush1.msra.mxu0 0.0
  %12374 = vmatprep.subr.mxu0 0.0
  %12375 = vmatpush1.msra.mxu0 0.0
  %12376 = vmatprep.subr.mxu0 0.0
  %12377 = vmatpush1.msra.mxu0 0.0
  %12378 = vmatprep.subr.mxu0 0.0
  %12379 = vmatpush1.msra.mxu0 0.0
  %12380 = vmatprep.subr.mxu0 0.0
  %12381 = vmatpush1.msra.mxu0 0.0
  %12382 = vmatprep.subr.mxu0 0.0
  %12383 = vmatpush1.msra.mxu0 0.0
  %12384 = vmatprep.subr.mxu0 0.0
  %12385 = vmatpush1.msra.mxu0 0.0
  %12386 = vmatprep.mubr.f32.mxu0 %v12301
  %12387 = vmatmul.mubr.f32.gmra.mrb[0].mxu0 %v12156
  %v12388 = vpop.f32.mrb[0].mxu0
  %v12389 = vadd.f32 0.0, %v12388
  %v12390 = vpop.f32.mrb[0].mxu0
  %v12391 = vadd.f32 0.0, %v12390
  %12392 = vmatprep.mubr.f32.mxu0 %v12304
  %12393 = vmatmul.mubr.f32.gmra.mrb[0].mxu0 %v12160
  %v12394 = vpop.f32.mrb[0].mxu0
  %v12395 = vadd.f32 0.0, %v12394
  %v12396 = vpop.f32.mrb[0].mxu0
  %v12397 = vadd.f32 0.0, %v12396
  %12398 = vmatprep.mubr.f32.mxu0 %v12307
  %12399 = vmatmul.mubr.f32.gmra.mrb[0].mxu0 %v12164
  %v12400 = vpop.f32.mrb[0].mxu0
  %v12401 = vadd.f32 0.0, %v12400
  %v12402 = vpop.f32.mrb[0].mxu0
  %v12403 = vadd.f32 0.0, %v12402
  %12404 = vmatprep.mubr.f32.mxu0 %v12310
  %12405 = vmatmul.mubr.f32.gmra.mrb[0].mxu0 %v12168
  %v12406 = vpop.f32.mrb[0].mxu0
  %v12407 = vadd.f32 0.0, %v12406
  %v12408 = vpop.f32.mrb[0].mxu0
  %v12409 = vadd.f32 0.0, %v12408
  %12410 = vdwg.mxu0
  %12411 = vmatprep.subr.mxu0 0.0
  %12412 = vmatpush1.msra.mxu0 %v12174
  %12413 = vmatprep.subr.mxu0 0.0
  %12414 = vmatpush1.msra.mxu0 %v12177
  %12415 = vmatprep.subr.mxu0 0.0
  %12416 = vmatpush1.msra.mxu0 %v12180
  %12417 = vmatprep.subr.mxu0 0.0
  %12418 = vmatpush1.msra.mxu0 %v12183
  %12419 = vmatprep.subr.mxu0 0.0
  %12420 = vmatpush1.msra.mxu0 %v12186
  %12421 = vmatprep.subr.mxu0 0.0
  %12422 = vmatpush1.msra.mxu0 %v12189
  %12423 = vmatprep.subr.mxu0 0.0
  %12424 = vmatpush1.msra.mxu0 %v12192
  %12425 = vmatprep.subr.mxu0 0.0
  %12426 = vmatpush1.msra.mxu0 %v12195
  %12427 = vmatprep.subr.mxu0 0.0
  %12428 = vmatpush1.msra.mxu0 %v12198
  %12429 = vmatprep.subr.mxu0 0.0
  %12430 = vmatpush1.msra.mxu0 %v12201
  %12431 = vmatprep.subr.mxu0 0.0
  %12432 = vmatpush1.msra.mxu0 %v12204
  %12433 = vmatprep.subr.mxu0 0.0
  %12434 = vmatpush1.msra.mxu0 %v12207
  %12435 = vmatprep.subr.mxu0 0.0
  %12436 = vmatpush1.msra.mxu0 %v12210
  %12437 = vmatprep.subr.mxu0 0.0
  %12438 = vmatpush1.msra.mxu0 %v12213
  %12439 = vmatprep.subr.mxu0 0.0
  %12440 = vmatpush1.msra.mxu0 %v12216
  %12441 = vmatprep.subr.mxu0 0.0
  %12442 = vmatpush1.msra.mxu0 %v12219
  %12443 = vmatprep.subr.mxu0 0.0
  %12444 = vmatpush1.msra.mxu0 %v12222
  %12445 = vmatprep.subr.mxu0 0.0
  %12446 = vmatpush1.msra.mxu0 %v12225
  %12447 = vmatprep.subr.mxu0 0.0
  %12448 = vmatpush1.msra.mxu0 %v12228
  %12449 = vmatprep.subr.mxu0 0.0
  %12450 = vmatpush1.msra.mxu0 %v12231
  %12451 = vmatprep.subr.mxu0 0.0
  %12452 = vmatpush1.msra.mxu0 %v12234
  %12453 = vmatprep.subr.mxu0 0.0
  %12454 = vmatpush1.msra.mxu0 %v12237
  %12455 = vmatprep.subr.mxu0 0.0
  %12456 = vmatpush1.msra.mxu0 %v12240
  %12457 = vmatprep.subr.mxu0 0.0
  %12458 = vmatpush1.msra.mxu0 %v12243
  %12459 = vmatprep.subr.mxu0 0.0
  %12460 = vmatpush1.msra.mxu0 %v12320
  %12461 = vmatprep.subr.mxu0 0.0
  %12462 = vmatpush1.msra.mxu0 0.0
  %12463 = vmatprep.subr.mxu0 0.0
  %12464 = vmatpush1.msra.mxu0 0.0
  %12465 = vmatprep.subr.mxu0 0.0
  %12466 = vmatpush1.msra.mxu0 0.0
  %12467 = vmatprep.subr.mxu0 0.0
  %12468 = vmatpush1.msra.mxu0 0.0
  %12469 = vmatprep.subr.mxu0 0.0
  %12470 = vmatpush1.msra.mxu0 0.0
  %12471 = vmatprep.subr.mxu0 0.0
  %12472 = vmatpush1.msra.mxu0 0.0
  %12473 = vmatprep.subr.mxu0 0.0
  %12474 = vmatpush1.msra.mxu0 0.0
  %12475 = vmatprep.mubr.f32.mxu0 %v12301
  %12476 = vmatmul.mubr.f32.gmra.mrb[0].mxu0 %v12156
  %v12477 = vpop.f32.mrb[0].mxu0
  %v12478 = vadd.f32 0.0, %v12477
  %v12479 = vpop.f32.mrb[0].mxu0
  %12480 = vmatprep.mubr.f32.mxu0 %v12304
  %12481 = vmatmul.mubr.f32.gmra.mrb[0].mxu0 %v12160
  %v12482 = vpop.f32.mrb[0].mxu0
  %v12483 = vadd.f32 0.0, %v12482
  %v12484 = vpop.f32.mrb[0].mxu0
  %12485 = vmatprep.mubr.f32.mxu0 %v12307
  %12486 = vmatmul.mubr.f32.gmra.mrb[0].mxu0 %v12164
  %v12487 = vpop.f32.mrb[0].mxu0
  %v12488 = vadd.f32 0.0, %v12487
  %v12489 = vpop.f32.mrb[0].mxu0
  %12490 = vmatprep.mubr.f32.mxu0 %v12310
  %12491 = vmatmul.mubr.f32.gmra.mrb[0].mxu0 %v12168
  %v12492 = vpop.f32.mrb[0].mxu0
  %v12493 = vadd.f32 0.0, %v12492
  %v12494 = vpop.f32.mrb[0].mxu0
  %12495 = vdwg.mxu0
  %v12496 = vmul.f32 %v12389, %v12247
  %v12497 = vmul.f32 %v12391, %v12248
  %v12498 = vmul.f32 %v12478, %v12249
  %v12499 = vmul.f32 %v12395, %v12250
  %v12500 = vmul.f32 %v12397, %v12251
  %v12501 = vmul.f32 %v12483, %v12252
  %v12502 = vmul.f32 %v12401, %v12253
  %v12503 = vmul.f32 %v12403, %v12254
  %v12504 = vmul.f32 %v12488, %v12255
  %v12505 = vmul.f32 %v12407, %v12256
  %v12506 = vmul.f32 %v12409, %v12257
  %v12507 = vmul.f32 %v12493, %v12258
  %v12508 = vadd.f32 %v12496, %v12499
  %v12509 = vadd.f32 %v12508, %v12502
  %v12510 = vadd.f32 %v12509, %v12505
  %v12511 = vrot.slane %v12510, 4
  %v12512 = vadd.f32 %v12510, %v12511
  %v12513 = vrot.slane %v12512, 2
  %v12514 = vadd.f32 %v12512, %v12513
  %v12515 = vrot.slane %v12514, 1
  %v12516 = vadd.f32 %v12514, %v12515
  %v12517 = vadd.f32 %v12497, %v12500
  %v12518 = vadd.f32 %v12517, %v12503
  %v12519 = vadd.f32 %v12518, %v12506
  %v12520 = vrot.slane %v12519, 4
  %v12521 = vadd.f32 %v12519, %v12520
  %v12522 = vrot.slane %v12521, 2
  %v12523 = vadd.f32 %v12521, %v12522
  %v12524 = vrot.slane %v12523, 1
  %v12525 = vadd.f32 %v12523, %v12524
  %vm12526 = vcmask 523264
  %v12527 = vsel %vm12526, %v12498, 0.0
  %v12528 = vsel %vm12526, %v12501, 0.0
  %v12529 = vadd.f32 %v12527, %v12528
  %v12530 = vsel %vm12526, %v12504, 0.0
  %v12531 = vadd.f32 %v12529, %v12530
  %v12532 = vsel %vm12526, %v12507, 0.0
  %v12533 = vadd.f32 %v12531, %v12532
  %v12534 = vrot.slane %v12533, 4
  %v12535 = vadd.f32 %v12533, %v12534
  %v12536 = vrot.slane %v12535, 2
  %v12537 = vadd.f32 %v12535, %v12536
  %v12538 = vrot.slane %v12537, 1
  %v12539 = vadd.f32 %v12537, %v12538
  %v12541 = vsel %vm12526, %v12539, 0
  %12543 = vmatprep.subr.mxu0 0.0
  %12544 = vmatpush1.msra.mxu0 %v12259
  %12545 = vmatprep.subr.mxu0 0.0
  %12546 = vmatpush1.msra.mxu0 %v12260
  %12547 = vmatprep.subr.mxu0 0.0
  %12548 = vmatpush1.msra.mxu0 %v12261
  %12549 = vmatprep.subr.mxu0 0.0
  %12550 = vmatpush1.msra.mxu0 %v12262
  %12551 = vmatprep.subr.mxu0 0.0
  %12552 = vmatpush1.msra.mxu0 %v12263
  %12553 = vmatprep.subr.mxu0 0.0
  %12554 = vmatpush1.msra.mxu0 %v12264
  %12555 = vmatprep.subr.mxu0 0.0
  %12556 = vmatpush1.msra.mxu0 %v12265
  %12557 = vmatprep.subr.mxu0 0.0
  %12558 = vmatpush1.msra.mxu0 %v12266
  %12559 = vmatprep.subr.mxu0 0.0
  %12560 = vmatpush1.msra.mxu0 %v12267
  %12561 = vmatprep.subr.mxu0 0.0
  %12562 = vmatpush1.msra.mxu0 %v12268
  %12563 = vmatprep.subr.mxu0 0.0
  %12564 = vmatpush1.msra.mxu0 %v12269
  %12565 = vmatprep.subr.mxu0 0.0
  %12566 = vmatpush1.msra.mxu0 %v12270
  %12567 = vmatprep.subr.mxu0 0.0
  %12568 = vmatpush1.msra.mxu0 %v12271
  %12569 = vmatprep.subr.mxu0 0.0
  %12570 = vmatpush1.msra.mxu0 %v12272
  %12571 = vmatprep.subr.mxu0 0.0
  %12572 = vmatpush1.msra.mxu0 %v12273
  %12573 = vmatprep.subr.mxu0 0.0
  %12574 = vmatpush1.msra.mxu0 %v12274
  %12575 = vmatprep.subr.mxu0 0.0
  %12576 = vmatpush1.msra.mxu0 %v12275
  %12577 = vmatprep.subr.mxu0 0.0
  %12578 = vmatpush1.msra.mxu0 %v12276
  %12579 = vmatprep.subr.mxu0 0.0
  %12580 = vmatpush1.msra.mxu0 %v12277
  %12581 = vmatprep.subr.mxu0 0.0
  %12582 = vmatpush1.msra.mxu0 %v12278
  %12583 = vmatprep.subr.mxu0 0.0
  %12584 = vmatpush1.msra.mxu0 %v12279
  %12585 = vmatprep.subr.mxu0 0.0
  %12586 = vmatpush1.msra.mxu0 %v12280
  %12587 = vmatprep.subr.mxu0 0.0
  %12588 = vmatpush1.msra.mxu0 %v12281
  %12589 = vmatprep.subr.mxu0 0.0
  %12590 = vmatpush1.msra.mxu0 %v12282
  %12591 = vmatprep.subr.mxu0 0.0
  %12592 = vmatpush1.msra.mxu0 %v12283
  %12593 = vmatprep.subr.mxu0 0.0
  %12594 = vmatpush1.msra.mxu0 %v12284
  %12595 = vmatprep.subr.mxu0 0.0
  %12596 = vmatpush1.msra.mxu0 %v12285
  %12597 = vmatprep.subr.mxu0 0.0
  %12598 = vmatpush1.msra.mxu0 %v12286
  %12599 = vmatprep.subr.mxu0 0.0
  %12600 = vmatpush1.msra.mxu0 %v12287
  %12601 = vmatprep.subr.mxu0 0.0
  %12602 = vmatpush1.msra.mxu0 %v12288
  %12603 = vmatprep.subr.mxu0 0.0
  %12604 = vmatpush1.msra.mxu0 %v12289
  %12605 = vmatprep.subr.mxu0 0.0
  %12606 = vmatpush1.msra.mxu0 %v12290
  %12607 = vmatprep.mubr.f32.mxu0 %v12525
  %12608 = vmatmul.mubr.f32.gmra.mrb[0].mxu0 %v12516
  %v12609 = vpop.f32.mrb[0].mxu0
  %v12610 = vadd.f32 %v12299, %v12609
  %v12611 = vpop.f32.mrb[0].mxu0
  %12612 = vdwg.mxu0
  %12613 = vmatprep.subr.mxu0 0.0
  %12614 = vmatpush1.msra.mxu0 %v12291
  %12615 = vmatprep.subr.mxu0 0.0
  %12616 = vmatpush1.msra.mxu0 %v12292
  %12617 = vmatprep.subr.mxu0 0.0
  %12618 = vmatpush1.msra.mxu0 %v12293
  %12619 = vmatprep.subr.mxu0 0.0
  %12620 = vmatpush1.msra.mxu0 %v12294
  %12621 = vmatprep.subr.mxu0 0.0
  %12622 = vmatpush1.msra.mxu0 %v12295
  %12623 = vmatprep.subr.mxu0 0.0
  %12624 = vmatpush1.msra.mxu0 %v12296
  %12625 = vmatprep.subr.mxu0 0.0
  %12626 = vmatpush1.msra.mxu0 %v12297
  %12627 = vmatprep.subr.mxu0 0.0
  %12628 = vmatpush1.msra.mxu0 %v12298
  %12629 = vmatprep.subr.mxu0 0.0
  %12630 = vmatpush1.msra.mxu0 0.0
  %12631 = vmatprep.subr.mxu0 0.0
  %12632 = vmatpush1.msra.mxu0 0.0
  %12633 = vmatprep.subr.mxu0 0.0
  %12634 = vmatpush1.msra.mxu0 0.0
  %12635 = vmatprep.subr.mxu0 0.0
  %12636 = vmatpush1.msra.mxu0 0.0
  %12637 = vmatprep.subr.mxu0 0.0
  %12638 = vmatpush1.msra.mxu0 0.0
  %12639 = vmatprep.subr.mxu0 0.0
  %12640 = vmatpush1.msra.mxu0 0.0
  %12641 = vmatprep.subr.mxu0 0.0
  %12642 = vmatpush1.msra.mxu0 0.0
  %12643 = vmatprep.subr.mxu0 0.0
  %12644 = vmatpush1.msra.mxu0 0.0
  %12645 = vmatprep.subr.mxu0 0.0
  %12646 = vmatpush1.msra.mxu0 0.0
  %12647 = vmatprep.subr.mxu0 0.0
  %12648 = vmatpush1.msra.mxu0 0.0
  %12649 = vmatprep.subr.mxu0 0.0
  %12650 = vmatpush1.msra.mxu0 0.0
  %12651 = vmatprep.subr.mxu0 0.0
  %12652 = vmatpush1.msra.mxu0 0.0
  %12653 = vmatprep.subr.mxu0 0.0
  %12654 = vmatpush1.msra.mxu0 0.0
  %12655 = vmatprep.subr.mxu0 0.0
  %12656 = vmatpush1.msra.mxu0 0.0
  %12657 = vmatprep.subr.mxu0 0.0
  %12658 = vmatpush1.msra.mxu0 0.0
  %12659 = vmatprep.subr.mxu0 0.0
  %12660 = vmatpush1.msra.mxu0 0.0
  %12661 = vmatprep.subr.mxu0 0.0
  %12662 = vmatpush1.msra.mxu0 0.0
  %12663 = vmatprep.subr.mxu0 0.0
  %12664 = vmatpush1.msra.mxu0 0.0
  %12665 = vmatprep.subr.mxu0 0.0
  %12666 = vmatpush1.msra.mxu0 0.0
  %12667 = vmatprep.subr.mxu0 0.0
  %12668 = vmatpush1.msra.mxu0 0.0
  %12669 = vmatprep.subr.mxu0 0.0
  %12670 = vmatpush1.msra.mxu0 0.0
  %12671 = vmatprep.subr.mxu0 0.0
  %12672 = vmatpush1.msra.mxu0 0.0
  %12673 = vmatprep.subr.mxu0 0.0
  %12674 = vmatpush1.msra.mxu0 0.0
  %12675 = vmatprep.subr.mxu0 0.0
  %12676 = vmatpush1.msra.mxu0 0.0
  %12677 = vmatprep.mubr.f32.mxu0 0.0
  %12678 = vmatmul.mubr.f32.gmra.mrb[0].mxu0 %v12541
  %v12679 = vpop.f32.mrb[0].mxu0
  %v12680 = vadd.f32 %v12610, %v12679
  %v12681 = vpop.f32.mrb[0].mxu0
  %12682 = vdwg.mxu0
  %vm12683 = vcmask 73728
  %12684 = vst.msk [vmem:[%s14] sm:$0x1] %vm12683, %v12680
  %12693 = vrot.lane.b32.xlu0 %v12157, 60
  %v12694 = vpop.permute.xlu0 %12693
  %12695 = vrot.lane.b32.xlu0 %v12158, 60
  %v12696 = vpop.permute.xlu0 %12695
  %12697 = vrot.lane.b32.xlu0 %v12159, 60
  %v12698 = vpop.permute.xlu0 %12697
  %12699 = vrot.lane.b32.xlu0 %v12161, 60
  %v12700 = vpop.permute.xlu0 %12699
  %12701 = vrot.lane.b32.xlu0 %v12162, 60
  %v12702 = vpop.permute.xlu0 %12701
  %12703 = vrot.lane.b32.xlu0 %v12163, 60
  %v12704 = vpop.permute.xlu0 %12703
  %12705 = vrot.lane.b32.xlu0 %v12165, 60
  %v12706 = vpop.permute.xlu0 %12705
  %12707 = vrot.lane.b32.xlu0 %v12166, 60
  %v12708 = vpop.permute.xlu0 %12707
  %12709 = vrot.lane.b32.xlu0 %v12167, 60
  %v12710 = vpop.permute.xlu0 %12709
  %12711 = vrot.lane.b32.xlu0 %v12169, 60
  %v12712 = vpop.permute.xlu0 %12711
  %12713 = vrot.lane.b32.xlu0 %v12170, 60
  %v12714 = vpop.permute.xlu0 %12713
  %12715 = vrot.lane.b32.xlu0 %v12171, 60
  %v12716 = vpop.permute.xlu0 %12715
  %v12717 = vsel %vm3933, %v12694, %v12696
  %v12718 = vsel %vm3933, %v12696, %v12698
  %v12719 = vsel %vm3933, %v12700, %v12702
  %v12720 = vsel %vm3933, %v12702, %v12704
  %v12721 = vsel %vm3933, %v12706, %v12708
  %v12722 = vsel %vm3933, %v12708, %v12710
  %v12723 = vsel %vm3933, %v12712, %v12714
  %v12724 = vsel %vm3933, %v12714, %v12716
  %v12729 = vsel %vm4122, %v12718, 0
  %v12731 = vsel %vm4122, %v12720, 0
  %v12733 = vsel %vm4122, %v12722, 0
  %v12735 = vsel %vm4122, %v12724, 0
  %12737 = vmatprep.subr.mxu0 %v12173
  %12738 = vmatpush1.msra.mxu0 %v12172
  %12739 = vmatprep.subr.mxu0 %v12176
  %12740 = vmatpush1.msra.mxu0 %v12175
  %12741 = vmatprep.subr.mxu0 %v12179
  %12742 = vmatpush1.msra.mxu0 %v12178
  %12743 = vmatprep.subr.mxu0 %v12182
  %12744 = vmatpush1.msra.mxu0 %v12181
  %12745 = vmatprep.subr.mxu0 %v12185
  %12746 = vmatpush1.msra.mxu0 %v12184
  %12747 = vmatprep.subr.mxu0 %v12188
  %12748 = vmatpush1.msra.mxu0 %v12187
  %12749 = vmatprep.subr.mxu0 %v12191
  %12750 = vmatpush1.msra.mxu0 %v12190
  %12751 = vmatprep.subr.mxu0 %v12194
  %12752 = vmatpush1.msra.mxu0 %v12193
  %12753 = vmatprep.subr.mxu0 %v12197
  %12754 = vmatpush1.msra.mxu0 %v12196
  %12755 = vmatprep.subr.mxu0 %v12200
  %12756 = vmatpush1.msra.mxu0 %v12199
  %12757 = vmatprep.subr.mxu0 %v12203
  %12758 = vmatpush1.msra.mxu0 %v12202
  %12759 = vmatprep.subr.mxu0 %v12206
  %12760 = vmatpush1.msra.mxu0 %v12205
  %12761 = vmatprep.subr.mxu0 %v12209
  %12762 = vmatpush1.msra.mxu0 %v12208
  %12763 = vmatprep.subr.mxu0 %v12212
  %12764 = vmatpush1.msra.mxu0 %v12211
  %12765 = vmatprep.subr.mxu0 %v12215
  %12766 = vmatpush1.msra.mxu0 %v12214
  %12767 = vmatprep.subr.mxu0 %v12218
  %12768 = vmatpush1.msra.mxu0 %v12217
  %12769 = vmatprep.subr.mxu0 %v12221
  %12770 = vmatpush1.msra.mxu0 %v12220
  %12771 = vmatprep.subr.mxu0 %v12224
  %12772 = vmatpush1.msra.mxu0 %v12223
  %12773 = vmatprep.subr.mxu0 %v12227
  %12774 = vmatpush1.msra.mxu0 %v12226
  %12775 = vmatprep.subr.mxu0 %v12230
  %12776 = vmatpush1.msra.mxu0 %v12229
  %12777 = vmatprep.subr.mxu0 %v12233
  %12778 = vmatpush1.msra.mxu0 %v12232
  %12779 = vmatprep.subr.mxu0 %v12236
  %12780 = vmatpush1.msra.mxu0 %v12235
  %12781 = vmatprep.subr.mxu0 %v12239
  %12782 = vmatpush1.msra.mxu0 %v12238
  %12783 = vmatprep.subr.mxu0 %v12242
  %12784 = vmatpush1.msra.mxu0 %v12241
  %12785 = vmatprep.subr.mxu0 %v12317
  %12786 = vmatpush1.msra.mxu0 %v12314
  %12787 = vmatprep.subr.mxu0 0.0
  %12788 = vmatpush1.msra.mxu0 0.0
  %12789 = vmatprep.subr.mxu0 0.0
  %12790 = vmatpush1.msra.mxu0 0.0
  %12791 = vmatprep.subr.mxu0 0.0
  %12792 = vmatpush1.msra.mxu0 0.0
  %12793 = vmatprep.subr.mxu0 0.0
  %12794 = vmatpush1.msra.mxu0 0.0
  %12795 = vmatprep.subr.mxu0 0.0
  %12796 = vmatpush1.msra.mxu0 0.0
  %12797 = vmatprep.subr.mxu0 0.0
  %12798 = vmatpush1.msra.mxu0 0.0
  %12799 = vmatprep.subr.mxu0 0.0
  %12800 = vmatpush1.msra.mxu0 0.0
  %12801 = vmatprep.mubr.f32.mxu0 %v12729
  %12802 = vmatmul.mubr.f32.gmra.mrb[0].mxu0 %v12717
  %v12803 = vpop.f32.mrb[0].mxu0
  %v12804 = vadd.f32 0.0, %v12803
  %v12805 = vpop.f32.mrb[0].mxu0
  %v12806 = vadd.f32 0.0, %v12805
  %12807 = vmatprep.mubr.f32.mxu0 %v12731
  %12808 = vmatmul.mubr.f32.gmra.mrb[0].mxu0 %v12719
  %v12809 = vpop.f32.mrb[0].mxu0
  %v12810 = vadd.f32 0.0, %v12809
  %v12811 = vpop.f32.mrb[0].mxu0
  %v12812 = vadd.f32 0.0, %v12811
  %12813 = vmatprep.mubr.f32.mxu0 %v12733
  %12814 = vmatmul.mubr.f32.gmra.mrb[0].mxu0 %v12721
  %v12815 = vpop.f32.mrb[0].mxu0
  %v12816 = vadd.f32 0.0, %v12815
  %v12817 = vpop.f32.mrb[0].mxu0
  %v12818 = vadd.f32 0.0, %v12817
  %12819 = vmatprep.mubr.f32.mxu0 %v12735
  %12820 = vmatmul.mubr.f32.gmra.mrb[0].mxu0 %v12723
  %v12821 = vpop.f32.mrb[0].mxu0
  %v12822 = vadd.f32 0.0, %v12821
  %v12823 = vpop.f32.mrb[0].mxu0
  %v12824 = vadd.f32 0.0, %v12823
  %12825 = vdwg.mxu0
  %12826 = vmatprep.subr.mxu0 0.0
  %12827 = vmatpush1.msra.mxu0 %v12174
  %12828 = vmatprep.subr.mxu0 0.0
  %12829 = vmatpush1.msra.mxu0 %v12177
  %12830 = vmatprep.subr.mxu0 0.0
  %12831 = vmatpush1.msra.mxu0 %v12180
  %12832 = vmatprep.subr.mxu0 0.0
  %12833 = vmatpush1.msra.mxu0 %v12183
  %12834 = vmatprep.subr.mxu0 0.0
  %12835 = vmatpush1.msra.mxu0 %v12186
  %12836 = vmatprep.subr.mxu0 0.0
  %12837 = vmatpush1.msra.mxu0 %v12189
  %12838 = vmatprep.subr.mxu0 0.0
  %12839 = vmatpush1.msra.mxu0 %v12192
  %12840 = vmatprep.subr.mxu0 0.0
  %12841 = vmatpush1.msra.mxu0 %v12195
  %12842 = vmatprep.subr.mxu0 0.0
  %12843 = vmatpush1.msra.mxu0 %v12198
  %12844 = vmatprep.subr.mxu0 0.0
  %12845 = vmatpush1.msra.mxu0 %v12201
  %12846 = vmatprep.subr.mxu0 0.0
  %12847 = vmatpush1.msra.mxu0 %v12204
  %12848 = vmatprep.subr.mxu0 0.0
  %12849 = vmatpush1.msra.mxu0 %v12207
  %12850 = vmatprep.subr.mxu0 0.0
  %12851 = vmatpush1.msra.mxu0 %v12210
  %12852 = vmatprep.subr.mxu0 0.0
  %12853 = vmatpush1.msra.mxu0 %v12213
  %12854 = vmatprep.subr.mxu0 0.0
  %12855 = vmatpush1.msra.mxu0 %v12216
  %12856 = vmatprep.subr.mxu0 0.0
  %12857 = vmatpush1.msra.mxu0 %v12219
  %12858 = vmatprep.subr.mxu0 0.0
  %12859 = vmatpush1.msra.mxu0 %v12222
  %12860 = vmatprep.subr.mxu0 0.0
  %12861 = vmatpush1.msra.mxu0 %v12225
  %12862 = vmatprep.subr.mxu0 0.0
  %12863 = vmatpush1.msra.mxu0 %v12228
  %12864 = vmatprep.subr.mxu0 0.0
  %12865 = vmatpush1.msra.mxu0 %v12231
  %12866 = vmatprep.subr.mxu0 0.0
  %12867 = vmatpush1.msra.mxu0 %v12234
  %12868 = vmatprep.subr.mxu0 0.0
  %12869 = vmatpush1.msra.mxu0 %v12237
  %12870 = vmatprep.subr.mxu0 0.0
  %12871 = vmatpush1.msra.mxu0 %v12240
  %12872 = vmatprep.subr.mxu0 0.0
  %12873 = vmatpush1.msra.mxu0 %v12243
  %12874 = vmatprep.subr.mxu0 0.0
  %12875 = vmatpush1.msra.mxu0 %v12320
  %12876 = vmatprep.subr.mxu0 0.0
  %12877 = vmatpush1.msra.mxu0 0.0
  %12878 = vmatprep.subr.mxu0 0.0
  %12879 = vmatpush1.msra.mxu0 0.0
  %12880 = vmatprep.subr.mxu0 0.0
  %12881 = vmatpush1.msra.mxu0 0.0
  %12882 = vmatprep.subr.mxu0 0.0
  %12883 = vmatpush1.msra.mxu0 0.0
  %12884 = vmatprep.subr.mxu0 0.0
  %12885 = vmatpush1.msra.mxu0 0.0
  %12886 = vmatprep.subr.mxu0 0.0
  %12887 = vmatpush1.msra.mxu0 0.0
  %12888 = vmatprep.subr.mxu0 0.0
  %12889 = vmatpush1.msra.mxu0 0.0
  %12890 = vmatprep.mubr.f32.mxu0 %v12729
  %12891 = vmatmul.mubr.f32.gmra.mrb[0].mxu0 %v12717
  %v12892 = vpop.f32.mrb[0].mxu0
  %v12893 = vadd.f32 0.0, %v12892
  %v12894 = vpop.f32.mrb[0].mxu0
  %12895 = vmatprep.mubr.f32.mxu0 %v12731
  %12896 = vmatmul.mubr.f32.gmra.mrb[0].mxu0 %v12719
  %v12897 = vpop.f32.mrb[0].mxu0
  %v12898 = vadd.f32 0.0, %v12897
  %v12899 = vpop.f32.mrb[0].mxu0
  %12900 = vmatprep.mubr.f32.mxu0 %v12733
  %12901 = vmatmul.mubr.f32.gmra.mrb[0].mxu0 %v12721
  %v12902 = vpop.f32.mrb[0].mxu0
  %v12903 = vadd.f32 0.0, %v12902
  %v12904 = vpop.f32.mrb[0].mxu0
  %12905 = vmatprep.mubr.f32.mxu0 %v12735
  %12906 = vmatmul.mubr.f32.gmra.mrb[0].mxu0 %v12723
  %v12907 = vpop.f32.mrb[0].mxu0
  %v12908 = vadd.f32 0.0, %v12907
  %v12909 = vpop.f32.mrb[0].mxu0
  %12910 = vdwg.mxu0
  %v12911 = vmul.f32 %v12804, %v12247
  %v12912 = vmul.f32 %v12806, %v12248
  %v12913 = vmul.f32 %v12893, %v12249
  %v12914 = vmul.f32 %v12810, %v12250
  %v12915 = vmul.f32 %v12812, %v12251
  %v12916 = vmul.f32 %v12898, %v12252
  %v12917 = vmul.f32 %v12816, %v12253
  %v12918 = vmul.f32 %v12818, %v12254
  %v12919 = vmul.f32 %v12903, %v12255
  %v12920 = vmul.f32 %v12822, %v12256
  %v12921 = vmul.f32 %v12824, %v12257
  %v12922 = vmul.f32 %v12908, %v12258
  %v12923 = vadd.f32 %v12911, %v12914
  %v12924 = vadd.f32 %v12923, %v12917
  %v12925 = vadd.f32 %v12924, %v12920
  %v12926 = vrot.slane %v12925, 4
  %v12927 = vadd.f32 %v12925, %v12926
  %v12928 = vrot.slane %v12927, 2
  %v12929 = vadd.f32 %v12927, %v12928
  %v12930 = vrot.slane %v12929, 1
  %v12931 = vadd.f32 %v12929, %v12930
  %v12932 = vadd.f32 %v12912, %v12915
  %v12933 = vadd.f32 %v12932, %v12918
  %v12934 = vadd.f32 %v12933, %v12921
  %v12935 = vrot.slane %v12934, 4
  %v12936 = vadd.f32 %v12934, %v12935
  %v12937 = vrot.slane %v12936, 2
  %v12938 = vadd.f32 %v12936, %v12937
  %v12939 = vrot.slane %v12938, 1
  %v12940 = vadd.f32 %v12938, %v12939
  %v12941 = vsel %vm12526, %v12913, 0.0
  %v12942 = vsel %vm12526, %v12916, 0.0
  %v12943 = vadd.f32 %v12941, %v12942
  %v12944 = vsel %vm12526, %v12919, 0.0
  %v12945 = vadd.f32 %v12943, %v12944
  %v12946 = vsel %vm12526, %v12922, 0.0
  %v12947 = vadd.f32 %v12945, %v12946
  %v12948 = vrot.slane %v12947, 4
  %v12949 = vadd.f32 %v12947, %v12948
  %v12950 = vrot.slane %v12949, 2
  %v12951 = vadd.f32 %v12949, %v12950
  %v12952 = vrot.slane %v12951, 1
  %v12953 = vadd.f32 %v12951, %v12952
  %v12955 = vsel %vm12526, %v12953, 0
  %12957 = vmatprep.subr.mxu0 0.0
  %12958 = vmatpush1.msra.mxu0 %v12259
  %12959 = vmatprep.subr.mxu0 0.0
  %12960 = vmatpush1.msra.mxu0 %v12260
  %12961 = vmatprep.subr.mxu0 0.0
  %12962 = vmatpush1.msra.mxu0 %v12261
  %12963 = vmatprep.subr.mxu0 0.0
  %12964 = vmatpush1.msra.mxu0 %v12262
  %12965 = vmatprep.subr.mxu0 0.0
  %12966 = vmatpush1.msra.mxu0 %v12263
  %12967 = vmatprep.subr.mxu0 0.0
  %12968 = vmatpush1.msra.mxu0 %v12264
  %12969 = vmatprep.subr.mxu0 0.0
  %12970 = vmatpush1.msra.mxu0 %v12265
  %12971 = vmatprep.subr.mxu0 0.0
  %12972 = vmatpush1.msra.mxu0 %v12266
  %12973 = vmatprep.subr.mxu0 0.0
  %12974 = vmatpush1.msra.mxu0 %v12267
  %12975 = vmatprep.subr.mxu0 0.0
  %12976 = vmatpush1.msra.mxu0 %v12268
  %12977 = vmatprep.subr.mxu0 0.0
  %12978 = vmatpush1.msra.mxu0 %v12269
  %12979 = vmatprep.subr.mxu0 0.0
  %12980 = vmatpush1.msra.mxu0 %v12270
  %12981 = vmatprep.subr.mxu0 0.0
  %12982 = vmatpush1.msra.mxu0 %v12271
  %12983 = vmatprep.subr.mxu0 0.0
  %12984 = vmatpush1.msra.mxu0 %v12272
  %12985 = vmatprep.subr.mxu0 0.0
  %12986 = vmatpush1.msra.mxu0 %v12273
  %12987 = vmatprep.subr.mxu0 0.0
  %12988 = vmatpush1.msra.mxu0 %v12274
  %12989 = vmatprep.subr.mxu0 0.0
  %12990 = vmatpush1.msra.mxu0 %v12275
  %12991 = vmatprep.subr.mxu0 0.0
  %12992 = vmatpush1.msra.mxu0 %v12276
  %12993 = vmatprep.subr.mxu0 0.0
  %12994 = vmatpush1.msra.mxu0 %v12277
  %12995 = vmatprep.subr.mxu0 0.0
  %12996 = vmatpush1.msra.mxu0 %v12278
  %12997 = vmatprep.subr.mxu0 0.0
  %12998 = vmatpush1.msra.mxu0 %v12279
  %12999 = vmatprep.subr.mxu0 0.0
  %13000 = vmatpush1.msra.mxu0 %v12280
  %13001 = vmatprep.subr.mxu0 0.0
  %13002 = vmatpush1.msra.mxu0 %v12281
  %13003 = vmatprep.subr.mxu0 0.0
  %13004 = vmatpush1.msra.mxu0 %v12282
  %13005 = vmatprep.subr.mxu0 0.0
  %13006 = vmatpush1.msra.mxu0 %v12283
  %13007 = vmatprep.subr.mxu0 0.0
  %13008 = vmatpush1.msra.mxu0 %v12284
  %13009 = vmatprep.subr.mxu0 0.0
  %13010 = vmatpush1.msra.mxu0 %v12285
  %13011 = vmatprep.subr.mxu0 0.0
  %13012 = vmatpush1.msra.mxu0 %v12286
  %13013 = vmatprep.subr.mxu0 0.0
  %13014 = vmatpush1.msra.mxu0 %v12287
  %13015 = vmatprep.subr.mxu0 0.0
  %13016 = vmatpush1.msra.mxu0 %v12288
  %13017 = vmatprep.subr.mxu0 0.0
  %13018 = vmatpush1.msra.mxu0 %v12289
  %13019 = vmatprep.subr.mxu0 0.0
  %13020 = vmatpush1.msra.mxu0 %v12290
  %13021 = vmatprep.mubr.f32.mxu0 %v12940
  %13022 = vmatmul.mubr.f32.gmra.mrb[0].mxu0 %v12931
  %v13023 = vpop.f32.mrb[0].mxu0
  %v13024 = vadd.f32 %v12299, %v13023
  %v13025 = vpop.f32.mrb[0].mxu0
  %13026 = vdwg.mxu0
  %13027 = vmatprep.subr.mxu0 0.0
  %13028 = vmatpush1.msra.mxu0 %v12291
  %13029 = vmatprep.subr.mxu0 0.0
  %13030 = vmatpush1.msra.mxu0 %v12292
  %13031 = vmatprep.subr.mxu0 0.0
  %13032 = vmatpush1.msra.mxu0 %v12293
  %13033 = vmatprep.subr.mxu0 0.0
  %13034 = vmatpush1.msra.mxu0 %v12294
  %13035 = vmatprep.subr.mxu0 0.0
  %13036 = vmatpush1.msra.mxu0 %v12295
  %13037 = vmatprep.subr.mxu0 0.0
  %13038 = vmatpush1.msra.mxu0 %v12296
  %13039 = vmatprep.subr.mxu0 0.0
  %13040 = vmatpush1.msra.mxu0 %v12297
  %13041 = vmatprep.subr.mxu0 0.0
  %13042 = vmatpush1.msra.mxu0 %v12298
  %13043 = vmatprep.subr.mxu0 0.0
  %13044 = vmatpush1.msra.mxu0 0.0
  %13045 = vmatprep.subr.mxu0 0.0
  %13046 = vmatpush1.msra.mxu0 0.0
  %13047 = vmatprep.subr.mxu0 0.0
  %13048 = vmatpush1.msra.mxu0 0.0
  %13049 = vmatprep.subr.mxu0 0.0
  %13050 = vmatpush1.msra.mxu0 0.0
  %13051 = vmatprep.subr.mxu0 0.0
  %13052 = vmatpush1.msra.mxu0 0.0
  %13053 = vmatprep.subr.mxu0 0.0
  %13054 = vmatpush1.msra.mxu0 0.0
  %13055 = vmatprep.subr.mxu0 0.0
  %13056 = vmatpush1.msra.mxu0 0.0
  %13057 = vmatprep.subr.mxu0 0.0
  %13058 = vmatpush1.msra.mxu0 0.0
  %13059 = vmatprep.subr.mxu0 0.0
  %13060 = vmatpush1.msra.mxu0 0.0
  %13061 = vmatprep.subr.mxu0 0.0
  %13062 = vmatpush1.msra.mxu0 0.0
  %13063 = vmatprep.subr.mxu0 0.0
  %13064 = vmatpush1.msra.mxu0 0.0
  %13065 = vmatprep.subr.mxu0 0.0
  %13066 = vmatpush1.msra.mxu0 0.0
  %13067 = vmatprep.subr.mxu0 0.0
  %13068 = vmatpush1.msra.mxu0 0.0
  %13069 = vmatprep.subr.mxu0 0.0
  %13070 = vmatpush1.msra.mxu0 0.0
  %13071 = vmatprep.subr.mxu0 0.0
  %13072 = vmatpush1.msra.mxu0 0.0
  %13073 = vmatprep.subr.mxu0 0.0
  %13074 = vmatpush1.msra.mxu0 0.0
  %13075 = vmatprep.subr.mxu0 0.0
  %13076 = vmatpush1.msra.mxu0 0.0
  %13077 = vmatprep.subr.mxu0 0.0
  %13078 = vmatpush1.msra.mxu0 0.0
  %13079 = vmatprep.subr.mxu0 0.0
  %13080 = vmatpush1.msra.mxu0 0.0
  %13081 = vmatprep.subr.mxu0 0.0
  %13082 = vmatpush1.msra.mxu0 0.0
  %13083 = vmatprep.subr.mxu0 0.0
  %13084 = vmatpush1.msra.mxu0 0.0
  %13085 = vmatprep.subr.mxu0 0.0
  %13086 = vmatpush1.msra.mxu0 0.0
  %13087 = vmatprep.subr.mxu0 0.0
  %13088 = vmatpush1.msra.mxu0 0.0
  %13089 = vmatprep.subr.mxu0 0.0
  %13090 = vmatpush1.msra.mxu0 0.0
  %13091 = vmatprep.mubr.f32.mxu0 0.0
  %13092 = vmatmul.mubr.f32.gmra.mrb[0].mxu0 %v12955
  %v13093 = vpop.f32.mrb[0].mxu0
  %v13094 = vadd.f32 %v13024, %v13093
  %v13095 = vpop.f32.mrb[0].mxu0
  %13096 = vdwg.mxu0
  %13098 = vrot.lane.b32.xlu0 %v13094, 10
  %v13099 = vpop.permute.xlu0 %13098
  %vm13101 = vcmask 155728
  %13102 = vst.msk [vmem:[%s14] sm:$0x1] %vm13101, %v13099
  // Predicated region
  $region58: #{convnet_forward.1} parent=0 // pred_check
    _
  $region59: #{convnet_forward.1} parent=0 // pred_check_branch
    %13104 = sbr.rel (0) target = $region61
  $region60: #{convnet_forward.1} parent=0 // pred_region
    _
  $region61: #{convnet_forward.1} parent=0 // pred_fallthru
    _
  // Predicated region
  $region62: #{convnet_forward.1} parent=0 // pred_check
    _
  $region63: #{convnet_forward.1} parent=0 // pred_check_branch
    %13106 = sbr.rel (0) target = $region65
  $region64: #{convnet_forward.1} parent=0 // pred_region
    _
  $region65: #{convnet_forward.1} parent=0 // pred_fallthru
    _

</llo_original>
